<compile_context>
chip_gen: v5e
topology: v5e:2x2
jax: 0.10.0
libtpu: 0.0.40
codegen_flags: <defaults>
</compile_context>

<pallas_src>
import math

import jax
import jax.numpy as jnp
from jax.experimental import pallas as pl
from jax.experimental.pallas import tpu as pltpu

IN_FEATURES = 1280           # efficientnet_b0: self.model.classifier[1].in_features
H1, H2, NUM_CLASSES = 512, 256, 2
NUM_CLASSES_PADDED = 128     # lane-dense final store; cols >= 2 are zero, sliced off outside
STEM_C = 128                 # synthetic stem width (128 => lane-dense tiles)
KSIZE = 3


# --------------------------- fused forward kernel ---------------------------
# Grid: (B_pad // BB,) — one batch tile of BB samples per grid step ("parallel").
# Per step, everything (conv taps, ReLU, GAP, projection, MLP) stays in VMEM.
def fused_forward_kernel(
    xp_ref,                      # (BB, H+2, W+2, C) f32  SAME-padded NHWC batch tile
    wc_ref, bc_ref,              # (9, C, STEM_C) f32, (1, STEM_C) f32
    wp_ref, bp_ref,              # (STEM_C, 1280) bf16, (1, 1280) f32
    w1_ref, b1_ref,              # (1280, 512)    bf16, (1, 512)  f32
    w2_ref, b2_ref,              # (512, 256)     bf16, (1, 256)  f32
    w3_ref, b3_ref,              # (256, 128)     bf16, (1, 128)  f32 (cols >= 2 are zero)
    mid_ref,                     # out: (BB, 1280) f32
    out_ref,                     # out: (BB, 128)  f32
):
    bb, hp, wp_dim, c_in = xp_ref.shape
    H, W = hp - 2, wp_dim - 2
    stem_c = wc_ref.shape[-1]

    xp = xp_ref[...]             # whole padded batch tile in VMEM (tiny)
    wc = wc_ref[...]             # (9, C, STEM_C)

    # --- 3x3 conv stem (SAME padding), batch folded into M: no im2col in HBM ---
    acc = jnp.zeros((bb * H * W, stem_c), jnp.float32)
    for t in range(KSIZE * KSIZE):
        di, dj = divmod(t, KSIZE)
        tap = xp[:, di:di + H, dj:dj + W, :].reshape(bb * H * W, c_in)   # (BB*H*W, C)
        acc = acc + jnp.dot(tap, wc[t], preferred_element_type=jnp.float32)
    feat = jnp.maximum(acc + bc_ref[...], 0.0)                           # (BB*H*W, STEM_C)

    # --- global average pool (VMEM-resident reduction) + projection to 1280 ---
    pooled = feat.reshape(bb, H * W, stem_c).sum(axis=1) * (1.0 / (H * W))  # (BB, STEM_C)
    mid = jnp.dot(pooled.astype(jnp.bfloat16), wp_ref[...],
                  preferred_element_type=jnp.float32) + bp_ref[...]         # (BB, 1280)
    mid_ref[...] = mid

    # --- classifier MLP; Dropout(0.5) layers are identity in eval mode ---
    h = jnp.dot(mid.astype(jnp.bfloat16), w1_ref[...],
                preferred_element_type=jnp.float32) + b1_ref[...]
    h = jnp.maximum(h, 0.0)
    h = jnp.dot(h.astype(jnp.bfloat16), w2_ref[...],
                preferred_element_type=jnp.float32) + b2_ref[...]
    h = jnp.maximum(h, 0.0)
    out_ref[...] = jnp.dot(h.astype(jnp.bfloat16), w3_ref[...],
                           preferred_element_type=jnp.float32) + b3_ref[...]   # (BB, 128)


# ------------------------------ wrapper / specs ------------------------------
def _const_spec(arr):
    """Full-array block with a constant index_map (stays resident across grid steps)."""
    nd = arr.ndim
    return pl.BlockSpec(arr.shape, lambda i, nd=nd: (0,) * nd)


def defect_classifier_forward(params, x_nchw):
    """Returns (mid_fea, final_acc) exactly like DefectClassifier.forward (eval mode)."""
    B, C, H, W = x_nchw.shape
    BB = 8 if B >= 8 else B                       # sublane-dense batch tile when possible
    B_pad = ((B + BB - 1) // BB) * BB

    x_nhwc = jnp.transpose(x_nchw, (0, 2, 3, 1)).astype(jnp.float32)
    xp = jnp.pad(x_nhwc, ((0, B_pad - B), (1, 1), (1, 1), (0, 0)))   # batch pad + SAME pad

    # TODO(synk): for very large images the per-tile stem activation should be
    # row-tiled with an explicit halo DMA; up to ~64x64 stems the whole padded
    # batch tile and its (BB*H*W, 128) activation fit comfortably in VMEM.
    in_specs = [pl.BlockSpec((BB, H + 2, W + 2, C), lambda i: (i, 0, 0, 0))] + [
        _const_spec(params[k])
        for k in ("wc", "bc", "wp", "bp", "w1", "b1", "w2", "b2", "w3", "b3")
    ]
    out_specs = (
        pl.BlockSpec((BB, IN_FEATURES), lambda i: (i, 0)),
        pl.BlockSpec((BB, NUM_CLASSES_PADDED), lambda i: (i, 0)),
    )
    out_shape = (
        jax.ShapeDtypeStruct((B_pad, IN_FEATURES), jnp.float32),
        jax.ShapeDtypeStruct((B_pad, NUM_CLASSES_PADDED), jnp.float32),
    )

    mid_fea, final_pad = pl.pallas_call(
        fused_forward_kernel,
        grid=(B_pad // BB,),
        in_specs=in_specs,
        out_specs=out_specs,
        out_shape=out_shape,
        compiler_params=pltpu.CompilerParams(dimension_semantics=("parallel",)),
    )(
        xp,
        params["wc"], params["bc"],
        params["wp"], params["bp"],
        params["w1"], params["b1"],
        params["w2"], params["b2"],
        params["w3"], params["b3"],
    )
    return mid_fea[:B], final_pad[:B, :NUM_CLASSES]


def init_params(key, c_in=3):
    """Deterministic PyTorch-Linear-style uniform(-1/sqrt(fan_in), +) init.

    Matmul weights for the large layers are stored bf16 (f32 accumulation in-kernel);
    biases and the tiny conv weights stay f32.  The final layer is zero-padded from
    2 -> NUM_CLASSES_PADDED output columns for lane-dense stores.
    """
    ks = jax.random.split(key, 10)

    def lin(k, fan_in, shape, dtype=jnp.float32):
        bound = 1.0 / math.sqrt(fan_in)
        return jax.random.uniform(k, shape, jnp.float32, -bound, bound).astype(dtype)

    k_patch = KSIZE * KSIZE * c_in

    w3_small = lin(ks[8], H2, (H2, NUM_CLASSES))
    b3_small = lin(ks[9], H2, (1, NUM_CLASSES))
    w3 = (jnp.zeros((H2, NUM_CLASSES_PADDED), jnp.float32)
          .at[:, :NUM_CLASSES].set(w3_small).astype(jnp.bfloat16))
    b3 = jnp.zeros((1, NUM_CLASSES_PADDED), jnp.float32).at[:, :NUM_CLASSES].set(b3_small)

    return dict(
        wc=lin(ks[0], k_patch, (KSIZE * KSIZE, c_in, STEM_C)),             # f32 (tiny)
        bc=lin(ks[1], k_patch, (1, STEM_C)),
        wp=lin(ks[2], STEM_C, (STEM_C, IN_FEATURES), jnp.bfloat16),
        bp=lin(ks[3], STEM_C, (1, IN_FEATURES)),
        w1=lin(ks[4], IN_FEATURES, (IN_FEATURES, H1), jnp.bfloat16),
        b1=lin(ks[5], IN_FEATURES, (1, H1)),
        w2=lin(ks[6], H1, (H1, H2), jnp.bfloat16),
        b2=lin(ks[7], H1, (1, H2)),
        w3=w3,
        b3=b3,
    )


if __name__ == "__main__":
    key = jax.random.PRNGKey(0)
    k_x, k_p = jax.random.split(key)
    x = jax.random.normal(k_x, (2, 3, 16, 16), dtype=jnp.float32)      # NCHW, like PyTorch
    params = init_params(k_p, c_in=3)

    mid_fea, final_acc = jax.jit(defect_classifier_forward)(params, x)
    jax.block_until_ready((mid_fea, final_acc))

    assert mid_fea.shape == (2, IN_FEATURES) and mid_fea.dtype == jnp.float32
    assert final_acc.shape == (2, NUM_CLASSES) and final_acc.dtype == jnp.float32
    assert bool(jnp.all(jnp.isfinite(mid_fea))) and bool(jnp.all(jnp.isfinite(final_acc)))
    print("KERNEL_OK")
</pallas_src>

<mosaic_0001>
module attributes {stable_mosaic.version = 11 : i64} {
  func.func @fused_forward_kernel(%arg0: i32, %arg1: memref<2x18x18x3xf32, #tpu.memory_space<vmem>>, %arg2: memref<9x3x128xf32, #tpu.memory_space<vmem>>, %arg3: memref<1x128xf32, #tpu.memory_space<vmem>>, %arg4: memref<128x1280xbf16, #tpu.memory_space<vmem>>, %arg5: memref<1x1280xf32, #tpu.memory_space<vmem>>, %arg6: memref<1280x512xbf16, #tpu.memory_space<vmem>>, %arg7: memref<1x512xf32, #tpu.memory_space<vmem>>, %arg8: memref<512x256xbf16, #tpu.memory_space<vmem>>, %arg9: memref<1x256xf32, #tpu.memory_space<vmem>>, %arg10: memref<256x128xbf16, #tpu.memory_space<vmem>>, %arg11: memref<1x128xf32, #tpu.memory_space<vmem>>, %arg12: memref<2x1280xf32, #tpu.memory_space<vmem>>, %arg13: memref<2x128xf32, #tpu.memory_space<vmem>>) attributes {dimension_semantics = [#tpu.dimension_semantics<parallel>], iteration_bounds = array<i64: 1>, scalar_prefetch = 0 : i64, scratch_operands = 0 : i64, tpu.core_type = #tpu.core_type<tc>, window_params = [{transform_indices = @transform_0, window_bounds = array<i64: 2, 18, 18, 3>}, {pipeline_mode = #tpu.pipeline_mode<synchronous>, transform_indices = @transform_1, window_bounds = array<i64: 9, 3, 128>}, {pipeline_mode = #tpu.pipeline_mode<synchronous>, transform_indices = @transform_2, window_bounds = array<i64: 1, 128>}, {pipeline_mode = #tpu.pipeline_mode<synchronous>, transform_indices = @transform_3, window_bounds = array<i64: 128, 1280>}, {pipeline_mode = #tpu.pipeline_mode<synchronous>, transform_indices = @transform_4, window_bounds = array<i64: 1, 1280>}, {pipeline_mode = #tpu.pipeline_mode<synchronous>, transform_indices = @transform_5, window_bounds = array<i64: 1280, 512>}, {pipeline_mode = #tpu.pipeline_mode<synchronous>, transform_indices = @transform_6, window_bounds = array<i64: 1, 512>}, {pipeline_mode = #tpu.pipeline_mode<synchronous>, transform_indices = @transform_7, window_bounds = array<i64: 512, 256>}, {pipeline_mode = #tpu.pipeline_mode<synchronous>, transform_indices = @transform_8, window_bounds = array<i64: 1, 256>}, {pipeline_mode = #tpu.pipeline_mode<synchronous>, transform_indices = @transform_9, window_bounds = array<i64: 256, 128>}, {pipeline_mode = #tpu.pipeline_mode<synchronous>, transform_indices = @transform_10, window_bounds = array<i64: 1, 128>}, {transform_indices = @transform_11, window_bounds = array<i64: 2, 1280>}, {transform_indices = @transform_12, window_bounds = array<i64: 2, 128>}]} {
    %c0 = arith.constant 0 : index
    %c0_0 = arith.constant 0 : index
    %c0_1 = arith.constant 0 : index
    %c0_2 = arith.constant 0 : index
    %0 = vector.load %arg1[%c0, %c0_0, %c0_1, %c0_2] : memref<2x18x18x3xf32, #tpu.memory_space<vmem>>, vector<2x18x18x3xf32>
    %c0_3 = arith.constant 0 : index
    %c0_4 = arith.constant 0 : index
    %c0_5 = arith.constant 0 : index
    %1 = vector.load %arg2[%c0_3, %c0_4, %c0_5] : memref<9x3x128xf32, #tpu.memory_space<vmem>>, vector<9x3x128xf32>
    %cst = arith.constant 0.000000e+00 : f32
    %2 = vector.broadcast %cst : f32 to vector<512x128xf32>
    %3 = vector.extract_strided_slice %0 {offsets = [0, 0, 0, 0], sizes = [2, 16, 16, 3], strides = [1, 1, 1, 1]} : vector<2x18x18x3xf32> to vector<2x16x16x3xf32>
    %4 = vector.shape_cast %3 : vector<2x16x16x3xf32> to vector<512x3xf32>
    %5 = vector.extract_strided_slice %1 {offsets = [0, 0, 0], sizes = [1, 3, 128], strides = [1, 1, 1]} : vector<9x3x128xf32> to vector<1x3x128xf32>
    %6 = vector.shape_cast %5 : vector<1x3x128xf32> to vector<3x128xf32>
    %cst_6 = arith.constant dense<0.000000e+00> : vector<512x128xf32>
    %7 = tpu.matmul %4, %6, %cst_6 {dimension_numbers = #tpu.dot_dimension_numbers<[1], [0], [0], [1], [0, 0, 1, 1], [], []>} : vector<512x3xf32>, vector<3x128xf32>, vector<512x128xf32> -> vector<512x128xf32>
    %8 = arith.addf %2, %7 : vector<512x128xf32>
    %9 = vector.extract_strided_slice %0 {offsets = [0, 0, 1, 0], sizes = [2, 16, 16, 3], strides = [1, 1, 1, 1]} : vector<2x18x18x3xf32> to vector<2x16x16x3xf32>
    %10 = vector.shape_cast %9 : vector<2x16x16x3xf32> to vector<512x3xf32>
    %11 = vector.extract_strided_slice %1 {offsets = [1, 0, 0], sizes = [1, 3, 128], strides = [1, 1, 1]} : vector<9x3x128xf32> to vector<1x3x128xf32>
    %12 = vector.shape_cast %11 : vector<1x3x128xf32> to vector<3x128xf32>
    %cst_7 = arith.constant dense<0.000000e+00> : vector<512x128xf32>
    %13 = tpu.matmul %10, %12, %cst_7 {dimension_numbers = #tpu.dot_dimension_numbers<[1], [0], [0], [1], [0, 0, 1, 1], [], []>} : vector<512x3xf32>, vector<3x128xf32>, vector<512x128xf32> -> vector<512x128xf32>
    %14 = arith.addf %8, %13 : vector<512x128xf32>
    %15 = vector.extract_strided_slice %0 {offsets = [0, 0, 2, 0], sizes = [2, 16, 16, 3], strides = [1, 1, 1, 1]} : vector<2x18x18x3xf32> to vector<2x16x16x3xf32>
    %16 = vector.shape_cast %15 : vector<2x16x16x3xf32> to vector<512x3xf32>
    %17 = vector.extract_strided_slice %1 {offsets = [2, 0, 0], sizes = [1, 3, 128], strides = [1, 1, 1]} : vector<9x3x128xf32> to vector<1x3x128xf32>
    %18 = vector.shape_cast %17 : vector<1x3x128xf32> to vector<3x128xf32>
    %cst_8 = arith.constant dense<0.000000e+00> : vector<512x128xf32>
    %19 = tpu.matmul %16, %18, %cst_8 {dimension_numbers = #tpu.dot_dimension_numbers<[1], [0], [0], [1], [0, 0, 1, 1], [], []>} : vector<512x3xf32>, vector<3x128xf32>, vector<512x128xf32> -> vector<512x128xf32>
    %20 = arith.addf %14, %19 : vector<512x128xf32>
    %21 = vector.extract_strided_slice %0 {offsets = [0, 1, 0, 0], sizes = [2, 16, 16, 3], strides = [1, 1, 1, 1]} : vector<2x18x18x3xf32> to vector<2x16x16x3xf32>
    %22 = vector.shape_cast %21 : vector<2x16x16x3xf32> to vector<512x3xf32>
    %23 = vector.extract_strided_slice %1 {offsets = [3, 0, 0], sizes = [1, 3, 128], strides = [1, 1, 1]} : vector<9x3x128xf32> to vector<1x3x128xf32>
    %24 = vector.shape_cast %23 : vector<1x3x128xf32> to vector<3x128xf32>
    %cst_9 = arith.constant dense<0.000000e+00> : vector<512x128xf32>
    %25 = tpu.matmul %22, %24, %cst_9 {dimension_numbers = #tpu.dot_dimension_numbers<[1], [0], [0], [1], [0, 0, 1, 1], [], []>} : vector<512x3xf32>, vector<3x128xf32>, vector<512x128xf32> -> vector<512x128xf32>
    %26 = arith.addf %20, %25 : vector<512x128xf32>
    %27 = vector.extract_strided_slice %0 {offsets = [0, 1, 1, 0], sizes = [2, 16, 16, 3], strides = [1, 1, 1, 1]} : vector<2x18x18x3xf32> to vector<2x16x16x3xf32>
    %28 = vector.shape_cast %27 : vector<2x16x16x3xf32> to vector<512x3xf32>
    %29 = vector.extract_strided_slice %1 {offsets = [4, 0, 0], sizes = [1, 3, 128], strides = [1, 1, 1]} : vector<9x3x128xf32> to vector<1x3x128xf32>
    %30 = vector.shape_cast %29 : vector<1x3x128xf32> to vector<3x128xf32>
    %cst_10 = arith.constant dense<0.000000e+00> : vector<512x128xf32>
    %31 = tpu.matmul %28, %30, %cst_10 {dimension_numbers = #tpu.dot_dimension_numbers<[1], [0], [0], [1], [0, 0, 1, 1], [], []>} : vector<512x3xf32>, vector<3x128xf32>, vector<512x128xf32> -> vector<512x128xf32>
    %32 = arith.addf %26, %31 : vector<512x128xf32>
    %33 = vector.extract_strided_slice %0 {offsets = [0, 1, 2, 0], sizes = [2, 16, 16, 3], strides = [1, 1, 1, 1]} : vector<2x18x18x3xf32> to vector<2x16x16x3xf32>
    %34 = vector.shape_cast %33 : vector<2x16x16x3xf32> to vector<512x3xf32>
    %35 = vector.extract_strided_slice %1 {offsets = [5, 0, 0], sizes = [1, 3, 128], strides = [1, 1, 1]} : vector<9x3x128xf32> to vector<1x3x128xf32>
    %36 = vector.shape_cast %35 : vector<1x3x128xf32> to vector<3x128xf32>
    %cst_11 = arith.constant dense<0.000000e+00> : vector<512x128xf32>
    %37 = tpu.matmul %34, %36, %cst_11 {dimension_numbers = #tpu.dot_dimension_numbers<[1], [0], [0], [1], [0, 0, 1, 1], [], []>} : vector<512x3xf32>, vector<3x128xf32>, vector<512x128xf32> -> vector<512x128xf32>
    %38 = arith.addf %32, %37 : vector<512x128xf32>
    %39 = vector.extract_strided_slice %0 {offsets = [0, 2, 0, 0], sizes = [2, 16, 16, 3], strides = [1, 1, 1, 1]} : vector<2x18x18x3xf32> to vector<2x16x16x3xf32>
    %40 = vector.shape_cast %39 : vector<2x16x16x3xf32> to vector<512x3xf32>
    %41 = vector.extract_strided_slice %1 {offsets = [6, 0, 0], sizes = [1, 3, 128], strides = [1, 1, 1]} : vector<9x3x128xf32> to vector<1x3x128xf32>
    %42 = vector.shape_cast %41 : vector<1x3x128xf32> to vector<3x128xf32>
    %cst_12 = arith.constant dense<0.000000e+00> : vector<512x128xf32>
    %43 = tpu.matmul %40, %42, %cst_12 {dimension_numbers = #tpu.dot_dimension_numbers<[1], [0], [0], [1], [0, 0, 1, 1], [], []>} : vector<512x3xf32>, vector<3x128xf32>, vector<512x128xf32> -> vector<512x128xf32>
    %44 = arith.addf %38, %43 : vector<512x128xf32>
    %45 = vector.extract_strided_slice %0 {offsets = [0, 2, 1, 0], sizes = [2, 16, 16, 3], strides = [1, 1, 1, 1]} : vector<2x18x18x3xf32> to vector<2x16x16x3xf32>
    %46 = vector.shape_cast %45 : vector<2x16x16x3xf32> to vector<512x3xf32>
    %47 = vector.extract_strided_slice %1 {offsets = [7, 0, 0], sizes = [1, 3, 128], strides = [1, 1, 1]} : vector<9x3x128xf32> to vector<1x3x128xf32>
    %48 = vector.shape_cast %47 : vector<1x3x128xf32> to vector<3x128xf32>
    %cst_13 = arith.constant dense<0.000000e+00> : vector<512x128xf32>
    %49 = tpu.matmul %46, %48, %cst_13 {dimension_numbers = #tpu.dot_dimension_numbers<[1], [0], [0], [1], [0, 0, 1, 1], [], []>} : vector<512x3xf32>, vector<3x128xf32>, vector<512x128xf32> -> vector<512x128xf32>
    %50 = arith.addf %44, %49 : vector<512x128xf32>
    %51 = vector.extract_strided_slice %0 {offsets = [0, 2, 2, 0], sizes = [2, 16, 16, 3], strides = [1, 1, 1, 1]} : vector<2x18x18x3xf32> to vector<2x16x16x3xf32>
    %52 = vector.shape_cast %51 : vector<2x16x16x3xf32> to vector<512x3xf32>
    %53 = vector.extract_strided_slice %1 {offsets = [8, 0, 0], sizes = [1, 3, 128], strides = [1, 1, 1]} : vector<9x3x128xf32> to vector<1x3x128xf32>
    %54 = vector.shape_cast %53 : vector<1x3x128xf32> to vector<3x128xf32>
    %cst_14 = arith.constant dense<0.000000e+00> : vector<512x128xf32>
    %55 = tpu.matmul %52, %54, %cst_14 {dimension_numbers = #tpu.dot_dimension_numbers<[1], [0], [0], [1], [0, 0, 1, 1], [], []>} : vector<512x3xf32>, vector<3x128xf32>, vector<512x128xf32> -> vector<512x128xf32>
    %56 = arith.addf %50, %55 : vector<512x128xf32>
    %c0_15 = arith.constant 0 : index
    %c0_16 = arith.constant 0 : index
    %57 = vector.load %arg3[%c0_15, %c0_16] : memref<1x128xf32, #tpu.memory_space<vmem>>, vector<1x128xf32>
    %58 = vector.broadcast %57 : vector<1x128xf32> to vector<512x128xf32>
    %59 = arith.addf %56, %58 : vector<512x128xf32>
    %cst_17 = arith.constant 0.000000e+00 : f32
    %60 = vector.broadcast %cst_17 : f32 to vector<512x128xf32>
    %61 = arith.maximumf %59, %60 : vector<512x128xf32>
    %62 = vector.shape_cast %61 : vector<512x128xf32> to vector<2x256x128xf32>
    %cst_18 = arith.constant dense<0.000000e+00> : vector<2x128xf32>
    %63 = vector.multi_reduction <add>, %62, %cst_18 [1] : vector<2x256x128xf32> to vector<2x128xf32>
    %cst_19 = arith.constant 3.906250e-03 : f32
    %64 = vector.broadcast %cst_19 : f32 to vector<2x128xf32>
    %65 = arith.mulf %63, %64 : vector<2x128xf32>
    %66 = arith.truncf %65 : vector<2x128xf32> to vector<2x128xbf16>
    %c0_20 = arith.constant 0 : index
    %c0_21 = arith.constant 0 : index
    %67 = vector.load %arg4[%c0_20, %c0_21] : memref<128x1280xbf16, #tpu.memory_space<vmem>>, vector<128x1280xbf16>
    %cst_22 = arith.constant dense<0.000000e+00> : vector<2x1280xf32>
    %68 = tpu.matmul %66, %67, %cst_22 {dimension_numbers = #tpu.dot_dimension_numbers<[1], [0], [0], [1], [0, 0, 1, 1], [], []>} : vector<2x128xbf16>, vector<128x1280xbf16>, vector<2x1280xf32> -> vector<2x1280xf32>
    %c0_23 = arith.constant 0 : index
    %c0_24 = arith.constant 0 : index
    %69 = vector.load %arg5[%c0_23, %c0_24] : memref<1x1280xf32, #tpu.memory_space<vmem>>, vector<1x1280xf32>
    %70 = vector.broadcast %69 : vector<1x1280xf32> to vector<2x1280xf32>
    %71 = arith.addf %68, %70 : vector<2x1280xf32>
    %c0_25 = arith.constant 0 : index
    %c0_26 = arith.constant 0 : index
    %72 = vector.load %arg12[%c0_25, %c0_26] : memref<2x1280xf32, #tpu.memory_space<vmem>>, vector<2x1280xf32>
    tpu.vector_store %arg12[%c0_25, %c0_26], %71 {strides = array<i32>} : memref<2x1280xf32, #tpu.memory_space<vmem>>, vector<2x1280xf32>,
    %73 = arith.truncf %71 : vector<2x1280xf32> to vector<2x1280xbf16>
    %c0_27 = arith.constant 0 : index
    %c0_28 = arith.constant 0 : index
    %74 = vector.load %arg6[%c0_27, %c0_28] : memref<1280x512xbf16, #tpu.memory_space<vmem>>, vector<1280x512xbf16>
    %cst_29 = arith.constant dense<0.000000e+00> : vector<2x512xf32>
    %75 = tpu.matmul %73, %74, %cst_29 {dimension_numbers = #tpu.dot_dimension_numbers<[1], [0], [0], [1], [0, 0, 1, 1], [], []>} : vector<2x1280xbf16>, vector<1280x512xbf16>, vector<2x512xf32> -> vector<2x512xf32>
    %c0_30 = arith.constant 0 : index
    %c0_31 = arith.constant 0 : index
    %76 = vector.load %arg7[%c0_30, %c0_31] : memref<1x512xf32, #tpu.memory_space<vmem>>, vector<1x512xf32>
    %77 = vector.broadcast %76 : vector<1x512xf32> to vector<2x512xf32>
    %78 = arith.addf %75, %77 : vector<2x512xf32>
    %cst_32 = arith.constant 0.000000e+00 : f32
    %79 = vector.broadcast %cst_32 : f32 to vector<2x512xf32>
    %80 = arith.maximumf %78, %79 : vector<2x512xf32>
    %81 = arith.truncf %80 : vector<2x512xf32> to vector<2x512xbf16>
    %c0_33 = arith.constant 0 : index
    %c0_34 = arith.constant 0 : index
    %82 = vector.load %arg8[%c0_33, %c0_34] : memref<512x256xbf16, #tpu.memory_space<vmem>>, vector<512x256xbf16>
    %cst_35 = arith.constant dense<0.000000e+00> : vector<2x256xf32>
    %83 = tpu.matmul %81, %82, %cst_35 {dimension_numbers = #tpu.dot_dimension_numbers<[1], [0], [0], [1], [0, 0, 1, 1], [], []>} : vector<2x512xbf16>, vector<512x256xbf16>, vector<2x256xf32> -> vector<2x256xf32>
    %c0_36 = arith.constant 0 : index
    %c0_37 = arith.constant 0 : index
    %84 = vector.load %arg9[%c0_36, %c0_37] : memref<1x256xf32, #tpu.memory_space<vmem>>, vector<1x256xf32>
    %85 = vector.broadcast %84 : vector<1x256xf32> to vector<2x256xf32>
    %86 = arith.addf %83, %85 : vector<2x256xf32>
    %cst_38 = arith.constant 0.000000e+00 : f32
    %87 = vector.broadcast %cst_38 : f32 to vector<2x256xf32>
    %88 = arith.maximumf %86, %87 : vector<2x256xf32>
    %89 = arith.truncf %88 : vector<2x256xf32> to vector<2x256xbf16>
    %c0_39 = arith.constant 0 : index
    %c0_40 = arith.constant 0 : index
    %90 = vector.load %arg10[%c0_39, %c0_40] : memref<256x128xbf16, #tpu.memory_space<vmem>>, vector<256x128xbf16>
    %cst_41 = arith.constant dense<0.000000e+00> : vector<2x128xf32>
    %91 = tpu.matmul %89, %90, %cst_41 {dimension_numbers = #tpu.dot_dimension_numbers<[1], [0], [0], [1], [0, 0, 1, 1], [], []>} : vector<2x256xbf16>, vector<256x128xbf16>, vector<2x128xf32> -> vector<2x128xf32>
    %c0_42 = arith.constant 0 : index
    %c0_43 = arith.constant 0 : index
    %92 = vector.load %arg11[%c0_42, %c0_43] : memref<1x128xf32, #tpu.memory_space<vmem>>, vector<1x128xf32>
    %93 = vector.broadcast %92 : vector<1x128xf32> to vector<2x128xf32>
    %94 = arith.addf %91, %93 : vector<2x128xf32>
    %c0_44 = arith.constant 0 : index
    %c0_45 = arith.constant 0 : index
    %95 = vector.load %arg13[%c0_44, %c0_45] : memref<2x128xf32, #tpu.memory_space<vmem>>, vector<2x128xf32>
    tpu.vector_store %arg13[%c0_44, %c0_45], %94 {strides = array<i32>} : memref<2x128xf32, #tpu.memory_space<vmem>>, vector<2x128xf32>,
    return
  }
  func.func @transform_0(%arg0: i32) -> (i32, i32, i32, i32) {
    %c0_i32 = arith.constant 0 : i32
    %c0_i32_0 = arith.constant 0 : i32
    %c0_i32_1 = arith.constant 0 : i32
    %c0_i32_2 = arith.constant 0 : i32
    return %arg0, %c0_i32, %c0_i32_0, %c0_i32_1 : i32, i32, i32, i32
  }
  func.func @transform_1(%arg0: i32) -> (i32, i32, i32) {
    %c0_i32 = arith.constant 0 : i32
    %c0_i32_0 = arith.constant 0 : i32
    %c0_i32_1 = arith.constant 0 : i32
    %c0_i32_2 = arith.constant 0 : i32
    return %c0_i32, %c0_i32_0, %c0_i32_1 : i32, i32, i32
  }
  func.func @transform_2(%arg0: i32) -> (i32, i32) {
    %c0_i32 = arith.constant 0 : i32
    %c0_i32_0 = arith.constant 0 : i32
    %c0_i32_1 = arith.constant 0 : i32
    return %c0_i32, %c0_i32_0 : i32, i32
  }
  func.func @transform_3(%arg0: i32) -> (i32, i32) {
    %c0_i32 = arith.constant 0 : i32
    %c0_i32_0 = arith.constant 0 : i32
    %c0_i32_1 = arith.constant 0 : i32
    return %c0_i32, %c0_i32_0 : i32, i32
  }
  func.func @transform_4(%arg0: i32) -> (i32, i32) {
    %c0_i32 = arith.constant 0 : i32
    %c0_i32_0 = arith.constant 0 : i32
    %c0_i32_1 = arith.constant 0 : i32
    return %c0_i32, %c0_i32_0 : i32, i32
  }
  func.func @transform_5(%arg0: i32) -> (i32, i32) {
    %c0_i32 = arith.constant 0 : i32
    %c0_i32_0 = arith.constant 0 : i32
    %c0_i32_1 = arith.constant 0 : i32
    return %c0_i32, %c0_i32_0 : i32, i32
  }
  func.func @transform_6(%arg0: i32) -> (i32, i32) {
    %c0_i32 = arith.constant 0 : i32
    %c0_i32_0 = arith.constant 0 : i32
    %c0_i32_1 = arith.constant 0 : i32
    return %c0_i32, %c0_i32_0 : i32, i32
  }
  func.func @transform_7(%arg0: i32) -> (i32, i32) {
    %c0_i32 = arith.constant 0 : i32
    %c0_i32_0 = arith.constant 0 : i32
    %c0_i32_1 = arith.constant 0 : i32
    return %c0_i32, %c0_i32_0 : i32, i32
  }
  func.func @transform_8(%arg0: i32) -> (i32, i32) {
    %c0_i32 = arith.constant 0 : i32
    %c0_i32_0 = arith.constant 0 : i32
    %c0_i32_1 = arith.constant 0 : i32
    return %c0_i32, %c0_i32_0 : i32, i32
  }
  func.func @transform_9(%arg0: i32) -> (i32, i32) {
    %c0_i32 = arith.constant 0 : i32
    %c0_i32_0 = arith.constant 0 : i32
    %c0_i32_1 = arith.constant 0 : i32
    return %c0_i32, %c0_i32_0 : i32, i32
  }
  func.func @transform_10(%arg0: i32) -> (i32, i32) {
    %c0_i32 = arith.constant 0 : i32
    %c0_i32_0 = arith.constant 0 : i32
    %c0_i32_1 = arith.constant 0 : i32
    return %c0_i32, %c0_i32_0 : i32, i32
  }
  func.func @transform_11(%arg0: i32) -> (i32, i32) {
    %c0_i32 = arith.constant 0 : i32
    %c0_i32_0 = arith.constant 0 : i32
    return %arg0, %c0_i32 : i32, i32
  }
  func.func @transform_12(%arg0: i32) -> (i32, i32) {
    %c0_i32 = arith.constant 0 : i32
    %c0_i32_0 = arith.constant 0 : i32
    return %arg0, %c0_i32 : i32, i32
  }
}

</mosaic_0001>

<llo_original>
// kernel: defect_classifier_forward.1
$region0: #{defect_classifier_forward.1}
  #allocation0 [shape = 'u32[]', space=smem, size = 0x4, offset = 0x4, fixed_abs, tag = 'smem constant byte address 0x4 - core index']
  #allocation1 [shape = 'u32[72,128]{1,0:T(1,128)}', space=vmem, size = 0x9000, scoped, tag = 'internal scratch']
  %s0 = inlined_call_operand.vmem [shape: f32[2,18,18,3], index: 0, kind: input, shape index: {}]
  %s1 = inlined_call_operand.hbm [shape: f32[9,3,128], index: 1, kind: input, shape index: {}]
  %s2 = inlined_call_operand.hbm [shape: f32[1,128], index: 2, kind: input, shape index: {}]
  %s3 = inlined_call_operand.hbm [shape: bf16[128,1280], index: 3, kind: input, shape index: {}]
  %s4 = inlined_call_operand.hbm [shape: f32[1,1280], index: 4, kind: input, shape index: {}]
  %s5 = inlined_call_operand.hbm [shape: bf16[1280,512], index: 5, kind: input, shape index: {}]
  %s6 = inlined_call_operand.hbm [shape: f32[1,512], index: 6, kind: input, shape index: {}]
  %s7 = inlined_call_operand.hbm [shape: bf16[512,256], index: 7, kind: input, shape index: {}]
  %s8 = inlined_call_operand.hbm [shape: f32[1,256], index: 8, kind: input, shape index: {}]
  %s9 = inlined_call_operand.hbm [shape: bf16[256,128], index: 9, kind: input, shape index: {}]
  %s10 = inlined_call_operand.hbm [shape: f32[1,128], index: 10, kind: input, shape index: {}]
  %s11 = inlined_call_operand.hbm [shape: f32[2,1280], index: 11, kind: output, shape index: {0}]
  %s12 = inlined_call_operand.hbm [shape: f32[2,128], index: 12, kind: output, shape index: {1}]
  %13 = xla_tuple %s11, %s12
  %s14 = sld [smem:[#allocation0]]
  $region102: #{defect_classifier_forward.1} parent=0
    _
  %s16 = ssub.s32 1, %s14
  %s17 = scalar_select 0, %s16, %s14
  $region1: #{defect_classifier_forward.1} parent=0
    #allocation2 [shape = 'u8[18432]{0}', space=vmem, size = 0x4800, scoped, tag = 'input window, operand 1, single buffered']
    #allocation3 [shape = 's32[1]{0}', space=sflag, size = 0x4, scoped, tag = 'scoped memory for defect_classifier_forward.1']
    #allocation4 [shape = 's32[1]{0}', space=sflag, size = 0x4, scoped, tag = 'scoped memory for defect_classifier_forward.1']
    #allocation5 [shape = 'u8[512]{0}', space=vmem, size = 0x400, scoped, tag = 'input window, operand 2, single buffered']
    #allocation6 [shape = 's32[1]{0}', space=sflag, size = 0x4, scoped, tag = 'scoped memory for defect_classifier_forward.1']
    #allocation7 [shape = 'u8[327680]{0}', space=vmem, size = 0x50000, scoped, tag = 'input window, operand 3, single buffered']
    #allocation8 [shape = 'u8[5120]{0}', space=vmem, size = 0x1400, scoped, tag = 'input window, operand 4, single buffered']
    #allocation9 [shape = 's32[1]{0}', space=sflag, size = 0x4, scoped, tag = 'scoped memory for defect_classifier_forward.1']
    #allocation10 [shape = 'u8[1310720]{0}', space=vmem, size = 0x140000, scoped, tag = 'input window, operand 5, single buffered']
    #allocation11 [shape = 'u8[2048]{0}', space=vmem, size = 0x800, scoped, tag = 'input window, operand 6, single buffered']
    #allocation12 [shape = 's32[1]{0}', space=sflag, size = 0x4, scoped, tag = 'scoped memory for defect_classifier_forward.1']
    #allocation13 [shape = 'u8[262144]{0}', space=vmem, size = 0x40000, scoped, tag = 'input window, operand 7, single buffered']
    #allocation14 [shape = 'u8[1024]{0}', space=vmem, size = 0x400, scoped, tag = 'input window, operand 8, single buffered']
    #allocation15 [shape = 's32[1]{0}', space=sflag, size = 0x4, scoped, tag = 'scoped memory for defect_classifier_forward.1']
    #allocation16 [shape = 'u8[65536]{0}', space=vmem, size = 0x10000, scoped, tag = 'input window, operand 9, single buffered']
    #allocation17 [shape = 'u8[512]{0}', space=vmem, size = 0x400, scoped, tag = 'input window, operand 10, single buffered']
    #allocation18 [shape = 's32[1]{0}', space=sflag, size = 0x4, scoped, tag = 'scoped memory for defect_classifier_forward.1']
    #allocation19 [shape = 'u8[10240]{0}', space=vmem, size = 0x2800, scoped, tag = 'output window, operand 0, single buffered']
    #allocation20 [shape = 'u8[1024]{0}', space=vmem, size = 0x400, scoped, tag = 'output window, operand 1, single buffered']
    #allocation21 [shape = 's32[1]{0}', space=sflag, size = 0x4, scoped, tag = 'scoped memory for defect_classifier_forward.1']
    %18 = vsyncpa [#allocation3], 0
    %19 = vsyncpa [#allocation6], 0
    %20 = vsyncpa [#allocation9], 0
    %21 = vsyncpa [#allocation12], 0
    %22 = vsyncpa [#allocation15], 0
    %23 = vsyncpa [#allocation18], 0
    %24 = vsyncpa [#allocation4], 0
    %25 = vsyncpa [#allocation21], 0
    // Predicated region
    $region2: #{defect_classifier_forward.1} parent=1 // pred_check
      _
    $region3: #{defect_classifier_forward.1} parent=1 // pred_check_branch
      %27 = sbr.rel (0) target = $region5
    $region4: #{defect_classifier_forward.1} parent=1 // pred_region
      _
    $region5: #{defect_classifier_forward.1} parent=1 // pred_fallthru
      _
    // Predicated region
    $region6: #{defect_classifier_forward.1} parent=1 // pred_check
      _
    $region7: #{defect_classifier_forward.1} parent=1 // pred_check_branch
      %29 = sbr.rel (0) target = $region9
    $region8: #{defect_classifier_forward.1} parent=1 // pred_region
      %31 = vsyncadd [#allocation3], 0
      %s32 = sshll.u32 %s1, 4
      %s33 = int_to_ptr.hbm [resolvable:$true] %s32
      %s34 = sshll.u32 [#allocation2], 4
      %s35 = int_to_ptr.vmem [resolvable:$true] %s34
      %40 = dma.hbm_to_vmem [thread:$0]  %s33, 576, %s35, [#allocation3], 64, 64, 4
    $region9: #{defect_classifier_forward.1} parent=1 // pred_fallthru
      _
    // Predicated region
    $region10: #{defect_classifier_forward.1} parent=1 // pred_check
      _
    $region11: #{defect_classifier_forward.1} parent=1 // pred_check_branch
      %42 = sbr.rel (0) target = $region13
    $region12: #{defect_classifier_forward.1} parent=1 // pred_region
      %44 = vsyncadd [#allocation6], 0
      %s46 = sshll.u32 %s2, 4
      %s47 = int_to_ptr.hbm [resolvable:$true] %s46
      %s48 = sshll.u32 [#allocation5], 4
      %s49 = int_to_ptr.vmem [resolvable:$true] %s48
      %51 = dma.hbm_to_vmem [thread:$0]  %s47, 16, %s49, [#allocation6]
    $region13: #{defect_classifier_forward.1} parent=1 // pred_fallthru
      _
    // Predicated region
    $region14: #{defect_classifier_forward.1} parent=1 // pred_check
      _
    $region15: #{defect_classifier_forward.1} parent=1 // pred_check_branch
      %53 = sbr.rel (0) target = $region17
    $region16: #{defect_classifier_forward.1} parent=1 // pred_region
      %55 = vsyncadd [#allocation6], 0
      %s56 = sshll.u32 %s3, 4
      %s57 = int_to_ptr.hbm [resolvable:$true] %s56
      %s58 = sshll.u32 [#allocation7], 4
      %s59 = int_to_ptr.vmem [resolvable:$true] %s58
      %64 = dma.hbm_to_vmem [thread:$0]  %s57, 10240, %s59, [#allocation6], 640, 640, 40
    $region17: #{defect_classifier_forward.1} parent=1 // pred_fallthru
      _
    // Predicated region
    $region18: #{defect_classifier_forward.1} parent=1 // pred_check
      _
    $region19: #{defect_classifier_forward.1} parent=1 // pred_check_branch
      %66 = sbr.rel (0) target = $region21
    $region20: #{defect_classifier_forward.1} parent=1 // pred_region
      %68 = vsyncadd [#allocation9], 0
      %s70 = sshll.u32 %s4, 4
      %s71 = int_to_ptr.hbm [resolvable:$true] %s70
      %s72 = sshll.u32 [#allocation8], 4
      %s73 = int_to_ptr.vmem [resolvable:$true] %s72
      %75 = dma.hbm_to_vmem [thread:$0]  %s71, 160, %s73, [#allocation9]
    $region21: #{defect_classifier_forward.1} parent=1 // pred_fallthru
      _
    // Predicated region
    $region22: #{defect_classifier_forward.1} parent=1 // pred_check
      _
    $region23: #{defect_classifier_forward.1} parent=1 // pred_check_branch
      %77 = sbr.rel (0) target = $region25
    $region24: #{defect_classifier_forward.1} parent=1 // pred_region
      %79 = vsyncadd [#allocation9], 0
      %s80 = sshll.u32 %s5, 4
      %s81 = int_to_ptr.hbm [resolvable:$true] %s80
      %s82 = sshll.u32 [#allocation10], 4
      %s83 = int_to_ptr.vmem [resolvable:$true] %s82
      %88 = dma.hbm_to_vmem [thread:$0]  %s81, 40960, %s83, [#allocation9], 256, 256, 16
    $region25: #{defect_classifier_forward.1} parent=1 // pred_fallthru
      _
    // Predicated region
    $region26: #{defect_classifier_forward.1} parent=1 // pred_check
      _
    $region27: #{defect_classifier_forward.1} parent=1 // pred_check_branch
      %90 = sbr.rel (0) target = $region29
    $region28: #{defect_classifier_forward.1} parent=1 // pred_region
      %92 = vsyncadd [#allocation12], 0
      %s94 = sshll.u32 %s6, 4
      %s95 = int_to_ptr.hbm [resolvable:$true] %s94
      %s96 = sshll.u32 [#allocation11], 4
      %s97 = int_to_ptr.vmem [resolvable:$true] %s96
      %99 = dma.hbm_to_vmem [thread:$0]  %s95, 64, %s97, [#allocation12]
    $region29: #{defect_classifier_forward.1} parent=1 // pred_fallthru
      _
    // Predicated region
    $region30: #{defect_classifier_forward.1} parent=1 // pred_check
      _
    $region31: #{defect_classifier_forward.1} parent=1 // pred_check_branch
      %101 = sbr.rel (0) target = $region33
    $region32: #{defect_classifier_forward.1} parent=1 // pred_region
      %103 = vsyncadd [#allocation12], 0
      %s104 = sshll.u32 %s7, 4
      %s105 = int_to_ptr.hbm [resolvable:$true] %s104
      %s106 = sshll.u32 [#allocation13], 4
      %s107 = int_to_ptr.vmem [resolvable:$true] %s106
      %112 = dma.hbm_to_vmem [thread:$0]  %s105, 8192, %s107, [#allocation12], 128, 128, 8
    $region33: #{defect_classifier_forward.1} parent=1 // pred_fallthru
      _
    // Predicated region
    $region34: #{defect_classifier_forward.1} parent=1 // pred_check
      _
    $region35: #{defect_classifier_forward.1} parent=1 // pred_check_branch
      %114 = sbr.rel (0) target = $region37
    $region36: #{defect_classifier_forward.1} parent=1 // pred_region
      %116 = vsyncadd [#allocation15], 0
      %s118 = sshll.u32 %s8, 4
      %s119 = int_to_ptr.hbm [resolvable:$true] %s118
      %s120 = sshll.u32 [#allocation14], 4
      %s121 = int_to_ptr.vmem [resolvable:$true] %s120
      %123 = dma.hbm_to_vmem [thread:$0]  %s119, 32, %s121, [#allocation15]
    $region37: #{defect_classifier_forward.1} parent=1 // pred_fallthru
      _
    // Predicated region
    $region38: #{defect_classifier_forward.1} parent=1 // pred_check
      _
    $region39: #{defect_classifier_forward.1} parent=1 // pred_check_branch
      %125 = sbr.rel (0) target = $region41
    $region40: #{defect_classifier_forward.1} parent=1 // pred_region
      %127 = vsyncadd [#allocation15], 0
      %s128 = sshll.u32 %s9, 4
      %s129 = int_to_ptr.hbm [resolvable:$true] %s128
      %s130 = sshll.u32 [#allocation16], 4
      %s131 = int_to_ptr.vmem [resolvable:$true] %s130
      %136 = dma.hbm_to_vmem [thread:$0]  %s129, 2048, %s131, [#allocation15], 64, 64, 4
    $region41: #{defect_classifier_forward.1} parent=1 // pred_fallthru
      _
    // Predicated region
    $region42: #{defect_classifier_forward.1} parent=1 // pred_check
      _
    $region43: #{defect_classifier_forward.1} parent=1 // pred_check_branch
      %138 = sbr.rel (0) target = $region45
    $region44: #{defect_classifier_forward.1} parent=1 // pred_region
      %140 = vsyncadd [#allocation18], 0
      %s142 = sshll.u32 %s10, 4
      %s143 = int_to_ptr.hbm [resolvable:$true] %s142
      %s144 = sshll.u32 [#allocation17], 4
      %s145 = int_to_ptr.vmem [resolvable:$true] %s144
      %147 = dma.hbm_to_vmem [thread:$0]  %s143, 16, %s145, [#allocation18]
    $region45: #{defect_classifier_forward.1} parent=1 // pred_fallthru
      _
    // Predicated region
    $region46: #{defect_classifier_forward.1} parent=1 // pred_check
      _
    $region47: #{defect_classifier_forward.1} parent=1 // pred_check_branch
      %149 = sbr.rel (0) target = $region49
    $region48: #{defect_classifier_forward.1} parent=1 // pred_region
      %151 = dma.done [#allocation3], 576
    $region49: #{defect_classifier_forward.1} parent=1 // pred_fallthru
      _
    // Predicated region
    $region50: #{defect_classifier_forward.1} parent=1 // pred_check
      _
    $region51: #{defect_classifier_forward.1} parent=1 // pred_check_branch
      %153 = sbr.rel (0) target = $region53
    $region52: #{defect_classifier_forward.1} parent=1 // pred_region
      %155 = dma.done [#allocation6], 16
    $region53: #{defect_classifier_forward.1} parent=1 // pred_fallthru
      _
    // Predicated region
    $region54: #{defect_classifier_forward.1} parent=1 // pred_check
      _
    $region55: #{defect_classifier_forward.1} parent=1 // pred_check_branch
      %157 = sbr.rel (0) target = $region57
    $region56: #{defect_classifier_forward.1} parent=1 // pred_region
      %159 = dma.done [#allocation6], 10240
    $region57: #{defect_classifier_forward.1} parent=1 // pred_fallthru
      _
    // Predicated region
    $region58: #{defect_classifier_forward.1} parent=1 // pred_check
      _
    $region59: #{defect_classifier_forward.1} parent=1 // pred_check_branch
      %161 = sbr.rel (0) target = $region61
    $region60: #{defect_classifier_forward.1} parent=1 // pred_region
      %163 = dma.done [#allocation9], 160
    $region61: #{defect_classifier_forward.1} parent=1 // pred_fallthru
      _
    // Predicated region
    $region62: #{defect_classifier_forward.1} parent=1 // pred_check
      _
    $region63: #{defect_classifier_forward.1} parent=1 // pred_check_branch
      %165 = sbr.rel (0) target = $region65
    $region64: #{defect_classifier_forward.1} parent=1 // pred_region
      %167 = dma.done [#allocation9], 40960
    $region65: #{defect_classifier_forward.1} parent=1 // pred_fallthru
      _
    // Predicated region
    $region66: #{defect_classifier_forward.1} parent=1 // pred_check
      _
    $region67: #{defect_classifier_forward.1} parent=1 // pred_check_branch
      %169 = sbr.rel (0) target = $region69
    $region68: #{defect_classifier_forward.1} parent=1 // pred_region
      %171 = dma.done [#allocation12], 64
    $region69: #{defect_classifier_forward.1} parent=1 // pred_fallthru
      _
    // Predicated region
    $region70: #{defect_classifier_forward.1} parent=1 // pred_check
      _
    $region71: #{defect_classifier_forward.1} parent=1 // pred_check_branch
      %173 = sbr.rel (0) target = $region73
    $region72: #{defect_classifier_forward.1} parent=1 // pred_region
      %175 = dma.done [#allocation12], 8192
    $region73: #{defect_classifier_forward.1} parent=1 // pred_fallthru
      _
    // Predicated region
    $region74: #{defect_classifier_forward.1} parent=1 // pred_check
      _
    $region75: #{defect_classifier_forward.1} parent=1 // pred_check_branch
      %177 = sbr.rel (0) target = $region77
    $region76: #{defect_classifier_forward.1} parent=1 // pred_region
      %179 = dma.done [#allocation15], 32
    $region77: #{defect_classifier_forward.1} parent=1 // pred_fallthru
      _
    // Predicated region
    $region78: #{defect_classifier_forward.1} parent=1 // pred_check
      _
    $region79: #{defect_classifier_forward.1} parent=1 // pred_check_branch
      %181 = sbr.rel (0) target = $region81
    $region80: #{defect_classifier_forward.1} parent=1 // pred_region
      %183 = dma.done [#allocation15], 2048
    $region81: #{defect_classifier_forward.1} parent=1 // pred_fallthru
      _
    // Predicated region
    $region82: #{defect_classifier_forward.1} parent=1 // pred_check
      _
    $region83: #{defect_classifier_forward.1} parent=1 // pred_check_branch
      %185 = sbr.rel (0) target = $region85
    $region84: #{defect_classifier_forward.1} parent=1 // pred_region
      %187 = dma.done [#allocation18], 16
    $region85: #{defect_classifier_forward.1} parent=1 // pred_fallthru
      _
    %v188 = vld [vmem:[%s0] sm:$0xff]
    %v189 = vld [vmem:[%s0 + $0x8] sm:$0xff]
    %v190 = vld [vmem:[%s0 + $0x10] sm:$0x3]
    %v191 = vld [vmem:[%s0 + $0x18] sm:$0xff]
    %v192 = vld [vmem:[%s0 + $0x20] sm:$0xff]
    %v193 = vld [vmem:[%s0 + $0x28] sm:$0x3]
    %v194 = vld [vmem:[%s0 + $0x30] sm:$0xff]
    %v195 = vld [vmem:[%s0 + $0x38] sm:$0xff]
    %v196 = vld [vmem:[%s0 + $0x40] sm:$0x3]
    %v197 = vld [vmem:[%s0 + $0x48] sm:$0xff]
    %v198 = vld [vmem:[%s0 + $0x50] sm:$0xff]
    %v199 = vld [vmem:[%s0 + $0x58] sm:$0x3]
    %v200 = vld [vmem:[%s0 + $0x60] sm:$0xff]
    %v201 = vld [vmem:[%s0 + $0x68] sm:$0xff]
    %v202 = vld [vmem:[%s0 + $0x70] sm:$0x3]
    %v203 = vld [vmem:[%s0 + $0x78] sm:$0xff]
    %v204 = vld [vmem:[%s0 + $0x80] sm:$0xff]
    %v205 = vld [vmem:[%s0 + $0x88] sm:$0x3]
    %v206 = vld [vmem:[%s0 + $0x90] sm:$0xff]
    %v207 = vld [vmem:[%s0 + $0x98] sm:$0xff]
    %v208 = vld [vmem:[%s0 + $0xa0] sm:$0x3]
    %v209 = vld [vmem:[%s0 + $0xa8] sm:$0xff]
    %v210 = vld [vmem:[%s0 + $0xb0] sm:$0xff]
    %v211 = vld [vmem:[%s0 + $0xb8] sm:$0x3]
    %v212 = vld [vmem:[%s0 + $0xc0] sm:$0xff]
    %v213 = vld [vmem:[%s0 + $0xc8] sm:$0xff]
    %v214 = vld [vmem:[%s0 + $0xd0] sm:$0x3]
    %v215 = vld [vmem:[%s0 + $0xd8] sm:$0xff]
    %v216 = vld [vmem:[%s0 + $0xe0] sm:$0xff]
    %v217 = vld [vmem:[%s0 + $0xe8] sm:$0x3]
    %v218 = vld [vmem:[%s0 + $0xf0] sm:$0xff]
    %v219 = vld [vmem:[%s0 + $0xf8] sm:$0xff]
    %v220 = vld [vmem:[%s0 + $0x100] sm:$0x3]
    %v221 = vld [vmem:[%s0 + $0x108] sm:$0xff]
    %v222 = vld [vmem:[%s0 + $0x110] sm:$0xff]
    %v223 = vld [vmem:[%s0 + $0x118] sm:$0x3]
    %v224 = vld [vmem:[%s0 + $0x120] sm:$0xff]
    %v225 = vld [vmem:[%s0 + $0x128] sm:$0xff]
    %v226 = vld [vmem:[%s0 + $0x130] sm:$0x3]
    %v227 = vld [vmem:[%s0 + $0x138] sm:$0xff]
    %v228 = vld [vmem:[%s0 + $0x140] sm:$0xff]
    %v229 = vld [vmem:[%s0 + $0x148] sm:$0x3]
    %v230 = vld [vmem:[%s0 + $0x150] sm:$0xff]
    %v231 = vld [vmem:[%s0 + $0x158] sm:$0xff]
    %v232 = vld [vmem:[%s0 + $0x160] sm:$0x3]
    %v233 = vld [vmem:[%s0 + $0x168] sm:$0xff]
    %v234 = vld [vmem:[%s0 + $0x170] sm:$0xff]
    %v235 = vld [vmem:[%s0 + $0x178] sm:$0x3]
    %v236 = vld [vmem:[%s0 + $0x180] sm:$0xff]
    %v237 = vld [vmem:[%s0 + $0x188] sm:$0xff]
    %v238 = vld [vmem:[%s0 + $0x190] sm:$0x3]
    %v239 = vld [vmem:[%s0 + $0x198] sm:$0xff]
    %v240 = vld [vmem:[%s0 + $0x1a0] sm:$0xff]
    %v241 = vld [vmem:[%s0 + $0x1a8] sm:$0x3]
    %v242 = vld [vmem:[%s0 + $0x1b0] sm:$0xff]
    %v243 = vld [vmem:[%s0 + $0x1b8] sm:$0xff]
    %v244 = vld [vmem:[%s0 + $0x1c0] sm:$0x3]
    %v245 = vld [vmem:[%s0 + $0x1c8] sm:$0xff]
    %v246 = vld [vmem:[%s0 + $0x1d0] sm:$0xff]
    %v247 = vld [vmem:[%s0 + $0x1d8] sm:$0x3]
    %v248 = vld [vmem:[%s0 + $0x1e0] sm:$0xff]
    %v249 = vld [vmem:[%s0 + $0x1e8] sm:$0xff]
    %v250 = vld [vmem:[%s0 + $0x1f0] sm:$0x3]
    %v251 = vld [vmem:[%s0 + $0x1f8] sm:$0xff]
    %v252 = vld [vmem:[%s0 + $0x200] sm:$0xff]
    %v253 = vld [vmem:[%s0 + $0x208] sm:$0x3]
    %v254 = vld [vmem:[%s0 + $0x210] sm:$0xff]
    %v255 = vld [vmem:[%s0 + $0x218] sm:$0xff]
    %v256 = vld [vmem:[%s0 + $0x220] sm:$0x3]
    %v257 = vld [vmem:[%s0 + $0x228] sm:$0xff]
    %v258 = vld [vmem:[%s0 + $0x230] sm:$0xff]
    %v259 = vld [vmem:[%s0 + $0x238] sm:$0x3]
    %v260 = vld [vmem:[%s0 + $0x240] sm:$0xff]
    %v261 = vld [vmem:[%s0 + $0x248] sm:$0xff]
    %v262 = vld [vmem:[%s0 + $0x250] sm:$0x3]
    %v263 = vld [vmem:[%s0 + $0x258] sm:$0xff]
    %v264 = vld [vmem:[%s0 + $0x260] sm:$0xff]
    %v265 = vld [vmem:[%s0 + $0x268] sm:$0x3]
    %v266 = vld [vmem:[%s0 + $0x270] sm:$0xff]
    %v267 = vld [vmem:[%s0 + $0x278] sm:$0xff]
    %v268 = vld [vmem:[%s0 + $0x280] sm:$0x3]
    %v269 = vld [vmem:[%s0 + $0x288] sm:$0xff]
    %v270 = vld [vmem:[%s0 + $0x290] sm:$0xff]
    %v271 = vld [vmem:[%s0 + $0x298] sm:$0x3]
    %v272 = vld [vmem:[%s0 + $0x2a0] sm:$0xff]
    %v273 = vld [vmem:[%s0 + $0x2a8] sm:$0xff]
    %v274 = vld [vmem:[%s0 + $0x2b0] sm:$0x3]
    %v275 = vld [vmem:[%s0 + $0x2b8] sm:$0xff]
    %v276 = vld [vmem:[%s0 + $0x2c0] sm:$0xff]
    %v277 = vld [vmem:[%s0 + $0x2c8] sm:$0x3]
    %v278 = vld [vmem:[%s0 + $0x2d0] sm:$0xff]
    %v279 = vld [vmem:[%s0 + $0x2d8] sm:$0xff]
    %v280 = vld [vmem:[%s0 + $0x2e0] sm:$0x3]
    %v281 = vld [vmem:[%s0 + $0x2e8] sm:$0xff]
    %v282 = vld [vmem:[%s0 + $0x2f0] sm:$0xff]
    %v283 = vld [vmem:[%s0 + $0x2f8] sm:$0x3]
    %v284 = vld [vmem:[%s0 + $0x300] sm:$0xff]
    %v285 = vld [vmem:[%s0 + $0x308] sm:$0xff]
    %v286 = vld [vmem:[%s0 + $0x310] sm:$0x3]
    %v287 = vld [vmem:[%s0 + $0x318] sm:$0xff]
    %v288 = vld [vmem:[%s0 + $0x320] sm:$0xff]
    %v289 = vld [vmem:[%s0 + $0x328] sm:$0x3]
    %v290 = vld [vmem:[%s0 + $0x330] sm:$0xff]
    %v291 = vld [vmem:[%s0 + $0x338] sm:$0xff]
    %v292 = vld [vmem:[%s0 + $0x340] sm:$0x3]
    %v293 = vld [vmem:[%s0 + $0x348] sm:$0xff]
    %v294 = vld [vmem:[%s0 + $0x350] sm:$0xff]
    %v295 = vld [vmem:[%s0 + $0x358] sm:$0x3]
    %v296 = vld [vmem:[#allocation2] sm:$0x7]
    %v297 = vld [vmem:[#allocation2 + $0x4] sm:$0x7]
    %v298 = vld [vmem:[#allocation2 + $0x8] sm:$0x7]
    %v299 = vld [vmem:[#allocation2 + $0xc] sm:$0x7]
    %v300 = vld [vmem:[#allocation2 + $0x10] sm:$0x7]
    %v301 = vld [vmem:[#allocation2 + $0x14] sm:$0x7]
    %v302 = vld [vmem:[#allocation2 + $0x18] sm:$0x7]
    %v303 = vld [vmem:[#allocation2 + $0x1c] sm:$0x7]
    %v304 = vld [vmem:[#allocation2 + $0x20] sm:$0x7]
    %vm401 = vcmask 1046528
    %v402 = vrot.slane %v188, 1
    %v403 = vrot.slane %v189, 1
    %v404 = vsel %vm401, %v402, %v403
    %v405 = vrot.slane %v190, 1
    %v406 = vsel %vm401, %v403, %v405
    %v407 = vrot.slane %v191, 1
    %v408 = vrot.slane %v192, 1
    %v409 = vsel %vm401, %v407, %v408
    %v410 = vrot.slane %v193, 1
    %v411 = vsel %vm401, %v408, %v410
    %v412 = vrot.slane %v194, 1
    %v413 = vrot.slane %v195, 1
    %v414 = vsel %vm401, %v412, %v413
    %v415 = vrot.slane %v196, 1
    %v416 = vsel %vm401, %v413, %v415
    %v417 = vrot.slane %v197, 1
    %v418 = vrot.slane %v198, 1
    %v419 = vsel %vm401, %v417, %v418
    %v420 = vrot.slane %v199, 1
    %v421 = vsel %vm401, %v418, %v420
    %v422 = vrot.slane %v200, 1
    %v423 = vrot.slane %v201, 1
    %v424 = vsel %vm401, %v422, %v423
    %v425 = vrot.slane %v202, 1
    %v426 = vsel %vm401, %v423, %v425
    %v427 = vrot.slane %v203, 1
    %v428 = vrot.slane %v204, 1
    %v429 = vsel %vm401, %v427, %v428
    %v430 = vrot.slane %v205, 1
    %v431 = vsel %vm401, %v428, %v430
    %v432 = vrot.slane %v206, 1
    %v433 = vrot.slane %v207, 1
    %v434 = vsel %vm401, %v432, %v433
    %v435 = vrot.slane %v208, 1
    %v436 = vsel %vm401, %v433, %v435
    %v437 = vrot.slane %v209, 1
    %v438 = vrot.slane %v210, 1
    %v439 = vsel %vm401, %v437, %v438
    %v440 = vrot.slane %v211, 1
    %v441 = vsel %vm401, %v438, %v440
    %v442 = vrot.slane %v212, 1
    %v443 = vrot.slane %v213, 1
    %v444 = vsel %vm401, %v442, %v443
    %v445 = vrot.slane %v214, 1
    %v446 = vsel %vm401, %v443, %v445
    %v447 = vrot.slane %v215, 1
    %v448 = vrot.slane %v216, 1
    %v449 = vsel %vm401, %v447, %v448
    %v450 = vrot.slane %v217, 1
    %v451 = vsel %vm401, %v448, %v450
    %v452 = vrot.slane %v218, 1
    %v453 = vrot.slane %v219, 1
    %v454 = vsel %vm401, %v452, %v453
    %v455 = vrot.slane %v220, 1
    %v456 = vsel %vm401, %v453, %v455
    %v457 = vrot.slane %v221, 1
    %v458 = vrot.slane %v222, 1
    %v459 = vsel %vm401, %v457, %v458
    %v460 = vrot.slane %v223, 1
    %v461 = vsel %vm401, %v458, %v460
    %v462 = vrot.slane %v224, 1
    %v463 = vrot.slane %v225, 1
    %v464 = vsel %vm401, %v462, %v463
    %v465 = vrot.slane %v226, 1
    %v466 = vsel %vm401, %v463, %v465
    %v467 = vrot.slane %v227, 1
    %v468 = vrot.slane %v228, 1
    %v469 = vsel %vm401, %v467, %v468
    %v470 = vrot.slane %v229, 1
    %v471 = vsel %vm401, %v468, %v470
    %v472 = vrot.slane %v230, 1
    %v473 = vrot.slane %v231, 1
    %v474 = vsel %vm401, %v472, %v473
    %v475 = vrot.slane %v232, 1
    %v476 = vsel %vm401, %v473, %v475
    %v477 = vrot.slane %v233, 1
    %v478 = vrot.slane %v234, 1
    %v479 = vsel %vm401, %v477, %v478
    %v480 = vrot.slane %v235, 1
    %v481 = vsel %vm401, %v478, %v480
    %v482 = vrot.slane %v242, 1
    %v483 = vrot.slane %v243, 1
    %v484 = vsel %vm401, %v482, %v483
    %v485 = vrot.slane %v244, 1
    %v486 = vsel %vm401, %v483, %v485
    %v487 = vrot.slane %v245, 1
    %v488 = vrot.slane %v246, 1
    %v489 = vsel %vm401, %v487, %v488
    %v490 = vrot.slane %v247, 1
    %v491 = vsel %vm401, %v488, %v490
    %v492 = vrot.slane %v248, 1
    %v493 = vrot.slane %v249, 1
    %v494 = vsel %vm401, %v492, %v493
    %v495 = vrot.slane %v250, 1
    %v496 = vsel %vm401, %v493, %v495
    %v497 = vrot.slane %v251, 1
    %v498 = vrot.slane %v252, 1
    %v499 = vsel %vm401, %v497, %v498
    %v500 = vrot.slane %v253, 1
    %v501 = vsel %vm401, %v498, %v500
    %v502 = vrot.slane %v254, 1
    %v503 = vrot.slane %v255, 1
    %v504 = vsel %vm401, %v502, %v503
    %v505 = vrot.slane %v256, 1
    %v506 = vsel %vm401, %v503, %v505
    %v507 = vrot.slane %v257, 1
    %v508 = vrot.slane %v258, 1
    %v509 = vsel %vm401, %v507, %v508
    %v510 = vrot.slane %v259, 1
    %v511 = vsel %vm401, %v508, %v510
    %v512 = vrot.slane %v260, 1
    %v513 = vrot.slane %v261, 1
    %v514 = vsel %vm401, %v512, %v513
    %v515 = vrot.slane %v262, 1
    %v516 = vsel %vm401, %v513, %v515
    %v517 = vrot.slane %v263, 1
    %v518 = vrot.slane %v264, 1
    %v519 = vsel %vm401, %v517, %v518
    %v520 = vrot.slane %v265, 1
    %v521 = vsel %vm401, %v518, %v520
    %v522 = vrot.slane %v266, 1
    %v523 = vrot.slane %v267, 1
    %v524 = vsel %vm401, %v522, %v523
    %v525 = vrot.slane %v268, 1
    %v526 = vsel %vm401, %v523, %v525
    %v527 = vrot.slane %v269, 1
    %v528 = vrot.slane %v270, 1
    %v529 = vsel %vm401, %v527, %v528
    %v530 = vrot.slane %v271, 1
    %v531 = vsel %vm401, %v528, %v530
    %v532 = vrot.slane %v272, 1
    %v533 = vrot.slane %v273, 1
    %v534 = vsel %vm401, %v532, %v533
    %v535 = vrot.slane %v274, 1
    %v536 = vsel %vm401, %v533, %v535
    %v537 = vrot.slane %v275, 1
    %v538 = vrot.slane %v276, 1
    %v539 = vsel %vm401, %v537, %v538
    %v540 = vrot.slane %v277, 1
    %v541 = vsel %vm401, %v538, %v540
    %v542 = vrot.slane %v278, 1
    %v543 = vrot.slane %v279, 1
    %v544 = vsel %vm401, %v542, %v543
    %v545 = vrot.slane %v280, 1
    %v546 = vsel %vm401, %v543, %v545
    %v547 = vrot.slane %v281, 1
    %v548 = vrot.slane %v282, 1
    %v549 = vsel %vm401, %v547, %v548
    %v550 = vrot.slane %v283, 1
    %v551 = vsel %vm401, %v548, %v550
    %v552 = vrot.slane %v284, 1
    %v553 = vrot.slane %v285, 1
    %v554 = vsel %vm401, %v552, %v553
    %v555 = vrot.slane %v286, 1
    %v556 = vsel %vm401, %v553, %v555
    %v557 = vrot.slane %v287, 1
    %v558 = vrot.slane %v288, 1
    %v559 = vsel %vm401, %v557, %v558
    %v560 = vrot.slane %v289, 1
    %v561 = vsel %vm401, %v558, %v560
    %vm562 = vcmask 23552
    %v563 = vsel %vm562, %v404, 0
    %v565 = vsel %vm562, %v406, 0
    %v567 = vsel %vm562, %v409, 0
    %v569 = vsel %vm562, %v411, 0
    %v571 = vsel %vm562, %v414, 0
    %v573 = vsel %vm562, %v416, 0
    %v575 = vsel %vm562, %v419, 0
    %v577 = vsel %vm562, %v421, 0
    %v579 = vsel %vm562, %v424, 0
    %v581 = vsel %vm562, %v426, 0
    %v583 = vsel %vm562, %v429, 0
    %v585 = vsel %vm562, %v431, 0
    %v587 = vsel %vm562, %v434, 0
    %v589 = vsel %vm562, %v436, 0
    %v591 = vsel %vm562, %v439, 0
    %v593 = vsel %vm562, %v441, 0
    %v595 = vsel %vm562, %v444, 0
    %v597 = vsel %vm562, %v446, 0
    %v599 = vsel %vm562, %v449, 0
    %v601 = vsel %vm562, %v451, 0
    %v603 = vsel %vm562, %v454, 0
    %v605 = vsel %vm562, %v456, 0
    %v607 = vsel %vm562, %v459, 0
    %v609 = vsel %vm562, %v461, 0
    %v611 = vsel %vm562, %v464, 0
    %v613 = vsel %vm562, %v466, 0
    %v615 = vsel %vm562, %v469, 0
    %v617 = vsel %vm562, %v471, 0
    %v619 = vsel %vm562, %v474, 0
    %v621 = vsel %vm562, %v476, 0
    %v623 = vsel %vm562, %v479, 0
    %v625 = vsel %vm562, %v481, 0
    %v627 = vsel %vm562, %v484, 0
    %v629 = vsel %vm562, %v486, 0
    %v631 = vsel %vm562, %v489, 0
    %v633 = vsel %vm562, %v491, 0
    %v635 = vsel %vm562, %v494, 0
    %v637 = vsel %vm562, %v496, 0
    %v639 = vsel %vm562, %v499, 0
    %v641 = vsel %vm562, %v501, 0
    %v643 = vsel %vm562, %v504, 0
    %v645 = vsel %vm562, %v506, 0
    %v647 = vsel %vm562, %v509, 0
    %v649 = vsel %vm562, %v511, 0
    %v651 = vsel %vm562, %v514, 0
    %v653 = vsel %vm562, %v516, 0
    %v655 = vsel %vm562, %v519, 0
    %v657 = vsel %vm562, %v521, 0
    %v659 = vsel %vm562, %v524, 0
    %v661 = vsel %vm562, %v526, 0
    %v663 = vsel %vm562, %v529, 0
    %v665 = vsel %vm562, %v531, 0
    %v667 = vsel %vm562, %v534, 0
    %v669 = vsel %vm562, %v536, 0
    %v671 = vsel %vm562, %v539, 0
    %v673 = vsel %vm562, %v541, 0
    %v675 = vsel %vm562, %v544, 0
    %v677 = vsel %vm562, %v546, 0
    %v679 = vsel %vm562, %v549, 0
    %v681 = vsel %vm562, %v551, 0
    %v683 = vsel %vm562, %v554, 0
    %v685 = vsel %vm562, %v556, 0
    %v687 = vsel %vm562, %v559, 0
    %v689 = vsel %vm562, %v561, 0
    %vm691 = vcmask 1042432
    %v693 = vsel %vm691, %v297, 0
    %695 = vmatpush.msra.mxu0 0.0
    %696 = vmatpush.msra.mxu0 0.0
    %697 = vmatpush.msra.mxu0 0.0
    %698 = vmatpush.msra.mxu0 0.0
    %699 = vmatpush.msra.mxu0 0.0
    %700 = vmatpush.msra.mxu0 0.0
    %701 = vmatpush.msra.mxu0 0.0
    %702 = vmatpush.msra.mxu0 0.0
    %703 = vmatpush.msra.mxu0 0.0
    %704 = vmatpush.msra.mxu0 0.0
    %705 = vmatpush.msra.mxu0 0.0
    %706 = vmatpush.msra.mxu0 0.0
    %707 = vmatpush.msra.mxu0 0.0
    %708 = vmatpush.msra.mxu0 0.0
    %709 = vmatpush.msra.mxu0 0.0
    %710 = vmatpush.msra.mxu0 %v693
    %711 = vmatmul.f32.gmra.mxu0 %v563
    %v712 = vpop.f32.mrf.mxu0
    %v713 = vadd.f32 0.0, %v712
    %714 = vmatmul.f32.gmra.mxu0 %v565
    %v715 = vpop.f32.mrf.mxu0
    %v716 = vadd.f32 0.0, %v715
    %717 = vmatmul.f32.gmra.mxu0 %v567
    %v718 = vpop.f32.mrf.mxu0
    %v719 = vadd.f32 0.0, %v718
    %720 = vmatmul.f32.gmra.mxu0 %v569
    %v721 = vpop.f32.mrf.mxu0
    %v722 = vadd.f32 0.0, %v721
    %723 = vmatmul.f32.gmra.mxu0 %v571
    %v724 = vpop.f32.mrf.mxu0
    %v725 = vadd.f32 0.0, %v724
    %726 = vmatmul.f32.gmra.mxu0 %v573
    %v727 = vpop.f32.mrf.mxu0
    %v728 = vadd.f32 0.0, %v727
    %729 = vmatmul.f32.gmra.mxu0 %v575
    %v730 = vpop.f32.mrf.mxu0
    %v731 = vadd.f32 0.0, %v730
    %732 = vmatmul.f32.gmra.mxu0 %v577
    %v733 = vpop.f32.mrf.mxu0
    %v734 = vadd.f32 0.0, %v733
    %735 = vmatmul.f32.gmra.mxu0 %v579
    %v736 = vpop.f32.mrf.mxu0
    %v737 = vadd.f32 0.0, %v736
    %738 = vmatmul.f32.gmra.mxu0 %v581
    %v739 = vpop.f32.mrf.mxu0
    %v740 = vadd.f32 0.0, %v739
    %741 = vmatmul.f32.gmra.mxu0 %v583
    %v742 = vpop.f32.mrf.mxu0
    %v743 = vadd.f32 0.0, %v742
    %744 = vmatmul.f32.gmra.mxu0 %v585
    %v745 = vpop.f32.mrf.mxu0
    %v746 = vadd.f32 0.0, %v745
    %747 = vmatmul.f32.gmra.mxu0 %v587
    %v748 = vpop.f32.mrf.mxu0
    %v749 = vadd.f32 0.0, %v748
    %750 = vmatmul.f32.gmra.mxu0 %v589
    %v751 = vpop.f32.mrf.mxu0
    %v752 = vadd.f32 0.0, %v751
    %753 = vmatmul.f32.gmra.mxu0 %v591
    %v754 = vpop.f32.mrf.mxu0
    %v755 = vadd.f32 0.0, %v754
    %756 = vmatmul.f32.gmra.mxu0 %v593
    %v757 = vpop.f32.mrf.mxu0
    %v758 = vadd.f32 0.0, %v757
    %759 = vmatmul.f32.gmra.mxu0 %v595
    %v760 = vpop.f32.mrf.mxu0
    %v761 = vadd.f32 0.0, %v760
    %762 = vmatmul.f32.gmra.mxu0 %v597
    %v763 = vpop.f32.mrf.mxu0
    %v764 = vadd.f32 0.0, %v763
    %765 = vmatmul.f32.gmra.mxu0 %v599
    %v766 = vpop.f32.mrf.mxu0
    %v767 = vadd.f32 0.0, %v766
    %768 = vmatmul.f32.gmra.mxu0 %v601
    %v769 = vpop.f32.mrf.mxu0
    %v770 = vadd.f32 0.0, %v769
    %771 = vmatmul.f32.gmra.mxu0 %v603
    %v772 = vpop.f32.mrf.mxu0
    %v773 = vadd.f32 0.0, %v772
    %774 = vmatmul.f32.gmra.mxu0 %v605
    %v775 = vpop.f32.mrf.mxu0
    %v776 = vadd.f32 0.0, %v775
    %777 = vmatmul.f32.gmra.mxu0 %v607
    %v778 = vpop.f32.mrf.mxu0
    %v779 = vadd.f32 0.0, %v778
    %780 = vmatmul.f32.gmra.mxu0 %v609
    %v781 = vpop.f32.mrf.mxu0
    %v782 = vadd.f32 0.0, %v781
    %783 = vmatmul.f32.gmra.mxu0 %v611
    %v784 = vpop.f32.mrf.mxu0
    %v785 = vadd.f32 0.0, %v784
    %786 = vmatmul.f32.gmra.mxu0 %v613
    %v787 = vpop.f32.mrf.mxu0
    %v788 = vadd.f32 0.0, %v787
    %789 = vmatmul.f32.gmra.mxu0 %v615
    %v790 = vpop.f32.mrf.mxu0
    %v791 = vadd.f32 0.0, %v790
    %792 = vmatmul.f32.gmra.mxu0 %v617
    %v793 = vpop.f32.mrf.mxu0
    %v794 = vadd.f32 0.0, %v793
    %795 = vmatmul.f32.gmra.mxu0 %v619
    %v796 = vpop.f32.mrf.mxu0
    %v797 = vadd.f32 0.0, %v796
    %798 = vmatmul.f32.gmra.mxu0 %v621
    %v799 = vpop.f32.mrf.mxu0
    %v800 = vadd.f32 0.0, %v799
    %801 = vmatmul.f32.gmra.mxu0 %v623
    %v802 = vpop.f32.mrf.mxu0
    %v803 = vadd.f32 0.0, %v802
    %804 = vmatmul.f32.gmra.mxu0 %v625
    %v805 = vpop.f32.mrf.mxu0
    %v806 = vadd.f32 0.0, %v805
    %807 = vmatmul.f32.gmra.mxu0 %v627
    %v808 = vpop.f32.mrf.mxu0
    %v809 = vadd.f32 0.0, %v808
    %810 = vmatmul.f32.gmra.mxu0 %v629
    %v811 = vpop.f32.mrf.mxu0
    %v812 = vadd.f32 0.0, %v811
    %813 = vmatmul.f32.gmra.mxu0 %v631
    %v814 = vpop.f32.mrf.mxu0
    %v815 = vadd.f32 0.0, %v814
    %816 = vmatmul.f32.gmra.mxu0 %v633
    %v817 = vpop.f32.mrf.mxu0
    %v818 = vadd.f32 0.0, %v817
    %819 = vmatmul.f32.gmra.mxu0 %v635
    %v820 = vpop.f32.mrf.mxu0
    %v821 = vadd.f32 0.0, %v820
    %822 = vmatmul.f32.gmra.mxu0 %v637
    %v823 = vpop.f32.mrf.mxu0
    %v824 = vadd.f32 0.0, %v823
    %825 = vmatmul.f32.gmra.mxu0 %v639
    %v826 = vpop.f32.mrf.mxu0
    %v827 = vadd.f32 0.0, %v826
    %828 = vmatmul.f32.gmra.mxu0 %v641
    %v829 = vpop.f32.mrf.mxu0
    %v830 = vadd.f32 0.0, %v829
    %831 = vmatmul.f32.gmra.mxu0 %v643
    %v832 = vpop.f32.mrf.mxu0
    %v833 = vadd.f32 0.0, %v832
    %834 = vmatmul.f32.gmra.mxu0 %v645
    %v835 = vpop.f32.mrf.mxu0
    %v836 = vadd.f32 0.0, %v835
    %837 = vmatmul.f32.gmra.mxu0 %v647
    %v838 = vpop.f32.mrf.mxu0
    %v839 = vadd.f32 0.0, %v838
    %840 = vmatmul.f32.gmra.mxu0 %v649
    %v841 = vpop.f32.mrf.mxu0
    %v842 = vadd.f32 0.0, %v841
    %843 = vmatmul.f32.gmra.mxu0 %v651
    %v844 = vpop.f32.mrf.mxu0
    %v845 = vadd.f32 0.0, %v844
    %846 = vmatmul.f32.gmra.mxu0 %v653
    %v847 = vpop.f32.mrf.mxu0
    %v848 = vadd.f32 0.0, %v847
    %849 = vmatmul.f32.gmra.mxu0 %v655
    %v850 = vpop.f32.mrf.mxu0
    %v851 = vadd.f32 0.0, %v850
    %852 = vmatmul.f32.gmra.mxu0 %v657
    %v853 = vpop.f32.mrf.mxu0
    %v854 = vadd.f32 0.0, %v853
    %855 = vmatmul.f32.gmra.mxu0 %v659
    %v856 = vpop.f32.mrf.mxu0
    %v857 = vadd.f32 0.0, %v856
    %858 = vmatmul.f32.gmra.mxu0 %v661
    %v859 = vpop.f32.mrf.mxu0
    %v860 = vadd.f32 0.0, %v859
    %861 = vmatmul.f32.gmra.mxu0 %v663
    %v862 = vpop.f32.mrf.mxu0
    %v863 = vadd.f32 0.0, %v862
    %864 = vmatmul.f32.gmra.mxu0 %v665
    %v865 = vpop.f32.mrf.mxu0
    %v866 = vadd.f32 0.0, %v865
    %867 = vmatmul.f32.gmra.mxu0 %v667
    %v868 = vpop.f32.mrf.mxu0
    %v869 = vadd.f32 0.0, %v868
    %870 = vmatmul.f32.gmra.mxu0 %v669
    %v871 = vpop.f32.mrf.mxu0
    %v872 = vadd.f32 0.0, %v871
    %873 = vmatmul.f32.gmra.mxu0 %v671
    %v874 = vpop.f32.mrf.mxu0
    %v875 = vadd.f32 0.0, %v874
    %876 = vmatmul.f32.gmra.mxu0 %v673
    %v877 = vpop.f32.mrf.mxu0
    %v878 = vadd.f32 0.0, %v877
    %879 = vmatmul.f32.gmra.mxu0 %v675
    %v880 = vpop.f32.mrf.mxu0
    %v881 = vadd.f32 0.0, %v880
    %882 = vmatmul.f32.gmra.mxu0 %v677
    %v883 = vpop.f32.mrf.mxu0
    %v884 = vadd.f32 0.0, %v883
    %885 = vmatmul.f32.gmra.mxu0 %v679
    %v886 = vpop.f32.mrf.mxu0
    %v887 = vadd.f32 0.0, %v886
    %888 = vmatmul.f32.gmra.mxu0 %v681
    %v889 = vpop.f32.mrf.mxu0
    %v890 = vadd.f32 0.0, %v889
    %891 = vmatmul.f32.gmra.mxu0 %v683
    %v892 = vpop.f32.mrf.mxu0
    %v893 = vadd.f32 0.0, %v892
    %894 = vmatmul.f32.gmra.mxu0 %v685
    %v895 = vpop.f32.mrf.mxu0
    %v896 = vadd.f32 0.0, %v895
    %897 = vmatmul.f32.gmra.mxu0 %v687
    %v898 = vpop.f32.mrf.mxu0
    %v899 = vadd.f32 0.0, %v898
    %900 = vmatmul.f32.gmra.mxu0 %v689
    %v901 = vpop.f32.mrf.mxu0
    %v902 = vadd.f32 0.0, %v901
    %903 = vdwg.mxu0
    %v904 = vsel %vm562, %v188, 0
    %v906 = vsel %vm562, %v189, 0
    %v908 = vsel %vm562, %v191, 0
    %v910 = vsel %vm562, %v192, 0
    %v912 = vsel %vm562, %v194, 0
    %v914 = vsel %vm562, %v195, 0
    %v916 = vsel %vm562, %v197, 0
    %v918 = vsel %vm562, %v198, 0
    %v920 = vsel %vm562, %v200, 0
    %v922 = vsel %vm562, %v201, 0
    %v924 = vsel %vm562, %v203, 0
    %v926 = vsel %vm562, %v204, 0
    %v928 = vsel %vm562, %v206, 0
    %v930 = vsel %vm562, %v207, 0
    %v932 = vsel %vm562, %v209, 0
    %v934 = vsel %vm562, %v210, 0
    %v936 = vsel %vm562, %v212, 0
    %v938 = vsel %vm562, %v213, 0
    %v940 = vsel %vm562, %v215, 0
    %v942 = vsel %vm562, %v216, 0
    %v944 = vsel %vm562, %v218, 0
    %v946 = vsel %vm562, %v219, 0
    %v948 = vsel %vm562, %v221, 0
    %v950 = vsel %vm562, %v222, 0
    %v952 = vsel %vm562, %v224, 0
    %v954 = vsel %vm562, %v225, 0
    %v956 = vsel %vm562, %v227, 0
    %v958 = vsel %vm562, %v228, 0
    %v960 = vsel %vm562, %v230, 0
    %v962 = vsel %vm562, %v231, 0
    %v964 = vsel %vm562, %v233, 0
    %v966 = vsel %vm562, %v234, 0
    %v968 = vsel %vm562, %v242, 0
    %v970 = vsel %vm562, %v243, 0
    %v972 = vsel %vm562, %v245, 0
    %v974 = vsel %vm562, %v246, 0
    %v976 = vsel %vm562, %v248, 0
    %v978 = vsel %vm562, %v249, 0
    %v980 = vsel %vm562, %v251, 0
    %v982 = vsel %vm562, %v252, 0
    %v984 = vsel %vm562, %v254, 0
    %v986 = vsel %vm562, %v255, 0
    %v988 = vsel %vm562, %v257, 0
    %v990 = vsel %vm562, %v258, 0
    %v992 = vsel %vm562, %v260, 0
    %v994 = vsel %vm562, %v261, 0
    %v996 = vsel %vm562, %v263, 0
    %v998 = vsel %vm562, %v264, 0
    %v1000 = vsel %vm562, %v266, 0
    %v1002 = vsel %vm562, %v267, 0
    %v1004 = vsel %vm562, %v269, 0
    %v1006 = vsel %vm562, %v270, 0
    %v1008 = vsel %vm562, %v272, 0
    %v1010 = vsel %vm562, %v273, 0
    %v1012 = vsel %vm562, %v275, 0
    %v1014 = vsel %vm562, %v276, 0
    %v1016 = vsel %vm562, %v278, 0
    %v1018 = vsel %vm562, %v279, 0
    %v1020 = vsel %vm562, %v281, 0
    %v1022 = vsel %vm562, %v282, 0
    %v1024 = vsel %vm562, %v284, 0
    %v1026 = vsel %vm562, %v285, 0
    %v1028 = vsel %vm562, %v287, 0
    %v1030 = vsel %vm562, %v288, 0
    %v1033 = vsel %vm691, %v296, 0
    %1035 = vmatpush.msra.mxu0 0.0
    %1036 = vmatpush.msra.mxu0 0.0
    %1037 = vmatpush.msra.mxu0 0.0
    %1038 = vmatpush.msra.mxu0 0.0
    %1039 = vmatpush.msra.mxu0 0.0
    %1040 = vmatpush.msra.mxu0 0.0
    %1041 = vmatpush.msra.mxu0 0.0
    %1042 = vmatpush.msra.mxu0 0.0
    %1043 = vmatpush.msra.mxu0 0.0
    %1044 = vmatpush.msra.mxu0 0.0
    %1045 = vmatpush.msra.mxu0 0.0
    %1046 = vmatpush.msra.mxu0 0.0
    %1047 = vmatpush.msra.mxu0 0.0
    %1048 = vmatpush.msra.mxu0 0.0
    %1049 = vmatpush.msra.mxu0 0.0
    %1050 = vmatpush.msra.mxu0 %v1033
    %1051 = vmatmul.f32.gmra.mxu0 %v904
    %v1052 = vpop.f32.mrf.mxu0
    %v1053 = vadd.f32 %v713, %v1052
    %1054 = vmatmul.f32.gmra.mxu0 %v906
    %v1055 = vpop.f32.mrf.mxu0
    %v1056 = vadd.f32 %v716, %v1055
    %1057 = vmatmul.f32.gmra.mxu0 %v908
    %v1058 = vpop.f32.mrf.mxu0
    %v1059 = vadd.f32 %v719, %v1058
    %1060 = vmatmul.f32.gmra.mxu0 %v910
    %v1061 = vpop.f32.mrf.mxu0
    %v1062 = vadd.f32 %v722, %v1061
    %1063 = vmatmul.f32.gmra.mxu0 %v912
    %v1064 = vpop.f32.mrf.mxu0
    %v1065 = vadd.f32 %v725, %v1064
    %1066 = vmatmul.f32.gmra.mxu0 %v914
    %v1067 = vpop.f32.mrf.mxu0
    %v1068 = vadd.f32 %v728, %v1067
    %1069 = vmatmul.f32.gmra.mxu0 %v916
    %v1070 = vpop.f32.mrf.mxu0
    %v1071 = vadd.f32 %v731, %v1070
    %1072 = vmatmul.f32.gmra.mxu0 %v918
    %v1073 = vpop.f32.mrf.mxu0
    %v1074 = vadd.f32 %v734, %v1073
    %1075 = vmatmul.f32.gmra.mxu0 %v920
    %v1076 = vpop.f32.mrf.mxu0
    %v1077 = vadd.f32 %v737, %v1076
    %1078 = vmatmul.f32.gmra.mxu0 %v922
    %v1079 = vpop.f32.mrf.mxu0
    %v1080 = vadd.f32 %v740, %v1079
    %1081 = vmatmul.f32.gmra.mxu0 %v924
    %v1082 = vpop.f32.mrf.mxu0
    %v1083 = vadd.f32 %v743, %v1082
    %1084 = vmatmul.f32.gmra.mxu0 %v926
    %v1085 = vpop.f32.mrf.mxu0
    %v1086 = vadd.f32 %v746, %v1085
    %1087 = vmatmul.f32.gmra.mxu0 %v928
    %v1088 = vpop.f32.mrf.mxu0
    %v1089 = vadd.f32 %v749, %v1088
    %1090 = vmatmul.f32.gmra.mxu0 %v930
    %v1091 = vpop.f32.mrf.mxu0
    %v1092 = vadd.f32 %v752, %v1091
    %1093 = vmatmul.f32.gmra.mxu0 %v932
    %v1094 = vpop.f32.mrf.mxu0
    %v1095 = vadd.f32 %v755, %v1094
    %1096 = vmatmul.f32.gmra.mxu0 %v934
    %v1097 = vpop.f32.mrf.mxu0
    %v1098 = vadd.f32 %v758, %v1097
    %1099 = vmatmul.f32.gmra.mxu0 %v936
    %v1100 = vpop.f32.mrf.mxu0
    %v1101 = vadd.f32 %v761, %v1100
    %1102 = vmatmul.f32.gmra.mxu0 %v938
    %v1103 = vpop.f32.mrf.mxu0
    %v1104 = vadd.f32 %v764, %v1103
    %1105 = vmatmul.f32.gmra.mxu0 %v940
    %v1106 = vpop.f32.mrf.mxu0
    %v1107 = vadd.f32 %v767, %v1106
    %1108 = vmatmul.f32.gmra.mxu0 %v942
    %v1109 = vpop.f32.mrf.mxu0
    %v1110 = vadd.f32 %v770, %v1109
    %1111 = vmatmul.f32.gmra.mxu0 %v944
    %v1112 = vpop.f32.mrf.mxu0
    %v1113 = vadd.f32 %v773, %v1112
    %1114 = vmatmul.f32.gmra.mxu0 %v946
    %v1115 = vpop.f32.mrf.mxu0
    %v1116 = vadd.f32 %v776, %v1115
    %1117 = vmatmul.f32.gmra.mxu0 %v948
    %v1118 = vpop.f32.mrf.mxu0
    %v1119 = vadd.f32 %v779, %v1118
    %1120 = vmatmul.f32.gmra.mxu0 %v950
    %v1121 = vpop.f32.mrf.mxu0
    %v1122 = vadd.f32 %v782, %v1121
    %1123 = vmatmul.f32.gmra.mxu0 %v952
    %v1124 = vpop.f32.mrf.mxu0
    %v1125 = vadd.f32 %v785, %v1124
    %1126 = vmatmul.f32.gmra.mxu0 %v954
    %v1127 = vpop.f32.mrf.mxu0
    %v1128 = vadd.f32 %v788, %v1127
    %1129 = vmatmul.f32.gmra.mxu0 %v956
    %v1130 = vpop.f32.mrf.mxu0
    %v1131 = vadd.f32 %v791, %v1130
    %1132 = vmatmul.f32.gmra.mxu0 %v958
    %v1133 = vpop.f32.mrf.mxu0
    %v1134 = vadd.f32 %v794, %v1133
    %1135 = vmatmul.f32.gmra.mxu0 %v960
    %v1136 = vpop.f32.mrf.mxu0
    %v1137 = vadd.f32 %v797, %v1136
    %1138 = vmatmul.f32.gmra.mxu0 %v962
    %v1139 = vpop.f32.mrf.mxu0
    %v1140 = vadd.f32 %v800, %v1139
    %1141 = vmatmul.f32.gmra.mxu0 %v964
    %v1142 = vpop.f32.mrf.mxu0
    %v1143 = vadd.f32 %v803, %v1142
    %1144 = vmatmul.f32.gmra.mxu0 %v966
    %v1145 = vpop.f32.mrf.mxu0
    %v1146 = vadd.f32 %v806, %v1145
    %1147 = vmatmul.f32.gmra.mxu0 %v968
    %v1148 = vpop.f32.mrf.mxu0
    %v1149 = vadd.f32 %v809, %v1148
    %1150 = vmatmul.f32.gmra.mxu0 %v970
    %v1151 = vpop.f32.mrf.mxu0
    %v1152 = vadd.f32 %v812, %v1151
    %1153 = vmatmul.f32.gmra.mxu0 %v972
    %v1154 = vpop.f32.mrf.mxu0
    %v1155 = vadd.f32 %v815, %v1154
    %1156 = vmatmul.f32.gmra.mxu0 %v974
    %v1157 = vpop.f32.mrf.mxu0
    %v1158 = vadd.f32 %v818, %v1157
    %1159 = vmatmul.f32.gmra.mxu0 %v976
    %v1160 = vpop.f32.mrf.mxu0
    %v1161 = vadd.f32 %v821, %v1160
    %1162 = vmatmul.f32.gmra.mxu0 %v978
    %v1163 = vpop.f32.mrf.mxu0
    %v1164 = vadd.f32 %v824, %v1163
    %1165 = vmatmul.f32.gmra.mxu0 %v980
    %v1166 = vpop.f32.mrf.mxu0
    %v1167 = vadd.f32 %v827, %v1166
    %1168 = vmatmul.f32.gmra.mxu0 %v982
    %v1169 = vpop.f32.mrf.mxu0
    %v1170 = vadd.f32 %v830, %v1169
    %1171 = vmatmul.f32.gmra.mxu0 %v984
    %v1172 = vpop.f32.mrf.mxu0
    %v1173 = vadd.f32 %v833, %v1172
    %1174 = vmatmul.f32.gmra.mxu0 %v986
    %v1175 = vpop.f32.mrf.mxu0
    %v1176 = vadd.f32 %v836, %v1175
    %1177 = vmatmul.f32.gmra.mxu0 %v988
    %v1178 = vpop.f32.mrf.mxu0
    %v1179 = vadd.f32 %v839, %v1178
    %1180 = vmatmul.f32.gmra.mxu0 %v990
    %v1181 = vpop.f32.mrf.mxu0
    %v1182 = vadd.f32 %v842, %v1181
    %1183 = vmatmul.f32.gmra.mxu0 %v992
    %v1184 = vpop.f32.mrf.mxu0
    %v1185 = vadd.f32 %v845, %v1184
    %1186 = vmatmul.f32.gmra.mxu0 %v994
    %v1187 = vpop.f32.mrf.mxu0
    %v1188 = vadd.f32 %v848, %v1187
    %1189 = vmatmul.f32.gmra.mxu0 %v996
    %v1190 = vpop.f32.mrf.mxu0
    %v1191 = vadd.f32 %v851, %v1190
    %1192 = vmatmul.f32.gmra.mxu0 %v998
    %v1193 = vpop.f32.mrf.mxu0
    %v1194 = vadd.f32 %v854, %v1193
    %1195 = vmatmul.f32.gmra.mxu0 %v1000
    %v1196 = vpop.f32.mrf.mxu0
    %v1197 = vadd.f32 %v857, %v1196
    %1198 = vmatmul.f32.gmra.mxu0 %v1002
    %v1199 = vpop.f32.mrf.mxu0
    %v1200 = vadd.f32 %v860, %v1199
    %1201 = vmatmul.f32.gmra.mxu0 %v1004
    %v1202 = vpop.f32.mrf.mxu0
    %v1203 = vadd.f32 %v863, %v1202
    %1204 = vmatmul.f32.gmra.mxu0 %v1006
    %v1205 = vpop.f32.mrf.mxu0
    %v1206 = vadd.f32 %v866, %v1205
    %1207 = vmatmul.f32.gmra.mxu0 %v1008
    %v1208 = vpop.f32.mrf.mxu0
    %v1209 = vadd.f32 %v869, %v1208
    %1210 = vmatmul.f32.gmra.mxu0 %v1010
    %v1211 = vpop.f32.mrf.mxu0
    %v1212 = vadd.f32 %v872, %v1211
    %1213 = vmatmul.f32.gmra.mxu0 %v1012
    %v1214 = vpop.f32.mrf.mxu0
    %v1215 = vadd.f32 %v875, %v1214
    %1216 = vmatmul.f32.gmra.mxu0 %v1014
    %v1217 = vpop.f32.mrf.mxu0
    %v1218 = vadd.f32 %v878, %v1217
    %1219 = vmatmul.f32.gmra.mxu0 %v1016
    %v1220 = vpop.f32.mrf.mxu0
    %v1221 = vadd.f32 %v881, %v1220
    %1222 = vmatmul.f32.gmra.mxu0 %v1018
    %v1223 = vpop.f32.mrf.mxu0
    %v1224 = vadd.f32 %v884, %v1223
    %1225 = vmatmul.f32.gmra.mxu0 %v1020
    %v1226 = vpop.f32.mrf.mxu0
    %v1227 = vadd.f32 %v887, %v1226
    %1228 = vmatmul.f32.gmra.mxu0 %v1022
    %v1229 = vpop.f32.mrf.mxu0
    %v1230 = vadd.f32 %v890, %v1229
    %1231 = vmatmul.f32.gmra.mxu0 %v1024
    %v1232 = vpop.f32.mrf.mxu0
    %v1233 = vadd.f32 %v893, %v1232
    %1234 = vmatmul.f32.gmra.mxu0 %v1026
    %v1235 = vpop.f32.mrf.mxu0
    %v1236 = vadd.f32 %v896, %v1235
    %1237 = vmatmul.f32.gmra.mxu0 %v1028
    %v1238 = vpop.f32.mrf.mxu0
    %v1239 = vadd.f32 %v899, %v1238
    %1240 = vmatmul.f32.gmra.mxu0 %v1030
    %v1241 = vpop.f32.mrf.mxu0
    %v1242 = vadd.f32 %v902, %v1241
    %1243 = vdwg.mxu0
    %vm1244 = vcmask 1045504
    %v1245 = vrot.slane %v188, 2
    %v1246 = vrot.slane %v189, 2
    %v1247 = vsel %vm1244, %v1245, %v1246
    %v1248 = vrot.slane %v190, 2
    %v1249 = vsel %vm1244, %v1246, %v1248
    %v1250 = vrot.slane %v191, 2
    %v1251 = vrot.slane %v192, 2
    %v1252 = vsel %vm1244, %v1250, %v1251
    %v1253 = vrot.slane %v193, 2
    %v1254 = vsel %vm1244, %v1251, %v1253
    %v1255 = vrot.slane %v194, 2
    %v1256 = vrot.slane %v195, 2
    %v1257 = vsel %vm1244, %v1255, %v1256
    %v1258 = vrot.slane %v196, 2
    %v1259 = vsel %vm1244, %v1256, %v1258
    %v1260 = vrot.slane %v197, 2
    %v1261 = vrot.slane %v198, 2
    %v1262 = vsel %vm1244, %v1260, %v1261
    %v1263 = vrot.slane %v199, 2
    %v1264 = vsel %vm1244, %v1261, %v1263
    %v1265 = vrot.slane %v200, 2
    %v1266 = vrot.slane %v201, 2
    %v1267 = vsel %vm1244, %v1265, %v1266
    %v1268 = vrot.slane %v202, 2
    %v1269 = vsel %vm1244, %v1266, %v1268
    %v1270 = vrot.slane %v203, 2
    %v1271 = vrot.slane %v204, 2
    %v1272 = vsel %vm1244, %v1270, %v1271
    %v1273 = vrot.slane %v205, 2
    %v1274 = vsel %vm1244, %v1271, %v1273
    %v1275 = vrot.slane %v206, 2
    %v1276 = vrot.slane %v207, 2
    %v1277 = vsel %vm1244, %v1275, %v1276
    %v1278 = vrot.slane %v208, 2
    %v1279 = vsel %vm1244, %v1276, %v1278
    %v1280 = vrot.slane %v209, 2
    %v1281 = vrot.slane %v210, 2
    %v1282 = vsel %vm1244, %v1280, %v1281
    %v1283 = vrot.slane %v211, 2
    %v1284 = vsel %vm1244, %v1281, %v1283
    %v1285 = vrot.slane %v212, 2
    %v1286 = vrot.slane %v213, 2
    %v1287 = vsel %vm1244, %v1285, %v1286
    %v1288 = vrot.slane %v214, 2
    %v1289 = vsel %vm1244, %v1286, %v1288
    %v1290 = vrot.slane %v215, 2
    %v1291 = vrot.slane %v216, 2
    %v1292 = vsel %vm1244, %v1290, %v1291
    %v1293 = vrot.slane %v217, 2
    %v1294 = vsel %vm1244, %v1291, %v1293
    %v1295 = vrot.slane %v218, 2
    %v1296 = vrot.slane %v219, 2
    %v1297 = vsel %vm1244, %v1295, %v1296
    %v1298 = vrot.slane %v220, 2
    %v1299 = vsel %vm1244, %v1296, %v1298
    %v1300 = vrot.slane %v221, 2
    %v1301 = vrot.slane %v222, 2
    %v1302 = vsel %vm1244, %v1300, %v1301
    %v1303 = vrot.slane %v223, 2
    %v1304 = vsel %vm1244, %v1301, %v1303
    %v1305 = vrot.slane %v224, 2
    %v1306 = vrot.slane %v225, 2
    %v1307 = vsel %vm1244, %v1305, %v1306
    %v1308 = vrot.slane %v226, 2
    %v1309 = vsel %vm1244, %v1306, %v1308
    %v1310 = vrot.slane %v227, 2
    %v1311 = vrot.slane %v228, 2
    %v1312 = vsel %vm1244, %v1310, %v1311
    %v1313 = vrot.slane %v229, 2
    %v1314 = vsel %vm1244, %v1311, %v1313
    %v1315 = vrot.slane %v230, 2
    %v1316 = vrot.slane %v231, 2
    %v1317 = vsel %vm1244, %v1315, %v1316
    %v1318 = vrot.slane %v232, 2
    %v1319 = vsel %vm1244, %v1316, %v1318
    %v1320 = vrot.slane %v233, 2
    %v1321 = vrot.slane %v234, 2
    %v1322 = vsel %vm1244, %v1320, %v1321
    %v1323 = vrot.slane %v235, 2
    %v1324 = vsel %vm1244, %v1321, %v1323
    %v1325 = vrot.slane %v242, 2
    %v1326 = vrot.slane %v243, 2
    %v1327 = vsel %vm1244, %v1325, %v1326
    %v1328 = vrot.slane %v244, 2
    %v1329 = vsel %vm1244, %v1326, %v1328
    %v1330 = vrot.slane %v245, 2
    %v1331 = vrot.slane %v246, 2
    %v1332 = vsel %vm1244, %v1330, %v1331
    %v1333 = vrot.slane %v247, 2
    %v1334 = vsel %vm1244, %v1331, %v1333
    %v1335 = vrot.slane %v248, 2
    %v1336 = vrot.slane %v249, 2
    %v1337 = vsel %vm1244, %v1335, %v1336
    %v1338 = vrot.slane %v250, 2
    %v1339 = vsel %vm1244, %v1336, %v1338
    %v1340 = vrot.slane %v251, 2
    %v1341 = vrot.slane %v252, 2
    %v1342 = vsel %vm1244, %v1340, %v1341
    %v1343 = vrot.slane %v253, 2
    %v1344 = vsel %vm1244, %v1341, %v1343
    %v1345 = vrot.slane %v254, 2
    %v1346 = vrot.slane %v255, 2
    %v1347 = vsel %vm1244, %v1345, %v1346
    %v1348 = vrot.slane %v256, 2
    %v1349 = vsel %vm1244, %v1346, %v1348
    %v1350 = vrot.slane %v257, 2
    %v1351 = vrot.slane %v258, 2
    %v1352 = vsel %vm1244, %v1350, %v1351
    %v1353 = vrot.slane %v259, 2
    %v1354 = vsel %vm1244, %v1351, %v1353
    %v1355 = vrot.slane %v260, 2
    %v1356 = vrot.slane %v261, 2
    %v1357 = vsel %vm1244, %v1355, %v1356
    %v1358 = vrot.slane %v262, 2
    %v1359 = vsel %vm1244, %v1356, %v1358
    %v1360 = vrot.slane %v263, 2
    %v1361 = vrot.slane %v264, 2
    %v1362 = vsel %vm1244, %v1360, %v1361
    %v1363 = vrot.slane %v265, 2
    %v1364 = vsel %vm1244, %v1361, %v1363
    %v1365 = vrot.slane %v266, 2
    %v1366 = vrot.slane %v267, 2
    %v1367 = vsel %vm1244, %v1365, %v1366
    %v1368 = vrot.slane %v268, 2
    %v1369 = vsel %vm1244, %v1366, %v1368
    %v1370 = vrot.slane %v269, 2
    %v1371 = vrot.slane %v270, 2
    %v1372 = vsel %vm1244, %v1370, %v1371
    %v1373 = vrot.slane %v271, 2
    %v1374 = vsel %vm1244, %v1371, %v1373
    %v1375 = vrot.slane %v272, 2
    %v1376 = vrot.slane %v273, 2
    %v1377 = vsel %vm1244, %v1375, %v1376
    %v1378 = vrot.slane %v274, 2
    %v1379 = vsel %vm1244, %v1376, %v1378
    %v1380 = vrot.slane %v275, 2
    %v1381 = vrot.slane %v276, 2
    %v1382 = vsel %vm1244, %v1380, %v1381
    %v1383 = vrot.slane %v277, 2
    %v1384 = vsel %vm1244, %v1381, %v1383
    %v1385 = vrot.slane %v278, 2
    %v1386 = vrot.slane %v279, 2
    %v1387 = vsel %vm1244, %v1385, %v1386
    %v1388 = vrot.slane %v280, 2
    %v1389 = vsel %vm1244, %v1386, %v1388
    %v1390 = vrot.slane %v281, 2
    %v1391 = vrot.slane %v282, 2
    %v1392 = vsel %vm1244, %v1390, %v1391
    %v1393 = vrot.slane %v283, 2
    %v1394 = vsel %vm1244, %v1391, %v1393
    %v1395 = vrot.slane %v284, 2
    %v1396 = vrot.slane %v285, 2
    %v1397 = vsel %vm1244, %v1395, %v1396
    %v1398 = vrot.slane %v286, 2
    %v1399 = vsel %vm1244, %v1396, %v1398
    %v1400 = vrot.slane %v287, 2
    %v1401 = vrot.slane %v288, 2
    %v1402 = vsel %vm1244, %v1400, %v1401
    %v1403 = vrot.slane %v289, 2
    %v1404 = vsel %vm1244, %v1401, %v1403
    %v1405 = vsel %vm562, %v1247, 0
    %v1407 = vsel %vm562, %v1249, 0
    %v1409 = vsel %vm562, %v1252, 0
    %v1411 = vsel %vm562, %v1254, 0
    %v1413 = vsel %vm562, %v1257, 0
    %v1415 = vsel %vm562, %v1259, 0
    %v1417 = vsel %vm562, %v1262, 0
    %v1419 = vsel %vm562, %v1264, 0
    %v1421 = vsel %vm562, %v1267, 0
    %v1423 = vsel %vm562, %v1269, 0
    %v1425 = vsel %vm562, %v1272, 0
    %v1427 = vsel %vm562, %v1274, 0
    %v1429 = vsel %vm562, %v1277, 0
    %v1431 = vsel %vm562, %v1279, 0
    %v1433 = vsel %vm562, %v1282, 0
    %v1435 = vsel %vm562, %v1284, 0
    %v1437 = vsel %vm562, %v1287, 0
    %v1439 = vsel %vm562, %v1289, 0
    %v1441 = vsel %vm562, %v1292, 0
    %v1443 = vsel %vm562, %v1294, 0
    %v1445 = vsel %vm562, %v1297, 0
    %v1447 = vsel %vm562, %v1299, 0
    %v1449 = vsel %vm562, %v1302, 0
    %v1451 = vsel %vm562, %v1304, 0
    %v1453 = vsel %vm562, %v1307, 0
    %v1455 = vsel %vm562, %v1309, 0
    %v1457 = vsel %vm562, %v1312, 0
    %v1459 = vsel %vm562, %v1314, 0
    %v1461 = vsel %vm562, %v1317, 0
    %v1463 = vsel %vm562, %v1319, 0
    %v1465 = vsel %vm562, %v1322, 0
    %v1467 = vsel %vm562, %v1324, 0
    %v1469 = vsel %vm562, %v1327, 0
    %v1471 = vsel %vm562, %v1329, 0
    %v1473 = vsel %vm562, %v1332, 0
    %v1475 = vsel %vm562, %v1334, 0
    %v1477 = vsel %vm562, %v1337, 0
    %v1479 = vsel %vm562, %v1339, 0
    %v1481 = vsel %vm562, %v1342, 0
    %v1483 = vsel %vm562, %v1344, 0
    %v1485 = vsel %vm562, %v1347, 0
    %v1487 = vsel %vm562, %v1349, 0
    %v1489 = vsel %vm562, %v1352, 0
    %v1491 = vsel %vm562, %v1354, 0
    %v1493 = vsel %vm562, %v1357, 0
    %v1495 = vsel %vm562, %v1359, 0
    %v1497 = vsel %vm562, %v1362, 0
    %v1499 = vsel %vm562, %v1364, 0
    %v1501 = vsel %vm562, %v1367, 0
    %v1503 = vsel %vm562, %v1369, 0
    %v1505 = vsel %vm562, %v1372, 0
    %v1507 = vsel %vm562, %v1374, 0
    %v1509 = vsel %vm562, %v1377, 0
    %v1511 = vsel %vm562, %v1379, 0
    %v1513 = vsel %vm562, %v1382, 0
    %v1515 = vsel %vm562, %v1384, 0
    %v1517 = vsel %vm562, %v1387, 0
    %v1519 = vsel %vm562, %v1389, 0
    %v1521 = vsel %vm562, %v1392, 0
    %v1523 = vsel %vm562, %v1394, 0
    %v1525 = vsel %vm562, %v1397, 0
    %v1527 = vsel %vm562, %v1399, 0
    %v1529 = vsel %vm562, %v1402, 0
    %v1531 = vsel %vm562, %v1404, 0
    %v1534 = vsel %vm691, %v298, 0
    %1536 = vmatpush.msra.mxu0 0.0
    %1537 = vmatpush.msra.mxu0 0.0
    %1538 = vmatpush.msra.mxu0 0.0
    %1539 = vmatpush.msra.mxu0 0.0
    %1540 = vmatpush.msra.mxu0 0.0
    %1541 = vmatpush.msra.mxu0 0.0
    %1542 = vmatpush.msra.mxu0 0.0
    %1543 = vmatpush.msra.mxu0 0.0
    %1544 = vmatpush.msra.mxu0 0.0
    %1545 = vmatpush.msra.mxu0 0.0
    %1546 = vmatpush.msra.mxu0 0.0
    %1547 = vmatpush.msra.mxu0 0.0
    %1548 = vmatpush.msra.mxu0 0.0
    %1549 = vmatpush.msra.mxu0 0.0
    %1550 = vmatpush.msra.mxu0 0.0
    %1551 = vmatpush.msra.mxu0 %v1534
    %1552 = vmatmul.f32.gmra.mxu0 %v1405
    %v1553 = vpop.f32.mrf.mxu0
    %v1554 = vadd.f32 0.0, %v1553
    %1555 = vmatmul.f32.gmra.mxu0 %v1407
    %v1556 = vpop.f32.mrf.mxu0
    %v1557 = vadd.f32 0.0, %v1556
    %1558 = vmatmul.f32.gmra.mxu0 %v1409
    %v1559 = vpop.f32.mrf.mxu0
    %v1560 = vadd.f32 0.0, %v1559
    %1561 = vmatmul.f32.gmra.mxu0 %v1411
    %v1562 = vpop.f32.mrf.mxu0
    %v1563 = vadd.f32 0.0, %v1562
    %1564 = vmatmul.f32.gmra.mxu0 %v1413
    %v1565 = vpop.f32.mrf.mxu0
    %v1566 = vadd.f32 0.0, %v1565
    %1567 = vmatmul.f32.gmra.mxu0 %v1415
    %v1568 = vpop.f32.mrf.mxu0
    %v1569 = vadd.f32 0.0, %v1568
    %1570 = vmatmul.f32.gmra.mxu0 %v1417
    %v1571 = vpop.f32.mrf.mxu0
    %v1572 = vadd.f32 0.0, %v1571
    %1573 = vmatmul.f32.gmra.mxu0 %v1419
    %v1574 = vpop.f32.mrf.mxu0
    %v1575 = vadd.f32 0.0, %v1574
    %1576 = vmatmul.f32.gmra.mxu0 %v1421
    %v1577 = vpop.f32.mrf.mxu0
    %v1578 = vadd.f32 0.0, %v1577
    %1579 = vmatmul.f32.gmra.mxu0 %v1423
    %v1580 = vpop.f32.mrf.mxu0
    %v1581 = vadd.f32 0.0, %v1580
    %1582 = vmatmul.f32.gmra.mxu0 %v1425
    %v1583 = vpop.f32.mrf.mxu0
    %v1584 = vadd.f32 0.0, %v1583
    %1585 = vmatmul.f32.gmra.mxu0 %v1427
    %v1586 = vpop.f32.mrf.mxu0
    %v1587 = vadd.f32 0.0, %v1586
    %1588 = vmatmul.f32.gmra.mxu0 %v1429
    %v1589 = vpop.f32.mrf.mxu0
    %v1590 = vadd.f32 0.0, %v1589
    %1591 = vmatmul.f32.gmra.mxu0 %v1431
    %v1592 = vpop.f32.mrf.mxu0
    %v1593 = vadd.f32 0.0, %v1592
    %1594 = vmatmul.f32.gmra.mxu0 %v1433
    %v1595 = vpop.f32.mrf.mxu0
    %v1596 = vadd.f32 0.0, %v1595
    %1597 = vmatmul.f32.gmra.mxu0 %v1435
    %v1598 = vpop.f32.mrf.mxu0
    %v1599 = vadd.f32 0.0, %v1598
    %1600 = vmatmul.f32.gmra.mxu0 %v1437
    %v1601 = vpop.f32.mrf.mxu0
    %v1602 = vadd.f32 0.0, %v1601
    %1603 = vmatmul.f32.gmra.mxu0 %v1439
    %v1604 = vpop.f32.mrf.mxu0
    %v1605 = vadd.f32 0.0, %v1604
    %1606 = vmatmul.f32.gmra.mxu0 %v1441
    %v1607 = vpop.f32.mrf.mxu0
    %v1608 = vadd.f32 0.0, %v1607
    %1609 = vmatmul.f32.gmra.mxu0 %v1443
    %v1610 = vpop.f32.mrf.mxu0
    %v1611 = vadd.f32 0.0, %v1610
    %1612 = vmatmul.f32.gmra.mxu0 %v1445
    %v1613 = vpop.f32.mrf.mxu0
    %v1614 = vadd.f32 0.0, %v1613
    %1615 = vmatmul.f32.gmra.mxu0 %v1447
    %v1616 = vpop.f32.mrf.mxu0
    %v1617 = vadd.f32 0.0, %v1616
    %1618 = vmatmul.f32.gmra.mxu0 %v1449
    %v1619 = vpop.f32.mrf.mxu0
    %v1620 = vadd.f32 0.0, %v1619
    %1621 = vmatmul.f32.gmra.mxu0 %v1451
    %v1622 = vpop.f32.mrf.mxu0
    %v1623 = vadd.f32 0.0, %v1622
    %1624 = vmatmul.f32.gmra.mxu0 %v1453
    %v1625 = vpop.f32.mrf.mxu0
    %v1626 = vadd.f32 0.0, %v1625
    %1627 = vmatmul.f32.gmra.mxu0 %v1455
    %v1628 = vpop.f32.mrf.mxu0
    %v1629 = vadd.f32 0.0, %v1628
    %1630 = vmatmul.f32.gmra.mxu0 %v1457
    %v1631 = vpop.f32.mrf.mxu0
    %v1632 = vadd.f32 0.0, %v1631
    %1633 = vmatmul.f32.gmra.mxu0 %v1459
    %v1634 = vpop.f32.mrf.mxu0
    %v1635 = vadd.f32 0.0, %v1634
    %1636 = vmatmul.f32.gmra.mxu0 %v1461
    %v1637 = vpop.f32.mrf.mxu0
    %v1638 = vadd.f32 0.0, %v1637
    %1639 = vmatmul.f32.gmra.mxu0 %v1463
    %v1640 = vpop.f32.mrf.mxu0
    %v1641 = vadd.f32 0.0, %v1640
    %1642 = vmatmul.f32.gmra.mxu0 %v1465
    %v1643 = vpop.f32.mrf.mxu0
    %v1644 = vadd.f32 0.0, %v1643
    %1645 = vmatmul.f32.gmra.mxu0 %v1467
    %v1646 = vpop.f32.mrf.mxu0
    %v1647 = vadd.f32 0.0, %v1646
    %1648 = vmatmul.f32.gmra.mxu0 %v1469
    %v1649 = vpop.f32.mrf.mxu0
    %v1650 = vadd.f32 0.0, %v1649
    %1651 = vmatmul.f32.gmra.mxu0 %v1471
    %v1652 = vpop.f32.mrf.mxu0
    %v1653 = vadd.f32 0.0, %v1652
    %1654 = vmatmul.f32.gmra.mxu0 %v1473
    %v1655 = vpop.f32.mrf.mxu0
    %v1656 = vadd.f32 0.0, %v1655
    %1657 = vmatmul.f32.gmra.mxu0 %v1475
    %v1658 = vpop.f32.mrf.mxu0
    %v1659 = vadd.f32 0.0, %v1658
    %1660 = vmatmul.f32.gmra.mxu0 %v1477
    %v1661 = vpop.f32.mrf.mxu0
    %v1662 = vadd.f32 0.0, %v1661
    %1663 = vmatmul.f32.gmra.mxu0 %v1479
    %v1664 = vpop.f32.mrf.mxu0
    %v1665 = vadd.f32 0.0, %v1664
    %1666 = vmatmul.f32.gmra.mxu0 %v1481
    %v1667 = vpop.f32.mrf.mxu0
    %v1668 = vadd.f32 0.0, %v1667
    %1669 = vmatmul.f32.gmra.mxu0 %v1483
    %v1670 = vpop.f32.mrf.mxu0
    %v1671 = vadd.f32 0.0, %v1670
    %1672 = vmatmul.f32.gmra.mxu0 %v1485
    %v1673 = vpop.f32.mrf.mxu0
    %v1674 = vadd.f32 0.0, %v1673
    %1675 = vmatmul.f32.gmra.mxu0 %v1487
    %v1676 = vpop.f32.mrf.mxu0
    %v1677 = vadd.f32 0.0, %v1676
    %1678 = vmatmul.f32.gmra.mxu0 %v1489
    %v1679 = vpop.f32.mrf.mxu0
    %v1680 = vadd.f32 0.0, %v1679
    %1681 = vmatmul.f32.gmra.mxu0 %v1491
    %v1682 = vpop.f32.mrf.mxu0
    %v1683 = vadd.f32 0.0, %v1682
    %1684 = vmatmul.f32.gmra.mxu0 %v1493
    %v1685 = vpop.f32.mrf.mxu0
    %v1686 = vadd.f32 0.0, %v1685
    %1687 = vmatmul.f32.gmra.mxu0 %v1495
    %v1688 = vpop.f32.mrf.mxu0
    %v1689 = vadd.f32 0.0, %v1688
    %1690 = vmatmul.f32.gmra.mxu0 %v1497
    %v1691 = vpop.f32.mrf.mxu0
    %v1692 = vadd.f32 0.0, %v1691
    %1693 = vmatmul.f32.gmra.mxu0 %v1499
    %v1694 = vpop.f32.mrf.mxu0
    %v1695 = vadd.f32 0.0, %v1694
    %1696 = vmatmul.f32.gmra.mxu0 %v1501
    %v1697 = vpop.f32.mrf.mxu0
    %v1698 = vadd.f32 0.0, %v1697
    %1699 = vmatmul.f32.gmra.mxu0 %v1503
    %v1700 = vpop.f32.mrf.mxu0
    %v1701 = vadd.f32 0.0, %v1700
    %1702 = vmatmul.f32.gmra.mxu0 %v1505
    %v1703 = vpop.f32.mrf.mxu0
    %v1704 = vadd.f32 0.0, %v1703
    %1705 = vmatmul.f32.gmra.mxu0 %v1507
    %v1706 = vpop.f32.mrf.mxu0
    %v1707 = vadd.f32 0.0, %v1706
    %1708 = vmatmul.f32.gmra.mxu0 %v1509
    %v1709 = vpop.f32.mrf.mxu0
    %v1710 = vadd.f32 0.0, %v1709
    %1711 = vmatmul.f32.gmra.mxu0 %v1511
    %v1712 = vpop.f32.mrf.mxu0
    %v1713 = vadd.f32 0.0, %v1712
    %1714 = vmatmul.f32.gmra.mxu0 %v1513
    %v1715 = vpop.f32.mrf.mxu0
    %v1716 = vadd.f32 0.0, %v1715
    %1717 = vmatmul.f32.gmra.mxu0 %v1515
    %v1718 = vpop.f32.mrf.mxu0
    %v1719 = vadd.f32 0.0, %v1718
    %1720 = vmatmul.f32.gmra.mxu0 %v1517
    %v1721 = vpop.f32.mrf.mxu0
    %v1722 = vadd.f32 0.0, %v1721
    %1723 = vmatmul.f32.gmra.mxu0 %v1519
    %v1724 = vpop.f32.mrf.mxu0
    %v1725 = vadd.f32 0.0, %v1724
    %1726 = vmatmul.f32.gmra.mxu0 %v1521
    %v1727 = vpop.f32.mrf.mxu0
    %v1728 = vadd.f32 0.0, %v1727
    %1729 = vmatmul.f32.gmra.mxu0 %v1523
    %v1730 = vpop.f32.mrf.mxu0
    %v1731 = vadd.f32 0.0, %v1730
    %1732 = vmatmul.f32.gmra.mxu0 %v1525
    %v1733 = vpop.f32.mrf.mxu0
    %v1734 = vadd.f32 0.0, %v1733
    %1735 = vmatmul.f32.gmra.mxu0 %v1527
    %v1736 = vpop.f32.mrf.mxu0
    %v1737 = vadd.f32 0.0, %v1736
    %1738 = vmatmul.f32.gmra.mxu0 %v1529
    %v1739 = vpop.f32.mrf.mxu0
    %v1740 = vadd.f32 0.0, %v1739
    %1741 = vmatmul.f32.gmra.mxu0 %v1531
    %v1742 = vpop.f32.mrf.mxu0
    %v1743 = vadd.f32 0.0, %v1742
    %1744 = vdwg.mxu0
    %v1745 = vadd.f32 %v1053, %v1554
    %v1746 = vadd.f32 %v1056, %v1557
    %v1747 = vadd.f32 %v1059, %v1560
    %v1748 = vadd.f32 %v1062, %v1563
    %v1749 = vadd.f32 %v1065, %v1566
    %v1750 = vadd.f32 %v1068, %v1569
    %v1751 = vadd.f32 %v1071, %v1572
    %v1752 = vadd.f32 %v1074, %v1575
    %v1753 = vadd.f32 %v1077, %v1578
    %v1754 = vadd.f32 %v1080, %v1581
    %v1755 = vadd.f32 %v1083, %v1584
    %v1756 = vadd.f32 %v1086, %v1587
    %v1757 = vadd.f32 %v1089, %v1590
    %v1758 = vadd.f32 %v1092, %v1593
    %v1759 = vadd.f32 %v1095, %v1596
    %v1760 = vadd.f32 %v1098, %v1599
    %v1761 = vadd.f32 %v1101, %v1602
    %v1762 = vadd.f32 %v1104, %v1605
    %v1763 = vadd.f32 %v1107, %v1608
    %v1764 = vadd.f32 %v1110, %v1611
    %v1765 = vadd.f32 %v1113, %v1614
    %v1766 = vadd.f32 %v1116, %v1617
    %v1767 = vadd.f32 %v1119, %v1620
    %v1768 = vadd.f32 %v1122, %v1623
    %v1769 = vadd.f32 %v1125, %v1626
    %v1770 = vadd.f32 %v1128, %v1629
    %v1771 = vadd.f32 %v1131, %v1632
    %v1772 = vadd.f32 %v1134, %v1635
    %v1773 = vadd.f32 %v1137, %v1638
    %v1774 = vadd.f32 %v1140, %v1641
    %v1775 = vadd.f32 %v1143, %v1644
    %v1776 = vadd.f32 %v1146, %v1647
    %v1777 = vadd.f32 %v1149, %v1650
    %v1778 = vadd.f32 %v1152, %v1653
    %v1779 = vadd.f32 %v1155, %v1656
    %v1780 = vadd.f32 %v1158, %v1659
    %v1781 = vadd.f32 %v1161, %v1662
    %v1782 = vadd.f32 %v1164, %v1665
    %v1783 = vadd.f32 %v1167, %v1668
    %v1784 = vadd.f32 %v1170, %v1671
    %v1785 = vadd.f32 %v1173, %v1674
    %v1786 = vadd.f32 %v1176, %v1677
    %v1787 = vadd.f32 %v1179, %v1680
    %v1788 = vadd.f32 %v1182, %v1683
    %v1789 = vadd.f32 %v1185, %v1686
    %v1790 = vadd.f32 %v1188, %v1689
    %v1791 = vadd.f32 %v1191, %v1692
    %v1792 = vadd.f32 %v1194, %v1695
    %v1793 = vadd.f32 %v1197, %v1698
    %v1794 = vadd.f32 %v1200, %v1701
    %v1795 = vadd.f32 %v1203, %v1704
    %v1796 = vadd.f32 %v1206, %v1707
    %v1797 = vadd.f32 %v1209, %v1710
    %v1798 = vadd.f32 %v1212, %v1713
    %v1799 = vadd.f32 %v1215, %v1716
    %v1800 = vadd.f32 %v1218, %v1719
    %v1801 = vadd.f32 %v1221, %v1722
    %v1802 = vadd.f32 %v1224, %v1725
    %v1803 = vadd.f32 %v1227, %v1728
    %v1804 = vadd.f32 %v1230, %v1731
    %v1805 = vadd.f32 %v1233, %v1734
    %v1806 = vadd.f32 %v1236, %v1737
    %v1807 = vadd.f32 %v1239, %v1740
    %v1808 = vadd.f32 %v1242, %v1743
    %v1810 = vsel %vm562, %v236, 0
    %v1813 = vsel %vm562, %v237, 0
    %v1816 = vsel %vm562, %v290, 0
    %v1819 = vsel %vm562, %v291, 0
    %v1822 = vsel %vm691, %v299, 0
    %1824 = vmatpush.msra.mxu0 0.0
    %1825 = vmatpush.msra.mxu0 0.0
    %1826 = vmatpush.msra.mxu0 0.0
    %1827 = vmatpush.msra.mxu0 0.0
    %1828 = vmatpush.msra.mxu0 0.0
    %1829 = vmatpush.msra.mxu0 0.0
    %1830 = vmatpush.msra.mxu0 0.0
    %1831 = vmatpush.msra.mxu0 0.0
    %1832 = vmatpush.msra.mxu0 0.0
    %1833 = vmatpush.msra.mxu0 0.0
    %1834 = vmatpush.msra.mxu0 0.0
    %1835 = vmatpush.msra.mxu0 0.0
    %1836 = vmatpush.msra.mxu0 0.0
    %1837 = vmatpush.msra.mxu0 0.0
    %1838 = vmatpush.msra.mxu0 0.0
    %1839 = vmatpush.msra.mxu0 %v1822
    %1840 = vmatmul.f32.gmra.mxu0 %v908
    %v1841 = vpop.f32.mrf.mxu0
    %v1842 = vadd.f32 0.0, %v1841
    %1843 = vmatmul.f32.gmra.mxu0 %v910
    %v1844 = vpop.f32.mrf.mxu0
    %v1845 = vadd.f32 0.0, %v1844
    %1846 = vmatmul.f32.gmra.mxu0 %v912
    %v1847 = vpop.f32.mrf.mxu0
    %v1848 = vadd.f32 0.0, %v1847
    %1849 = vmatmul.f32.gmra.mxu0 %v914
    %v1850 = vpop.f32.mrf.mxu0
    %v1851 = vadd.f32 0.0, %v1850
    %1852 = vmatmul.f32.gmra.mxu0 %v916
    %v1853 = vpop.f32.mrf.mxu0
    %v1854 = vadd.f32 0.0, %v1853
    %1855 = vmatmul.f32.gmra.mxu0 %v918
    %v1856 = vpop.f32.mrf.mxu0
    %v1857 = vadd.f32 0.0, %v1856
    %1858 = vmatmul.f32.gmra.mxu0 %v920
    %v1859 = vpop.f32.mrf.mxu0
    %v1860 = vadd.f32 0.0, %v1859
    %1861 = vmatmul.f32.gmra.mxu0 %v922
    %v1862 = vpop.f32.mrf.mxu0
    %v1863 = vadd.f32 0.0, %v1862
    %1864 = vmatmul.f32.gmra.mxu0 %v924
    %v1865 = vpop.f32.mrf.mxu0
    %v1866 = vadd.f32 0.0, %v1865
    %1867 = vmatmul.f32.gmra.mxu0 %v926
    %v1868 = vpop.f32.mrf.mxu0
    %v1869 = vadd.f32 0.0, %v1868
    %1870 = vmatmul.f32.gmra.mxu0 %v928
    %v1871 = vpop.f32.mrf.mxu0
    %v1872 = vadd.f32 0.0, %v1871
    %1873 = vmatmul.f32.gmra.mxu0 %v930
    %v1874 = vpop.f32.mrf.mxu0
    %v1875 = vadd.f32 0.0, %v1874
    %1876 = vmatmul.f32.gmra.mxu0 %v932
    %v1877 = vpop.f32.mrf.mxu0
    %v1878 = vadd.f32 0.0, %v1877
    %1879 = vmatmul.f32.gmra.mxu0 %v934
    %v1880 = vpop.f32.mrf.mxu0
    %v1881 = vadd.f32 0.0, %v1880
    %1882 = vmatmul.f32.gmra.mxu0 %v936
    %v1883 = vpop.f32.mrf.mxu0
    %v1884 = vadd.f32 0.0, %v1883
    %1885 = vmatmul.f32.gmra.mxu0 %v938
    %v1886 = vpop.f32.mrf.mxu0
    %v1887 = vadd.f32 0.0, %v1886
    %1888 = vmatmul.f32.gmra.mxu0 %v940
    %v1889 = vpop.f32.mrf.mxu0
    %v1890 = vadd.f32 0.0, %v1889
    %1891 = vmatmul.f32.gmra.mxu0 %v942
    %v1892 = vpop.f32.mrf.mxu0
    %v1893 = vadd.f32 0.0, %v1892
    %1894 = vmatmul.f32.gmra.mxu0 %v944
    %v1895 = vpop.f32.mrf.mxu0
    %v1896 = vadd.f32 0.0, %v1895
    %1897 = vmatmul.f32.gmra.mxu0 %v946
    %v1898 = vpop.f32.mrf.mxu0
    %v1899 = vadd.f32 0.0, %v1898
    %1900 = vmatmul.f32.gmra.mxu0 %v948
    %v1901 = vpop.f32.mrf.mxu0
    %v1902 = vadd.f32 0.0, %v1901
    %1903 = vmatmul.f32.gmra.mxu0 %v950
    %v1904 = vpop.f32.mrf.mxu0
    %v1905 = vadd.f32 0.0, %v1904
    %1906 = vmatmul.f32.gmra.mxu0 %v952
    %v1907 = vpop.f32.mrf.mxu0
    %v1908 = vadd.f32 0.0, %v1907
    %1909 = vmatmul.f32.gmra.mxu0 %v954
    %v1910 = vpop.f32.mrf.mxu0
    %v1911 = vadd.f32 0.0, %v1910
    %1912 = vmatmul.f32.gmra.mxu0 %v956
    %v1913 = vpop.f32.mrf.mxu0
    %v1914 = vadd.f32 0.0, %v1913
    %1915 = vmatmul.f32.gmra.mxu0 %v958
    %v1916 = vpop.f32.mrf.mxu0
    %v1917 = vadd.f32 0.0, %v1916
    %1918 = vmatmul.f32.gmra.mxu0 %v960
    %v1919 = vpop.f32.mrf.mxu0
    %v1920 = vadd.f32 0.0, %v1919
    %1921 = vmatmul.f32.gmra.mxu0 %v962
    %v1922 = vpop.f32.mrf.mxu0
    %v1923 = vadd.f32 0.0, %v1922
    %1924 = vmatmul.f32.gmra.mxu0 %v964
    %v1925 = vpop.f32.mrf.mxu0
    %v1926 = vadd.f32 0.0, %v1925
    %1927 = vmatmul.f32.gmra.mxu0 %v966
    %v1928 = vpop.f32.mrf.mxu0
    %v1929 = vadd.f32 0.0, %v1928
    %1930 = vmatmul.f32.gmra.mxu0 %v1810
    %v1931 = vpop.f32.mrf.mxu0
    %v1932 = vadd.f32 0.0, %v1931
    %1933 = vmatmul.f32.gmra.mxu0 %v1813
    %v1934 = vpop.f32.mrf.mxu0
    %v1935 = vadd.f32 0.0, %v1934
    %1936 = vmatmul.f32.gmra.mxu0 %v972
    %v1937 = vpop.f32.mrf.mxu0
    %v1938 = vadd.f32 0.0, %v1937
    %1939 = vmatmul.f32.gmra.mxu0 %v974
    %v1940 = vpop.f32.mrf.mxu0
    %v1941 = vadd.f32 0.0, %v1940
    %1942 = vmatmul.f32.gmra.mxu0 %v976
    %v1943 = vpop.f32.mrf.mxu0
    %v1944 = vadd.f32 0.0, %v1943
    %1945 = vmatmul.f32.gmra.mxu0 %v978
    %v1946 = vpop.f32.mrf.mxu0
    %v1947 = vadd.f32 0.0, %v1946
    %1948 = vmatmul.f32.gmra.mxu0 %v980
    %v1949 = vpop.f32.mrf.mxu0
    %v1950 = vadd.f32 0.0, %v1949
    %1951 = vmatmul.f32.gmra.mxu0 %v982
    %v1952 = vpop.f32.mrf.mxu0
    %v1953 = vadd.f32 0.0, %v1952
    %1954 = vmatmul.f32.gmra.mxu0 %v984
    %v1955 = vpop.f32.mrf.mxu0
    %v1956 = vadd.f32 0.0, %v1955
    %1957 = vmatmul.f32.gmra.mxu0 %v986
    %v1958 = vpop.f32.mrf.mxu0
    %v1959 = vadd.f32 0.0, %v1958
    %1960 = vmatmul.f32.gmra.mxu0 %v988
    %v1961 = vpop.f32.mrf.mxu0
    %v1962 = vadd.f32 0.0, %v1961
    %1963 = vmatmul.f32.gmra.mxu0 %v990
    %v1964 = vpop.f32.mrf.mxu0
    %v1965 = vadd.f32 0.0, %v1964
    %1966 = vmatmul.f32.gmra.mxu0 %v992
    %v1967 = vpop.f32.mrf.mxu0
    %v1968 = vadd.f32 0.0, %v1967
    %1969 = vmatmul.f32.gmra.mxu0 %v994
    %v1970 = vpop.f32.mrf.mxu0
    %v1971 = vadd.f32 0.0, %v1970
    %1972 = vmatmul.f32.gmra.mxu0 %v996
    %v1973 = vpop.f32.mrf.mxu0
    %v1974 = vadd.f32 0.0, %v1973
    %1975 = vmatmul.f32.gmra.mxu0 %v998
    %v1976 = vpop.f32.mrf.mxu0
    %v1977 = vadd.f32 0.0, %v1976
    %1978 = vmatmul.f32.gmra.mxu0 %v1000
    %v1979 = vpop.f32.mrf.mxu0
    %v1980 = vadd.f32 0.0, %v1979
    %1981 = vmatmul.f32.gmra.mxu0 %v1002
    %v1982 = vpop.f32.mrf.mxu0
    %v1983 = vadd.f32 0.0, %v1982
    %1984 = vmatmul.f32.gmra.mxu0 %v1004
    %v1985 = vpop.f32.mrf.mxu0
    %v1986 = vadd.f32 0.0, %v1985
    %1987 = vmatmul.f32.gmra.mxu0 %v1006
    %v1988 = vpop.f32.mrf.mxu0
    %v1989 = vadd.f32 0.0, %v1988
    %1990 = vmatmul.f32.gmra.mxu0 %v1008
    %v1991 = vpop.f32.mrf.mxu0
    %v1992 = vadd.f32 0.0, %v1991
    %1993 = vmatmul.f32.gmra.mxu0 %v1010
    %v1994 = vpop.f32.mrf.mxu0
    %v1995 = vadd.f32 0.0, %v1994
    %1996 = vmatmul.f32.gmra.mxu0 %v1012
    %v1997 = vpop.f32.mrf.mxu0
    %v1998 = vadd.f32 0.0, %v1997
    %1999 = vmatmul.f32.gmra.mxu0 %v1014
    %v2000 = vpop.f32.mrf.mxu0
    %v2001 = vadd.f32 0.0, %v2000
    %2002 = vmatmul.f32.gmra.mxu0 %v1016
    %v2003 = vpop.f32.mrf.mxu0
    %v2004 = vadd.f32 0.0, %v2003
    %2005 = vmatmul.f32.gmra.mxu0 %v1018
    %v2006 = vpop.f32.mrf.mxu0
    %v2007 = vadd.f32 0.0, %v2006
    %2008 = vmatmul.f32.gmra.mxu0 %v1020
    %v2009 = vpop.f32.mrf.mxu0
    %v2010 = vadd.f32 0.0, %v2009
    %2011 = vmatmul.f32.gmra.mxu0 %v1022
    %v2012 = vpop.f32.mrf.mxu0
    %v2013 = vadd.f32 0.0, %v2012
    %2014 = vmatmul.f32.gmra.mxu0 %v1024
    %v2015 = vpop.f32.mrf.mxu0
    %v2016 = vadd.f32 0.0, %v2015
    %2017 = vmatmul.f32.gmra.mxu0 %v1026
    %v2018 = vpop.f32.mrf.mxu0
    %v2019 = vadd.f32 0.0, %v2018
    %2020 = vmatmul.f32.gmra.mxu0 %v1028
    %v2021 = vpop.f32.mrf.mxu0
    %v2022 = vadd.f32 0.0, %v2021
    %2023 = vmatmul.f32.gmra.mxu0 %v1030
    %v2024 = vpop.f32.mrf.mxu0
    %v2025 = vadd.f32 0.0, %v2024
    %2026 = vmatmul.f32.gmra.mxu0 %v1816
    %v2027 = vpop.f32.mrf.mxu0
    %v2028 = vadd.f32 0.0, %v2027
    %2029 = vmatmul.f32.gmra.mxu0 %v1819
    %v2030 = vpop.f32.mrf.mxu0
    %v2031 = vadd.f32 0.0, %v2030
    %2032 = vdwg.mxu0
    %v2033 = vadd.f32 %v1745, %v1842
    %v2034 = vadd.f32 %v1746, %v1845
    %v2035 = vadd.f32 %v1747, %v1848
    %v2036 = vadd.f32 %v1748, %v1851
    %v2037 = vadd.f32 %v1749, %v1854
    %v2038 = vadd.f32 %v1750, %v1857
    %v2039 = vadd.f32 %v1751, %v1860
    %v2040 = vadd.f32 %v1752, %v1863
    %v2041 = vadd.f32 %v1753, %v1866
    %v2042 = vadd.f32 %v1754, %v1869
    %v2043 = vadd.f32 %v1755, %v1872
    %v2044 = vadd.f32 %v1756, %v1875
    %v2045 = vadd.f32 %v1757, %v1878
    %v2046 = vadd.f32 %v1758, %v1881
    %v2047 = vadd.f32 %v1759, %v1884
    %v2048 = vadd.f32 %v1760, %v1887
    %v2049 = vadd.f32 %v1761, %v1890
    %v2050 = vadd.f32 %v1762, %v1893
    %v2051 = vadd.f32 %v1763, %v1896
    %v2052 = vadd.f32 %v1764, %v1899
    %v2053 = vadd.f32 %v1765, %v1902
    %v2054 = vadd.f32 %v1766, %v1905
    %v2055 = vadd.f32 %v1767, %v1908
    %v2056 = vadd.f32 %v1768, %v1911
    %v2057 = vadd.f32 %v1769, %v1914
    %v2058 = vadd.f32 %v1770, %v1917
    %v2059 = vadd.f32 %v1771, %v1920
    %v2060 = vadd.f32 %v1772, %v1923
    %v2061 = vadd.f32 %v1773, %v1926
    %v2062 = vadd.f32 %v1774, %v1929
    %v2063 = vadd.f32 %v1775, %v1932
    %v2064 = vadd.f32 %v1776, %v1935
    %v2065 = vadd.f32 %v1777, %v1938
    %v2066 = vadd.f32 %v1778, %v1941
    %v2067 = vadd.f32 %v1779, %v1944
    %v2068 = vadd.f32 %v1780, %v1947
    %v2069 = vadd.f32 %v1781, %v1950
    %v2070 = vadd.f32 %v1782, %v1953
    %v2071 = vadd.f32 %v1783, %v1956
    %v2072 = vadd.f32 %v1784, %v1959
    %v2073 = vadd.f32 %v1785, %v1962
    %v2074 = vadd.f32 %v1786, %v1965
    %v2075 = vadd.f32 %v1787, %v1968
    %v2076 = vadd.f32 %v1788, %v1971
    %v2077 = vadd.f32 %v1789, %v1974
    %v2078 = vadd.f32 %v1790, %v1977
    %v2079 = vadd.f32 %v1791, %v1980
    %v2080 = vadd.f32 %v1792, %v1983
    %v2081 = vadd.f32 %v1793, %v1986
    %v2082 = vadd.f32 %v1794, %v1989
    %v2083 = vadd.f32 %v1795, %v1992
    %v2084 = vadd.f32 %v1796, %v1995
    %v2085 = vadd.f32 %v1797, %v1998
    %v2086 = vadd.f32 %v1798, %v2001
    %v2087 = vadd.f32 %v1799, %v2004
    %v2088 = vadd.f32 %v1800, %v2007
    %v2089 = vadd.f32 %v1801, %v2010
    %v2090 = vadd.f32 %v1802, %v2013
    %v2091 = vadd.f32 %v1803, %v2016
    %v2092 = vadd.f32 %v1804, %v2019
    %v2093 = vadd.f32 %v1805, %v2022
    %v2094 = vadd.f32 %v1806, %v2025
    %v2095 = vadd.f32 %v1807, %v2028
    %v2096 = vadd.f32 %v1808, %v2031
    %v2099 = vrot.slane %v236, 1
    %v2100 = vrot.slane %v237, 1
    %v2101 = vsel %vm401, %v2099, %v2100
    %v2102 = vrot.slane %v238, 1
    %v2103 = vsel %vm401, %v2100, %v2102
    %v2104 = vrot.slane %v290, 1
    %v2105 = vrot.slane %v291, 1
    %v2106 = vsel %vm401, %v2104, %v2105
    %v2107 = vrot.slane %v292, 1
    %v2108 = vsel %vm401, %v2105, %v2107
    %v2109 = vsel %vm562, %v2101, 0
    %v2111 = vsel %vm562, %v2103, 0
    %v2113 = vsel %vm562, %v2106, 0
    %v2115 = vsel %vm562, %v2108, 0
    %v2118 = vsel %vm691, %v300, 0
    %2120 = vmatpush.msra.mxu0 0.0
    %2121 = vmatpush.msra.mxu0 0.0
    %2122 = vmatpush.msra.mxu0 0.0
    %2123 = vmatpush.msra.mxu0 0.0
    %2124 = vmatpush.msra.mxu0 0.0
    %2125 = vmatpush.msra.mxu0 0.0
    %2126 = vmatpush.msra.mxu0 0.0
    %2127 = vmatpush.msra.mxu0 0.0
    %2128 = vmatpush.msra.mxu0 0.0
    %2129 = vmatpush.msra.mxu0 0.0
    %2130 = vmatpush.msra.mxu0 0.0
    %2131 = vmatpush.msra.mxu0 0.0
    %2132 = vmatpush.msra.mxu0 0.0
    %2133 = vmatpush.msra.mxu0 0.0
    %2134 = vmatpush.msra.mxu0 0.0
    %2135 = vmatpush.msra.mxu0 %v2118
    %2136 = vmatmul.f32.gmra.mxu0 %v567
    %v2137 = vpop.f32.mrf.mxu0
    %v2138 = vadd.f32 0.0, %v2137
    %2139 = vmatmul.f32.gmra.mxu0 %v569
    %v2140 = vpop.f32.mrf.mxu0
    %v2141 = vadd.f32 0.0, %v2140
    %2142 = vmatmul.f32.gmra.mxu0 %v571
    %v2143 = vpop.f32.mrf.mxu0
    %v2144 = vadd.f32 0.0, %v2143
    %2145 = vmatmul.f32.gmra.mxu0 %v573
    %v2146 = vpop.f32.mrf.mxu0
    %v2147 = vadd.f32 0.0, %v2146
    %2148 = vmatmul.f32.gmra.mxu0 %v575
    %v2149 = vpop.f32.mrf.mxu0
    %v2150 = vadd.f32 0.0, %v2149
    %2151 = vmatmul.f32.gmra.mxu0 %v577
    %v2152 = vpop.f32.mrf.mxu0
    %v2153 = vadd.f32 0.0, %v2152
    %2154 = vmatmul.f32.gmra.mxu0 %v579
    %v2155 = vpop.f32.mrf.mxu0
    %v2156 = vadd.f32 0.0, %v2155
    %2157 = vmatmul.f32.gmra.mxu0 %v581
    %v2158 = vpop.f32.mrf.mxu0
    %v2159 = vadd.f32 0.0, %v2158
    %2160 = vmatmul.f32.gmra.mxu0 %v583
    %v2161 = vpop.f32.mrf.mxu0
    %v2162 = vadd.f32 0.0, %v2161
    %2163 = vmatmul.f32.gmra.mxu0 %v585
    %v2164 = vpop.f32.mrf.mxu0
    %v2165 = vadd.f32 0.0, %v2164
    %2166 = vmatmul.f32.gmra.mxu0 %v587
    %v2167 = vpop.f32.mrf.mxu0
    %v2168 = vadd.f32 0.0, %v2167
    %2169 = vmatmul.f32.gmra.mxu0 %v589
    %v2170 = vpop.f32.mrf.mxu0
    %v2171 = vadd.f32 0.0, %v2170
    %2172 = vmatmul.f32.gmra.mxu0 %v591
    %v2173 = vpop.f32.mrf.mxu0
    %v2174 = vadd.f32 0.0, %v2173
    %2175 = vmatmul.f32.gmra.mxu0 %v593
    %v2176 = vpop.f32.mrf.mxu0
    %v2177 = vadd.f32 0.0, %v2176
    %2178 = vmatmul.f32.gmra.mxu0 %v595
    %v2179 = vpop.f32.mrf.mxu0
    %v2180 = vadd.f32 0.0, %v2179
    %2181 = vmatmul.f32.gmra.mxu0 %v597
    %v2182 = vpop.f32.mrf.mxu0
    %v2183 = vadd.f32 0.0, %v2182
    %2184 = vmatmul.f32.gmra.mxu0 %v599
    %v2185 = vpop.f32.mrf.mxu0
    %v2186 = vadd.f32 0.0, %v2185
    %2187 = vmatmul.f32.gmra.mxu0 %v601
    %v2188 = vpop.f32.mrf.mxu0
    %v2189 = vadd.f32 0.0, %v2188
    %2190 = vmatmul.f32.gmra.mxu0 %v603
    %v2191 = vpop.f32.mrf.mxu0
    %v2192 = vadd.f32 0.0, %v2191
    %2193 = vmatmul.f32.gmra.mxu0 %v605
    %v2194 = vpop.f32.mrf.mxu0
    %v2195 = vadd.f32 0.0, %v2194
    %2196 = vmatmul.f32.gmra.mxu0 %v607
    %v2197 = vpop.f32.mrf.mxu0
    %v2198 = vadd.f32 0.0, %v2197
    %2199 = vmatmul.f32.gmra.mxu0 %v609
    %v2200 = vpop.f32.mrf.mxu0
    %v2201 = vadd.f32 0.0, %v2200
    %2202 = vmatmul.f32.gmra.mxu0 %v611
    %v2203 = vpop.f32.mrf.mxu0
    %v2204 = vadd.f32 0.0, %v2203
    %2205 = vmatmul.f32.gmra.mxu0 %v613
    %v2206 = vpop.f32.mrf.mxu0
    %v2207 = vadd.f32 0.0, %v2206
    %2208 = vmatmul.f32.gmra.mxu0 %v615
    %v2209 = vpop.f32.mrf.mxu0
    %v2210 = vadd.f32 0.0, %v2209
    %2211 = vmatmul.f32.gmra.mxu0 %v617
    %v2212 = vpop.f32.mrf.mxu0
    %v2213 = vadd.f32 0.0, %v2212
    %2214 = vmatmul.f32.gmra.mxu0 %v619
    %v2215 = vpop.f32.mrf.mxu0
    %v2216 = vadd.f32 0.0, %v2215
    %2217 = vmatmul.f32.gmra.mxu0 %v621
    %v2218 = vpop.f32.mrf.mxu0
    %v2219 = vadd.f32 0.0, %v2218
    %2220 = vmatmul.f32.gmra.mxu0 %v623
    %v2221 = vpop.f32.mrf.mxu0
    %v2222 = vadd.f32 0.0, %v2221
    %2223 = vmatmul.f32.gmra.mxu0 %v625
    %v2224 = vpop.f32.mrf.mxu0
    %v2225 = vadd.f32 0.0, %v2224
    %2226 = vmatmul.f32.gmra.mxu0 %v2109
    %v2227 = vpop.f32.mrf.mxu0
    %v2228 = vadd.f32 0.0, %v2227
    %2229 = vmatmul.f32.gmra.mxu0 %v2111
    %v2230 = vpop.f32.mrf.mxu0
    %v2231 = vadd.f32 0.0, %v2230
    %2232 = vmatmul.f32.gmra.mxu0 %v631
    %v2233 = vpop.f32.mrf.mxu0
    %v2234 = vadd.f32 0.0, %v2233
    %2235 = vmatmul.f32.gmra.mxu0 %v633
    %v2236 = vpop.f32.mrf.mxu0
    %v2237 = vadd.f32 0.0, %v2236
    %2238 = vmatmul.f32.gmra.mxu0 %v635
    %v2239 = vpop.f32.mrf.mxu0
    %v2240 = vadd.f32 0.0, %v2239
    %2241 = vmatmul.f32.gmra.mxu0 %v637
    %v2242 = vpop.f32.mrf.mxu0
    %v2243 = vadd.f32 0.0, %v2242
    %2244 = vmatmul.f32.gmra.mxu0 %v639
    %v2245 = vpop.f32.mrf.mxu0
    %v2246 = vadd.f32 0.0, %v2245
    %2247 = vmatmul.f32.gmra.mxu0 %v641
    %v2248 = vpop.f32.mrf.mxu0
    %v2249 = vadd.f32 0.0, %v2248
    %2250 = vmatmul.f32.gmra.mxu0 %v643
    %v2251 = vpop.f32.mrf.mxu0
    %v2252 = vadd.f32 0.0, %v2251
    %2253 = vmatmul.f32.gmra.mxu0 %v645
    %v2254 = vpop.f32.mrf.mxu0
    %v2255 = vadd.f32 0.0, %v2254
    %2256 = vmatmul.f32.gmra.mxu0 %v647
    %v2257 = vpop.f32.mrf.mxu0
    %v2258 = vadd.f32 0.0, %v2257
    %2259 = vmatmul.f32.gmra.mxu0 %v649
    %v2260 = vpop.f32.mrf.mxu0
    %v2261 = vadd.f32 0.0, %v2260
    %2262 = vmatmul.f32.gmra.mxu0 %v651
    %v2263 = vpop.f32.mrf.mxu0
    %v2264 = vadd.f32 0.0, %v2263
    %2265 = vmatmul.f32.gmra.mxu0 %v653
    %v2266 = vpop.f32.mrf.mxu0
    %v2267 = vadd.f32 0.0, %v2266
    %2268 = vmatmul.f32.gmra.mxu0 %v655
    %v2269 = vpop.f32.mrf.mxu0
    %v2270 = vadd.f32 0.0, %v2269
    %2271 = vmatmul.f32.gmra.mxu0 %v657
    %v2272 = vpop.f32.mrf.mxu0
    %v2273 = vadd.f32 0.0, %v2272
    %2274 = vmatmul.f32.gmra.mxu0 %v659
    %v2275 = vpop.f32.mrf.mxu0
    %v2276 = vadd.f32 0.0, %v2275
    %2277 = vmatmul.f32.gmra.mxu0 %v661
    %v2278 = vpop.f32.mrf.mxu0
    %v2279 = vadd.f32 0.0, %v2278
    %2280 = vmatmul.f32.gmra.mxu0 %v663
    %v2281 = vpop.f32.mrf.mxu0
    %v2282 = vadd.f32 0.0, %v2281
    %2283 = vmatmul.f32.gmra.mxu0 %v665
    %v2284 = vpop.f32.mrf.mxu0
    %v2285 = vadd.f32 0.0, %v2284
    %2286 = vmatmul.f32.gmra.mxu0 %v667
    %v2287 = vpop.f32.mrf.mxu0
    %v2288 = vadd.f32 0.0, %v2287
    %2289 = vmatmul.f32.gmra.mxu0 %v669
    %v2290 = vpop.f32.mrf.mxu0
    %v2291 = vadd.f32 0.0, %v2290
    %2292 = vmatmul.f32.gmra.mxu0 %v671
    %v2293 = vpop.f32.mrf.mxu0
    %v2294 = vadd.f32 0.0, %v2293
    %2295 = vmatmul.f32.gmra.mxu0 %v673
    %v2296 = vpop.f32.mrf.mxu0
    %v2297 = vadd.f32 0.0, %v2296
    %2298 = vmatmul.f32.gmra.mxu0 %v675
    %v2299 = vpop.f32.mrf.mxu0
    %v2300 = vadd.f32 0.0, %v2299
    %2301 = vmatmul.f32.gmra.mxu0 %v677
    %v2302 = vpop.f32.mrf.mxu0
    %v2303 = vadd.f32 0.0, %v2302
    %2304 = vmatmul.f32.gmra.mxu0 %v679
    %v2305 = vpop.f32.mrf.mxu0
    %v2306 = vadd.f32 0.0, %v2305
    %2307 = vmatmul.f32.gmra.mxu0 %v681
    %v2308 = vpop.f32.mrf.mxu0
    %v2309 = vadd.f32 0.0, %v2308
    %2310 = vmatmul.f32.gmra.mxu0 %v683
    %v2311 = vpop.f32.mrf.mxu0
    %v2312 = vadd.f32 0.0, %v2311
    %2313 = vmatmul.f32.gmra.mxu0 %v685
    %v2314 = vpop.f32.mrf.mxu0
    %v2315 = vadd.f32 0.0, %v2314
    %2316 = vmatmul.f32.gmra.mxu0 %v687
    %v2317 = vpop.f32.mrf.mxu0
    %v2318 = vadd.f32 0.0, %v2317
    %2319 = vmatmul.f32.gmra.mxu0 %v689
    %v2320 = vpop.f32.mrf.mxu0
    %v2321 = vadd.f32 0.0, %v2320
    %2322 = vmatmul.f32.gmra.mxu0 %v2113
    %v2323 = vpop.f32.mrf.mxu0
    %v2324 = vadd.f32 0.0, %v2323
    %2325 = vmatmul.f32.gmra.mxu0 %v2115
    %v2326 = vpop.f32.mrf.mxu0
    %v2327 = vadd.f32 0.0, %v2326
    %2328 = vdwg.mxu0
    %v2329 = vadd.f32 %v2033, %v2138
    %v2330 = vadd.f32 %v2034, %v2141
    %v2331 = vadd.f32 %v2035, %v2144
    %v2332 = vadd.f32 %v2036, %v2147
    %v2333 = vadd.f32 %v2037, %v2150
    %v2334 = vadd.f32 %v2038, %v2153
    %v2335 = vadd.f32 %v2039, %v2156
    %v2336 = vadd.f32 %v2040, %v2159
    %v2337 = vadd.f32 %v2041, %v2162
    %v2338 = vadd.f32 %v2042, %v2165
    %v2339 = vadd.f32 %v2043, %v2168
    %v2340 = vadd.f32 %v2044, %v2171
    %v2341 = vadd.f32 %v2045, %v2174
    %v2342 = vadd.f32 %v2046, %v2177
    %v2343 = vadd.f32 %v2047, %v2180
    %v2344 = vadd.f32 %v2048, %v2183
    %v2345 = vadd.f32 %v2049, %v2186
    %v2346 = vadd.f32 %v2050, %v2189
    %v2347 = vadd.f32 %v2051, %v2192
    %v2348 = vadd.f32 %v2052, %v2195
    %v2349 = vadd.f32 %v2053, %v2198
    %v2350 = vadd.f32 %v2054, %v2201
    %v2351 = vadd.f32 %v2055, %v2204
    %v2352 = vadd.f32 %v2056, %v2207
    %v2353 = vadd.f32 %v2057, %v2210
    %v2354 = vadd.f32 %v2058, %v2213
    %v2355 = vadd.f32 %v2059, %v2216
    %v2356 = vadd.f32 %v2060, %v2219
    %v2357 = vadd.f32 %v2061, %v2222
    %v2358 = vadd.f32 %v2062, %v2225
    %v2359 = vadd.f32 %v2063, %v2228
    %v2360 = vadd.f32 %v2064, %v2231
    %v2361 = vadd.f32 %v2065, %v2234
    %v2362 = vadd.f32 %v2066, %v2237
    %v2363 = vadd.f32 %v2067, %v2240
    %v2364 = vadd.f32 %v2068, %v2243
    %v2365 = vadd.f32 %v2069, %v2246
    %v2366 = vadd.f32 %v2070, %v2249
    %v2367 = vadd.f32 %v2071, %v2252
    %v2368 = vadd.f32 %v2072, %v2255
    %v2369 = vadd.f32 %v2073, %v2258
    %v2370 = vadd.f32 %v2074, %v2261
    %v2371 = vadd.f32 %v2075, %v2264
    %v2372 = vadd.f32 %v2076, %v2267
    %v2373 = vadd.f32 %v2077, %v2270
    %v2374 = vadd.f32 %v2078, %v2273
    %v2375 = vadd.f32 %v2079, %v2276
    %v2376 = vadd.f32 %v2080, %v2279
    %v2377 = vadd.f32 %v2081, %v2282
    %v2378 = vadd.f32 %v2082, %v2285
    %v2379 = vadd.f32 %v2083, %v2288
    %v2380 = vadd.f32 %v2084, %v2291
    %v2381 = vadd.f32 %v2085, %v2294
    %v2382 = vadd.f32 %v2086, %v2297
    %v2383 = vadd.f32 %v2087, %v2300
    %v2384 = vadd.f32 %v2088, %v2303
    %v2385 = vadd.f32 %v2089, %v2306
    %v2386 = vadd.f32 %v2090, %v2309
    %v2387 = vadd.f32 %v2091, %v2312
    %v2388 = vadd.f32 %v2092, %v2315
    %v2389 = vadd.f32 %v2093, %v2318
    %v2390 = vadd.f32 %v2094, %v2321
    %v2391 = vadd.f32 %v2095, %v2324
    %v2392 = vadd.f32 %v2096, %v2327
    %v2393 = vrot.slane %v236, 2
    %v2394 = vrot.slane %v237, 2
    %v2395 = vsel %vm1244, %v2393, %v2394
    %v2396 = vrot.slane %v238, 2
    %v2397 = vsel %vm1244, %v2394, %v2396
    %v2398 = vrot.slane %v290, 2
    %v2399 = vrot.slane %v291, 2
    %v2400 = vsel %vm1244, %v2398, %v2399
    %v2401 = vrot.slane %v292, 2
    %v2402 = vsel %vm1244, %v2399, %v2401
    %v2403 = vsel %vm562, %v2395, 0
    %v2405 = vsel %vm562, %v2397, 0
    %v2407 = vsel %vm562, %v2400, 0
    %v2409 = vsel %vm562, %v2402, 0
    %v2412 = vsel %vm691, %v301, 0
    %2414 = vmatpush.msra.mxu0 0.0
    %2415 = vmatpush.msra.mxu0 0.0
    %2416 = vmatpush.msra.mxu0 0.0
    %2417 = vmatpush.msra.mxu0 0.0
    %2418 = vmatpush.msra.mxu0 0.0
    %2419 = vmatpush.msra.mxu0 0.0
    %2420 = vmatpush.msra.mxu0 0.0
    %2421 = vmatpush.msra.mxu0 0.0
    %2422 = vmatpush.msra.mxu0 0.0
    %2423 = vmatpush.msra.mxu0 0.0
    %2424 = vmatpush.msra.mxu0 0.0
    %2425 = vmatpush.msra.mxu0 0.0
    %2426 = vmatpush.msra.mxu0 0.0
    %2427 = vmatpush.msra.mxu0 0.0
    %2428 = vmatpush.msra.mxu0 0.0
    %2429 = vmatpush.msra.mxu0 %v2412
    %2430 = vmatmul.f32.gmra.mxu0 %v1409
    %v2431 = vpop.f32.mrf.mxu0
    %v2432 = vadd.f32 0.0, %v2431
    %2433 = vmatmul.f32.gmra.mxu0 %v1411
    %v2434 = vpop.f32.mrf.mxu0
    %v2435 = vadd.f32 0.0, %v2434
    %2436 = vmatmul.f32.gmra.mxu0 %v1413
    %v2437 = vpop.f32.mrf.mxu0
    %v2438 = vadd.f32 0.0, %v2437
    %2439 = vmatmul.f32.gmra.mxu0 %v1415
    %v2440 = vpop.f32.mrf.mxu0
    %v2441 = vadd.f32 0.0, %v2440
    %2442 = vmatmul.f32.gmra.mxu0 %v1417
    %v2443 = vpop.f32.mrf.mxu0
    %v2444 = vadd.f32 0.0, %v2443
    %2445 = vmatmul.f32.gmra.mxu0 %v1419
    %v2446 = vpop.f32.mrf.mxu0
    %v2447 = vadd.f32 0.0, %v2446
    %2448 = vmatmul.f32.gmra.mxu0 %v1421
    %v2449 = vpop.f32.mrf.mxu0
    %v2450 = vadd.f32 0.0, %v2449
    %2451 = vmatmul.f32.gmra.mxu0 %v1423
    %v2452 = vpop.f32.mrf.mxu0
    %v2453 = vadd.f32 0.0, %v2452
    %2454 = vmatmul.f32.gmra.mxu0 %v1425
    %v2455 = vpop.f32.mrf.mxu0
    %v2456 = vadd.f32 0.0, %v2455
    %2457 = vmatmul.f32.gmra.mxu0 %v1427
    %v2458 = vpop.f32.mrf.mxu0
    %v2459 = vadd.f32 0.0, %v2458
    %2460 = vmatmul.f32.gmra.mxu0 %v1429
    %v2461 = vpop.f32.mrf.mxu0
    %v2462 = vadd.f32 0.0, %v2461
    %2463 = vmatmul.f32.gmra.mxu0 %v1431
    %v2464 = vpop.f32.mrf.mxu0
    %v2465 = vadd.f32 0.0, %v2464
    %2466 = vmatmul.f32.gmra.mxu0 %v1433
    %v2467 = vpop.f32.mrf.mxu0
    %v2468 = vadd.f32 0.0, %v2467
    %2469 = vmatmul.f32.gmra.mxu0 %v1435
    %v2470 = vpop.f32.mrf.mxu0
    %v2471 = vadd.f32 0.0, %v2470
    %2472 = vmatmul.f32.gmra.mxu0 %v1437
    %v2473 = vpop.f32.mrf.mxu0
    %v2474 = vadd.f32 0.0, %v2473
    %2475 = vmatmul.f32.gmra.mxu0 %v1439
    %v2476 = vpop.f32.mrf.mxu0
    %v2477 = vadd.f32 0.0, %v2476
    %2478 = vmatmul.f32.gmra.mxu0 %v1441
    %v2479 = vpop.f32.mrf.mxu0
    %v2480 = vadd.f32 0.0, %v2479
    %2481 = vmatmul.f32.gmra.mxu0 %v1443
    %v2482 = vpop.f32.mrf.mxu0
    %v2483 = vadd.f32 0.0, %v2482
    %2484 = vmatmul.f32.gmra.mxu0 %v1445
    %v2485 = vpop.f32.mrf.mxu0
    %v2486 = vadd.f32 0.0, %v2485
    %2487 = vmatmul.f32.gmra.mxu0 %v1447
    %v2488 = vpop.f32.mrf.mxu0
    %v2489 = vadd.f32 0.0, %v2488
    %2490 = vmatmul.f32.gmra.mxu0 %v1449
    %v2491 = vpop.f32.mrf.mxu0
    %v2492 = vadd.f32 0.0, %v2491
    %2493 = vmatmul.f32.gmra.mxu0 %v1451
    %v2494 = vpop.f32.mrf.mxu0
    %v2495 = vadd.f32 0.0, %v2494
    %2496 = vmatmul.f32.gmra.mxu0 %v1453
    %v2497 = vpop.f32.mrf.mxu0
    %v2498 = vadd.f32 0.0, %v2497
    %2499 = vmatmul.f32.gmra.mxu0 %v1455
    %v2500 = vpop.f32.mrf.mxu0
    %v2501 = vadd.f32 0.0, %v2500
    %2502 = vmatmul.f32.gmra.mxu0 %v1457
    %v2503 = vpop.f32.mrf.mxu0
    %v2504 = vadd.f32 0.0, %v2503
    %2505 = vmatmul.f32.gmra.mxu0 %v1459
    %v2506 = vpop.f32.mrf.mxu0
    %v2507 = vadd.f32 0.0, %v2506
    %2508 = vmatmul.f32.gmra.mxu0 %v1461
    %v2509 = vpop.f32.mrf.mxu0
    %v2510 = vadd.f32 0.0, %v2509
    %2511 = vmatmul.f32.gmra.mxu0 %v1463
    %v2512 = vpop.f32.mrf.mxu0
    %v2513 = vadd.f32 0.0, %v2512
    %2514 = vmatmul.f32.gmra.mxu0 %v1465
    %v2515 = vpop.f32.mrf.mxu0
    %v2516 = vadd.f32 0.0, %v2515
    %2517 = vmatmul.f32.gmra.mxu0 %v1467
    %v2518 = vpop.f32.mrf.mxu0
    %v2519 = vadd.f32 0.0, %v2518
    %2520 = vmatmul.f32.gmra.mxu0 %v2403
    %v2521 = vpop.f32.mrf.mxu0
    %v2522 = vadd.f32 0.0, %v2521
    %2523 = vmatmul.f32.gmra.mxu0 %v2405
    %v2524 = vpop.f32.mrf.mxu0
    %v2525 = vadd.f32 0.0, %v2524
    %2526 = vmatmul.f32.gmra.mxu0 %v1473
    %v2527 = vpop.f32.mrf.mxu0
    %v2528 = vadd.f32 0.0, %v2527
    %2529 = vmatmul.f32.gmra.mxu0 %v1475
    %v2530 = vpop.f32.mrf.mxu0
    %v2531 = vadd.f32 0.0, %v2530
    %2532 = vmatmul.f32.gmra.mxu0 %v1477
    %v2533 = vpop.f32.mrf.mxu0
    %v2534 = vadd.f32 0.0, %v2533
    %2535 = vmatmul.f32.gmra.mxu0 %v1479
    %v2536 = vpop.f32.mrf.mxu0
    %v2537 = vadd.f32 0.0, %v2536
    %2538 = vmatmul.f32.gmra.mxu0 %v1481
    %v2539 = vpop.f32.mrf.mxu0
    %v2540 = vadd.f32 0.0, %v2539
    %2541 = vmatmul.f32.gmra.mxu0 %v1483
    %v2542 = vpop.f32.mrf.mxu0
    %v2543 = vadd.f32 0.0, %v2542
    %2544 = vmatmul.f32.gmra.mxu0 %v1485
    %v2545 = vpop.f32.mrf.mxu0
    %v2546 = vadd.f32 0.0, %v2545
    %2547 = vmatmul.f32.gmra.mxu0 %v1487
    %v2548 = vpop.f32.mrf.mxu0
    %v2549 = vadd.f32 0.0, %v2548
    %2550 = vmatmul.f32.gmra.mxu0 %v1489
    %v2551 = vpop.f32.mrf.mxu0
    %v2552 = vadd.f32 0.0, %v2551
    %2553 = vmatmul.f32.gmra.mxu0 %v1491
    %v2554 = vpop.f32.mrf.mxu0
    %v2555 = vadd.f32 0.0, %v2554
    %2556 = vmatmul.f32.gmra.mxu0 %v1493
    %v2557 = vpop.f32.mrf.mxu0
    %v2558 = vadd.f32 0.0, %v2557
    %2559 = vmatmul.f32.gmra.mxu0 %v1495
    %v2560 = vpop.f32.mrf.mxu0
    %v2561 = vadd.f32 0.0, %v2560
    %2562 = vmatmul.f32.gmra.mxu0 %v1497
    %v2563 = vpop.f32.mrf.mxu0
    %v2564 = vadd.f32 0.0, %v2563
    %2565 = vmatmul.f32.gmra.mxu0 %v1499
    %v2566 = vpop.f32.mrf.mxu0
    %v2567 = vadd.f32 0.0, %v2566
    %2568 = vmatmul.f32.gmra.mxu0 %v1501
    %v2569 = vpop.f32.mrf.mxu0
    %v2570 = vadd.f32 0.0, %v2569
    %2571 = vmatmul.f32.gmra.mxu0 %v1503
    %v2572 = vpop.f32.mrf.mxu0
    %v2573 = vadd.f32 0.0, %v2572
    %2574 = vmatmul.f32.gmra.mxu0 %v1505
    %v2575 = vpop.f32.mrf.mxu0
    %v2576 = vadd.f32 0.0, %v2575
    %2577 = vmatmul.f32.gmra.mxu0 %v1507
    %v2578 = vpop.f32.mrf.mxu0
    %v2579 = vadd.f32 0.0, %v2578
    %2580 = vmatmul.f32.gmra.mxu0 %v1509
    %v2581 = vpop.f32.mrf.mxu0
    %v2582 = vadd.f32 0.0, %v2581
    %2583 = vmatmul.f32.gmra.mxu0 %v1511
    %v2584 = vpop.f32.mrf.mxu0
    %v2585 = vadd.f32 0.0, %v2584
    %2586 = vmatmul.f32.gmra.mxu0 %v1513
    %v2587 = vpop.f32.mrf.mxu0
    %v2588 = vadd.f32 0.0, %v2587
    %2589 = vmatmul.f32.gmra.mxu0 %v1515
    %v2590 = vpop.f32.mrf.mxu0
    %v2591 = vadd.f32 0.0, %v2590
    %2592 = vmatmul.f32.gmra.mxu0 %v1517
    %v2593 = vpop.f32.mrf.mxu0
    %v2594 = vadd.f32 0.0, %v2593
    %2595 = vmatmul.f32.gmra.mxu0 %v1519
    %v2596 = vpop.f32.mrf.mxu0
    %v2597 = vadd.f32 0.0, %v2596
    %2598 = vmatmul.f32.gmra.mxu0 %v1521
    %v2599 = vpop.f32.mrf.mxu0
    %v2600 = vadd.f32 0.0, %v2599
    %2601 = vmatmul.f32.gmra.mxu0 %v1523
    %v2602 = vpop.f32.mrf.mxu0
    %v2603 = vadd.f32 0.0, %v2602
    %2604 = vmatmul.f32.gmra.mxu0 %v1525
    %v2605 = vpop.f32.mrf.mxu0
    %v2606 = vadd.f32 0.0, %v2605
    %2607 = vmatmul.f32.gmra.mxu0 %v1527
    %v2608 = vpop.f32.mrf.mxu0
    %v2609 = vadd.f32 0.0, %v2608
    %2610 = vmatmul.f32.gmra.mxu0 %v1529
    %v2611 = vpop.f32.mrf.mxu0
    %v2612 = vadd.f32 0.0, %v2611
    %2613 = vmatmul.f32.gmra.mxu0 %v1531
    %v2614 = vpop.f32.mrf.mxu0
    %v2615 = vadd.f32 0.0, %v2614
    %2616 = vmatmul.f32.gmra.mxu0 %v2407
    %v2617 = vpop.f32.mrf.mxu0
    %v2618 = vadd.f32 0.0, %v2617
    %2619 = vmatmul.f32.gmra.mxu0 %v2409
    %v2620 = vpop.f32.mrf.mxu0
    %v2621 = vadd.f32 0.0, %v2620
    %2622 = vdwg.mxu0
    %v2623 = vadd.f32 %v2329, %v2432
    %v2624 = vadd.f32 %v2330, %v2435
    %v2625 = vadd.f32 %v2331, %v2438
    %v2626 = vadd.f32 %v2332, %v2441
    %v2627 = vadd.f32 %v2333, %v2444
    %v2628 = vadd.f32 %v2334, %v2447
    %v2629 = vadd.f32 %v2335, %v2450
    %v2630 = vadd.f32 %v2336, %v2453
    %v2631 = vadd.f32 %v2337, %v2456
    %v2632 = vadd.f32 %v2338, %v2459
    %v2633 = vadd.f32 %v2339, %v2462
    %v2634 = vadd.f32 %v2340, %v2465
    %v2635 = vadd.f32 %v2341, %v2468
    %v2636 = vadd.f32 %v2342, %v2471
    %v2637 = vadd.f32 %v2343, %v2474
    %v2638 = vadd.f32 %v2344, %v2477
    %v2639 = vadd.f32 %v2345, %v2480
    %v2640 = vadd.f32 %v2346, %v2483
    %v2641 = vadd.f32 %v2347, %v2486
    %v2642 = vadd.f32 %v2348, %v2489
    %v2643 = vadd.f32 %v2349, %v2492
    %v2644 = vadd.f32 %v2350, %v2495
    %v2645 = vadd.f32 %v2351, %v2498
    %v2646 = vadd.f32 %v2352, %v2501
    %v2647 = vadd.f32 %v2353, %v2504
    %v2648 = vadd.f32 %v2354, %v2507
    %v2649 = vadd.f32 %v2355, %v2510
    %v2650 = vadd.f32 %v2356, %v2513
    %v2651 = vadd.f32 %v2357, %v2516
    %v2652 = vadd.f32 %v2358, %v2519
    %v2653 = vadd.f32 %v2359, %v2522
    %v2654 = vadd.f32 %v2360, %v2525
    %v2655 = vadd.f32 %v2361, %v2528
    %v2656 = vadd.f32 %v2362, %v2531
    %v2657 = vadd.f32 %v2363, %v2534
    %v2658 = vadd.f32 %v2364, %v2537
    %v2659 = vadd.f32 %v2365, %v2540
    %v2660 = vadd.f32 %v2366, %v2543
    %v2661 = vadd.f32 %v2367, %v2546
    %v2662 = vadd.f32 %v2368, %v2549
    %v2663 = vadd.f32 %v2369, %v2552
    %v2664 = vadd.f32 %v2370, %v2555
    %v2665 = vadd.f32 %v2371, %v2558
    %v2666 = vadd.f32 %v2372, %v2561
    %v2667 = vadd.f32 %v2373, %v2564
    %v2668 = vadd.f32 %v2374, %v2567
    %v2669 = vadd.f32 %v2375, %v2570
    %v2670 = vadd.f32 %v2376, %v2573
    %v2671 = vadd.f32 %v2377, %v2576
    %v2672 = vadd.f32 %v2378, %v2579
    %v2673 = vadd.f32 %v2379, %v2582
    %v2674 = vadd.f32 %v2380, %v2585
    %v2675 = vadd.f32 %v2381, %v2588
    %v2676 = vadd.f32 %v2382, %v2591
    %v2677 = vadd.f32 %v2383, %v2594
    %v2678 = vadd.f32 %v2384, %v2597
    %v2679 = vadd.f32 %v2385, %v2600
    %v2680 = vadd.f32 %v2386, %v2603
    %v2681 = vadd.f32 %v2387, %v2606
    %v2682 = vadd.f32 %v2388, %v2609
    %v2683 = vadd.f32 %v2389, %v2612
    %v2684 = vadd.f32 %v2390, %v2615
    %v2685 = vadd.f32 %v2391, %v2618
    %v2686 = vadd.f32 %v2392, %v2621
    %v2688 = vsel %vm562, %v239, 0
    %v2691 = vsel %vm562, %v240, 0
    %v2694 = vsel %vm562, %v293, 0
    %v2697 = vsel %vm562, %v294, 0
    %v2700 = vsel %vm691, %v302, 0
    %2702 = vmatpush.msra.mxu0 0.0
    %2703 = vmatpush.msra.mxu0 0.0
    %2704 = vmatpush.msra.mxu0 0.0
    %2705 = vmatpush.msra.mxu0 0.0
    %2706 = vmatpush.msra.mxu0 0.0
    %2707 = vmatpush.msra.mxu0 0.0
    %2708 = vmatpush.msra.mxu0 0.0
    %2709 = vmatpush.msra.mxu0 0.0
    %2710 = vmatpush.msra.mxu0 0.0
    %2711 = vmatpush.msra.mxu0 0.0
    %2712 = vmatpush.msra.mxu0 0.0
    %2713 = vmatpush.msra.mxu0 0.0
    %2714 = vmatpush.msra.mxu0 0.0
    %2715 = vmatpush.msra.mxu0 0.0
    %2716 = vmatpush.msra.mxu0 0.0
    %2717 = vmatpush.msra.mxu0 %v2700
    %2718 = vmatmul.f32.gmra.mxu0 %v912
    %v2719 = vpop.f32.mrf.mxu0
    %v2720 = vadd.f32 0.0, %v2719
    %2721 = vmatmul.f32.gmra.mxu0 %v914
    %v2722 = vpop.f32.mrf.mxu0
    %v2723 = vadd.f32 0.0, %v2722
    %2724 = vmatmul.f32.gmra.mxu0 %v916
    %v2725 = vpop.f32.mrf.mxu0
    %v2726 = vadd.f32 0.0, %v2725
    %2727 = vmatmul.f32.gmra.mxu0 %v918
    %v2728 = vpop.f32.mrf.mxu0
    %v2729 = vadd.f32 0.0, %v2728
    %2730 = vmatmul.f32.gmra.mxu0 %v920
    %v2731 = vpop.f32.mrf.mxu0
    %v2732 = vadd.f32 0.0, %v2731
    %2733 = vmatmul.f32.gmra.mxu0 %v922
    %v2734 = vpop.f32.mrf.mxu0
    %v2735 = vadd.f32 0.0, %v2734
    %2736 = vmatmul.f32.gmra.mxu0 %v924
    %v2737 = vpop.f32.mrf.mxu0
    %v2738 = vadd.f32 0.0, %v2737
    %2739 = vmatmul.f32.gmra.mxu0 %v926
    %v2740 = vpop.f32.mrf.mxu0
    %v2741 = vadd.f32 0.0, %v2740
    %2742 = vmatmul.f32.gmra.mxu0 %v928
    %v2743 = vpop.f32.mrf.mxu0
    %v2744 = vadd.f32 0.0, %v2743
    %2745 = vmatmul.f32.gmra.mxu0 %v930
    %v2746 = vpop.f32.mrf.mxu0
    %v2747 = vadd.f32 0.0, %v2746
    %2748 = vmatmul.f32.gmra.mxu0 %v932
    %v2749 = vpop.f32.mrf.mxu0
    %v2750 = vadd.f32 0.0, %v2749
    %2751 = vmatmul.f32.gmra.mxu0 %v934
    %v2752 = vpop.f32.mrf.mxu0
    %v2753 = vadd.f32 0.0, %v2752
    %2754 = vmatmul.f32.gmra.mxu0 %v936
    %v2755 = vpop.f32.mrf.mxu0
    %v2756 = vadd.f32 0.0, %v2755
    %2757 = vmatmul.f32.gmra.mxu0 %v938
    %v2758 = vpop.f32.mrf.mxu0
    %v2759 = vadd.f32 0.0, %v2758
    %2760 = vmatmul.f32.gmra.mxu0 %v940
    %v2761 = vpop.f32.mrf.mxu0
    %v2762 = vadd.f32 0.0, %v2761
    %2763 = vmatmul.f32.gmra.mxu0 %v942
    %v2764 = vpop.f32.mrf.mxu0
    %v2765 = vadd.f32 0.0, %v2764
    %2766 = vmatmul.f32.gmra.mxu0 %v944
    %v2767 = vpop.f32.mrf.mxu0
    %v2768 = vadd.f32 0.0, %v2767
    %2769 = vmatmul.f32.gmra.mxu0 %v946
    %v2770 = vpop.f32.mrf.mxu0
    %v2771 = vadd.f32 0.0, %v2770
    %2772 = vmatmul.f32.gmra.mxu0 %v948
    %v2773 = vpop.f32.mrf.mxu0
    %v2774 = vadd.f32 0.0, %v2773
    %2775 = vmatmul.f32.gmra.mxu0 %v950
    %v2776 = vpop.f32.mrf.mxu0
    %v2777 = vadd.f32 0.0, %v2776
    %2778 = vmatmul.f32.gmra.mxu0 %v952
    %v2779 = vpop.f32.mrf.mxu0
    %v2780 = vadd.f32 0.0, %v2779
    %2781 = vmatmul.f32.gmra.mxu0 %v954
    %v2782 = vpop.f32.mrf.mxu0
    %v2783 = vadd.f32 0.0, %v2782
    %2784 = vmatmul.f32.gmra.mxu0 %v956
    %v2785 = vpop.f32.mrf.mxu0
    %v2786 = vadd.f32 0.0, %v2785
    %2787 = vmatmul.f32.gmra.mxu0 %v958
    %v2788 = vpop.f32.mrf.mxu0
    %v2789 = vadd.f32 0.0, %v2788
    %2790 = vmatmul.f32.gmra.mxu0 %v960
    %v2791 = vpop.f32.mrf.mxu0
    %v2792 = vadd.f32 0.0, %v2791
    %2793 = vmatmul.f32.gmra.mxu0 %v962
    %v2794 = vpop.f32.mrf.mxu0
    %v2795 = vadd.f32 0.0, %v2794
    %2796 = vmatmul.f32.gmra.mxu0 %v964
    %v2797 = vpop.f32.mrf.mxu0
    %v2798 = vadd.f32 0.0, %v2797
    %2799 = vmatmul.f32.gmra.mxu0 %v966
    %v2800 = vpop.f32.mrf.mxu0
    %v2801 = vadd.f32 0.0, %v2800
    %2802 = vmatmul.f32.gmra.mxu0 %v1810
    %v2803 = vpop.f32.mrf.mxu0
    %v2804 = vadd.f32 0.0, %v2803
    %2805 = vmatmul.f32.gmra.mxu0 %v1813
    %v2806 = vpop.f32.mrf.mxu0
    %v2807 = vadd.f32 0.0, %v2806
    %2808 = vmatmul.f32.gmra.mxu0 %v2688
    %v2809 = vpop.f32.mrf.mxu0
    %v2810 = vadd.f32 0.0, %v2809
    %2811 = vmatmul.f32.gmra.mxu0 %v2691
    %v2812 = vpop.f32.mrf.mxu0
    %v2813 = vadd.f32 0.0, %v2812
    %2814 = vmatmul.f32.gmra.mxu0 %v976
    %v2815 = vpop.f32.mrf.mxu0
    %v2816 = vadd.f32 0.0, %v2815
    %2817 = vmatmul.f32.gmra.mxu0 %v978
    %v2818 = vpop.f32.mrf.mxu0
    %v2819 = vadd.f32 0.0, %v2818
    %2820 = vmatmul.f32.gmra.mxu0 %v980
    %v2821 = vpop.f32.mrf.mxu0
    %v2822 = vadd.f32 0.0, %v2821
    %2823 = vmatmul.f32.gmra.mxu0 %v982
    %v2824 = vpop.f32.mrf.mxu0
    %v2825 = vadd.f32 0.0, %v2824
    %2826 = vmatmul.f32.gmra.mxu0 %v984
    %v2827 = vpop.f32.mrf.mxu0
    %v2828 = vadd.f32 0.0, %v2827
    %2829 = vmatmul.f32.gmra.mxu0 %v986
    %v2830 = vpop.f32.mrf.mxu0
    %v2831 = vadd.f32 0.0, %v2830
    %2832 = vmatmul.f32.gmra.mxu0 %v988
    %v2833 = vpop.f32.mrf.mxu0
    %v2834 = vadd.f32 0.0, %v2833
    %2835 = vmatmul.f32.gmra.mxu0 %v990
    %v2836 = vpop.f32.mrf.mxu0
    %v2837 = vadd.f32 0.0, %v2836
    %2838 = vmatmul.f32.gmra.mxu0 %v992
    %v2839 = vpop.f32.mrf.mxu0
    %v2840 = vadd.f32 0.0, %v2839
    %2841 = vmatmul.f32.gmra.mxu0 %v994
    %v2842 = vpop.f32.mrf.mxu0
    %v2843 = vadd.f32 0.0, %v2842
    %2844 = vmatmul.f32.gmra.mxu0 %v996
    %v2845 = vpop.f32.mrf.mxu0
    %v2846 = vadd.f32 0.0, %v2845
    %2847 = vmatmul.f32.gmra.mxu0 %v998
    %v2848 = vpop.f32.mrf.mxu0
    %v2849 = vadd.f32 0.0, %v2848
    %2850 = vmatmul.f32.gmra.mxu0 %v1000
    %v2851 = vpop.f32.mrf.mxu0
    %v2852 = vadd.f32 0.0, %v2851
    %2853 = vmatmul.f32.gmra.mxu0 %v1002
    %v2854 = vpop.f32.mrf.mxu0
    %v2855 = vadd.f32 0.0, %v2854
    %2856 = vmatmul.f32.gmra.mxu0 %v1004
    %v2857 = vpop.f32.mrf.mxu0
    %v2858 = vadd.f32 0.0, %v2857
    %2859 = vmatmul.f32.gmra.mxu0 %v1006
    %v2860 = vpop.f32.mrf.mxu0
    %v2861 = vadd.f32 0.0, %v2860
    %2862 = vmatmul.f32.gmra.mxu0 %v1008
    %v2863 = vpop.f32.mrf.mxu0
    %v2864 = vadd.f32 0.0, %v2863
    %2865 = vmatmul.f32.gmra.mxu0 %v1010
    %v2866 = vpop.f32.mrf.mxu0
    %v2867 = vadd.f32 0.0, %v2866
    %2868 = vmatmul.f32.gmra.mxu0 %v1012
    %v2869 = vpop.f32.mrf.mxu0
    %v2870 = vadd.f32 0.0, %v2869
    %2871 = vmatmul.f32.gmra.mxu0 %v1014
    %v2872 = vpop.f32.mrf.mxu0
    %v2873 = vadd.f32 0.0, %v2872
    %2874 = vmatmul.f32.gmra.mxu0 %v1016
    %v2875 = vpop.f32.mrf.mxu0
    %v2876 = vadd.f32 0.0, %v2875
    %2877 = vmatmul.f32.gmra.mxu0 %v1018
    %v2878 = vpop.f32.mrf.mxu0
    %v2879 = vadd.f32 0.0, %v2878
    %2880 = vmatmul.f32.gmra.mxu0 %v1020
    %v2881 = vpop.f32.mrf.mxu0
    %v2882 = vadd.f32 0.0, %v2881
    %2883 = vmatmul.f32.gmra.mxu0 %v1022
    %v2884 = vpop.f32.mrf.mxu0
    %v2885 = vadd.f32 0.0, %v2884
    %2886 = vmatmul.f32.gmra.mxu0 %v1024
    %v2887 = vpop.f32.mrf.mxu0
    %v2888 = vadd.f32 0.0, %v2887
    %2889 = vmatmul.f32.gmra.mxu0 %v1026
    %v2890 = vpop.f32.mrf.mxu0
    %v2891 = vadd.f32 0.0, %v2890
    %2892 = vmatmul.f32.gmra.mxu0 %v1028
    %v2893 = vpop.f32.mrf.mxu0
    %v2894 = vadd.f32 0.0, %v2893
    %2895 = vmatmul.f32.gmra.mxu0 %v1030
    %v2896 = vpop.f32.mrf.mxu0
    %v2897 = vadd.f32 0.0, %v2896
    %2898 = vmatmul.f32.gmra.mxu0 %v1816
    %v2899 = vpop.f32.mrf.mxu0
    %v2900 = vadd.f32 0.0, %v2899
    %2901 = vmatmul.f32.gmra.mxu0 %v1819
    %v2902 = vpop.f32.mrf.mxu0
    %v2903 = vadd.f32 0.0, %v2902
    %2904 = vmatmul.f32.gmra.mxu0 %v2694
    %v2905 = vpop.f32.mrf.mxu0
    %v2906 = vadd.f32 0.0, %v2905
    %2907 = vmatmul.f32.gmra.mxu0 %v2697
    %v2908 = vpop.f32.mrf.mxu0
    %v2909 = vadd.f32 0.0, %v2908
    %2910 = vdwg.mxu0
    %v2911 = vadd.f32 %v2623, %v2720
    %v2912 = vadd.f32 %v2624, %v2723
    %v2913 = vadd.f32 %v2625, %v2726
    %v2914 = vadd.f32 %v2626, %v2729
    %v2915 = vadd.f32 %v2627, %v2732
    %v2916 = vadd.f32 %v2628, %v2735
    %v2917 = vadd.f32 %v2629, %v2738
    %v2918 = vadd.f32 %v2630, %v2741
    %v2919 = vadd.f32 %v2631, %v2744
    %v2920 = vadd.f32 %v2632, %v2747
    %v2921 = vadd.f32 %v2633, %v2750
    %v2922 = vadd.f32 %v2634, %v2753
    %v2923 = vadd.f32 %v2635, %v2756
    %v2924 = vadd.f32 %v2636, %v2759
    %v2925 = vadd.f32 %v2637, %v2762
    %v2926 = vadd.f32 %v2638, %v2765
    %v2927 = vadd.f32 %v2639, %v2768
    %v2928 = vadd.f32 %v2640, %v2771
    %v2929 = vadd.f32 %v2641, %v2774
    %v2930 = vadd.f32 %v2642, %v2777
    %v2931 = vadd.f32 %v2643, %v2780
    %v2932 = vadd.f32 %v2644, %v2783
    %v2933 = vadd.f32 %v2645, %v2786
    %v2934 = vadd.f32 %v2646, %v2789
    %v2935 = vadd.f32 %v2647, %v2792
    %v2936 = vadd.f32 %v2648, %v2795
    %v2937 = vadd.f32 %v2649, %v2798
    %v2938 = vadd.f32 %v2650, %v2801
    %v2939 = vadd.f32 %v2651, %v2804
    %v2940 = vadd.f32 %v2652, %v2807
    %v2941 = vadd.f32 %v2653, %v2810
    %v2942 = vadd.f32 %v2654, %v2813
    %v2943 = vadd.f32 %v2655, %v2816
    %v2944 = vadd.f32 %v2656, %v2819
    %v2945 = vadd.f32 %v2657, %v2822
    %v2946 = vadd.f32 %v2658, %v2825
    %v2947 = vadd.f32 %v2659, %v2828
    %v2948 = vadd.f32 %v2660, %v2831
    %v2949 = vadd.f32 %v2661, %v2834
    %v2950 = vadd.f32 %v2662, %v2837
    %v2951 = vadd.f32 %v2663, %v2840
    %v2952 = vadd.f32 %v2664, %v2843
    %v2953 = vadd.f32 %v2665, %v2846
    %v2954 = vadd.f32 %v2666, %v2849
    %v2955 = vadd.f32 %v2667, %v2852
    %v2956 = vadd.f32 %v2668, %v2855
    %v2957 = vadd.f32 %v2669, %v2858
    %v2958 = vadd.f32 %v2670, %v2861
    %v2959 = vadd.f32 %v2671, %v2864
    %v2960 = vadd.f32 %v2672, %v2867
    %v2961 = vadd.f32 %v2673, %v2870
    %v2962 = vadd.f32 %v2674, %v2873
    %v2963 = vadd.f32 %v2675, %v2876
    %v2964 = vadd.f32 %v2676, %v2879
    %v2965 = vadd.f32 %v2677, %v2882
    %v2966 = vadd.f32 %v2678, %v2885
    %v2967 = vadd.f32 %v2679, %v2888
    %v2968 = vadd.f32 %v2680, %v2891
    %v2969 = vadd.f32 %v2681, %v2894
    %v2970 = vadd.f32 %v2682, %v2897
    %v2971 = vadd.f32 %v2683, %v2900
    %v2972 = vadd.f32 %v2684, %v2903
    %v2973 = vadd.f32 %v2685, %v2906
    %v2974 = vadd.f32 %v2686, %v2909
    %v2977 = vrot.slane %v239, 1
    %v2978 = vrot.slane %v240, 1
    %v2979 = vsel %vm401, %v2977, %v2978
    %v2980 = vrot.slane %v241, 1
    %v2981 = vsel %vm401, %v2978, %v2980
    %v2982 = vrot.slane %v293, 1
    %v2983 = vrot.slane %v294, 1
    %v2984 = vsel %vm401, %v2982, %v2983
    %v2985 = vrot.slane %v295, 1
    %v2986 = vsel %vm401, %v2983, %v2985
    %v2987 = vsel %vm562, %v2979, 0
    %v2989 = vsel %vm562, %v2981, 0
    %v2991 = vsel %vm562, %v2984, 0
    %v2993 = vsel %vm562, %v2986, 0
    %v2996 = vsel %vm691, %v303, 0
    %2998 = vmatpush.msra.mxu0 0.0
    %2999 = vmatpush.msra.mxu0 0.0
    %3000 = vmatpush.msra.mxu0 0.0
    %3001 = vmatpush.msra.mxu0 0.0
    %3002 = vmatpush.msra.mxu0 0.0
    %3003 = vmatpush.msra.mxu0 0.0
    %3004 = vmatpush.msra.mxu0 0.0
    %3005 = vmatpush.msra.mxu0 0.0
    %3006 = vmatpush.msra.mxu0 0.0
    %3007 = vmatpush.msra.mxu0 0.0
    %3008 = vmatpush.msra.mxu0 0.0
    %3009 = vmatpush.msra.mxu0 0.0
    %3010 = vmatpush.msra.mxu0 0.0
    %3011 = vmatpush.msra.mxu0 0.0
    %3012 = vmatpush.msra.mxu0 0.0
    %3013 = vmatpush.msra.mxu0 %v2996
    %3014 = vmatmul.f32.gmra.mxu0 %v571
    %v3015 = vpop.f32.mrf.mxu0
    %v3016 = vadd.f32 0.0, %v3015
    %3017 = vmatmul.f32.gmra.mxu0 %v573
    %v3018 = vpop.f32.mrf.mxu0
    %v3019 = vadd.f32 0.0, %v3018
    %3020 = vmatmul.f32.gmra.mxu0 %v575
    %v3021 = vpop.f32.mrf.mxu0
    %v3022 = vadd.f32 0.0, %v3021
    %3023 = vmatmul.f32.gmra.mxu0 %v577
    %v3024 = vpop.f32.mrf.mxu0
    %v3025 = vadd.f32 0.0, %v3024
    %3026 = vmatmul.f32.gmra.mxu0 %v579
    %v3027 = vpop.f32.mrf.mxu0
    %v3028 = vadd.f32 0.0, %v3027
    %3029 = vmatmul.f32.gmra.mxu0 %v581
    %v3030 = vpop.f32.mrf.mxu0
    %v3031 = vadd.f32 0.0, %v3030
    %3032 = vmatmul.f32.gmra.mxu0 %v583
    %v3033 = vpop.f32.mrf.mxu0
    %v3034 = vadd.f32 0.0, %v3033
    %3035 = vmatmul.f32.gmra.mxu0 %v585
    %v3036 = vpop.f32.mrf.mxu0
    %v3037 = vadd.f32 0.0, %v3036
    %3038 = vmatmul.f32.gmra.mxu0 %v587
    %v3039 = vpop.f32.mrf.mxu0
    %v3040 = vadd.f32 0.0, %v3039
    %3041 = vmatmul.f32.gmra.mxu0 %v589
    %v3042 = vpop.f32.mrf.mxu0
    %v3043 = vadd.f32 0.0, %v3042
    %3044 = vmatmul.f32.gmra.mxu0 %v591
    %v3045 = vpop.f32.mrf.mxu0
    %v3046 = vadd.f32 0.0, %v3045
    %3047 = vmatmul.f32.gmra.mxu0 %v593
    %v3048 = vpop.f32.mrf.mxu0
    %v3049 = vadd.f32 0.0, %v3048
    %3050 = vmatmul.f32.gmra.mxu0 %v595
    %v3051 = vpop.f32.mrf.mxu0
    %v3052 = vadd.f32 0.0, %v3051
    %3053 = vmatmul.f32.gmra.mxu0 %v597
    %v3054 = vpop.f32.mrf.mxu0
    %v3055 = vadd.f32 0.0, %v3054
    %3056 = vmatmul.f32.gmra.mxu0 %v599
    %v3057 = vpop.f32.mrf.mxu0
    %v3058 = vadd.f32 0.0, %v3057
    %3059 = vmatmul.f32.gmra.mxu0 %v601
    %v3060 = vpop.f32.mrf.mxu0
    %v3061 = vadd.f32 0.0, %v3060
    %3062 = vmatmul.f32.gmra.mxu0 %v603
    %v3063 = vpop.f32.mrf.mxu0
    %v3064 = vadd.f32 0.0, %v3063
    %3065 = vmatmul.f32.gmra.mxu0 %v605
    %v3066 = vpop.f32.mrf.mxu0
    %v3067 = vadd.f32 0.0, %v3066
    %3068 = vmatmul.f32.gmra.mxu0 %v607
    %v3069 = vpop.f32.mrf.mxu0
    %v3070 = vadd.f32 0.0, %v3069
    %3071 = vmatmul.f32.gmra.mxu0 %v609
    %v3072 = vpop.f32.mrf.mxu0
    %v3073 = vadd.f32 0.0, %v3072
    %3074 = vmatmul.f32.gmra.mxu0 %v611
    %v3075 = vpop.f32.mrf.mxu0
    %v3076 = vadd.f32 0.0, %v3075
    %3077 = vmatmul.f32.gmra.mxu0 %v613
    %v3078 = vpop.f32.mrf.mxu0
    %v3079 = vadd.f32 0.0, %v3078
    %3080 = vmatmul.f32.gmra.mxu0 %v615
    %v3081 = vpop.f32.mrf.mxu0
    %v3082 = vadd.f32 0.0, %v3081
    %3083 = vmatmul.f32.gmra.mxu0 %v617
    %v3084 = vpop.f32.mrf.mxu0
    %v3085 = vadd.f32 0.0, %v3084
    %3086 = vmatmul.f32.gmra.mxu0 %v619
    %v3087 = vpop.f32.mrf.mxu0
    %v3088 = vadd.f32 0.0, %v3087
    %3089 = vmatmul.f32.gmra.mxu0 %v621
    %v3090 = vpop.f32.mrf.mxu0
    %v3091 = vadd.f32 0.0, %v3090
    %3092 = vmatmul.f32.gmra.mxu0 %v623
    %v3093 = vpop.f32.mrf.mxu0
    %v3094 = vadd.f32 0.0, %v3093
    %3095 = vmatmul.f32.gmra.mxu0 %v625
    %v3096 = vpop.f32.mrf.mxu0
    %v3097 = vadd.f32 0.0, %v3096
    %3098 = vmatmul.f32.gmra.mxu0 %v2109
    %v3099 = vpop.f32.mrf.mxu0
    %v3100 = vadd.f32 0.0, %v3099
    %3101 = vmatmul.f32.gmra.mxu0 %v2111
    %v3102 = vpop.f32.mrf.mxu0
    %v3103 = vadd.f32 0.0, %v3102
    %3104 = vmatmul.f32.gmra.mxu0 %v2987
    %v3105 = vpop.f32.mrf.mxu0
    %v3106 = vadd.f32 0.0, %v3105
    %3107 = vmatmul.f32.gmra.mxu0 %v2989
    %v3108 = vpop.f32.mrf.mxu0
    %v3109 = vadd.f32 0.0, %v3108
    %3110 = vmatmul.f32.gmra.mxu0 %v635
    %v3111 = vpop.f32.mrf.mxu0
    %v3112 = vadd.f32 0.0, %v3111
    %3113 = vmatmul.f32.gmra.mxu0 %v637
    %v3114 = vpop.f32.mrf.mxu0
    %v3115 = vadd.f32 0.0, %v3114
    %3116 = vmatmul.f32.gmra.mxu0 %v639
    %v3117 = vpop.f32.mrf.mxu0
    %v3118 = vadd.f32 0.0, %v3117
    %3119 = vmatmul.f32.gmra.mxu0 %v641
    %v3120 = vpop.f32.mrf.mxu0
    %v3121 = vadd.f32 0.0, %v3120
    %3122 = vmatmul.f32.gmra.mxu0 %v643
    %v3123 = vpop.f32.mrf.mxu0
    %v3124 = vadd.f32 0.0, %v3123
    %3125 = vmatmul.f32.gmra.mxu0 %v645
    %v3126 = vpop.f32.mrf.mxu0
    %v3127 = vadd.f32 0.0, %v3126
    %3128 = vmatmul.f32.gmra.mxu0 %v647
    %v3129 = vpop.f32.mrf.mxu0
    %v3130 = vadd.f32 0.0, %v3129
    %3131 = vmatmul.f32.gmra.mxu0 %v649
    %v3132 = vpop.f32.mrf.mxu0
    %v3133 = vadd.f32 0.0, %v3132
    %3134 = vmatmul.f32.gmra.mxu0 %v651
    %v3135 = vpop.f32.mrf.mxu0
    %v3136 = vadd.f32 0.0, %v3135
    %3137 = vmatmul.f32.gmra.mxu0 %v653
    %v3138 = vpop.f32.mrf.mxu0
    %v3139 = vadd.f32 0.0, %v3138
    %3140 = vmatmul.f32.gmra.mxu0 %v655
    %v3141 = vpop.f32.mrf.mxu0
    %v3142 = vadd.f32 0.0, %v3141
    %3143 = vmatmul.f32.gmra.mxu0 %v657
    %v3144 = vpop.f32.mrf.mxu0
    %v3145 = vadd.f32 0.0, %v3144
    %3146 = vmatmul.f32.gmra.mxu0 %v659
    %v3147 = vpop.f32.mrf.mxu0
    %v3148 = vadd.f32 0.0, %v3147
    %3149 = vmatmul.f32.gmra.mxu0 %v661
    %v3150 = vpop.f32.mrf.mxu0
    %v3151 = vadd.f32 0.0, %v3150
    %3152 = vmatmul.f32.gmra.mxu0 %v663
    %v3153 = vpop.f32.mrf.mxu0
    %v3154 = vadd.f32 0.0, %v3153
    %3155 = vmatmul.f32.gmra.mxu0 %v665
    %v3156 = vpop.f32.mrf.mxu0
    %v3157 = vadd.f32 0.0, %v3156
    %3158 = vmatmul.f32.gmra.mxu0 %v667
    %v3159 = vpop.f32.mrf.mxu0
    %v3160 = vadd.f32 0.0, %v3159
    %3161 = vmatmul.f32.gmra.mxu0 %v669
    %v3162 = vpop.f32.mrf.mxu0
    %v3163 = vadd.f32 0.0, %v3162
    %3164 = vmatmul.f32.gmra.mxu0 %v671
    %v3165 = vpop.f32.mrf.mxu0
    %v3166 = vadd.f32 0.0, %v3165
    %3167 = vmatmul.f32.gmra.mxu0 %v673
    %v3168 = vpop.f32.mrf.mxu0
    %v3169 = vadd.f32 0.0, %v3168
    %3170 = vmatmul.f32.gmra.mxu0 %v675
    %v3171 = vpop.f32.mrf.mxu0
    %v3172 = vadd.f32 0.0, %v3171
    %3173 = vmatmul.f32.gmra.mxu0 %v677
    %v3174 = vpop.f32.mrf.mxu0
    %v3175 = vadd.f32 0.0, %v3174
    %3176 = vmatmul.f32.gmra.mxu0 %v679
    %v3177 = vpop.f32.mrf.mxu0
    %v3178 = vadd.f32 0.0, %v3177
    %3179 = vmatmul.f32.gmra.mxu0 %v681
    %v3180 = vpop.f32.mrf.mxu0
    %v3181 = vadd.f32 0.0, %v3180
    %3182 = vmatmul.f32.gmra.mxu0 %v683
    %v3183 = vpop.f32.mrf.mxu0
    %v3184 = vadd.f32 0.0, %v3183
    %3185 = vmatmul.f32.gmra.mxu0 %v685
    %v3186 = vpop.f32.mrf.mxu0
    %v3187 = vadd.f32 0.0, %v3186
    %3188 = vmatmul.f32.gmra.mxu0 %v687
    %v3189 = vpop.f32.mrf.mxu0
    %v3190 = vadd.f32 0.0, %v3189
    %3191 = vmatmul.f32.gmra.mxu0 %v689
    %v3192 = vpop.f32.mrf.mxu0
    %v3193 = vadd.f32 0.0, %v3192
    %3194 = vmatmul.f32.gmra.mxu0 %v2113
    %v3195 = vpop.f32.mrf.mxu0
    %v3196 = vadd.f32 0.0, %v3195
    %3197 = vmatmul.f32.gmra.mxu0 %v2115
    %v3198 = vpop.f32.mrf.mxu0
    %v3199 = vadd.f32 0.0, %v3198
    %3200 = vmatmul.f32.gmra.mxu0 %v2991
    %v3201 = vpop.f32.mrf.mxu0
    %v3202 = vadd.f32 0.0, %v3201
    %3203 = vmatmul.f32.gmra.mxu0 %v2993
    %v3204 = vpop.f32.mrf.mxu0
    %v3205 = vadd.f32 0.0, %v3204
    %3206 = vdwg.mxu0
    %v3207 = vadd.f32 %v2911, %v3016
    %v3208 = vadd.f32 %v2912, %v3019
    %v3209 = vadd.f32 %v2913, %v3022
    %v3210 = vadd.f32 %v2914, %v3025
    %v3211 = vadd.f32 %v2915, %v3028
    %v3212 = vadd.f32 %v2916, %v3031
    %v3213 = vadd.f32 %v2917, %v3034
    %v3214 = vadd.f32 %v2918, %v3037
    %v3215 = vadd.f32 %v2919, %v3040
    %v3216 = vadd.f32 %v2920, %v3043
    %v3217 = vadd.f32 %v2921, %v3046
    %v3218 = vadd.f32 %v2922, %v3049
    %v3219 = vadd.f32 %v2923, %v3052
    %v3220 = vadd.f32 %v2924, %v3055
    %v3221 = vadd.f32 %v2925, %v3058
    %v3222 = vadd.f32 %v2926, %v3061
    %v3223 = vadd.f32 %v2927, %v3064
    %v3224 = vadd.f32 %v2928, %v3067
    %v3225 = vadd.f32 %v2929, %v3070
    %v3226 = vadd.f32 %v2930, %v3073
    %v3227 = vadd.f32 %v2931, %v3076
    %v3228 = vadd.f32 %v2932, %v3079
    %v3229 = vadd.f32 %v2933, %v3082
    %v3230 = vadd.f32 %v2934, %v3085
    %v3231 = vadd.f32 %v2935, %v3088
    %v3232 = vadd.f32 %v2936, %v3091
    %v3233 = vadd.f32 %v2937, %v3094
    %v3234 = vadd.f32 %v2938, %v3097
    %v3235 = vadd.f32 %v2939, %v3100
    %v3236 = vadd.f32 %v2940, %v3103
    %v3237 = vadd.f32 %v2941, %v3106
    %v3238 = vadd.f32 %v2942, %v3109
    %v3239 = vadd.f32 %v2943, %v3112
    %v3240 = vadd.f32 %v2944, %v3115
    %v3241 = vadd.f32 %v2945, %v3118
    %v3242 = vadd.f32 %v2946, %v3121
    %v3243 = vadd.f32 %v2947, %v3124
    %v3244 = vadd.f32 %v2948, %v3127
    %v3245 = vadd.f32 %v2949, %v3130
    %v3246 = vadd.f32 %v2950, %v3133
    %v3247 = vadd.f32 %v2951, %v3136
    %v3248 = vadd.f32 %v2952, %v3139
    %v3249 = vadd.f32 %v2953, %v3142
    %v3250 = vadd.f32 %v2954, %v3145
    %v3251 = vadd.f32 %v2955, %v3148
    %v3252 = vadd.f32 %v2956, %v3151
    %v3253 = vadd.f32 %v2957, %v3154
    %v3254 = vadd.f32 %v2958, %v3157
    %v3255 = vadd.f32 %v2959, %v3160
    %v3256 = vadd.f32 %v2960, %v3163
    %v3257 = vadd.f32 %v2961, %v3166
    %v3258 = vadd.f32 %v2962, %v3169
    %v3259 = vadd.f32 %v2963, %v3172
    %v3260 = vadd.f32 %v2964, %v3175
    %v3261 = vadd.f32 %v2965, %v3178
    %v3262 = vadd.f32 %v2966, %v3181
    %v3263 = vadd.f32 %v2967, %v3184
    %v3264 = vadd.f32 %v2968, %v3187
    %v3265 = vadd.f32 %v2969, %v3190
    %v3266 = vadd.f32 %v2970, %v3193
    %v3267 = vadd.f32 %v2971, %v3196
    %v3268 = vadd.f32 %v2972, %v3199
    %v3269 = vadd.f32 %v2973, %v3202
    %v3270 = vadd.f32 %v2974, %v3205
    %v3271 = vrot.slane %v239, 2
    %v3272 = vrot.slane %v240, 2
    %v3273 = vsel %vm1244, %v3271, %v3272
    %v3274 = vrot.slane %v241, 2
    %v3275 = vsel %vm1244, %v3272, %v3274
    %v3276 = vrot.slane %v293, 2
    %v3277 = vrot.slane %v294, 2
    %v3278 = vsel %vm1244, %v3276, %v3277
    %v3279 = vrot.slane %v295, 2
    %v3280 = vsel %vm1244, %v3277, %v3279
    %v3281 = vsel %vm562, %v3273, 0
    %v3283 = vsel %vm562, %v3275, 0
    %v3285 = vsel %vm562, %v3278, 0
    %v3287 = vsel %vm562, %v3280, 0
    %v3290 = vsel %vm691, %v304, 0
    %3292 = vmatpush.msra.mxu0 0.0
    %3293 = vmatpush.msra.mxu0 0.0
    %3294 = vmatpush.msra.mxu0 0.0
    %3295 = vmatpush.msra.mxu0 0.0
    %3296 = vmatpush.msra.mxu0 0.0
    %3297 = vmatpush.msra.mxu0 0.0
    %3298 = vmatpush.msra.mxu0 0.0
    %3299 = vmatpush.msra.mxu0 0.0
    %3300 = vmatpush.msra.mxu0 0.0
    %3301 = vmatpush.msra.mxu0 0.0
    %3302 = vmatpush.msra.mxu0 0.0
    %3303 = vmatpush.msra.mxu0 0.0
    %3304 = vmatpush.msra.mxu0 0.0
    %3305 = vmatpush.msra.mxu0 0.0
    %3306 = vmatpush.msra.mxu0 0.0
    %3307 = vmatpush.msra.mxu0 %v3290
    %3308 = vmatmul.f32.gmra.mxu0 %v1413
    %v3309 = vpop.f32.mrf.mxu0
    %v3310 = vadd.f32 0.0, %v3309
    %3311 = vmatmul.f32.gmra.mxu0 %v1415
    %v3312 = vpop.f32.mrf.mxu0
    %v3313 = vadd.f32 0.0, %v3312
    %3314 = vmatmul.f32.gmra.mxu0 %v1417
    %v3315 = vpop.f32.mrf.mxu0
    %v3316 = vadd.f32 0.0, %v3315
    %3317 = vmatmul.f32.gmra.mxu0 %v1419
    %v3318 = vpop.f32.mrf.mxu0
    %v3319 = vadd.f32 0.0, %v3318
    %3320 = vmatmul.f32.gmra.mxu0 %v1421
    %v3321 = vpop.f32.mrf.mxu0
    %v3322 = vadd.f32 0.0, %v3321
    %3323 = vmatmul.f32.gmra.mxu0 %v1423
    %v3324 = vpop.f32.mrf.mxu0
    %v3325 = vadd.f32 0.0, %v3324
    %3326 = vmatmul.f32.gmra.mxu0 %v1425
    %v3327 = vpop.f32.mrf.mxu0
    %v3328 = vadd.f32 0.0, %v3327
    %3329 = vmatmul.f32.gmra.mxu0 %v1427
    %v3330 = vpop.f32.mrf.mxu0
    %v3331 = vadd.f32 0.0, %v3330
    %3332 = vmatmul.f32.gmra.mxu0 %v1429
    %v3333 = vpop.f32.mrf.mxu0
    %v3334 = vadd.f32 0.0, %v3333
    %3335 = vmatmul.f32.gmra.mxu0 %v1431
    %v3336 = vpop.f32.mrf.mxu0
    %v3337 = vadd.f32 0.0, %v3336
    %3338 = vmatmul.f32.gmra.mxu0 %v1433
    %v3339 = vpop.f32.mrf.mxu0
    %v3340 = vadd.f32 0.0, %v3339
    %3341 = vmatmul.f32.gmra.mxu0 %v1435
    %v3342 = vpop.f32.mrf.mxu0
    %v3343 = vadd.f32 0.0, %v3342
    %3344 = vmatmul.f32.gmra.mxu0 %v1437
    %v3345 = vpop.f32.mrf.mxu0
    %v3346 = vadd.f32 0.0, %v3345
    %3347 = vmatmul.f32.gmra.mxu0 %v1439
    %v3348 = vpop.f32.mrf.mxu0
    %v3349 = vadd.f32 0.0, %v3348
    %3350 = vmatmul.f32.gmra.mxu0 %v1441
    %v3351 = vpop.f32.mrf.mxu0
    %v3352 = vadd.f32 0.0, %v3351
    %3353 = vmatmul.f32.gmra.mxu0 %v1443
    %v3354 = vpop.f32.mrf.mxu0
    %v3355 = vadd.f32 0.0, %v3354
    %3356 = vmatmul.f32.gmra.mxu0 %v1445
    %v3357 = vpop.f32.mrf.mxu0
    %v3358 = vadd.f32 0.0, %v3357
    %3359 = vmatmul.f32.gmra.mxu0 %v1447
    %v3360 = vpop.f32.mrf.mxu0
    %v3361 = vadd.f32 0.0, %v3360
    %3362 = vmatmul.f32.gmra.mxu0 %v1449
    %v3363 = vpop.f32.mrf.mxu0
    %v3364 = vadd.f32 0.0, %v3363
    %3365 = vmatmul.f32.gmra.mxu0 %v1451
    %v3366 = vpop.f32.mrf.mxu0
    %v3367 = vadd.f32 0.0, %v3366
    %3368 = vmatmul.f32.gmra.mxu0 %v1453
    %v3369 = vpop.f32.mrf.mxu0
    %v3370 = vadd.f32 0.0, %v3369
    %3371 = vmatmul.f32.gmra.mxu0 %v1455
    %v3372 = vpop.f32.mrf.mxu0
    %v3373 = vadd.f32 0.0, %v3372
    %3374 = vmatmul.f32.gmra.mxu0 %v1457
    %v3375 = vpop.f32.mrf.mxu0
    %v3376 = vadd.f32 0.0, %v3375
    %3377 = vmatmul.f32.gmra.mxu0 %v1459
    %v3378 = vpop.f32.mrf.mxu0
    %v3379 = vadd.f32 0.0, %v3378
    %3380 = vmatmul.f32.gmra.mxu0 %v1461
    %v3381 = vpop.f32.mrf.mxu0
    %v3382 = vadd.f32 0.0, %v3381
    %3383 = vmatmul.f32.gmra.mxu0 %v1463
    %v3384 = vpop.f32.mrf.mxu0
    %v3385 = vadd.f32 0.0, %v3384
    %3386 = vmatmul.f32.gmra.mxu0 %v1465
    %v3387 = vpop.f32.mrf.mxu0
    %v3388 = vadd.f32 0.0, %v3387
    %3389 = vmatmul.f32.gmra.mxu0 %v1467
    %v3390 = vpop.f32.mrf.mxu0
    %v3391 = vadd.f32 0.0, %v3390
    %3392 = vmatmul.f32.gmra.mxu0 %v2403
    %v3393 = vpop.f32.mrf.mxu0
    %v3394 = vadd.f32 0.0, %v3393
    %3395 = vmatmul.f32.gmra.mxu0 %v2405
    %v3396 = vpop.f32.mrf.mxu0
    %v3397 = vadd.f32 0.0, %v3396
    %3398 = vmatmul.f32.gmra.mxu0 %v3281
    %v3399 = vpop.f32.mrf.mxu0
    %v3400 = vadd.f32 0.0, %v3399
    %3401 = vmatmul.f32.gmra.mxu0 %v3283
    %v3402 = vpop.f32.mrf.mxu0
    %v3403 = vadd.f32 0.0, %v3402
    %3404 = vmatmul.f32.gmra.mxu0 %v1477
    %v3405 = vpop.f32.mrf.mxu0
    %v3406 = vadd.f32 0.0, %v3405
    %3407 = vmatmul.f32.gmra.mxu0 %v1479
    %v3408 = vpop.f32.mrf.mxu0
    %v3409 = vadd.f32 0.0, %v3408
    %3410 = vmatmul.f32.gmra.mxu0 %v1481
    %v3411 = vpop.f32.mrf.mxu0
    %v3412 = vadd.f32 0.0, %v3411
    %3413 = vmatmul.f32.gmra.mxu0 %v1483
    %v3414 = vpop.f32.mrf.mxu0
    %v3415 = vadd.f32 0.0, %v3414
    %3416 = vmatmul.f32.gmra.mxu0 %v1485
    %v3417 = vpop.f32.mrf.mxu0
    %v3418 = vadd.f32 0.0, %v3417
    %3419 = vmatmul.f32.gmra.mxu0 %v1487
    %v3420 = vpop.f32.mrf.mxu0
    %v3421 = vadd.f32 0.0, %v3420
    %3422 = vmatmul.f32.gmra.mxu0 %v1489
    %v3423 = vpop.f32.mrf.mxu0
    %v3424 = vadd.f32 0.0, %v3423
    %3425 = vmatmul.f32.gmra.mxu0 %v1491
    %v3426 = vpop.f32.mrf.mxu0
    %v3427 = vadd.f32 0.0, %v3426
    %3428 = vmatmul.f32.gmra.mxu0 %v1493
    %v3429 = vpop.f32.mrf.mxu0
    %v3430 = vadd.f32 0.0, %v3429
    %3431 = vmatmul.f32.gmra.mxu0 %v1495
    %v3432 = vpop.f32.mrf.mxu0
    %v3433 = vadd.f32 0.0, %v3432
    %3434 = vmatmul.f32.gmra.mxu0 %v1497
    %v3435 = vpop.f32.mrf.mxu0
    %v3436 = vadd.f32 0.0, %v3435
    %3437 = vmatmul.f32.gmra.mxu0 %v1499
    %v3438 = vpop.f32.mrf.mxu0
    %v3439 = vadd.f32 0.0, %v3438
    %3440 = vmatmul.f32.gmra.mxu0 %v1501
    %v3441 = vpop.f32.mrf.mxu0
    %v3442 = vadd.f32 0.0, %v3441
    %3443 = vmatmul.f32.gmra.mxu0 %v1503
    %v3444 = vpop.f32.mrf.mxu0
    %v3445 = vadd.f32 0.0, %v3444
    %3446 = vmatmul.f32.gmra.mxu0 %v1505
    %v3447 = vpop.f32.mrf.mxu0
    %v3448 = vadd.f32 0.0, %v3447
    %3449 = vmatmul.f32.gmra.mxu0 %v1507
    %v3450 = vpop.f32.mrf.mxu0
    %v3451 = vadd.f32 0.0, %v3450
    %3452 = vmatmul.f32.gmra.mxu0 %v1509
    %v3453 = vpop.f32.mrf.mxu0
    %v3454 = vadd.f32 0.0, %v3453
    %3455 = vmatmul.f32.gmra.mxu0 %v1511
    %v3456 = vpop.f32.mrf.mxu0
    %v3457 = vadd.f32 0.0, %v3456
    %3458 = vmatmul.f32.gmra.mxu0 %v1513
    %v3459 = vpop.f32.mrf.mxu0
    %v3460 = vadd.f32 0.0, %v3459
    %3461 = vmatmul.f32.gmra.mxu0 %v1515
    %v3462 = vpop.f32.mrf.mxu0
    %v3463 = vadd.f32 0.0, %v3462
    %3464 = vmatmul.f32.gmra.mxu0 %v1517
    %v3465 = vpop.f32.mrf.mxu0
    %v3466 = vadd.f32 0.0, %v3465
    %3467 = vmatmul.f32.gmra.mxu0 %v1519
    %v3468 = vpop.f32.mrf.mxu0
    %v3469 = vadd.f32 0.0, %v3468
    %3470 = vmatmul.f32.gmra.mxu0 %v1521
    %v3471 = vpop.f32.mrf.mxu0
    %v3472 = vadd.f32 0.0, %v3471
    %3473 = vmatmul.f32.gmra.mxu0 %v1523
    %v3474 = vpop.f32.mrf.mxu0
    %v3475 = vadd.f32 0.0, %v3474
    %3476 = vmatmul.f32.gmra.mxu0 %v1525
    %v3477 = vpop.f32.mrf.mxu0
    %v3478 = vadd.f32 0.0, %v3477
    %3479 = vmatmul.f32.gmra.mxu0 %v1527
    %v3480 = vpop.f32.mrf.mxu0
    %v3481 = vadd.f32 0.0, %v3480
    %3482 = vmatmul.f32.gmra.mxu0 %v1529
    %v3483 = vpop.f32.mrf.mxu0
    %v3484 = vadd.f32 0.0, %v3483
    %3485 = vmatmul.f32.gmra.mxu0 %v1531
    %v3486 = vpop.f32.mrf.mxu0
    %v3487 = vadd.f32 0.0, %v3486
    %3488 = vmatmul.f32.gmra.mxu0 %v2407
    %v3489 = vpop.f32.mrf.mxu0
    %v3490 = vadd.f32 0.0, %v3489
    %3491 = vmatmul.f32.gmra.mxu0 %v2409
    %v3492 = vpop.f32.mrf.mxu0
    %v3493 = vadd.f32 0.0, %v3492
    %3494 = vmatmul.f32.gmra.mxu0 %v3285
    %v3495 = vpop.f32.mrf.mxu0
    %v3496 = vadd.f32 0.0, %v3495
    %3497 = vmatmul.f32.gmra.mxu0 %v3287
    %v3498 = vpop.f32.mrf.mxu0
    %v3499 = vadd.f32 0.0, %v3498
    %3500 = vdwg.mxu0
    %v3501 = vadd.f32 %v3207, %v3310
    %v3502 = vadd.f32 %v3208, %v3313
    %v3503 = vadd.f32 %v3209, %v3316
    %v3504 = vadd.f32 %v3210, %v3319
    %v3505 = vadd.f32 %v3211, %v3322
    %v3506 = vadd.f32 %v3212, %v3325
    %v3507 = vadd.f32 %v3213, %v3328
    %v3508 = vadd.f32 %v3214, %v3331
    %v3509 = vadd.f32 %v3215, %v3334
    %v3510 = vadd.f32 %v3216, %v3337
    %v3511 = vadd.f32 %v3217, %v3340
    %v3512 = vadd.f32 %v3218, %v3343
    %v3513 = vadd.f32 %v3219, %v3346
    %v3514 = vadd.f32 %v3220, %v3349
    %v3515 = vadd.f32 %v3221, %v3352
    %v3516 = vadd.f32 %v3222, %v3355
    %v3517 = vadd.f32 %v3223, %v3358
    %v3518 = vadd.f32 %v3224, %v3361
    %v3519 = vadd.f32 %v3225, %v3364
    %v3520 = vadd.f32 %v3226, %v3367
    %v3521 = vadd.f32 %v3227, %v3370
    %v3522 = vadd.f32 %v3228, %v3373
    %v3523 = vadd.f32 %v3229, %v3376
    %v3524 = vadd.f32 %v3230, %v3379
    %v3525 = vadd.f32 %v3231, %v3382
    %v3526 = vadd.f32 %v3232, %v3385
    %v3527 = vadd.f32 %v3233, %v3388
    %v3528 = vadd.f32 %v3234, %v3391
    %v3529 = vadd.f32 %v3235, %v3394
    %v3530 = vadd.f32 %v3236, %v3397
    %v3531 = vadd.f32 %v3237, %v3400
    %v3532 = vadd.f32 %v3238, %v3403
    %v3533 = vadd.f32 %v3239, %v3406
    %v3534 = vadd.f32 %v3240, %v3409
    %v3535 = vadd.f32 %v3241, %v3412
    %v3536 = vadd.f32 %v3242, %v3415
    %v3537 = vadd.f32 %v3243, %v3418
    %v3538 = vadd.f32 %v3244, %v3421
    %v3539 = vadd.f32 %v3245, %v3424
    %v3540 = vadd.f32 %v3246, %v3427
    %v3541 = vadd.f32 %v3247, %v3430
    %v3542 = vadd.f32 %v3248, %v3433
    %v3543 = vadd.f32 %v3249, %v3436
    %v3544 = vadd.f32 %v3250, %v3439
    %v3545 = vadd.f32 %v3251, %v3442
    %v3546 = vadd.f32 %v3252, %v3445
    %v3547 = vadd.f32 %v3253, %v3448
    %v3548 = vadd.f32 %v3254, %v3451
    %v3549 = vadd.f32 %v3255, %v3454
    %v3550 = vadd.f32 %v3256, %v3457
    %v3551 = vadd.f32 %v3257, %v3460
    %v3552 = vadd.f32 %v3258, %v3463
    %v3553 = vadd.f32 %v3259, %v3466
    %v3554 = vadd.f32 %v3260, %v3469
    %v3555 = vadd.f32 %v3261, %v3472
    %v3556 = vadd.f32 %v3262, %v3475
    %v3557 = vadd.f32 %v3263, %v3478
    %v3558 = vadd.f32 %v3264, %v3481
    %v3559 = vadd.f32 %v3265, %v3484
    %v3560 = vadd.f32 %v3266, %v3487
    %v3561 = vadd.f32 %v3267, %v3490
    %v3562 = vadd.f32 %v3268, %v3493
    %v3563 = vadd.f32 %v3269, %v3496
    %v3564 = vadd.f32 %v3270, %v3499
    %v3565 = vld [vmem:[#allocation5] sm:$0x1]
    %v3567 = vperm.slane %v3565, 0
    %v3569 = vadd.f32 %v3501, %v3567
    %v3570 = vadd.f32 %v3502, %v3567
    %v3571 = vadd.f32 %v3503, %v3567
    %v3572 = vadd.f32 %v3504, %v3567
    %v3573 = vadd.f32 %v3505, %v3567
    %v3574 = vadd.f32 %v3506, %v3567
    %v3575 = vadd.f32 %v3507, %v3567
    %v3576 = vadd.f32 %v3508, %v3567
    %v3577 = vadd.f32 %v3509, %v3567
    %v3578 = vadd.f32 %v3510, %v3567
    %v3579 = vadd.f32 %v3511, %v3567
    %v3580 = vadd.f32 %v3512, %v3567
    %v3581 = vadd.f32 %v3513, %v3567
    %v3582 = vadd.f32 %v3514, %v3567
    %v3583 = vadd.f32 %v3515, %v3567
    %v3584 = vadd.f32 %v3516, %v3567
    %v3585 = vadd.f32 %v3517, %v3567
    %v3586 = vadd.f32 %v3518, %v3567
    %v3587 = vadd.f32 %v3519, %v3567
    %v3588 = vadd.f32 %v3520, %v3567
    %v3589 = vadd.f32 %v3521, %v3567
    %v3590 = vadd.f32 %v3522, %v3567
    %v3591 = vadd.f32 %v3523, %v3567
    %v3592 = vadd.f32 %v3524, %v3567
    %v3593 = vadd.f32 %v3525, %v3567
    %v3594 = vadd.f32 %v3526, %v3567
    %v3595 = vadd.f32 %v3527, %v3567
    %v3596 = vadd.f32 %v3528, %v3567
    %v3597 = vadd.f32 %v3529, %v3567
    %v3598 = vadd.f32 %v3530, %v3567
    %v3599 = vadd.f32 %v3531, %v3567
    %v3600 = vadd.f32 %v3532, %v3567
    %v3601 = vadd.f32 %v3533, %v3567
    %v3602 = vadd.f32 %v3534, %v3567
    %v3603 = vadd.f32 %v3535, %v3567
    %v3604 = vadd.f32 %v3536, %v3567
    %v3605 = vadd.f32 %v3537, %v3567
    %v3606 = vadd.f32 %v3538, %v3567
    %v3607 = vadd.f32 %v3539, %v3567
    %v3608 = vadd.f32 %v3540, %v3567
    %v3609 = vadd.f32 %v3541, %v3567
    %v3610 = vadd.f32 %v3542, %v3567
    %v3611 = vadd.f32 %v3543, %v3567
    %v3612 = vadd.f32 %v3544, %v3567
    %v3613 = vadd.f32 %v3545, %v3567
    %v3614 = vadd.f32 %v3546, %v3567
    %v3615 = vadd.f32 %v3547, %v3567
    %v3616 = vadd.f32 %v3548, %v3567
    %v3617 = vadd.f32 %v3549, %v3567
    %v3618 = vadd.f32 %v3550, %v3567
    %v3619 = vadd.f32 %v3551, %v3567
    %v3620 = vadd.f32 %v3552, %v3567
    %v3621 = vadd.f32 %v3553, %v3567
    %v3622 = vadd.f32 %v3554, %v3567
    %v3623 = vadd.f32 %v3555, %v3567
    %v3624 = vadd.f32 %v3556, %v3567
    %v3625 = vadd.f32 %v3557, %v3567
    %v3626 = vadd.f32 %v3558, %v3567
    %v3627 = vadd.f32 %v3559, %v3567
    %v3628 = vadd.f32 %v3560, %v3567
    %v3629 = vadd.f32 %v3561, %v3567
    %v3630 = vadd.f32 %v3562, %v3567
    %v3631 = vadd.f32 %v3563, %v3567
    %v3632 = vadd.f32 %v3564, %v3567
    %v3633 = vmax.f32 %v3569, 0.0
    %v3634 = vmax.f32 %v3570, 0.0
    %v3635 = vmax.f32 %v3571, 0.0
    %v3636 = vmax.f32 %v3572, 0.0
    %v3637 = vmax.f32 %v3573, 0.0
    %v3638 = vmax.f32 %v3574, 0.0
    %v3639 = vmax.f32 %v3575, 0.0
    %v3640 = vmax.f32 %v3576, 0.0
    %v3641 = vmax.f32 %v3577, 0.0
    %v3642 = vmax.f32 %v3578, 0.0
    %v3643 = vmax.f32 %v3579, 0.0
    %v3644 = vmax.f32 %v3580, 0.0
    %v3645 = vmax.f32 %v3581, 0.0
    %v3646 = vmax.f32 %v3582, 0.0
    %v3647 = vmax.f32 %v3583, 0.0
    %v3648 = vmax.f32 %v3584, 0.0
    %v3649 = vmax.f32 %v3585, 0.0
    %v3650 = vmax.f32 %v3586, 0.0
    %v3651 = vmax.f32 %v3587, 0.0
    %v3652 = vmax.f32 %v3588, 0.0
    %v3653 = vmax.f32 %v3589, 0.0
    %v3654 = vmax.f32 %v3590, 0.0
    %v3655 = vmax.f32 %v3591, 0.0
    %v3656 = vmax.f32 %v3592, 0.0
    %v3657 = vmax.f32 %v3593, 0.0
    %v3658 = vmax.f32 %v3594, 0.0
    %v3659 = vmax.f32 %v3595, 0.0
    %v3660 = vmax.f32 %v3596, 0.0
    %v3661 = vmax.f32 %v3597, 0.0
    %v3662 = vmax.f32 %v3598, 0.0
    %v3663 = vmax.f32 %v3599, 0.0
    %v3664 = vmax.f32 %v3600, 0.0
    %v3665 = vmax.f32 %v3601, 0.0
    %v3666 = vmax.f32 %v3602, 0.0
    %v3667 = vmax.f32 %v3603, 0.0
    %v3668 = vmax.f32 %v3604, 0.0
    %v3669 = vmax.f32 %v3605, 0.0
    %v3670 = vmax.f32 %v3606, 0.0
    %v3671 = vmax.f32 %v3607, 0.0
    %v3672 = vmax.f32 %v3608, 0.0
    %v3673 = vmax.f32 %v3609, 0.0
    %v3674 = vmax.f32 %v3610, 0.0
    %v3675 = vmax.f32 %v3611, 0.0
    %v3676 = vmax.f32 %v3612, 0.0
    %v3677 = vmax.f32 %v3613, 0.0
    %v3678 = vmax.f32 %v3614, 0.0
    %v3679 = vmax.f32 %v3615, 0.0
    %v3680 = vmax.f32 %v3616, 0.0
    %v3681 = vmax.f32 %v3617, 0.0
    %v3682 = vmax.f32 %v3618, 0.0
    %v3683 = vmax.f32 %v3619, 0.0
    %v3684 = vmax.f32 %v3620, 0.0
    %v3685 = vmax.f32 %v3621, 0.0
    %v3686 = vmax.f32 %v3622, 0.0
    %v3687 = vmax.f32 %v3623, 0.0
    %v3688 = vmax.f32 %v3624, 0.0
    %v3689 = vmax.f32 %v3625, 0.0
    %v3690 = vmax.f32 %v3626, 0.0
    %v3691 = vmax.f32 %v3627, 0.0
    %v3692 = vmax.f32 %v3628, 0.0
    %v3693 = vmax.f32 %v3629, 0.0
    %v3694 = vmax.f32 %v3630, 0.0
    %v3695 = vmax.f32 %v3631, 0.0
    %v3696 = vmax.f32 %v3632, 0.0
    %v3697 = vadd.f32 %v3633, %v3634
    %v3698 = vadd.f32 %v3697, %v3635
    %v3699 = vadd.f32 %v3698, %v3636
    %v3700 = vadd.f32 %v3699, %v3637
    %v3701 = vadd.f32 %v3700, %v3638
    %v3702 = vadd.f32 %v3701, %v3639
    %v3703 = vadd.f32 %v3702, %v3640
    %v3704 = vadd.f32 %v3703, %v3641
    %v3705 = vadd.f32 %v3704, %v3642
    %v3706 = vadd.f32 %v3705, %v3643
    %v3707 = vadd.f32 %v3706, %v3644
    %v3708 = vadd.f32 %v3707, %v3645
    %v3709 = vadd.f32 %v3708, %v3646
    %v3710 = vadd.f32 %v3709, %v3647
    %v3711 = vadd.f32 %v3710, %v3648
    %v3712 = vadd.f32 %v3711, %v3649
    %v3713 = vadd.f32 %v3712, %v3650
    %v3714 = vadd.f32 %v3713, %v3651
    %v3715 = vadd.f32 %v3714, %v3652
    %v3716 = vadd.f32 %v3715, %v3653
    %v3717 = vadd.f32 %v3716, %v3654
    %v3718 = vadd.f32 %v3717, %v3655
    %v3719 = vadd.f32 %v3718, %v3656
    %v3720 = vadd.f32 %v3719, %v3657
    %v3721 = vadd.f32 %v3720, %v3658
    %v3722 = vadd.f32 %v3721, %v3659
    %v3723 = vadd.f32 %v3722, %v3660
    %v3724 = vadd.f32 %v3723, %v3661
    %v3725 = vadd.f32 %v3724, %v3662
    %v3726 = vadd.f32 %v3725, %v3663
    %v3727 = vadd.f32 %v3726, %v3664
    %v3728 = vrot.slane %v3727, 4
    %v3729 = vadd.f32 %v3727, %v3728
    %v3730 = vrot.slane %v3729, 2
    %v3731 = vadd.f32 %v3729, %v3730
    %v3732 = vrot.slane %v3731, 1
    %v3733 = vadd.f32 %v3731, %v3732
    %v3734 = vadd.f32 %v3665, %v3666
    %v3735 = vadd.f32 %v3734, %v3667
    %v3736 = vadd.f32 %v3735, %v3668
    %v3737 = vadd.f32 %v3736, %v3669
    %v3738 = vadd.f32 %v3737, %v3670
    %v3739 = vadd.f32 %v3738, %v3671
    %v3740 = vadd.f32 %v3739, %v3672
    %v3741 = vadd.f32 %v3740, %v3673
    %v3742 = vadd.f32 %v3741, %v3674
    %v3743 = vadd.f32 %v3742, %v3675
    %v3744 = vadd.f32 %v3743, %v3676
    %v3745 = vadd.f32 %v3744, %v3677
    %v3746 = vadd.f32 %v3745, %v3678
    %v3747 = vadd.f32 %v3746, %v3679
    %v3748 = vadd.f32 %v3747, %v3680
    %v3749 = vadd.f32 %v3748, %v3681
    %v3750 = vadd.f32 %v3749, %v3682
    %v3751 = vadd.f32 %v3750, %v3683
    %v3752 = vadd.f32 %v3751, %v3684
    %v3753 = vadd.f32 %v3752, %v3685
    %v3754 = vadd.f32 %v3753, %v3686
    %v3755 = vadd.f32 %v3754, %v3687
    %v3756 = vadd.f32 %v3755, %v3688
    %v3757 = vadd.f32 %v3756, %v3689
    %v3758 = vadd.f32 %v3757, %v3690
    %v3759 = vadd.f32 %v3758, %v3691
    %v3760 = vadd.f32 %v3759, %v3692
    %v3761 = vadd.f32 %v3760, %v3693
    %v3762 = vadd.f32 %v3761, %v3694
    %v3763 = vadd.f32 %v3762, %v3695
    %v3764 = vadd.f32 %v3763, %v3696
    %v3765 = vrot.slane %v3764, 4
    %v3766 = vadd.f32 %v3764, %v3765
    %v3767 = vrot.slane %v3766, 2
    %v3768 = vadd.f32 %v3766, %v3767
    %v3769 = vrot.slane %v3768, 1
    %v3770 = vadd.f32 %v3768, %v3769
    %v3771 = vmul.f32 %v3733, 0.00390625
    %v3772 = vmul.f32 %v3770, 0.00390625
    %v3773 = vpack.c.bf16 %v3771, %v3771
    %v3774 = vpack.c.bf16 %v3772, %v3772
    %v3775 = vld [vmem:[#allocation7] sm:$0xff]
    %v3776 = vld [vmem:[#allocation7 + $0x8] sm:$0xff]
    %v3777 = vld [vmem:[#allocation7 + $0x10] sm:$0xff]
    %v3778 = vld [vmem:[#allocation7 + $0x18] sm:$0xff]
    %v3779 = vld [vmem:[#allocation7 + $0x20] sm:$0xff]
    %v3780 = vld [vmem:[#allocation7 + $0x28] sm:$0xff]
    %v3781 = vld [vmem:[#allocation7 + $0x30] sm:$0xff]
    %v3782 = vld [vmem:[#allocation7 + $0x38] sm:$0xff]
    %v3783 = vld [vmem:[#allocation7 + $0x40] sm:$0xff]
    %v3784 = vld [vmem:[#allocation7 + $0x48] sm:$0xff]
    %v3785 = vld [vmem:[#allocation7 + $0x50] sm:$0xff]
    %v3786 = vld [vmem:[#allocation7 + $0x58] sm:$0xff]
    %v3787 = vld [vmem:[#allocation7 + $0x60] sm:$0xff]
    %v3788 = vld [vmem:[#allocation7 + $0x68] sm:$0xff]
    %v3789 = vld [vmem:[#allocation7 + $0x70] sm:$0xff]
    %v3790 = vld [vmem:[#allocation7 + $0x78] sm:$0xff]
    %v3791 = vld [vmem:[#allocation7 + $0x80] sm:$0xff]
    %v3792 = vld [vmem:[#allocation7 + $0x88] sm:$0xff]
    %v3793 = vld [vmem:[#allocation7 + $0x90] sm:$0xff]
    %v3794 = vld [vmem:[#allocation7 + $0x98] sm:$0xff]
    %v3795 = vld [vmem:[#allocation7 + $0xa0] sm:$0xff]
    %v3796 = vld [vmem:[#allocation7 + $0xa8] sm:$0xff]
    %v3797 = vld [vmem:[#allocation7 + $0xb0] sm:$0xff]
    %v3798 = vld [vmem:[#allocation7 + $0xb8] sm:$0xff]
    %v3799 = vld [vmem:[#allocation7 + $0xc0] sm:$0xff]
    %v3800 = vld [vmem:[#allocation7 + $0xc8] sm:$0xff]
    %v3801 = vld [vmem:[#allocation7 + $0xd0] sm:$0xff]
    %v3802 = vld [vmem:[#allocation7 + $0xd8] sm:$0xff]
    %v3803 = vld [vmem:[#allocation7 + $0xe0] sm:$0xff]
    %v3804 = vld [vmem:[#allocation7 + $0xe8] sm:$0xff]
    %v3805 = vld [vmem:[#allocation7 + $0xf0] sm:$0xff]
    %v3806 = vld [vmem:[#allocation7 + $0xf8] sm:$0xff]
    %v3807 = vld [vmem:[#allocation7 + $0x100] sm:$0xff]
    %v3808 = vld [vmem:[#allocation7 + $0x108] sm:$0xff]
    %v3809 = vld [vmem:[#allocation7 + $0x110] sm:$0xff]
    %v3810 = vld [vmem:[#allocation7 + $0x118] sm:$0xff]
    %v3811 = vld [vmem:[#allocation7 + $0x120] sm:$0xff]
    %v3812 = vld [vmem:[#allocation7 + $0x128] sm:$0xff]
    %v3813 = vld [vmem:[#allocation7 + $0x130] sm:$0xff]
    %v3814 = vld [vmem:[#allocation7 + $0x138] sm:$0xff]
    %v3815 = vld [vmem:[#allocation7 + $0x140] sm:$0xff]
    %v3816 = vld [vmem:[#allocation7 + $0x148] sm:$0xff]
    %v3817 = vld [vmem:[#allocation7 + $0x150] sm:$0xff]
    %v3818 = vld [vmem:[#allocation7 + $0x158] sm:$0xff]
    %v3819 = vld [vmem:[#allocation7 + $0x160] sm:$0xff]
    %v3820 = vld [vmem:[#allocation7 + $0x168] sm:$0xff]
    %v3821 = vld [vmem:[#allocation7 + $0x170] sm:$0xff]
    %v3822 = vld [vmem:[#allocation7 + $0x178] sm:$0xff]
    %v3823 = vld [vmem:[#allocation7 + $0x180] sm:$0xff]
    %v3824 = vld [vmem:[#allocation7 + $0x188] sm:$0xff]
    %v3825 = vld [vmem:[#allocation7 + $0x190] sm:$0xff]
    %v3826 = vld [vmem:[#allocation7 + $0x198] sm:$0xff]
    %v3827 = vld [vmem:[#allocation7 + $0x1a0] sm:$0xff]
    %v3828 = vld [vmem:[#allocation7 + $0x1a8] sm:$0xff]
    %v3829 = vld [vmem:[#allocation7 + $0x1b0] sm:$0xff]
    %v3830 = vld [vmem:[#allocation7 + $0x1b8] sm:$0xff]
    %v3831 = vld [vmem:[#allocation7 + $0x1c0] sm:$0xff]
    %v3832 = vld [vmem:[#allocation7 + $0x1c8] sm:$0xff]
    %v3833 = vld [vmem:[#allocation7 + $0x1d0] sm:$0xff]
    %v3834 = vld [vmem:[#allocation7 + $0x1d8] sm:$0xff]
    %v3835 = vld [vmem:[#allocation7 + $0x1e0] sm:$0xff]
    %v3836 = vld [vmem:[#allocation7 + $0x1e8] sm:$0xff]
    %v3837 = vld [vmem:[#allocation7 + $0x1f0] sm:$0xff]
    %v3838 = vld [vmem:[#allocation7 + $0x1f8] sm:$0xff]
    %v3839 = vld [vmem:[#allocation7 + $0x200] sm:$0xff]
    %v3840 = vld [vmem:[#allocation7 + $0x208] sm:$0xff]
    %v3841 = vld [vmem:[#allocation7 + $0x210] sm:$0xff]
    %v3842 = vld [vmem:[#allocation7 + $0x218] sm:$0xff]
    %v3843 = vld [vmem:[#allocation7 + $0x220] sm:$0xff]
    %v3844 = vld [vmem:[#allocation7 + $0x228] sm:$0xff]
    %v3845 = vld [vmem:[#allocation7 + $0x230] sm:$0xff]
    %v3846 = vld [vmem:[#allocation7 + $0x238] sm:$0xff]
    %v3847 = vld [vmem:[#allocation7 + $0x240] sm:$0xff]
    %v3848 = vld [vmem:[#allocation7 + $0x248] sm:$0xff]
    %v3849 = vld [vmem:[#allocation7 + $0x250] sm:$0xff]
    %v3850 = vld [vmem:[#allocation7 + $0x258] sm:$0xff]
    %v3851 = vld [vmem:[#allocation7 + $0x260] sm:$0xff]
    %v3852 = vld [vmem:[#allocation7 + $0x268] sm:$0xff]
    %v3853 = vld [vmem:[#allocation7 + $0x270] sm:$0xff]
    %v3854 = vld [vmem:[#allocation7 + $0x278] sm:$0xff]
    %v3855 = vld [vmem:[#allocation8] sm:$0xff]
    %v3856 = vld [vmem:[#allocation8 + $0x8] sm:$0x3]
    %v3859 = vperm.slane %v3855, 0
    %v3860 = vperm.slane %v3855, 1
    %v3861 = vperm.slane %v3855, 2
    %v3862 = vperm.slane %v3855, 3
    %v3863 = vperm.slane %v3855, 4
    %v3864 = vperm.slane %v3855, 5
    %v3865 = vperm.slane %v3855, 6
    %v3866 = vperm.slane %v3855, 7
    %v3867 = vperm.slane %v3856, 0
    %v3868 = vperm.slane %v3856, 1
    %v3881 = vunpack.c.l.b16 %v3773
    %v3882 = vunpack.c.l.b16 %v3774
    %vm3883 = vcmask 1041409
    %v3884 = vsel %vm3883, %v3882, %v3881
    %v3885 = vpack.c.b16 %v3884, %v3884
    %v3967 = vunpack.c.l.b16 %v3775
    %v3968 = vunpack.c.h.b16 %v3775
    %v3969 = vunpack.c.l.b16 %v3776
    %v3970 = vunpack.c.h.b16 %v3776
    %v3971 = vunpack.c.l.b16 %v3777
    %v3972 = vunpack.c.h.b16 %v3777
    %v3973 = vunpack.c.l.b16 %v3778
    %v3974 = vunpack.c.h.b16 %v3778
    %v3975 = vunpack.c.l.b16 %v3779
    %v3976 = vunpack.c.h.b16 %v3779
    %v3977 = vunpack.c.l.b16 %v3780
    %v3978 = vunpack.c.h.b16 %v3780
    %v3979 = vunpack.c.l.b16 %v3781
    %v3980 = vunpack.c.h.b16 %v3781
    %v3981 = vunpack.c.l.b16 %v3782
    %v3982 = vunpack.c.h.b16 %v3782
    %v3983 = vunpack.c.l.b16 %v3783
    %v3984 = vunpack.c.h.b16 %v3783
    %v3985 = vunpack.c.l.b16 %v3784
    %v3986 = vunpack.c.h.b16 %v3784
    %v3987 = vunpack.c.l.b16 %v3785
    %v3988 = vunpack.c.h.b16 %v3785
    %v3989 = vunpack.c.l.b16 %v3786
    %v3990 = vunpack.c.h.b16 %v3786
    %v3991 = vunpack.c.l.b16 %v3787
    %v3992 = vunpack.c.h.b16 %v3787
    %v3993 = vunpack.c.l.b16 %v3788
    %v3994 = vunpack.c.h.b16 %v3788
    %v3995 = vunpack.c.l.b16 %v3789
    %v3996 = vunpack.c.h.b16 %v3789
    %v3997 = vunpack.c.l.b16 %v3790
    %v3998 = vunpack.c.h.b16 %v3790
    %v3999 = vunpack.c.l.b16 %v3791
    %v4000 = vunpack.c.h.b16 %v3791
    %v4001 = vunpack.c.l.b16 %v3792
    %v4002 = vunpack.c.h.b16 %v3792
    %v4003 = vunpack.c.l.b16 %v3793
    %v4004 = vunpack.c.h.b16 %v3793
    %v4005 = vunpack.c.l.b16 %v3794
    %v4006 = vunpack.c.h.b16 %v3794
    %v4007 = vunpack.c.l.b16 %v3795
    %v4008 = vunpack.c.h.b16 %v3795
    %v4009 = vunpack.c.l.b16 %v3796
    %v4010 = vunpack.c.h.b16 %v3796
    %v4011 = vunpack.c.l.b16 %v3797
    %v4012 = vunpack.c.h.b16 %v3797
    %v4013 = vunpack.c.l.b16 %v3798
    %v4014 = vunpack.c.h.b16 %v3798
    %v4015 = vunpack.c.l.b16 %v3799
    %v4016 = vunpack.c.h.b16 %v3799
    %v4017 = vunpack.c.l.b16 %v3800
    %v4018 = vunpack.c.h.b16 %v3800
    %v4019 = vunpack.c.l.b16 %v3801
    %v4020 = vunpack.c.h.b16 %v3801
    %v4021 = vunpack.c.l.b16 %v3802
    %v4022 = vunpack.c.h.b16 %v3802
    %v4023 = vunpack.c.l.b16 %v3803
    %v4024 = vunpack.c.h.b16 %v3803
    %v4025 = vunpack.c.l.b16 %v3804
    %v4026 = vunpack.c.h.b16 %v3804
    %v4027 = vunpack.c.l.b16 %v3805
    %v4028 = vunpack.c.h.b16 %v3805
    %v4029 = vunpack.c.l.b16 %v3806
    %v4030 = vunpack.c.h.b16 %v3806
    %v4031 = vunpack.c.l.b16 %v3807
    %v4032 = vunpack.c.h.b16 %v3807
    %v4033 = vunpack.c.l.b16 %v3808
    %v4034 = vunpack.c.h.b16 %v3808
    %v4035 = vunpack.c.l.b16 %v3809
    %v4036 = vunpack.c.h.b16 %v3809
    %v4037 = vunpack.c.l.b16 %v3810
    %v4038 = vunpack.c.h.b16 %v3810
    %v4039 = vunpack.c.l.b16 %v3811
    %v4040 = vunpack.c.h.b16 %v3811
    %v4041 = vunpack.c.l.b16 %v3812
    %v4042 = vunpack.c.h.b16 %v3812
    %v4043 = vunpack.c.l.b16 %v3813
    %v4044 = vunpack.c.h.b16 %v3813
    %v4045 = vunpack.c.l.b16 %v3814
    %v4046 = vunpack.c.h.b16 %v3814
    %v4047 = vunpack.c.l.b16 %v3815
    %v4048 = vunpack.c.h.b16 %v3815
    %v4049 = vunpack.c.l.b16 %v3816
    %v4050 = vunpack.c.h.b16 %v3816
    %v4051 = vunpack.c.l.b16 %v3817
    %v4052 = vunpack.c.h.b16 %v3817
    %v4053 = vunpack.c.l.b16 %v3818
    %v4054 = vunpack.c.h.b16 %v3818
    %v4055 = vunpack.c.l.b16 %v3819
    %v4056 = vunpack.c.h.b16 %v3819
    %v4057 = vunpack.c.l.b16 %v3820
    %v4058 = vunpack.c.h.b16 %v3820
    %v4059 = vunpack.c.l.b16 %v3821
    %v4060 = vunpack.c.h.b16 %v3821
    %v4061 = vunpack.c.l.b16 %v3822
    %v4062 = vunpack.c.h.b16 %v3822
    %v4063 = vunpack.c.l.b16 %v3823
    %v4064 = vunpack.c.h.b16 %v3823
    %v4065 = vunpack.c.l.b16 %v3824
    %v4066 = vunpack.c.h.b16 %v3824
    %v4067 = vunpack.c.l.b16 %v3825
    %v4068 = vunpack.c.h.b16 %v3825
    %v4069 = vunpack.c.l.b16 %v3826
    %v4070 = vunpack.c.h.b16 %v3826
    %v4071 = vunpack.c.l.b16 %v3827
    %v4072 = vunpack.c.h.b16 %v3827
    %v4073 = vunpack.c.l.b16 %v3828
    %v4074 = vunpack.c.h.b16 %v3828
    %v4075 = vunpack.c.l.b16 %v3829
    %v4076 = vunpack.c.h.b16 %v3829
    %v4077 = vunpack.c.l.b16 %v3830
    %v4078 = vunpack.c.h.b16 %v3830
    %v4079 = vunpack.c.l.b16 %v3831
    %v4080 = vunpack.c.h.b16 %v3831
    %v4081 = vunpack.c.l.b16 %v3832
    %v4082 = vunpack.c.h.b16 %v3832
    %v4083 = vunpack.c.l.b16 %v3833
    %v4084 = vunpack.c.h.b16 %v3833
    %v4085 = vunpack.c.l.b16 %v3834
    %v4086 = vunpack.c.h.b16 %v3834
    %v4087 = vunpack.c.l.b16 %v3835
    %v4088 = vunpack.c.h.b16 %v3835
    %v4089 = vunpack.c.l.b16 %v3836
    %v4090 = vunpack.c.h.b16 %v3836
    %v4091 = vunpack.c.l.b16 %v3837
    %v4092 = vunpack.c.h.b16 %v3837
    %v4093 = vunpack.c.l.b16 %v3838
    %v4094 = vunpack.c.h.b16 %v3838
    %v4095 = vunpack.c.l.b16 %v3839
    %v4096 = vunpack.c.h.b16 %v3839
    %v4097 = vunpack.c.l.b16 %v3840
    %v4098 = vunpack.c.h.b16 %v3840
    %v4099 = vunpack.c.l.b16 %v3841
    %v4100 = vunpack.c.h.b16 %v3841
    %v4101 = vunpack.c.l.b16 %v3842
    %v4102 = vunpack.c.h.b16 %v3842
    %v4103 = vunpack.c.l.b16 %v3843
    %v4104 = vunpack.c.h.b16 %v3843
    %v4105 = vunpack.c.l.b16 %v3844
    %v4106 = vunpack.c.h.b16 %v3844
    %v4107 = vunpack.c.l.b16 %v3845
    %v4108 = vunpack.c.h.b16 %v3845
    %v4109 = vunpack.c.l.b16 %v3846
    %v4110 = vunpack.c.h.b16 %v3846
    %v4111 = vunpack.c.l.b16 %v3847
    %v4112 = vunpack.c.h.b16 %v3847
    %v4113 = vunpack.c.l.b16 %v3848
    %v4114 = vunpack.c.h.b16 %v3848
    %v4115 = vunpack.c.l.b16 %v3849
    %v4116 = vunpack.c.h.b16 %v3849
    %v4117 = vunpack.c.l.b16 %v3850
    %v4118 = vunpack.c.h.b16 %v3850
    %v4119 = vunpack.c.l.b16 %v3851
    %v4120 = vunpack.c.h.b16 %v3851
    %v4121 = vunpack.c.l.b16 %v3852
    %v4122 = vunpack.c.h.b16 %v3852
    %v4123 = vunpack.c.l.b16 %v3853
    %v4124 = vunpack.c.h.b16 %v3853
    %v4125 = vunpack.c.l.b16 %v3854
    %v4126 = vunpack.c.h.b16 %v3854
    %v4127 = vpack.c.b16 %v3977, %v3967
    %v4128 = vpack.c.b16 %v3978, %v3968
    %v4129 = vpack.c.b16 %v3979, %v3969
    %v4130 = vpack.c.b16 %v3980, %v3970
    %v4131 = vpack.c.b16 %v3981, %v3971
    %v4132 = vpack.c.b16 %v3982, %v3972
    %v4133 = vpack.c.b16 %v3983, %v3973
    %v4134 = vpack.c.b16 %v3984, %v3974
    %v4135 = vpack.c.b16 %v3985, %v3975
    %v4136 = vpack.c.b16 %v3986, %v3976
    %v4137 = vpack.c.b16 %v3997, %v3987
    %v4138 = vpack.c.b16 %v3998, %v3988
    %v4139 = vpack.c.b16 %v3999, %v3989
    %v4140 = vpack.c.b16 %v4000, %v3990
    %v4141 = vpack.c.b16 %v4001, %v3991
    %v4142 = vpack.c.b16 %v4002, %v3992
    %v4143 = vpack.c.b16 %v4003, %v3993
    %v4144 = vpack.c.b16 %v4004, %v3994
    %v4145 = vpack.c.b16 %v4005, %v3995
    %v4146 = vpack.c.b16 %v4006, %v3996
    %v4147 = vpack.c.b16 %v4017, %v4007
    %v4148 = vpack.c.b16 %v4018, %v4008
    %v4149 = vpack.c.b16 %v4019, %v4009
    %v4150 = vpack.c.b16 %v4020, %v4010
    %v4151 = vpack.c.b16 %v4021, %v4011
    %v4152 = vpack.c.b16 %v4022, %v4012
    %v4153 = vpack.c.b16 %v4023, %v4013
    %v4154 = vpack.c.b16 %v4024, %v4014
    %v4155 = vpack.c.b16 %v4025, %v4015
    %v4156 = vpack.c.b16 %v4026, %v4016
    %v4157 = vpack.c.b16 %v4037, %v4027
    %v4158 = vpack.c.b16 %v4038, %v4028
    %v4159 = vpack.c.b16 %v4039, %v4029
    %v4160 = vpack.c.b16 %v4040, %v4030
    %v4161 = vpack.c.b16 %v4041, %v4031
    %v4162 = vpack.c.b16 %v4042, %v4032
    %v4163 = vpack.c.b16 %v4043, %v4033
    %v4164 = vpack.c.b16 %v4044, %v4034
    %v4165 = vpack.c.b16 %v4045, %v4035
    %v4166 = vpack.c.b16 %v4046, %v4036
    %v4167 = vpack.c.b16 %v4057, %v4047
    %v4168 = vpack.c.b16 %v4058, %v4048
    %v4169 = vpack.c.b16 %v4059, %v4049
    %v4170 = vpack.c.b16 %v4060, %v4050
    %v4171 = vpack.c.b16 %v4061, %v4051
    %v4172 = vpack.c.b16 %v4062, %v4052
    %v4173 = vpack.c.b16 %v4063, %v4053
    %v4174 = vpack.c.b16 %v4064, %v4054
    %v4175 = vpack.c.b16 %v4065, %v4055
    %v4176 = vpack.c.b16 %v4066, %v4056
    %v4177 = vpack.c.b16 %v4077, %v4067
    %v4178 = vpack.c.b16 %v4078, %v4068
    %v4179 = vpack.c.b16 %v4079, %v4069
    %v4180 = vpack.c.b16 %v4080, %v4070
    %v4181 = vpack.c.b16 %v4081, %v4071
    %v4182 = vpack.c.b16 %v4082, %v4072
    %v4183 = vpack.c.b16 %v4083, %v4073
    %v4184 = vpack.c.b16 %v4084, %v4074
    %v4185 = vpack.c.b16 %v4085, %v4075
    %v4186 = vpack.c.b16 %v4086, %v4076
    %v4187 = vpack.c.b16 %v4097, %v4087
    %v4188 = vpack.c.b16 %v4098, %v4088
    %v4189 = vpack.c.b16 %v4099, %v4089
    %v4190 = vpack.c.b16 %v4100, %v4090
    %v4191 = vpack.c.b16 %v4101, %v4091
    %v4192 = vpack.c.b16 %v4102, %v4092
    %v4193 = vpack.c.b16 %v4103, %v4093
    %v4194 = vpack.c.b16 %v4104, %v4094
    %v4195 = vpack.c.b16 %v4105, %v4095
    %v4196 = vpack.c.b16 %v4106, %v4096
    %v4197 = vpack.c.b16 %v4117, %v4107
    %v4198 = vpack.c.b16 %v4118, %v4108
    %v4199 = vpack.c.b16 %v4119, %v4109
    %v4200 = vpack.c.b16 %v4120, %v4110
    %v4201 = vpack.c.b16 %v4121, %v4111
    %v4202 = vpack.c.b16 %v4122, %v4112
    %v4203 = vpack.c.b16 %v4123, %v4113
    %v4204 = vpack.c.b16 %v4124, %v4114
    %v4205 = vpack.c.b16 %v4125, %v4115
    %v4206 = vpack.c.b16 %v4126, %v4116
    %4287 = vmatpush.bf16.msra.mxu0 %v4197
    %4288 = vmatpush.bf16.msra.mxu0 %v4187
    %4289 = vmatpush.bf16.msra.mxu0 %v4177
    %4290 = vmatpush.bf16.msra.mxu0 %v4167
    %4291 = vmatpush.bf16.msra.mxu0 %v4157
    %4292 = vmatpush.bf16.msra.mxu0 %v4147
    %4293 = vmatpush.bf16.msra.mxu0 %v4137
    %4294 = vmatpush.bf16.msra.mxu0 %v4127
    %4295 = vmatmul.bf16.gmra.mxu0 %v3885
    %v4296 = vpop.f32.mrf.mxu0
    %v4297 = vadd.f32 %v3859, %v4296
    %v4298 = vpop.f32.mrf.mxu0
    %4299 = vdwg.mxu0
    %4300 = vmatpush.bf16.msra.mxu0 %v4198
    %4301 = vmatpush.bf16.msra.mxu0 %v4188
    %4302 = vmatpush.bf16.msra.mxu0 %v4178
    %4303 = vmatpush.bf16.msra.mxu0 %v4168
    %4304 = vmatpush.bf16.msra.mxu0 %v4158
    %4305 = vmatpush.bf16.msra.mxu0 %v4148
    %4306 = vmatpush.bf16.msra.mxu0 %v4138
    %4307 = vmatpush.bf16.msra.mxu0 %v4128
    %4308 = vmatmul.bf16.gmra.mxu0 %v3885
    %v4309 = vpop.f32.mrf.mxu0
    %v4310 = vadd.f32 %v3860, %v4309
    %v4311 = vpop.f32.mrf.mxu0
    %4312 = vdwg.mxu0
    %4313 = vmatpush.bf16.msra.mxu0 %v4199
    %4314 = vmatpush.bf16.msra.mxu0 %v4189
    %4315 = vmatpush.bf16.msra.mxu0 %v4179
    %4316 = vmatpush.bf16.msra.mxu0 %v4169
    %4317 = vmatpush.bf16.msra.mxu0 %v4159
    %4318 = vmatpush.bf16.msra.mxu0 %v4149
    %4319 = vmatpush.bf16.msra.mxu0 %v4139
    %4320 = vmatpush.bf16.msra.mxu0 %v4129
    %4321 = vmatmul.bf16.gmra.mxu0 %v3885
    %v4322 = vpop.f32.mrf.mxu0
    %v4323 = vadd.f32 %v3861, %v4322
    %v4324 = vpop.f32.mrf.mxu0
    %4325 = vdwg.mxu0
    %4326 = vmatpush.bf16.msra.mxu0 %v4200
    %4327 = vmatpush.bf16.msra.mxu0 %v4190
    %4328 = vmatpush.bf16.msra.mxu0 %v4180
    %4329 = vmatpush.bf16.msra.mxu0 %v4170
    %4330 = vmatpush.bf16.msra.mxu0 %v4160
    %4331 = vmatpush.bf16.msra.mxu0 %v4150
    %4332 = vmatpush.bf16.msra.mxu0 %v4140
    %4333 = vmatpush.bf16.msra.mxu0 %v4130
    %4334 = vmatmul.bf16.gmra.mxu0 %v3885
    %v4335 = vpop.f32.mrf.mxu0
    %v4336 = vadd.f32 %v3862, %v4335
    %v4337 = vpop.f32.mrf.mxu0
    %4338 = vdwg.mxu0
    %4339 = vmatpush.bf16.msra.mxu0 %v4201
    %4340 = vmatpush.bf16.msra.mxu0 %v4191
    %4341 = vmatpush.bf16.msra.mxu0 %v4181
    %4342 = vmatpush.bf16.msra.mxu0 %v4171
    %4343 = vmatpush.bf16.msra.mxu0 %v4161
    %4344 = vmatpush.bf16.msra.mxu0 %v4151
    %4345 = vmatpush.bf16.msra.mxu0 %v4141
    %4346 = vmatpush.bf16.msra.mxu0 %v4131
    %4347 = vmatmul.bf16.gmra.mxu0 %v3885
    %v4348 = vpop.f32.mrf.mxu0
    %v4349 = vadd.f32 %v3863, %v4348
    %v4350 = vpop.f32.mrf.mxu0
    %4351 = vdwg.mxu0
    %4352 = vmatpush.bf16.msra.mxu0 %v4202
    %4353 = vmatpush.bf16.msra.mxu0 %v4192
    %4354 = vmatpush.bf16.msra.mxu0 %v4182
    %4355 = vmatpush.bf16.msra.mxu0 %v4172
    %4356 = vmatpush.bf16.msra.mxu0 %v4162
    %4357 = vmatpush.bf16.msra.mxu0 %v4152
    %4358 = vmatpush.bf16.msra.mxu0 %v4142
    %4359 = vmatpush.bf16.msra.mxu0 %v4132
    %4360 = vmatmul.bf16.gmra.mxu0 %v3885
    %v4361 = vpop.f32.mrf.mxu0
    %v4362 = vadd.f32 %v3864, %v4361
    %v4363 = vpop.f32.mrf.mxu0
    %4364 = vdwg.mxu0
    %4365 = vmatpush.bf16.msra.mxu0 %v4203
    %4366 = vmatpush.bf16.msra.mxu0 %v4193
    %4367 = vmatpush.bf16.msra.mxu0 %v4183
    %4368 = vmatpush.bf16.msra.mxu0 %v4173
    %4369 = vmatpush.bf16.msra.mxu0 %v4163
    %4370 = vmatpush.bf16.msra.mxu0 %v4153
    %4371 = vmatpush.bf16.msra.mxu0 %v4143
    %4372 = vmatpush.bf16.msra.mxu0 %v4133
    %4373 = vmatmul.bf16.gmra.mxu0 %v3885
    %v4374 = vpop.f32.mrf.mxu0
    %v4375 = vadd.f32 %v3865, %v4374
    %v4376 = vpop.f32.mrf.mxu0
    %4377 = vdwg.mxu0
    %4378 = vmatpush.bf16.msra.mxu0 %v4204
    %4379 = vmatpush.bf16.msra.mxu0 %v4194
    %4380 = vmatpush.bf16.msra.mxu0 %v4184
    %4381 = vmatpush.bf16.msra.mxu0 %v4174
    %4382 = vmatpush.bf16.msra.mxu0 %v4164
    %4383 = vmatpush.bf16.msra.mxu0 %v4154
    %4384 = vmatpush.bf16.msra.mxu0 %v4144
    %4385 = vmatpush.bf16.msra.mxu0 %v4134
    %4386 = vmatmul.bf16.gmra.mxu0 %v3885
    %v4387 = vpop.f32.mrf.mxu0
    %v4388 = vadd.f32 %v3866, %v4387
    %v4389 = vpop.f32.mrf.mxu0
    %4390 = vdwg.mxu0
    %4391 = vmatpush.bf16.msra.mxu0 %v4205
    %4392 = vmatpush.bf16.msra.mxu0 %v4195
    %4393 = vmatpush.bf16.msra.mxu0 %v4185
    %4394 = vmatpush.bf16.msra.mxu0 %v4175
    %4395 = vmatpush.bf16.msra.mxu0 %v4165
    %4396 = vmatpush.bf16.msra.mxu0 %v4155
    %4397 = vmatpush.bf16.msra.mxu0 %v4145
    %4398 = vmatpush.bf16.msra.mxu0 %v4135
    %4399 = vmatmul.bf16.gmra.mxu0 %v3885
    %v4400 = vpop.f32.mrf.mxu0
    %v4401 = vadd.f32 %v3867, %v4400
    %v4402 = vpop.f32.mrf.mxu0
    %4403 = vdwg.mxu0
    %4404 = vmatpush.bf16.msra.mxu0 %v4206
    %4405 = vmatpush.bf16.msra.mxu0 %v4196
    %4406 = vmatpush.bf16.msra.mxu0 %v4186
    %4407 = vmatpush.bf16.msra.mxu0 %v4176
    %4408 = vmatpush.bf16.msra.mxu0 %v4166
    %4409 = vmatpush.bf16.msra.mxu0 %v4156
    %4410 = vmatpush.bf16.msra.mxu0 %v4146
    %4411 = vmatpush.bf16.msra.mxu0 %v4136
    %4412 = vmatmul.bf16.gmra.mxu0 %v3885
    %v4413 = vpop.f32.mrf.mxu0
    %v4414 = vadd.f32 %v3868, %v4413
    %v4415 = vpop.f32.mrf.mxu0
    %4416 = vdwg.mxu0
    %v4427 = vrot.slane %v4310, 6
    %v4428 = vrot.slane %v4323, 4
    %v4429 = vrot.slane %v4336, 2
    %v4430 = vrot.slane %v4362, 6
    %v4431 = vrot.slane %v4375, 4
    %v4432 = vrot.slane %v4388, 2
    %v4433 = vrot.slane %v4414, 6
    %vm4434 = vcmask 1041408
    %v4435 = vsel %vm4434, %v4297, %v4427
    %vm4436 = vcmask 1045508
    %v4437 = vsel %vm4436, %v4428, %v4429
    %vm4438 = vcmask 1043456
    %v4439 = vsel %vm4438, %v4435, %v4437
    %v4440 = vsel %vm4434, %v4349, %v4430
    %v4441 = vsel %vm4436, %v4431, %v4432
    %v4442 = vsel %vm4438, %v4440, %v4441
    %v4443 = vsel %vm4434, %v4401, %v4433
    %4447 = vst [vmem:[#allocation19] sm:$0xff] %v4439
    %4448 = vst [vmem:[#allocation19 + $0x8] sm:$0xff] %v4442
    %4449 = vst [vmem:[#allocation19 + $0x10] sm:$0xf] %v4443
    %v4450 = vpack.c.bf16 %v4297, %v4297
    %v4451 = vpack.c.bf16 %v4310, %v4310
    %v4452 = vpack.c.bf16 %v4323, %v4323
    %v4453 = vpack.c.bf16 %v4336, %v4336
    %v4454 = vpack.c.bf16 %v4349, %v4349
    %v4455 = vpack.c.bf16 %v4362, %v4362
    %v4456 = vpack.c.bf16 %v4375, %v4375
    %v4457 = vpack.c.bf16 %v4388, %v4388
    %v4458 = vpack.c.bf16 %v4401, %v4401
    %v4459 = vpack.c.bf16 %v4414, %v4414
    %v4460 = vld [vmem:[#allocation10] sm:$0xff]
    %v4461 = vld [vmem:[#allocation10 + $0x8] sm:$0xff]
    %v4462 = vld [vmem:[#allocation10 + $0x10] sm:$0xff]
    %v4463 = vld [vmem:[#allocation10 + $0x18] sm:$0xff]
    %v4464 = vld [vmem:[#allocation10 + $0x20] sm:$0xff]
    %v4465 = vld [vmem:[#allocation10 + $0x28] sm:$0xff]
    %v4466 = vld [vmem:[#allocation10 + $0x30] sm:$0xff]
    %v4467 = vld [vmem:[#allocation10 + $0x38] sm:$0xff]
    %v4468 = vld [vmem:[#allocation10 + $0x40] sm:$0xff]
    %v4469 = vld [vmem:[#allocation10 + $0x48] sm:$0xff]
    %v4470 = vld [vmem:[#allocation10 + $0x50] sm:$0xff]
    %v4471 = vld [vmem:[#allocation10 + $0x58] sm:$0xff]
    %v4472 = vld [vmem:[#allocation10 + $0x60] sm:$0xff]
    %v4473 = vld [vmem:[#allocation10 + $0x68] sm:$0xff]
    %v4474 = vld [vmem:[#allocation10 + $0x70] sm:$0xff]
    %v4475 = vld [vmem:[#allocation10 + $0x78] sm:$0xff]
    %v4476 = vld [vmem:[#allocation10 + $0x80] sm:$0xff]
    %v4477 = vld [vmem:[#allocation10 + $0x88] sm:$0xff]
    %v4478 = vld [vmem:[#allocation10 + $0x90] sm:$0xff]
    %v4479 = vld [vmem:[#allocation10 + $0x98] sm:$0xff]
    %v4480 = vld [vmem:[#allocation10 + $0xa0] sm:$0xff]
    %v4481 = vld [vmem:[#allocation10 + $0xa8] sm:$0xff]
    %v4482 = vld [vmem:[#allocation10 + $0xb0] sm:$0xff]
    %v4483 = vld [vmem:[#allocation10 + $0xb8] sm:$0xff]
    %v4484 = vld [vmem:[#allocation10 + $0xc0] sm:$0xff]
    %v4485 = vld [vmem:[#allocation10 + $0xc8] sm:$0xff]
    %v4486 = vld [vmem:[#allocation10 + $0xd0] sm:$0xff]
    %v4487 = vld [vmem:[#allocation10 + $0xd8] sm:$0xff]
    %v4488 = vld [vmem:[#allocation10 + $0xe0] sm:$0xff]
    %v4489 = vld [vmem:[#allocation10 + $0xe8] sm:$0xff]
    %v4490 = vld [vmem:[#allocation10 + $0xf0] sm:$0xff]
    %v4491 = vld [vmem:[#allocation10 + $0xf8] sm:$0xff]
    %v4492 = vld [vmem:[#allocation10 + $0x100] sm:$0xff]
    %v4493 = vld [vmem:[#allocation10 + $0x108] sm:$0xff]
    %v4494 = vld [vmem:[#allocation10 + $0x110] sm:$0xff]
    %v4495 = vld [vmem:[#allocation10 + $0x118] sm:$0xff]
    %v4496 = vld [vmem:[#allocation10 + $0x120] sm:$0xff]
    %v4497 = vld [vmem:[#allocation10 + $0x128] sm:$0xff]
    %v4498 = vld [vmem:[#allocation10 + $0x130] sm:$0xff]
    %v4499 = vld [vmem:[#allocation10 + $0x138] sm:$0xff]
    %v4500 = vld [vmem:[#allocation10 + $0x140] sm:$0xff]
    %v4501 = vld [vmem:[#allocation10 + $0x148] sm:$0xff]
    %v4502 = vld [vmem:[#allocation10 + $0x150] sm:$0xff]
    %v4503 = vld [vmem:[#allocation10 + $0x158] sm:$0xff]
    %v4504 = vld [vmem:[#allocation10 + $0x160] sm:$0xff]
    %v4505 = vld [vmem:[#allocation10 + $0x168] sm:$0xff]
    %v4506 = vld [vmem:[#allocation10 + $0x170] sm:$0xff]
    %v4507 = vld [vmem:[#allocation10 + $0x178] sm:$0xff]
    %v4508 = vld [vmem:[#allocation10 + $0x180] sm:$0xff]
    %v4509 = vld [vmem:[#allocation10 + $0x188] sm:$0xff]
    %v4510 = vld [vmem:[#allocation10 + $0x190] sm:$0xff]
    %v4511 = vld [vmem:[#allocation10 + $0x198] sm:$0xff]
    %v4512 = vld [vmem:[#allocation10 + $0x1a0] sm:$0xff]
    %v4513 = vld [vmem:[#allocation10 + $0x1a8] sm:$0xff]
    %v4514 = vld [vmem:[#allocation10 + $0x1b0] sm:$0xff]
    %v4515 = vld [vmem:[#allocation10 + $0x1b8] sm:$0xff]
    %v4516 = vld [vmem:[#allocation10 + $0x1c0] sm:$0xff]
    %v4517 = vld [vmem:[#allocation10 + $0x1c8] sm:$0xff]
    %v4518 = vld [vmem:[#allocation10 + $0x1d0] sm:$0xff]
    %v4519 = vld [vmem:[#allocation10 + $0x1d8] sm:$0xff]
    %v4520 = vld [vmem:[#allocation10 + $0x1e0] sm:$0xff]
    %v4521 = vld [vmem:[#allocation10 + $0x1e8] sm:$0xff]
    %v4522 = vld [vmem:[#allocation10 + $0x1f0] sm:$0xff]
    %v4523 = vld [vmem:[#allocation10 + $0x1f8] sm:$0xff]
    %v4524 = vld [vmem:[#allocation10 + $0x200] sm:$0xff]
    %v4525 = vld [vmem:[#allocation10 + $0x208] sm:$0xff]
    %v4526 = vld [vmem:[#allocation10 + $0x210] sm:$0xff]
    %v4527 = vld [vmem:[#allocation10 + $0x218] sm:$0xff]
    %v4528 = vld [vmem:[#allocation10 + $0x220] sm:$0xff]
    %v4529 = vld [vmem:[#allocation10 + $0x228] sm:$0xff]
    %v4530 = vld [vmem:[#allocation10 + $0x230] sm:$0xff]
    %v4531 = vld [vmem:[#allocation10 + $0x238] sm:$0xff]
    %v4532 = vld [vmem:[#allocation10 + $0x240] sm:$0xff]
    %v4533 = vld [vmem:[#allocation10 + $0x248] sm:$0xff]
    %v4534 = vld [vmem:[#allocation10 + $0x250] sm:$0xff]
    %v4535 = vld [vmem:[#allocation10 + $0x258] sm:$0xff]
    %v4536 = vld [vmem:[#allocation10 + $0x260] sm:$0xff]
    %v4537 = vld [vmem:[#allocation10 + $0x268] sm:$0xff]
    %v4538 = vld [vmem:[#allocation10 + $0x270] sm:$0xff]
    %v4539 = vld [vmem:[#allocation10 + $0x278] sm:$0xff]
    %v4540 = vld [vmem:[#allocation10 + $0x280] sm:$0xff]
    %v4541 = vld [vmem:[#allocation10 + $0x288] sm:$0xff]
    %v4542 = vld [vmem:[#allocation10 + $0x290] sm:$0xff]
    %v4543 = vld [vmem:[#allocation10 + $0x298] sm:$0xff]
    %v4544 = vld [vmem:[#allocation10 + $0x2a0] sm:$0xff]
    %v4545 = vld [vmem:[#allocation10 + $0x2a8] sm:$0xff]
    %v4546 = vld [vmem:[#allocation10 + $0x2b0] sm:$0xff]
    %v4547 = vld [vmem:[#allocation10 + $0x2b8] sm:$0xff]
    %v4548 = vld [vmem:[#allocation10 + $0x2c0] sm:$0xff]
    %v4549 = vld [vmem:[#allocation10 + $0x2c8] sm:$0xff]
    %v4550 = vld [vmem:[#allocation10 + $0x2d0] sm:$0xff]
    %v4551 = vld [vmem:[#allocation10 + $0x2d8] sm:$0xff]
    %v4552 = vld [vmem:[#allocation10 + $0x2e0] sm:$0xff]
    %v4553 = vld [vmem:[#allocation10 + $0x2e8] sm:$0xff]
    %v4554 = vld [vmem:[#allocation10 + $0x2f0] sm:$0xff]
    %v4555 = vld [vmem:[#allocation10 + $0x2f8] sm:$0xff]
    %v4556 = vld [vmem:[#allocation10 + $0x300] sm:$0xff]
    %v4557 = vld [vmem:[#allocation10 + $0x308] sm:$0xff]
    %v4558 = vld [vmem:[#allocation10 + $0x310] sm:$0xff]
    %v4559 = vld [vmem:[#allocation10 + $0x318] sm:$0xff]
    %v4560 = vld [vmem:[#allocation10 + $0x320] sm:$0xff]
    %v4561 = vld [vmem:[#allocation10 + $0x328] sm:$0xff]
    %v4562 = vld [vmem:[#allocation10 + $0x330] sm:$0xff]
    %v4563 = vld [vmem:[#allocation10 + $0x338] sm:$0xff]
    %v4564 = vld [vmem:[#allocation10 + $0x340] sm:$0xff]
    %v4565 = vld [vmem:[#allocation10 + $0x348] sm:$0xff]
    %v4566 = vld [vmem:[#allocation10 + $0x350] sm:$0xff]
    %v4567 = vld [vmem:[#allocation10 + $0x358] sm:$0xff]
    %v4568 = vld [vmem:[#allocation10 + $0x360] sm:$0xff]
    %v4569 = vld [vmem:[#allocation10 + $0x368] sm:$0xff]
    %v4570 = vld [vmem:[#allocation10 + $0x370] sm:$0xff]
    %v4571 = vld [vmem:[#allocation10 + $0x378] sm:$0xff]
    %v4572 = vld [vmem:[#allocation10 + $0x380] sm:$0xff]
    %v4573 = vld [vmem:[#allocation10 + $0x388] sm:$0xff]
    %v4574 = vld [vmem:[#allocation10 + $0x390] sm:$0xff]
    %v4575 = vld [vmem:[#allocation10 + $0x398] sm:$0xff]
    %v4576 = vld [vmem:[#allocation10 + $0x3a0] sm:$0xff]
    %v4577 = vld [vmem:[#allocation10 + $0x3a8] sm:$0xff]
    %v4578 = vld [vmem:[#allocation10 + $0x3b0] sm:$0xff]
    %v4579 = vld [vmem:[#allocation10 + $0x3b8] sm:$0xff]
    %v4580 = vld [vmem:[#allocation10 + $0x3c0] sm:$0xff]
    %v4581 = vld [vmem:[#allocation10 + $0x3c8] sm:$0xff]
    %v4582 = vld [vmem:[#allocation10 + $0x3d0] sm:$0xff]
    %v4583 = vld [vmem:[#allocation10 + $0x3d8] sm:$0xff]
    %v4584 = vld [vmem:[#allocation10 + $0x3e0] sm:$0xff]
    %v4585 = vld [vmem:[#allocation10 + $0x3e8] sm:$0xff]
    %v4586 = vld [vmem:[#allocation10 + $0x3f0] sm:$0xff]
    %v4587 = vld [vmem:[#allocation10 + $0x3f8] sm:$0xff]
    %v4588 = vld [vmem:[#allocation10 + $0x400] sm:$0xff]
    %v4589 = vld [vmem:[#allocation10 + $0x408] sm:$0xff]
    %v4590 = vld [vmem:[#allocation10 + $0x410] sm:$0xff]
    %v4591 = vld [vmem:[#allocation10 + $0x418] sm:$0xff]
    %v4592 = vld [vmem:[#allocation10 + $0x420] sm:$0xff]
    %v4593 = vld [vmem:[#allocation10 + $0x428] sm:$0xff]
    %v4594 = vld [vmem:[#allocation10 + $0x430] sm:$0xff]
    %v4595 = vld [vmem:[#allocation10 + $0x438] sm:$0xff]
    %v4596 = vld [vmem:[#allocation10 + $0x440] sm:$0xff]
    %v4597 = vld [vmem:[#allocation10 + $0x448] sm:$0xff]
    %v4598 = vld [vmem:[#allocation10 + $0x450] sm:$0xff]
    %v4599 = vld [vmem:[#allocation10 + $0x458] sm:$0xff]
    %v4600 = vld [vmem:[#allocation10 + $0x460] sm:$0xff]
    %v4601 = vld [vmem:[#allocation10 + $0x468] sm:$0xff]
    %v4602 = vld [vmem:[#allocation10 + $0x470] sm:$0xff]
    %v4603 = vld [vmem:[#allocation10 + $0x478] sm:$0xff]
    %v4604 = vld [vmem:[#allocation10 + $0x480] sm:$0xff]
    %v4605 = vld [vmem:[#allocation10 + $0x488] sm:$0xff]
    %v4606 = vld [vmem:[#allocation10 + $0x490] sm:$0xff]
    %v4607 = vld [vmem:[#allocation10 + $0x498] sm:$0xff]
    %v4608 = vld [vmem:[#allocation10 + $0x4a0] sm:$0xff]
    %v4609 = vld [vmem:[#allocation10 + $0x4a8] sm:$0xff]
    %v4610 = vld [vmem:[#allocation10 + $0x4b0] sm:$0xff]
    %v4611 = vld [vmem:[#allocation10 + $0x4b8] sm:$0xff]
    %v4612 = vld [vmem:[#allocation10 + $0x4c0] sm:$0xff]
    %v4613 = vld [vmem:[#allocation10 + $0x4c8] sm:$0xff]
    %v4614 = vld [vmem:[#allocation10 + $0x4d0] sm:$0xff]
    %v4615 = vld [vmem:[#allocation10 + $0x4d8] sm:$0xff]
    %v4616 = vld [vmem:[#allocation10 + $0x4e0] sm:$0xff]
    %v4617 = vld [vmem:[#allocation10 + $0x4e8] sm:$0xff]
    %v4618 = vld [vmem:[#allocation10 + $0x4f0] sm:$0xff]
    %v4619 = vld [vmem:[#allocation10 + $0x4f8] sm:$0xff]
    %v4620 = vld [vmem:[#allocation10 + $0x500] sm:$0xff]
    %v4621 = vld [vmem:[#allocation10 + $0x508] sm:$0xff]
    %v4622 = vld [vmem:[#allocation10 + $0x510] sm:$0xff]
    %v4623 = vld [vmem:[#allocation10 + $0x518] sm:$0xff]
    %v4624 = vld [vmem:[#allocation10 + $0x520] sm:$0xff]
    %v4625 = vld [vmem:[#allocation10 + $0x528] sm:$0xff]
    %v4626 = vld [vmem:[#allocation10 + $0x530] sm:$0xff]
    %v4627 = vld [vmem:[#allocation10 + $0x538] sm:$0xff]
    %v4628 = vld [vmem:[#allocation10 + $0x540] sm:$0xff]
    %v4629 = vld [vmem:[#allocation10 + $0x548] sm:$0xff]
    %v4630 = vld [vmem:[#allocation10 + $0x550] sm:$0xff]
    %v4631 = vld [vmem:[#allocation10 + $0x558] sm:$0xff]
    %v4632 = vld [vmem:[#allocation10 + $0x560] sm:$0xff]
    %v4633 = vld [vmem:[#allocation10 + $0x568] sm:$0xff]
    %v4634 = vld [vmem:[#allocation10 + $0x570] sm:$0xff]
    %v4635 = vld [vmem:[#allocation10 + $0x578] sm:$0xff]
    %v4636 = vld [vmem:[#allocation10 + $0x580] sm:$0xff]
    %v4637 = vld [vmem:[#allocation10 + $0x588] sm:$0xff]
    %v4638 = vld [vmem:[#allocation10 + $0x590] sm:$0xff]
    %v4639 = vld [vmem:[#allocation10 + $0x598] sm:$0xff]
    %v4640 = vld [vmem:[#allocation10 + $0x5a0] sm:$0xff]
    %v4641 = vld [vmem:[#allocation10 + $0x5a8] sm:$0xff]
    %v4642 = vld [vmem:[#allocation10 + $0x5b0] sm:$0xff]
    %v4643 = vld [vmem:[#allocation10 + $0x5b8] sm:$0xff]
    %v4644 = vld [vmem:[#allocation10 + $0x5c0] sm:$0xff]
    %v4645 = vld [vmem:[#allocation10 + $0x5c8] sm:$0xff]
    %v4646 = vld [vmem:[#allocation10 + $0x5d0] sm:$0xff]
    %v4647 = vld [vmem:[#allocation10 + $0x5d8] sm:$0xff]
    %v4648 = vld [vmem:[#allocation10 + $0x5e0] sm:$0xff]
    %v4649 = vld [vmem:[#allocation10 + $0x5e8] sm:$0xff]
    %v4650 = vld [vmem:[#allocation10 + $0x5f0] sm:$0xff]
    %v4651 = vld [vmem:[#allocation10 + $0x5f8] sm:$0xff]
    %v4652 = vld [vmem:[#allocation10 + $0x600] sm:$0xff]
    %v4653 = vld [vmem:[#allocation10 + $0x608] sm:$0xff]
    %v4654 = vld [vmem:[#allocation10 + $0x610] sm:$0xff]
    %v4655 = vld [vmem:[#allocation10 + $0x618] sm:$0xff]
    %v4656 = vld [vmem:[#allocation10 + $0x620] sm:$0xff]
    %v4657 = vld [vmem:[#allocation10 + $0x628] sm:$0xff]
    %v4658 = vld [vmem:[#allocation10 + $0x630] sm:$0xff]
    %v4659 = vld [vmem:[#allocation10 + $0x638] sm:$0xff]
    %v4660 = vld [vmem:[#allocation10 + $0x640] sm:$0xff]
    %v4661 = vld [vmem:[#allocation10 + $0x648] sm:$0xff]
    %v4662 = vld [vmem:[#allocation10 + $0x650] sm:$0xff]
    %v4663 = vld [vmem:[#allocation10 + $0x658] sm:$0xff]
    %v4664 = vld [vmem:[#allocation10 + $0x660] sm:$0xff]
    %v4665 = vld [vmem:[#allocation10 + $0x668] sm:$0xff]
    %v4666 = vld [vmem:[#allocation10 + $0x670] sm:$0xff]
    %v4667 = vld [vmem:[#allocation10 + $0x678] sm:$0xff]
    %v4668 = vld [vmem:[#allocation10 + $0x680] sm:$0xff]
    %v4669 = vld [vmem:[#allocation10 + $0x688] sm:$0xff]
    %v4670 = vld [vmem:[#allocation10 + $0x690] sm:$0xff]
    %v4671 = vld [vmem:[#allocation10 + $0x698] sm:$0xff]
    %v4672 = vld [vmem:[#allocation10 + $0x6a0] sm:$0xff]
    %v4673 = vld [vmem:[#allocation10 + $0x6a8] sm:$0xff]
    %v4674 = vld [vmem:[#allocation10 + $0x6b0] sm:$0xff]
    %v4675 = vld [vmem:[#allocation10 + $0x6b8] sm:$0xff]
    %v4676 = vld [vmem:[#allocation10 + $0x6c0] sm:$0xff]
    %v4677 = vld [vmem:[#allocation10 + $0x6c8] sm:$0xff]
    %v4678 = vld [vmem:[#allocation10 + $0x6d0] sm:$0xff]
    %v4679 = vld [vmem:[#allocation10 + $0x6d8] sm:$0xff]
    %v4680 = vld [vmem:[#allocation10 + $0x6e0] sm:$0xff]
    %v4681 = vld [vmem:[#allocation10 + $0x6e8] sm:$0xff]
    %v4682 = vld [vmem:[#allocation10 + $0x6f0] sm:$0xff]
    %v4683 = vld [vmem:[#allocation10 + $0x6f8] sm:$0xff]
    %v4684 = vld [vmem:[#allocation10 + $0x700] sm:$0xff]
    %v4685 = vld [vmem:[#allocation10 + $0x708] sm:$0xff]
    %v4686 = vld [vmem:[#allocation10 + $0x710] sm:$0xff]
    %v4687 = vld [vmem:[#allocation10 + $0x718] sm:$0xff]
    %v4688 = vld [vmem:[#allocation10 + $0x720] sm:$0xff]
    %v4689 = vld [vmem:[#allocation10 + $0x728] sm:$0xff]
    %v4690 = vld [vmem:[#allocation10 + $0x730] sm:$0xff]
    %v4691 = vld [vmem:[#allocation10 + $0x738] sm:$0xff]
    %v4692 = vld [vmem:[#allocation10 + $0x740] sm:$0xff]
    %v4693 = vld [vmem:[#allocation10 + $0x748] sm:$0xff]
    %v4694 = vld [vmem:[#allocation10 + $0x750] sm:$0xff]
    %v4695 = vld [vmem:[#allocation10 + $0x758] sm:$0xff]
    %v4696 = vld [vmem:[#allocation10 + $0x760] sm:$0xff]
    %v4697 = vld [vmem:[#allocation10 + $0x768] sm:$0xff]
    %v4698 = vld [vmem:[#allocation10 + $0x770] sm:$0xff]
    %v4699 = vld [vmem:[#allocation10 + $0x778] sm:$0xff]
    %v4700 = vld [vmem:[#allocation10 + $0x780] sm:$0xff]
    %v4701 = vld [vmem:[#allocation10 + $0x788] sm:$0xff]
    %v4702 = vld [vmem:[#allocation10 + $0x790] sm:$0xff]
    %v4703 = vld [vmem:[#allocation10 + $0x798] sm:$0xff]
    %v4704 = vld [vmem:[#allocation10 + $0x7a0] sm:$0xff]
    %v4705 = vld [vmem:[#allocation10 + $0x7a8] sm:$0xff]
    %v4706 = vld [vmem:[#allocation10 + $0x7b0] sm:$0xff]
    %v4707 = vld [vmem:[#allocation10 + $0x7b8] sm:$0xff]
    %v4708 = vld [vmem:[#allocation10 + $0x7c0] sm:$0xff]
    %v4709 = vld [vmem:[#allocation10 + $0x7c8] sm:$0xff]
    %v4710 = vld [vmem:[#allocation10 + $0x7d0] sm:$0xff]
    %v4711 = vld [vmem:[#allocation10 + $0x7d8] sm:$0xff]
    %v4712 = vld [vmem:[#allocation10 + $0x7e0] sm:$0xff]
    %v4713 = vld [vmem:[#allocation10 + $0x7e8] sm:$0xff]
    %v4714 = vld [vmem:[#allocation10 + $0x7f0] sm:$0xff]
    %v4715 = vld [vmem:[#allocation10 + $0x7f8] sm:$0xff]
    %v4716 = vld [vmem:[#allocation10 + $0x800] sm:$0xff]
    %v4717 = vld [vmem:[#allocation10 + $0x808] sm:$0xff]
    %v4718 = vld [vmem:[#allocation10 + $0x810] sm:$0xff]
    %v4719 = vld [vmem:[#allocation10 + $0x818] sm:$0xff]
    %v4720 = vld [vmem:[#allocation10 + $0x820] sm:$0xff]
    %v4721 = vld [vmem:[#allocation10 + $0x828] sm:$0xff]
    %v4722 = vld [vmem:[#allocation10 + $0x830] sm:$0xff]
    %v4723 = vld [vmem:[#allocation10 + $0x838] sm:$0xff]
    %v4724 = vld [vmem:[#allocation10 + $0x840] sm:$0xff]
    %v4725 = vld [vmem:[#allocation10 + $0x848] sm:$0xff]
    %v4726 = vld [vmem:[#allocation10 + $0x850] sm:$0xff]
    %v4727 = vld [vmem:[#allocation10 + $0x858] sm:$0xff]
    %v4728 = vld [vmem:[#allocation10 + $0x860] sm:$0xff]
    %v4729 = vld [vmem:[#allocation10 + $0x868] sm:$0xff]
    %v4730 = vld [vmem:[#allocation10 + $0x870] sm:$0xff]
    %v4731 = vld [vmem:[#allocation10 + $0x878] sm:$0xff]
    %v4732 = vld [vmem:[#allocation10 + $0x880] sm:$0xff]
    %v4733 = vld [vmem:[#allocation10 + $0x888] sm:$0xff]
    %v4734 = vld [vmem:[#allocation10 + $0x890] sm:$0xff]
    %v4735 = vld [vmem:[#allocation10 + $0x898] sm:$0xff]
    %v4736 = vld [vmem:[#allocation10 + $0x8a0] sm:$0xff]
    %v4737 = vld [vmem:[#allocation10 + $0x8a8] sm:$0xff]
    %v4738 = vld [vmem:[#allocation10 + $0x8b0] sm:$0xff]
    %v4739 = vld [vmem:[#allocation10 + $0x8b8] sm:$0xff]
    %v4740 = vld [vmem:[#allocation10 + $0x8c0] sm:$0xff]
    %v4741 = vld [vmem:[#allocation10 + $0x8c8] sm:$0xff]
    %v4742 = vld [vmem:[#allocation10 + $0x8d0] sm:$0xff]
    %v4743 = vld [vmem:[#allocation10 + $0x8d8] sm:$0xff]
    %v4744 = vld [vmem:[#allocation10 + $0x8e0] sm:$0xff]
    %v4745 = vld [vmem:[#allocation10 + $0x8e8] sm:$0xff]
    %v4746 = vld [vmem:[#allocation10 + $0x8f0] sm:$0xff]
    %v4747 = vld [vmem:[#allocation10 + $0x8f8] sm:$0xff]
    %v4748 = vld [vmem:[#allocation10 + $0x900] sm:$0xff]
    %v4749 = vld [vmem:[#allocation10 + $0x908] sm:$0xff]
    %v4750 = vld [vmem:[#allocation10 + $0x910] sm:$0xff]
    %v4751 = vld [vmem:[#allocation10 + $0x918] sm:$0xff]
    %v4752 = vld [vmem:[#allocation10 + $0x920] sm:$0xff]
    %v4753 = vld [vmem:[#allocation10 + $0x928] sm:$0xff]
    %v4754 = vld [vmem:[#allocation10 + $0x930] sm:$0xff]
    %v4755 = vld [vmem:[#allocation10 + $0x938] sm:$0xff]
    %v4756 = vld [vmem:[#allocation10 + $0x940] sm:$0xff]
    %v4757 = vld [vmem:[#allocation10 + $0x948] sm:$0xff]
    %v4758 = vld [vmem:[#allocation10 + $0x950] sm:$0xff]
    %v4759 = vld [vmem:[#allocation10 + $0x958] sm:$0xff]
    %v4760 = vld [vmem:[#allocation10 + $0x960] sm:$0xff]
    %v4761 = vld [vmem:[#allocation10 + $0x968] sm:$0xff]
    %v4762 = vld [vmem:[#allocation10 + $0x970] sm:$0xff]
    %v4763 = vld [vmem:[#allocation10 + $0x978] sm:$0xff]
    %v4764 = vld [vmem:[#allocation10 + $0x980] sm:$0xff]
    %v4765 = vld [vmem:[#allocation10 + $0x988] sm:$0xff]
    %v4766 = vld [vmem:[#allocation10 + $0x990] sm:$0xff]
    %v4767 = vld [vmem:[#allocation10 + $0x998] sm:$0xff]
    %v4768 = vld [vmem:[#allocation10 + $0x9a0] sm:$0xff]
    %v4769 = vld [vmem:[#allocation10 + $0x9a8] sm:$0xff]
    %v4770 = vld [vmem:[#allocation10 + $0x9b0] sm:$0xff]
    %v4771 = vld [vmem:[#allocation10 + $0x9b8] sm:$0xff]
    %v4772 = vld [vmem:[#allocation10 + $0x9c0] sm:$0xff]
    %v4773 = vld [vmem:[#allocation10 + $0x9c8] sm:$0xff]
    %v4774 = vld [vmem:[#allocation10 + $0x9d0] sm:$0xff]
    %v4775 = vld [vmem:[#allocation10 + $0x9d8] sm:$0xff]
    %v4776 = vld [vmem:[#allocation10 + $0x9e0] sm:$0xff]
    %v4777 = vld [vmem:[#allocation10 + $0x9e8] sm:$0xff]
    %v4778 = vld [vmem:[#allocation10 + $0x9f0] sm:$0xff]
    %v4779 = vld [vmem:[#allocation10 + $0x9f8] sm:$0xff]
    %v4780 = vld [vmem:[#allocation11] sm:$0xf]
    %v4782 = vperm.slane %v4780, 0
    %v4783 = vperm.slane %v4780, 1
    %v4784 = vperm.slane %v4780, 2
    %v4785 = vperm.slane %v4780, 3
    %v5110 = vunpack.c.l.b16 %v4460
    %v5111 = vunpack.c.h.b16 %v4460
    %v5112 = vunpack.c.l.b16 %v4461
    %v5113 = vunpack.c.h.b16 %v4461
    %v5114 = vunpack.c.l.b16 %v4462
    %v5115 = vunpack.c.h.b16 %v4462
    %v5116 = vunpack.c.l.b16 %v4463
    %v5117 = vunpack.c.h.b16 %v4463
    %v5118 = vunpack.c.l.b16 %v4464
    %v5119 = vunpack.c.h.b16 %v4464
    %v5120 = vunpack.c.l.b16 %v4465
    %v5121 = vunpack.c.h.b16 %v4465
    %v5122 = vunpack.c.l.b16 %v4466
    %v5123 = vunpack.c.h.b16 %v4466
    %v5124 = vunpack.c.l.b16 %v4467
    %v5125 = vunpack.c.h.b16 %v4467
    %v5126 = vunpack.c.l.b16 %v4468
    %v5127 = vunpack.c.h.b16 %v4468
    %v5128 = vunpack.c.l.b16 %v4469
    %v5129 = vunpack.c.h.b16 %v4469
    %v5130 = vunpack.c.l.b16 %v4470
    %v5131 = vunpack.c.h.b16 %v4470
    %v5132 = vunpack.c.l.b16 %v4471
    %v5133 = vunpack.c.h.b16 %v4471
    %v5134 = vunpack.c.l.b16 %v4472
    %v5135 = vunpack.c.h.b16 %v4472
    %v5136 = vunpack.c.l.b16 %v4473
    %v5137 = vunpack.c.h.b16 %v4473
    %v5138 = vunpack.c.l.b16 %v4474
    %v5139 = vunpack.c.h.b16 %v4474
    %v5140 = vunpack.c.l.b16 %v4475
    %v5141 = vunpack.c.h.b16 %v4475
    %v5142 = vunpack.c.l.b16 %v4476
    %v5143 = vunpack.c.h.b16 %v4476
    %v5144 = vunpack.c.l.b16 %v4477
    %v5145 = vunpack.c.h.b16 %v4477
    %v5146 = vunpack.c.l.b16 %v4478
    %v5147 = vunpack.c.h.b16 %v4478
    %v5148 = vunpack.c.l.b16 %v4479
    %v5149 = vunpack.c.h.b16 %v4479
    %v5150 = vunpack.c.l.b16 %v4480
    %v5151 = vunpack.c.h.b16 %v4480
    %v5152 = vunpack.c.l.b16 %v4481
    %v5153 = vunpack.c.h.b16 %v4481
    %v5154 = vunpack.c.l.b16 %v4482
    %v5155 = vunpack.c.h.b16 %v4482
    %v5156 = vunpack.c.l.b16 %v4483
    %v5157 = vunpack.c.h.b16 %v4483
    %v5158 = vunpack.c.l.b16 %v4484
    %v5159 = vunpack.c.h.b16 %v4484
    %v5160 = vunpack.c.l.b16 %v4485
    %v5161 = vunpack.c.h.b16 %v4485
    %v5162 = vunpack.c.l.b16 %v4486
    %v5163 = vunpack.c.h.b16 %v4486
    %v5164 = vunpack.c.l.b16 %v4487
    %v5165 = vunpack.c.h.b16 %v4487
    %v5166 = vunpack.c.l.b16 %v4488
    %v5167 = vunpack.c.h.b16 %v4488
    %v5168 = vunpack.c.l.b16 %v4489
    %v5169 = vunpack.c.h.b16 %v4489
    %v5170 = vunpack.c.l.b16 %v4490
    %v5171 = vunpack.c.h.b16 %v4490
    %v5172 = vunpack.c.l.b16 %v4491
    %v5173 = vunpack.c.h.b16 %v4491
    %v5174 = vunpack.c.l.b16 %v4492
    %v5175 = vunpack.c.h.b16 %v4492
    %v5176 = vunpack.c.l.b16 %v4493
    %v5177 = vunpack.c.h.b16 %v4493
    %v5178 = vunpack.c.l.b16 %v4494
    %v5179 = vunpack.c.h.b16 %v4494
    %v5180 = vunpack.c.l.b16 %v4495
    %v5181 = vunpack.c.h.b16 %v4495
    %v5182 = vunpack.c.l.b16 %v4496
    %v5183 = vunpack.c.h.b16 %v4496
    %v5184 = vunpack.c.l.b16 %v4497
    %v5185 = vunpack.c.h.b16 %v4497
    %v5186 = vunpack.c.l.b16 %v4498
    %v5187 = vunpack.c.h.b16 %v4498
    %v5188 = vunpack.c.l.b16 %v4499
    %v5189 = vunpack.c.h.b16 %v4499
    %v5190 = vunpack.c.l.b16 %v4500
    %v5191 = vunpack.c.h.b16 %v4500
    %v5192 = vunpack.c.l.b16 %v4501
    %v5193 = vunpack.c.h.b16 %v4501
    %v5194 = vunpack.c.l.b16 %v4502
    %v5195 = vunpack.c.h.b16 %v4502
    %v5196 = vunpack.c.l.b16 %v4503
    %v5197 = vunpack.c.h.b16 %v4503
    %v5198 = vunpack.c.l.b16 %v4504
    %v5199 = vunpack.c.h.b16 %v4504
    %v5200 = vunpack.c.l.b16 %v4505
    %v5201 = vunpack.c.h.b16 %v4505
    %v5202 = vunpack.c.l.b16 %v4506
    %v5203 = vunpack.c.h.b16 %v4506
    %v5204 = vunpack.c.l.b16 %v4507
    %v5205 = vunpack.c.h.b16 %v4507
    %v5206 = vunpack.c.l.b16 %v4508
    %v5207 = vunpack.c.h.b16 %v4508
    %v5208 = vunpack.c.l.b16 %v4509
    %v5209 = vunpack.c.h.b16 %v4509
    %v5210 = vunpack.c.l.b16 %v4510
    %v5211 = vunpack.c.h.b16 %v4510
    %v5212 = vunpack.c.l.b16 %v4511
    %v5213 = vunpack.c.h.b16 %v4511
    %v5214 = vunpack.c.l.b16 %v4512
    %v5215 = vunpack.c.h.b16 %v4512
    %v5216 = vunpack.c.l.b16 %v4513
    %v5217 = vunpack.c.h.b16 %v4513
    %v5218 = vunpack.c.l.b16 %v4514
    %v5219 = vunpack.c.h.b16 %v4514
    %v5220 = vunpack.c.l.b16 %v4515
    %v5221 = vunpack.c.h.b16 %v4515
    %v5222 = vunpack.c.l.b16 %v4516
    %v5223 = vunpack.c.h.b16 %v4516
    %v5224 = vunpack.c.l.b16 %v4517
    %v5225 = vunpack.c.h.b16 %v4517
    %v5226 = vunpack.c.l.b16 %v4518
    %v5227 = vunpack.c.h.b16 %v4518
    %v5228 = vunpack.c.l.b16 %v4519
    %v5229 = vunpack.c.h.b16 %v4519
    %v5230 = vunpack.c.l.b16 %v4520
    %v5231 = vunpack.c.h.b16 %v4520
    %v5232 = vunpack.c.l.b16 %v4521
    %v5233 = vunpack.c.h.b16 %v4521
    %v5234 = vunpack.c.l.b16 %v4522
    %v5235 = vunpack.c.h.b16 %v4522
    %v5236 = vunpack.c.l.b16 %v4523
    %v5237 = vunpack.c.h.b16 %v4523
    %v5238 = vunpack.c.l.b16 %v4524
    %v5239 = vunpack.c.h.b16 %v4524
    %v5240 = vunpack.c.l.b16 %v4525
    %v5241 = vunpack.c.h.b16 %v4525
    %v5242 = vunpack.c.l.b16 %v4526
    %v5243 = vunpack.c.h.b16 %v4526
    %v5244 = vunpack.c.l.b16 %v4527
    %v5245 = vunpack.c.h.b16 %v4527
    %v5246 = vunpack.c.l.b16 %v4528
    %v5247 = vunpack.c.h.b16 %v4528
    %v5248 = vunpack.c.l.b16 %v4529
    %v5249 = vunpack.c.h.b16 %v4529
    %v5250 = vunpack.c.l.b16 %v4530
    %v5251 = vunpack.c.h.b16 %v4530
    %v5252 = vunpack.c.l.b16 %v4531
    %v5253 = vunpack.c.h.b16 %v4531
    %v5254 = vunpack.c.l.b16 %v4532
    %v5255 = vunpack.c.h.b16 %v4532
    %v5256 = vunpack.c.l.b16 %v4533
    %v5257 = vunpack.c.h.b16 %v4533
    %v5258 = vunpack.c.l.b16 %v4534
    %v5259 = vunpack.c.h.b16 %v4534
    %v5260 = vunpack.c.l.b16 %v4535
    %v5261 = vunpack.c.h.b16 %v4535
    %v5262 = vunpack.c.l.b16 %v4536
    %v5263 = vunpack.c.h.b16 %v4536
    %v5264 = vunpack.c.l.b16 %v4537
    %v5265 = vunpack.c.h.b16 %v4537
    %v5266 = vunpack.c.l.b16 %v4538
    %v5267 = vunpack.c.h.b16 %v4538
    %v5268 = vunpack.c.l.b16 %v4539
    %v5269 = vunpack.c.h.b16 %v4539
    %v5270 = vunpack.c.l.b16 %v4540
    %v5271 = vunpack.c.h.b16 %v4540
    %v5272 = vunpack.c.l.b16 %v4541
    %v5273 = vunpack.c.h.b16 %v4541
    %v5274 = vunpack.c.l.b16 %v4542
    %v5275 = vunpack.c.h.b16 %v4542
    %v5276 = vunpack.c.l.b16 %v4543
    %v5277 = vunpack.c.h.b16 %v4543
    %v5278 = vunpack.c.l.b16 %v4544
    %v5279 = vunpack.c.h.b16 %v4544
    %v5280 = vunpack.c.l.b16 %v4545
    %v5281 = vunpack.c.h.b16 %v4545
    %v5282 = vunpack.c.l.b16 %v4546
    %v5283 = vunpack.c.h.b16 %v4546
    %v5284 = vunpack.c.l.b16 %v4547
    %v5285 = vunpack.c.h.b16 %v4547
    %v5286 = vunpack.c.l.b16 %v4548
    %v5287 = vunpack.c.h.b16 %v4548
    %v5288 = vunpack.c.l.b16 %v4549
    %v5289 = vunpack.c.h.b16 %v4549
    %v5290 = vunpack.c.l.b16 %v4550
    %v5291 = vunpack.c.h.b16 %v4550
    %v5292 = vunpack.c.l.b16 %v4551
    %v5293 = vunpack.c.h.b16 %v4551
    %v5294 = vunpack.c.l.b16 %v4552
    %v5295 = vunpack.c.h.b16 %v4552
    %v5296 = vunpack.c.l.b16 %v4553
    %v5297 = vunpack.c.h.b16 %v4553
    %v5298 = vunpack.c.l.b16 %v4554
    %v5299 = vunpack.c.h.b16 %v4554
    %v5300 = vunpack.c.l.b16 %v4555
    %v5301 = vunpack.c.h.b16 %v4555
    %v5302 = vunpack.c.l.b16 %v4556
    %v5303 = vunpack.c.h.b16 %v4556
    %v5304 = vunpack.c.l.b16 %v4557
    %v5305 = vunpack.c.h.b16 %v4557
    %v5306 = vunpack.c.l.b16 %v4558
    %v5307 = vunpack.c.h.b16 %v4558
    %v5308 = vunpack.c.l.b16 %v4559
    %v5309 = vunpack.c.h.b16 %v4559
    %v5310 = vunpack.c.l.b16 %v4560
    %v5311 = vunpack.c.h.b16 %v4560
    %v5312 = vunpack.c.l.b16 %v4561
    %v5313 = vunpack.c.h.b16 %v4561
    %v5314 = vunpack.c.l.b16 %v4562
    %v5315 = vunpack.c.h.b16 %v4562
    %v5316 = vunpack.c.l.b16 %v4563
    %v5317 = vunpack.c.h.b16 %v4563
    %v5318 = vunpack.c.l.b16 %v4564
    %v5319 = vunpack.c.h.b16 %v4564
    %v5320 = vunpack.c.l.b16 %v4565
    %v5321 = vunpack.c.h.b16 %v4565
    %v5322 = vunpack.c.l.b16 %v4566
    %v5323 = vunpack.c.h.b16 %v4566
    %v5324 = vunpack.c.l.b16 %v4567
    %v5325 = vunpack.c.h.b16 %v4567
    %v5326 = vunpack.c.l.b16 %v4568
    %v5327 = vunpack.c.h.b16 %v4568
    %v5328 = vunpack.c.l.b16 %v4569
    %v5329 = vunpack.c.h.b16 %v4569
    %v5330 = vunpack.c.l.b16 %v4570
    %v5331 = vunpack.c.h.b16 %v4570
    %v5332 = vunpack.c.l.b16 %v4571
    %v5333 = vunpack.c.h.b16 %v4571
    %v5334 = vunpack.c.l.b16 %v4572
    %v5335 = vunpack.c.h.b16 %v4572
    %v5336 = vunpack.c.l.b16 %v4573
    %v5337 = vunpack.c.h.b16 %v4573
    %v5338 = vunpack.c.l.b16 %v4574
    %v5339 = vunpack.c.h.b16 %v4574
    %v5340 = vunpack.c.l.b16 %v4575
    %v5341 = vunpack.c.h.b16 %v4575
    %v5342 = vunpack.c.l.b16 %v4576
    %v5343 = vunpack.c.h.b16 %v4576
    %v5344 = vunpack.c.l.b16 %v4577
    %v5345 = vunpack.c.h.b16 %v4577
    %v5346 = vunpack.c.l.b16 %v4578
    %v5347 = vunpack.c.h.b16 %v4578
    %v5348 = vunpack.c.l.b16 %v4579
    %v5349 = vunpack.c.h.b16 %v4579
    %v5350 = vunpack.c.l.b16 %v4580
    %v5351 = vunpack.c.h.b16 %v4580
    %v5352 = vunpack.c.l.b16 %v4581
    %v5353 = vunpack.c.h.b16 %v4581
    %v5354 = vunpack.c.l.b16 %v4582
    %v5355 = vunpack.c.h.b16 %v4582
    %v5356 = vunpack.c.l.b16 %v4583
    %v5357 = vunpack.c.h.b16 %v4583
    %v5358 = vunpack.c.l.b16 %v4584
    %v5359 = vunpack.c.h.b16 %v4584
    %v5360 = vunpack.c.l.b16 %v4585
    %v5361 = vunpack.c.h.b16 %v4585
    %v5362 = vunpack.c.l.b16 %v4586
    %v5363 = vunpack.c.h.b16 %v4586
    %v5364 = vunpack.c.l.b16 %v4587
    %v5365 = vunpack.c.h.b16 %v4587
    %v5366 = vunpack.c.l.b16 %v4588
    %v5367 = vunpack.c.h.b16 %v4588
    %v5368 = vunpack.c.l.b16 %v4589
    %v5369 = vunpack.c.h.b16 %v4589
    %v5370 = vunpack.c.l.b16 %v4590
    %v5371 = vunpack.c.h.b16 %v4590
    %v5372 = vunpack.c.l.b16 %v4591
    %v5373 = vunpack.c.h.b16 %v4591
    %v5374 = vunpack.c.l.b16 %v4592
    %v5375 = vunpack.c.h.b16 %v4592
    %v5376 = vunpack.c.l.b16 %v4593
    %v5377 = vunpack.c.h.b16 %v4593
    %v5378 = vunpack.c.l.b16 %v4594
    %v5379 = vunpack.c.h.b16 %v4594
    %v5380 = vunpack.c.l.b16 %v4595
    %v5381 = vunpack.c.h.b16 %v4595
    %v5382 = vunpack.c.l.b16 %v4596
    %v5383 = vunpack.c.h.b16 %v4596
    %v5384 = vunpack.c.l.b16 %v4597
    %v5385 = vunpack.c.h.b16 %v4597
    %v5386 = vunpack.c.l.b16 %v4598
    %v5387 = vunpack.c.h.b16 %v4598
    %v5388 = vunpack.c.l.b16 %v4599
    %v5389 = vunpack.c.h.b16 %v4599
    %v5390 = vunpack.c.l.b16 %v4600
    %v5391 = vunpack.c.h.b16 %v4600
    %v5392 = vunpack.c.l.b16 %v4601
    %v5393 = vunpack.c.h.b16 %v4601
    %v5394 = vunpack.c.l.b16 %v4602
    %v5395 = vunpack.c.h.b16 %v4602
    %v5396 = vunpack.c.l.b16 %v4603
    %v5397 = vunpack.c.h.b16 %v4603
    %v5398 = vunpack.c.l.b16 %v4604
    %v5399 = vunpack.c.h.b16 %v4604
    %v5400 = vunpack.c.l.b16 %v4605
    %v5401 = vunpack.c.h.b16 %v4605
    %v5402 = vunpack.c.l.b16 %v4606
    %v5403 = vunpack.c.h.b16 %v4606
    %v5404 = vunpack.c.l.b16 %v4607
    %v5405 = vunpack.c.h.b16 %v4607
    %v5406 = vunpack.c.l.b16 %v4608
    %v5407 = vunpack.c.h.b16 %v4608
    %v5408 = vunpack.c.l.b16 %v4609
    %v5409 = vunpack.c.h.b16 %v4609
    %v5410 = vunpack.c.l.b16 %v4610
    %v5411 = vunpack.c.h.b16 %v4610
    %v5412 = vunpack.c.l.b16 %v4611
    %v5413 = vunpack.c.h.b16 %v4611
    %v5414 = vunpack.c.l.b16 %v4612
    %v5415 = vunpack.c.h.b16 %v4612
    %v5416 = vunpack.c.l.b16 %v4613
    %v5417 = vunpack.c.h.b16 %v4613
    %v5418 = vunpack.c.l.b16 %v4614
    %v5419 = vunpack.c.h.b16 %v4614
    %v5420 = vunpack.c.l.b16 %v4615
    %v5421 = vunpack.c.h.b16 %v4615
    %v5422 = vunpack.c.l.b16 %v4616
    %v5423 = vunpack.c.h.b16 %v4616
    %v5424 = vunpack.c.l.b16 %v4617
    %v5425 = vunpack.c.h.b16 %v4617
    %v5426 = vunpack.c.l.b16 %v4618
    %v5427 = vunpack.c.h.b16 %v4618
    %v5428 = vunpack.c.l.b16 %v4619
    %v5429 = vunpack.c.h.b16 %v4619
    %v5430 = vunpack.c.l.b16 %v4620
    %v5431 = vunpack.c.h.b16 %v4620
    %v5432 = vunpack.c.l.b16 %v4621
    %v5433 = vunpack.c.h.b16 %v4621
    %v5434 = vunpack.c.l.b16 %v4622
    %v5435 = vunpack.c.h.b16 %v4622
    %v5436 = vunpack.c.l.b16 %v4623
    %v5437 = vunpack.c.h.b16 %v4623
    %v5438 = vunpack.c.l.b16 %v4624
    %v5439 = vunpack.c.h.b16 %v4624
    %v5440 = vunpack.c.l.b16 %v4625
    %v5441 = vunpack.c.h.b16 %v4625
    %v5442 = vunpack.c.l.b16 %v4626
    %v5443 = vunpack.c.h.b16 %v4626
    %v5444 = vunpack.c.l.b16 %v4627
    %v5445 = vunpack.c.h.b16 %v4627
    %v5446 = vunpack.c.l.b16 %v4628
    %v5447 = vunpack.c.h.b16 %v4628
    %v5448 = vunpack.c.l.b16 %v4629
    %v5449 = vunpack.c.h.b16 %v4629
    %v5450 = vunpack.c.l.b16 %v4630
    %v5451 = vunpack.c.h.b16 %v4630
    %v5452 = vunpack.c.l.b16 %v4631
    %v5453 = vunpack.c.h.b16 %v4631
    %v5454 = vunpack.c.l.b16 %v4632
    %v5455 = vunpack.c.h.b16 %v4632
    %v5456 = vunpack.c.l.b16 %v4633
    %v5457 = vunpack.c.h.b16 %v4633
    %v5458 = vunpack.c.l.b16 %v4634
    %v5459 = vunpack.c.h.b16 %v4634
    %v5460 = vunpack.c.l.b16 %v4635
    %v5461 = vunpack.c.h.b16 %v4635
    %v5462 = vunpack.c.l.b16 %v4636
    %v5463 = vunpack.c.h.b16 %v4636
    %v5464 = vunpack.c.l.b16 %v4637
    %v5465 = vunpack.c.h.b16 %v4637
    %v5466 = vunpack.c.l.b16 %v4638
    %v5467 = vunpack.c.h.b16 %v4638
    %v5468 = vunpack.c.l.b16 %v4639
    %v5469 = vunpack.c.h.b16 %v4639
    %v5470 = vunpack.c.l.b16 %v4640
    %v5471 = vunpack.c.h.b16 %v4640
    %v5472 = vunpack.c.l.b16 %v4641
    %v5473 = vunpack.c.h.b16 %v4641
    %v5474 = vunpack.c.l.b16 %v4642
    %v5475 = vunpack.c.h.b16 %v4642
    %v5476 = vunpack.c.l.b16 %v4643
    %v5477 = vunpack.c.h.b16 %v4643
    %v5478 = vunpack.c.l.b16 %v4644
    %v5479 = vunpack.c.h.b16 %v4644
    %v5480 = vunpack.c.l.b16 %v4645
    %v5481 = vunpack.c.h.b16 %v4645
    %v5482 = vunpack.c.l.b16 %v4646
    %v5483 = vunpack.c.h.b16 %v4646
    %v5484 = vunpack.c.l.b16 %v4647
    %v5485 = vunpack.c.h.b16 %v4647
    %v5486 = vunpack.c.l.b16 %v4648
    %v5487 = vunpack.c.h.b16 %v4648
    %v5488 = vunpack.c.l.b16 %v4649
    %v5489 = vunpack.c.h.b16 %v4649
    %v5490 = vunpack.c.l.b16 %v4650
    %v5491 = vunpack.c.h.b16 %v4650
    %v5492 = vunpack.c.l.b16 %v4651
    %v5493 = vunpack.c.h.b16 %v4651
    %v5494 = vunpack.c.l.b16 %v4652
    %v5495 = vunpack.c.h.b16 %v4652
    %v5496 = vunpack.c.l.b16 %v4653
    %v5497 = vunpack.c.h.b16 %v4653
    %v5498 = vunpack.c.l.b16 %v4654
    %v5499 = vunpack.c.h.b16 %v4654
    %v5500 = vunpack.c.l.b16 %v4655
    %v5501 = vunpack.c.h.b16 %v4655
    %v5502 = vunpack.c.l.b16 %v4656
    %v5503 = vunpack.c.h.b16 %v4656
    %v5504 = vunpack.c.l.b16 %v4657
    %v5505 = vunpack.c.h.b16 %v4657
    %v5506 = vunpack.c.l.b16 %v4658
    %v5507 = vunpack.c.h.b16 %v4658
    %v5508 = vunpack.c.l.b16 %v4659
    %v5509 = vunpack.c.h.b16 %v4659
    %v5510 = vunpack.c.l.b16 %v4660
    %v5511 = vunpack.c.h.b16 %v4660
    %v5512 = vunpack.c.l.b16 %v4661
    %v5513 = vunpack.c.h.b16 %v4661
    %v5514 = vunpack.c.l.b16 %v4662
    %v5515 = vunpack.c.h.b16 %v4662
    %v5516 = vunpack.c.l.b16 %v4663
    %v5517 = vunpack.c.h.b16 %v4663
    %v5518 = vunpack.c.l.b16 %v4664
    %v5519 = vunpack.c.h.b16 %v4664
    %v5520 = vunpack.c.l.b16 %v4665
    %v5521 = vunpack.c.h.b16 %v4665
    %v5522 = vunpack.c.l.b16 %v4666
    %v5523 = vunpack.c.h.b16 %v4666
    %v5524 = vunpack.c.l.b16 %v4667
    %v5525 = vunpack.c.h.b16 %v4667
    %v5526 = vunpack.c.l.b16 %v4668
    %v5527 = vunpack.c.h.b16 %v4668
    %v5528 = vunpack.c.l.b16 %v4669
    %v5529 = vunpack.c.h.b16 %v4669
    %v5530 = vunpack.c.l.b16 %v4670
    %v5531 = vunpack.c.h.b16 %v4670
    %v5532 = vunpack.c.l.b16 %v4671
    %v5533 = vunpack.c.h.b16 %v4671
    %v5534 = vunpack.c.l.b16 %v4672
    %v5535 = vunpack.c.h.b16 %v4672
    %v5536 = vunpack.c.l.b16 %v4673
    %v5537 = vunpack.c.h.b16 %v4673
    %v5538 = vunpack.c.l.b16 %v4674
    %v5539 = vunpack.c.h.b16 %v4674
    %v5540 = vunpack.c.l.b16 %v4675
    %v5541 = vunpack.c.h.b16 %v4675
    %v5542 = vunpack.c.l.b16 %v4676
    %v5543 = vunpack.c.h.b16 %v4676
    %v5544 = vunpack.c.l.b16 %v4677
    %v5545 = vunpack.c.h.b16 %v4677
    %v5546 = vunpack.c.l.b16 %v4678
    %v5547 = vunpack.c.h.b16 %v4678
    %v5548 = vunpack.c.l.b16 %v4679
    %v5549 = vunpack.c.h.b16 %v4679
    %v5550 = vunpack.c.l.b16 %v4680
    %v5551 = vunpack.c.h.b16 %v4680
    %v5552 = vunpack.c.l.b16 %v4681
    %v5553 = vunpack.c.h.b16 %v4681
    %v5554 = vunpack.c.l.b16 %v4682
    %v5555 = vunpack.c.h.b16 %v4682
    %v5556 = vunpack.c.l.b16 %v4683
    %v5557 = vunpack.c.h.b16 %v4683
    %v5558 = vunpack.c.l.b16 %v4684
    %v5559 = vunpack.c.h.b16 %v4684
    %v5560 = vunpack.c.l.b16 %v4685
    %v5561 = vunpack.c.h.b16 %v4685
    %v5562 = vunpack.c.l.b16 %v4686
    %v5563 = vunpack.c.h.b16 %v4686
    %v5564 = vunpack.c.l.b16 %v4687
    %v5565 = vunpack.c.h.b16 %v4687
    %v5566 = vunpack.c.l.b16 %v4688
    %v5567 = vunpack.c.h.b16 %v4688
    %v5568 = vunpack.c.l.b16 %v4689
    %v5569 = vunpack.c.h.b16 %v4689
    %v5570 = vunpack.c.l.b16 %v4690
    %v5571 = vunpack.c.h.b16 %v4690
    %v5572 = vunpack.c.l.b16 %v4691
    %v5573 = vunpack.c.h.b16 %v4691
    %v5574 = vunpack.c.l.b16 %v4692
    %v5575 = vunpack.c.h.b16 %v4692
    %v5576 = vunpack.c.l.b16 %v4693
    %v5577 = vunpack.c.h.b16 %v4693
    %v5578 = vunpack.c.l.b16 %v4694
    %v5579 = vunpack.c.h.b16 %v4694
    %v5580 = vunpack.c.l.b16 %v4695
    %v5581 = vunpack.c.h.b16 %v4695
    %v5582 = vunpack.c.l.b16 %v4696
    %v5583 = vunpack.c.h.b16 %v4696
    %v5584 = vunpack.c.l.b16 %v4697
    %v5585 = vunpack.c.h.b16 %v4697
    %v5586 = vunpack.c.l.b16 %v4698
    %v5587 = vunpack.c.h.b16 %v4698
    %v5588 = vunpack.c.l.b16 %v4699
    %v5589 = vunpack.c.h.b16 %v4699
    %v5590 = vunpack.c.l.b16 %v4700
    %v5591 = vunpack.c.h.b16 %v4700
    %v5592 = vunpack.c.l.b16 %v4701
    %v5593 = vunpack.c.h.b16 %v4701
    %v5594 = vunpack.c.l.b16 %v4702
    %v5595 = vunpack.c.h.b16 %v4702
    %v5596 = vunpack.c.l.b16 %v4703
    %v5597 = vunpack.c.h.b16 %v4703
    %v5598 = vunpack.c.l.b16 %v4704
    %v5599 = vunpack.c.h.b16 %v4704
    %v5600 = vunpack.c.l.b16 %v4705
    %v5601 = vunpack.c.h.b16 %v4705
    %v5602 = vunpack.c.l.b16 %v4706
    %v5603 = vunpack.c.h.b16 %v4706
    %v5604 = vunpack.c.l.b16 %v4707
    %v5605 = vunpack.c.h.b16 %v4707
    %v5606 = vunpack.c.l.b16 %v4708
    %v5607 = vunpack.c.h.b16 %v4708
    %v5608 = vunpack.c.l.b16 %v4709
    %v5609 = vunpack.c.h.b16 %v4709
    %v5610 = vunpack.c.l.b16 %v4710
    %v5611 = vunpack.c.h.b16 %v4710
    %v5612 = vunpack.c.l.b16 %v4711
    %v5613 = vunpack.c.h.b16 %v4711
    %v5614 = vunpack.c.l.b16 %v4712
    %v5615 = vunpack.c.h.b16 %v4712
    %v5616 = vunpack.c.l.b16 %v4713
    %v5617 = vunpack.c.h.b16 %v4713
    %v5618 = vunpack.c.l.b16 %v4714
    %v5619 = vunpack.c.h.b16 %v4714
    %v5620 = vunpack.c.l.b16 %v4715
    %v5621 = vunpack.c.h.b16 %v4715
    %v5622 = vunpack.c.l.b16 %v4716
    %v5623 = vunpack.c.h.b16 %v4716
    %v5624 = vunpack.c.l.b16 %v4717
    %v5625 = vunpack.c.h.b16 %v4717
    %v5626 = vunpack.c.l.b16 %v4718
    %v5627 = vunpack.c.h.b16 %v4718
    %v5628 = vunpack.c.l.b16 %v4719
    %v5629 = vunpack.c.h.b16 %v4719
    %v5630 = vunpack.c.l.b16 %v4720
    %v5631 = vunpack.c.h.b16 %v4720
    %v5632 = vunpack.c.l.b16 %v4721
    %v5633 = vunpack.c.h.b16 %v4721
    %v5634 = vunpack.c.l.b16 %v4722
    %v5635 = vunpack.c.h.b16 %v4722
    %v5636 = vunpack.c.l.b16 %v4723
    %v5637 = vunpack.c.h.b16 %v4723
    %v5638 = vunpack.c.l.b16 %v4724
    %v5639 = vunpack.c.h.b16 %v4724
    %v5640 = vunpack.c.l.b16 %v4725
    %v5641 = vunpack.c.h.b16 %v4725
    %v5642 = vunpack.c.l.b16 %v4726
    %v5643 = vunpack.c.h.b16 %v4726
    %v5644 = vunpack.c.l.b16 %v4727
    %v5645 = vunpack.c.h.b16 %v4727
    %v5646 = vunpack.c.l.b16 %v4728
    %v5647 = vunpack.c.h.b16 %v4728
    %v5648 = vunpack.c.l.b16 %v4729
    %v5649 = vunpack.c.h.b16 %v4729
    %v5650 = vunpack.c.l.b16 %v4730
    %v5651 = vunpack.c.h.b16 %v4730
    %v5652 = vunpack.c.l.b16 %v4731
    %v5653 = vunpack.c.h.b16 %v4731
    %v5654 = vunpack.c.l.b16 %v4732
    %v5655 = vunpack.c.h.b16 %v4732
    %v5656 = vunpack.c.l.b16 %v4733
    %v5657 = vunpack.c.h.b16 %v4733
    %v5658 = vunpack.c.l.b16 %v4734
    %v5659 = vunpack.c.h.b16 %v4734
    %v5660 = vunpack.c.l.b16 %v4735
    %v5661 = vunpack.c.h.b16 %v4735
    %v5662 = vunpack.c.l.b16 %v4736
    %v5663 = vunpack.c.h.b16 %v4736
    %v5664 = vunpack.c.l.b16 %v4737
    %v5665 = vunpack.c.h.b16 %v4737
    %v5666 = vunpack.c.l.b16 %v4738
    %v5667 = vunpack.c.h.b16 %v4738
    %v5668 = vunpack.c.l.b16 %v4739
    %v5669 = vunpack.c.h.b16 %v4739
    %v5670 = vunpack.c.l.b16 %v4740
    %v5671 = vunpack.c.h.b16 %v4740
    %v5672 = vunpack.c.l.b16 %v4741
    %v5673 = vunpack.c.h.b16 %v4741
    %v5674 = vunpack.c.l.b16 %v4742
    %v5675 = vunpack.c.h.b16 %v4742
    %v5676 = vunpack.c.l.b16 %v4743
    %v5677 = vunpack.c.h.b16 %v4743
    %v5678 = vunpack.c.l.b16 %v4744
    %v5679 = vunpack.c.h.b16 %v4744
    %v5680 = vunpack.c.l.b16 %v4745
    %v5681 = vunpack.c.h.b16 %v4745
    %v5682 = vunpack.c.l.b16 %v4746
    %v5683 = vunpack.c.h.b16 %v4746
    %v5684 = vunpack.c.l.b16 %v4747
    %v5685 = vunpack.c.h.b16 %v4747
    %v5686 = vunpack.c.l.b16 %v4748
    %v5687 = vunpack.c.h.b16 %v4748
    %v5688 = vunpack.c.l.b16 %v4749
    %v5689 = vunpack.c.h.b16 %v4749
    %v5690 = vunpack.c.l.b16 %v4750
    %v5691 = vunpack.c.h.b16 %v4750
    %v5692 = vunpack.c.l.b16 %v4751
    %v5693 = vunpack.c.h.b16 %v4751
    %v5694 = vunpack.c.l.b16 %v4752
    %v5695 = vunpack.c.h.b16 %v4752
    %v5696 = vunpack.c.l.b16 %v4753
    %v5697 = vunpack.c.h.b16 %v4753
    %v5698 = vunpack.c.l.b16 %v4754
    %v5699 = vunpack.c.h.b16 %v4754
    %v5700 = vunpack.c.l.b16 %v4755
    %v5701 = vunpack.c.h.b16 %v4755
    %v5702 = vunpack.c.l.b16 %v4756
    %v5703 = vunpack.c.h.b16 %v4756
    %v5704 = vunpack.c.l.b16 %v4757
    %v5705 = vunpack.c.h.b16 %v4757
    %v5706 = vunpack.c.l.b16 %v4758
    %v5707 = vunpack.c.h.b16 %v4758
    %v5708 = vunpack.c.l.b16 %v4759
    %v5709 = vunpack.c.h.b16 %v4759
    %v5710 = vunpack.c.l.b16 %v4760
    %v5711 = vunpack.c.h.b16 %v4760
    %v5712 = vunpack.c.l.b16 %v4761
    %v5713 = vunpack.c.h.b16 %v4761
    %v5714 = vunpack.c.l.b16 %v4762
    %v5715 = vunpack.c.h.b16 %v4762
    %v5716 = vunpack.c.l.b16 %v4763
    %v5717 = vunpack.c.h.b16 %v4763
    %v5718 = vunpack.c.l.b16 %v4764
    %v5719 = vunpack.c.h.b16 %v4764
    %v5720 = vunpack.c.l.b16 %v4765
    %v5721 = vunpack.c.h.b16 %v4765
    %v5722 = vunpack.c.l.b16 %v4766
    %v5723 = vunpack.c.h.b16 %v4766
    %v5724 = vunpack.c.l.b16 %v4767
    %v5725 = vunpack.c.h.b16 %v4767
    %v5726 = vunpack.c.l.b16 %v4768
    %v5727 = vunpack.c.h.b16 %v4768
    %v5728 = vunpack.c.l.b16 %v4769
    %v5729 = vunpack.c.h.b16 %v4769
    %v5730 = vunpack.c.l.b16 %v4770
    %v5731 = vunpack.c.h.b16 %v4770
    %v5732 = vunpack.c.l.b16 %v4771
    %v5733 = vunpack.c.h.b16 %v4771
    %v5734 = vunpack.c.l.b16 %v4772
    %v5735 = vunpack.c.h.b16 %v4772
    %v5736 = vunpack.c.l.b16 %v4773
    %v5737 = vunpack.c.h.b16 %v4773
    %v5738 = vunpack.c.l.b16 %v4774
    %v5739 = vunpack.c.h.b16 %v4774
    %v5740 = vunpack.c.l.b16 %v4775
    %v5741 = vunpack.c.h.b16 %v4775
    %v5742 = vunpack.c.l.b16 %v4776
    %v5743 = vunpack.c.h.b16 %v4776
    %v5744 = vunpack.c.l.b16 %v4777
    %v5745 = vunpack.c.h.b16 %v4777
    %v5746 = vunpack.c.l.b16 %v4778
    %v5747 = vunpack.c.h.b16 %v4778
    %v5748 = vunpack.c.l.b16 %v4779
    %v5749 = vunpack.c.h.b16 %v4779
    %v5750 = vpack.c.b16 %v5114, %v5110
    %v5751 = vpack.c.b16 %v5115, %v5111
    %v5752 = vpack.c.b16 %v5116, %v5112
    %v5753 = vpack.c.b16 %v5117, %v5113
    %v5754 = vpack.c.b16 %v5122, %v5118
    %v5755 = vpack.c.b16 %v5123, %v5119
    %v5756 = vpack.c.b16 %v5124, %v5120
    %v5757 = vpack.c.b16 %v5125, %v5121
    %v5758 = vpack.c.b16 %v5130, %v5126
    %v5759 = vpack.c.b16 %v5131, %v5127
    %v5760 = vpack.c.b16 %v5132, %v5128
    %v5761 = vpack.c.b16 %v5133, %v5129
    %v5762 = vpack.c.b16 %v5138, %v5134
    %v5763 = vpack.c.b16 %v5139, %v5135
    %v5764 = vpack.c.b16 %v5140, %v5136
    %v5765 = vpack.c.b16 %v5141, %v5137
    %v5766 = vpack.c.b16 %v5146, %v5142
    %v5767 = vpack.c.b16 %v5147, %v5143
    %v5768 = vpack.c.b16 %v5148, %v5144
    %v5769 = vpack.c.b16 %v5149, %v5145
    %v5770 = vpack.c.b16 %v5154, %v5150
    %v5771 = vpack.c.b16 %v5155, %v5151
    %v5772 = vpack.c.b16 %v5156, %v5152
    %v5773 = vpack.c.b16 %v5157, %v5153
    %v5774 = vpack.c.b16 %v5162, %v5158
    %v5775 = vpack.c.b16 %v5163, %v5159
    %v5776 = vpack.c.b16 %v5164, %v5160
    %v5777 = vpack.c.b16 %v5165, %v5161
    %v5778 = vpack.c.b16 %v5170, %v5166
    %v5779 = vpack.c.b16 %v5171, %v5167
    %v5780 = vpack.c.b16 %v5172, %v5168
    %v5781 = vpack.c.b16 %v5173, %v5169
    %v5782 = vpack.c.b16 %v5178, %v5174
    %v5783 = vpack.c.b16 %v5179, %v5175
    %v5784 = vpack.c.b16 %v5180, %v5176
    %v5785 = vpack.c.b16 %v5181, %v5177
    %v5786 = vpack.c.b16 %v5186, %v5182
    %v5787 = vpack.c.b16 %v5187, %v5183
    %v5788 = vpack.c.b16 %v5188, %v5184
    %v5789 = vpack.c.b16 %v5189, %v5185
    %v5790 = vpack.c.b16 %v5194, %v5190
    %v5791 = vpack.c.b16 %v5195, %v5191
    %v5792 = vpack.c.b16 %v5196, %v5192
    %v5793 = vpack.c.b16 %v5197, %v5193
    %v5794 = vpack.c.b16 %v5202, %v5198
    %v5795 = vpack.c.b16 %v5203, %v5199
    %v5796 = vpack.c.b16 %v5204, %v5200
    %v5797 = vpack.c.b16 %v5205, %v5201
    %v5798 = vpack.c.b16 %v5210, %v5206
    %v5799 = vpack.c.b16 %v5211, %v5207
    %v5800 = vpack.c.b16 %v5212, %v5208
    %v5801 = vpack.c.b16 %v5213, %v5209
    %v5802 = vpack.c.b16 %v5218, %v5214
    %v5803 = vpack.c.b16 %v5219, %v5215
    %v5804 = vpack.c.b16 %v5220, %v5216
    %v5805 = vpack.c.b16 %v5221, %v5217
    %v5806 = vpack.c.b16 %v5226, %v5222
    %v5807 = vpack.c.b16 %v5227, %v5223
    %v5808 = vpack.c.b16 %v5228, %v5224
    %v5809 = vpack.c.b16 %v5229, %v5225
    %v5810 = vpack.c.b16 %v5234, %v5230
    %v5811 = vpack.c.b16 %v5235, %v5231
    %v5812 = vpack.c.b16 %v5236, %v5232
    %v5813 = vpack.c.b16 %v5237, %v5233
    %v5814 = vpack.c.b16 %v5242, %v5238
    %v5815 = vpack.c.b16 %v5243, %v5239
    %v5816 = vpack.c.b16 %v5244, %v5240
    %v5817 = vpack.c.b16 %v5245, %v5241
    %v5818 = vpack.c.b16 %v5250, %v5246
    %v5819 = vpack.c.b16 %v5251, %v5247
    %v5820 = vpack.c.b16 %v5252, %v5248
    %v5821 = vpack.c.b16 %v5253, %v5249
    %v5822 = vpack.c.b16 %v5258, %v5254
    %v5823 = vpack.c.b16 %v5259, %v5255
    %v5824 = vpack.c.b16 %v5260, %v5256
    %v5825 = vpack.c.b16 %v5261, %v5257
    %v5826 = vpack.c.b16 %v5266, %v5262
    %v5827 = vpack.c.b16 %v5267, %v5263
    %v5828 = vpack.c.b16 %v5268, %v5264
    %v5829 = vpack.c.b16 %v5269, %v5265
    %v5830 = vpack.c.b16 %v5274, %v5270
    %v5831 = vpack.c.b16 %v5275, %v5271
    %v5832 = vpack.c.b16 %v5276, %v5272
    %v5833 = vpack.c.b16 %v5277, %v5273
    %v5834 = vpack.c.b16 %v5282, %v5278
    %v5835 = vpack.c.b16 %v5283, %v5279
    %v5836 = vpack.c.b16 %v5284, %v5280
    %v5837 = vpack.c.b16 %v5285, %v5281
    %v5838 = vpack.c.b16 %v5290, %v5286
    %v5839 = vpack.c.b16 %v5291, %v5287
    %v5840 = vpack.c.b16 %v5292, %v5288
    %v5841 = vpack.c.b16 %v5293, %v5289
    %v5842 = vpack.c.b16 %v5298, %v5294
    %v5843 = vpack.c.b16 %v5299, %v5295
    %v5844 = vpack.c.b16 %v5300, %v5296
    %v5845 = vpack.c.b16 %v5301, %v5297
    %v5846 = vpack.c.b16 %v5306, %v5302
    %v5847 = vpack.c.b16 %v5307, %v5303
    %v5848 = vpack.c.b16 %v5308, %v5304
    %v5849 = vpack.c.b16 %v5309, %v5305
    %v5850 = vpack.c.b16 %v5314, %v5310
    %v5851 = vpack.c.b16 %v5315, %v5311
    %v5852 = vpack.c.b16 %v5316, %v5312
    %v5853 = vpack.c.b16 %v5317, %v5313
    %v5854 = vpack.c.b16 %v5322, %v5318
    %v5855 = vpack.c.b16 %v5323, %v5319
    %v5856 = vpack.c.b16 %v5324, %v5320
    %v5857 = vpack.c.b16 %v5325, %v5321
    %v5858 = vpack.c.b16 %v5330, %v5326
    %v5859 = vpack.c.b16 %v5331, %v5327
    %v5860 = vpack.c.b16 %v5332, %v5328
    %v5861 = vpack.c.b16 %v5333, %v5329
    %v5862 = vpack.c.b16 %v5338, %v5334
    %v5863 = vpack.c.b16 %v5339, %v5335
    %v5864 = vpack.c.b16 %v5340, %v5336
    %v5865 = vpack.c.b16 %v5341, %v5337
    %v5866 = vpack.c.b16 %v5346, %v5342
    %v5867 = vpack.c.b16 %v5347, %v5343
    %v5868 = vpack.c.b16 %v5348, %v5344
    %v5869 = vpack.c.b16 %v5349, %v5345
    %v5870 = vpack.c.b16 %v5354, %v5350
    %v5871 = vpack.c.b16 %v5355, %v5351
    %v5872 = vpack.c.b16 %v5356, %v5352
    %v5873 = vpack.c.b16 %v5357, %v5353
    %v5874 = vpack.c.b16 %v5362, %v5358
    %v5875 = vpack.c.b16 %v5363, %v5359
    %v5876 = vpack.c.b16 %v5364, %v5360
    %v5877 = vpack.c.b16 %v5365, %v5361
    %v5878 = vpack.c.b16 %v5370, %v5366
    %v5879 = vpack.c.b16 %v5371, %v5367
    %v5880 = vpack.c.b16 %v5372, %v5368
    %v5881 = vpack.c.b16 %v5373, %v5369
    %v5882 = vpack.c.b16 %v5378, %v5374
    %v5883 = vpack.c.b16 %v5379, %v5375
    %v5884 = vpack.c.b16 %v5380, %v5376
    %v5885 = vpack.c.b16 %v5381, %v5377
    %v5886 = vpack.c.b16 %v5386, %v5382
    %v5887 = vpack.c.b16 %v5387, %v5383
    %v5888 = vpack.c.b16 %v5388, %v5384
    %v5889 = vpack.c.b16 %v5389, %v5385
    %v5890 = vpack.c.b16 %v5394, %v5390
    %v5891 = vpack.c.b16 %v5395, %v5391
    %v5892 = vpack.c.b16 %v5396, %v5392
    %v5893 = vpack.c.b16 %v5397, %v5393
    %v5894 = vpack.c.b16 %v5402, %v5398
    %v5895 = vpack.c.b16 %v5403, %v5399
    %v5896 = vpack.c.b16 %v5404, %v5400
    %v5897 = vpack.c.b16 %v5405, %v5401
    %v5898 = vpack.c.b16 %v5410, %v5406
    %v5899 = vpack.c.b16 %v5411, %v5407
    %v5900 = vpack.c.b16 %v5412, %v5408
    %v5901 = vpack.c.b16 %v5413, %v5409
    %v5902 = vpack.c.b16 %v5418, %v5414
    %v5903 = vpack.c.b16 %v5419, %v5415
    %v5904 = vpack.c.b16 %v5420, %v5416
    %v5905 = vpack.c.b16 %v5421, %v5417
    %v5906 = vpack.c.b16 %v5426, %v5422
    %v5907 = vpack.c.b16 %v5427, %v5423
    %v5908 = vpack.c.b16 %v5428, %v5424
    %v5909 = vpack.c.b16 %v5429, %v5425
    %v5910 = vpack.c.b16 %v5434, %v5430
    %v5911 = vpack.c.b16 %v5435, %v5431
    %v5912 = vpack.c.b16 %v5436, %v5432
    %v5913 = vpack.c.b16 %v5437, %v5433
    %v5914 = vpack.c.b16 %v5442, %v5438
    %v5915 = vpack.c.b16 %v5443, %v5439
    %v5916 = vpack.c.b16 %v5444, %v5440
    %v5917 = vpack.c.b16 %v5445, %v5441
    %v5918 = vpack.c.b16 %v5450, %v5446
    %v5919 = vpack.c.b16 %v5451, %v5447
    %v5920 = vpack.c.b16 %v5452, %v5448
    %v5921 = vpack.c.b16 %v5453, %v5449
    %v5922 = vpack.c.b16 %v5458, %v5454
    %v5923 = vpack.c.b16 %v5459, %v5455
    %v5924 = vpack.c.b16 %v5460, %v5456
    %v5925 = vpack.c.b16 %v5461, %v5457
    %v5926 = vpack.c.b16 %v5466, %v5462
    %v5927 = vpack.c.b16 %v5467, %v5463
    %v5928 = vpack.c.b16 %v5468, %v5464
    %v5929 = vpack.c.b16 %v5469, %v5465
    %v5930 = vpack.c.b16 %v5474, %v5470
    %v5931 = vpack.c.b16 %v5475, %v5471
    %v5932 = vpack.c.b16 %v5476, %v5472
    %v5933 = vpack.c.b16 %v5477, %v5473
    %v5934 = vpack.c.b16 %v5482, %v5478
    %v5935 = vpack.c.b16 %v5483, %v5479
    %v5936 = vpack.c.b16 %v5484, %v5480
    %v5937 = vpack.c.b16 %v5485, %v5481
    %v5938 = vpack.c.b16 %v5490, %v5486
    %v5939 = vpack.c.b16 %v5491, %v5487
    %v5940 = vpack.c.b16 %v5492, %v5488
    %v5941 = vpack.c.b16 %v5493, %v5489
    %v5942 = vpack.c.b16 %v5498, %v5494
    %v5943 = vpack.c.b16 %v5499, %v5495
    %v5944 = vpack.c.b16 %v5500, %v5496
    %v5945 = vpack.c.b16 %v5501, %v5497
    %v5946 = vpack.c.b16 %v5506, %v5502
    %v5947 = vpack.c.b16 %v5507, %v5503
    %v5948 = vpack.c.b16 %v5508, %v5504
    %v5949 = vpack.c.b16 %v5509, %v5505
    %v5950 = vpack.c.b16 %v5514, %v5510
    %v5951 = vpack.c.b16 %v5515, %v5511
    %v5952 = vpack.c.b16 %v5516, %v5512
    %v5953 = vpack.c.b16 %v5517, %v5513
    %v5954 = vpack.c.b16 %v5522, %v5518
    %v5955 = vpack.c.b16 %v5523, %v5519
    %v5956 = vpack.c.b16 %v5524, %v5520
    %v5957 = vpack.c.b16 %v5525, %v5521
    %v5958 = vpack.c.b16 %v5530, %v5526
    %v5959 = vpack.c.b16 %v5531, %v5527
    %v5960 = vpack.c.b16 %v5532, %v5528
    %v5961 = vpack.c.b16 %v5533, %v5529
    %v5962 = vpack.c.b16 %v5538, %v5534
    %v5963 = vpack.c.b16 %v5539, %v5535
    %v5964 = vpack.c.b16 %v5540, %v5536
    %v5965 = vpack.c.b16 %v5541, %v5537
    %v5966 = vpack.c.b16 %v5546, %v5542
    %v5967 = vpack.c.b16 %v5547, %v5543
    %v5968 = vpack.c.b16 %v5548, %v5544
    %v5969 = vpack.c.b16 %v5549, %v5545
    %v5970 = vpack.c.b16 %v5554, %v5550
    %v5971 = vpack.c.b16 %v5555, %v5551
    %v5972 = vpack.c.b16 %v5556, %v5552
    %v5973 = vpack.c.b16 %v5557, %v5553
    %v5974 = vpack.c.b16 %v5562, %v5558
    %v5975 = vpack.c.b16 %v5563, %v5559
    %v5976 = vpack.c.b16 %v5564, %v5560
    %v5977 = vpack.c.b16 %v5565, %v5561
    %v5978 = vpack.c.b16 %v5570, %v5566
    %v5979 = vpack.c.b16 %v5571, %v5567
    %v5980 = vpack.c.b16 %v5572, %v5568
    %v5981 = vpack.c.b16 %v5573, %v5569
    %v5982 = vpack.c.b16 %v5578, %v5574
    %v5983 = vpack.c.b16 %v5579, %v5575
    %v5984 = vpack.c.b16 %v5580, %v5576
    %v5985 = vpack.c.b16 %v5581, %v5577
    %v5986 = vpack.c.b16 %v5586, %v5582
    %v5987 = vpack.c.b16 %v5587, %v5583
    %v5988 = vpack.c.b16 %v5588, %v5584
    %v5989 = vpack.c.b16 %v5589, %v5585
    %v5990 = vpack.c.b16 %v5594, %v5590
    %v5991 = vpack.c.b16 %v5595, %v5591
    %v5992 = vpack.c.b16 %v5596, %v5592
    %v5993 = vpack.c.b16 %v5597, %v5593
    %v5994 = vpack.c.b16 %v5602, %v5598
    %v5995 = vpack.c.b16 %v5603, %v5599
    %v5996 = vpack.c.b16 %v5604, %v5600
    %v5997 = vpack.c.b16 %v5605, %v5601
    %v5998 = vpack.c.b16 %v5610, %v5606
    %v5999 = vpack.c.b16 %v5611, %v5607
    %v6000 = vpack.c.b16 %v5612, %v5608
    %v6001 = vpack.c.b16 %v5613, %v5609
    %v6002 = vpack.c.b16 %v5618, %v5614
    %v6003 = vpack.c.b16 %v5619, %v5615
    %v6004 = vpack.c.b16 %v5620, %v5616
    %v6005 = vpack.c.b16 %v5621, %v5617
    %v6006 = vpack.c.b16 %v5626, %v5622
    %v6007 = vpack.c.b16 %v5627, %v5623
    %v6008 = vpack.c.b16 %v5628, %v5624
    %v6009 = vpack.c.b16 %v5629, %v5625
    %v6010 = vpack.c.b16 %v5634, %v5630
    %v6011 = vpack.c.b16 %v5635, %v5631
    %v6012 = vpack.c.b16 %v5636, %v5632
    %v6013 = vpack.c.b16 %v5637, %v5633
    %v6014 = vpack.c.b16 %v5642, %v5638
    %v6015 = vpack.c.b16 %v5643, %v5639
    %v6016 = vpack.c.b16 %v5644, %v5640
    %v6017 = vpack.c.b16 %v5645, %v5641
    %v6018 = vpack.c.b16 %v5650, %v5646
    %v6019 = vpack.c.b16 %v5651, %v5647
    %v6020 = vpack.c.b16 %v5652, %v5648
    %v6021 = vpack.c.b16 %v5653, %v5649
    %v6022 = vpack.c.b16 %v5658, %v5654
    %v6023 = vpack.c.b16 %v5659, %v5655
    %v6024 = vpack.c.b16 %v5660, %v5656
    %v6025 = vpack.c.b16 %v5661, %v5657
    %v6026 = vpack.c.b16 %v5666, %v5662
    %v6027 = vpack.c.b16 %v5667, %v5663
    %v6028 = vpack.c.b16 %v5668, %v5664
    %v6029 = vpack.c.b16 %v5669, %v5665
    %v6030 = vpack.c.b16 %v5674, %v5670
    %v6031 = vpack.c.b16 %v5675, %v5671
    %v6032 = vpack.c.b16 %v5676, %v5672
    %v6033 = vpack.c.b16 %v5677, %v5673
    %v6034 = vpack.c.b16 %v5682, %v5678
    %v6035 = vpack.c.b16 %v5683, %v5679
    %v6036 = vpack.c.b16 %v5684, %v5680
    %v6037 = vpack.c.b16 %v5685, %v5681
    %v6038 = vpack.c.b16 %v5690, %v5686
    %v6039 = vpack.c.b16 %v5691, %v5687
    %v6040 = vpack.c.b16 %v5692, %v5688
    %v6041 = vpack.c.b16 %v5693, %v5689
    %v6042 = vpack.c.b16 %v5698, %v5694
    %v6043 = vpack.c.b16 %v5699, %v5695
    %v6044 = vpack.c.b16 %v5700, %v5696
    %v6045 = vpack.c.b16 %v5701, %v5697
    %v6046 = vpack.c.b16 %v5706, %v5702
    %v6047 = vpack.c.b16 %v5707, %v5703
    %v6048 = vpack.c.b16 %v5708, %v5704
    %v6049 = vpack.c.b16 %v5709, %v5705
    %v6050 = vpack.c.b16 %v5714, %v5710
    %v6051 = vpack.c.b16 %v5715, %v5711
    %v6052 = vpack.c.b16 %v5716, %v5712
    %v6053 = vpack.c.b16 %v5717, %v5713
    %v6054 = vpack.c.b16 %v5722, %v5718
    %v6055 = vpack.c.b16 %v5723, %v5719
    %v6056 = vpack.c.b16 %v5724, %v5720
    %v6057 = vpack.c.b16 %v5725, %v5721
    %v6058 = vpack.c.b16 %v5730, %v5726
    %v6059 = vpack.c.b16 %v5731, %v5727
    %v6060 = vpack.c.b16 %v5732, %v5728
    %v6061 = vpack.c.b16 %v5733, %v5729
    %v6062 = vpack.c.b16 %v5738, %v5734
    %v6063 = vpack.c.b16 %v5739, %v5735
    %v6064 = vpack.c.b16 %v5740, %v5736
    %v6065 = vpack.c.b16 %v5741, %v5737
    %v6066 = vpack.c.b16 %v5746, %v5742
    %v6067 = vpack.c.b16 %v5747, %v5743
    %v6068 = vpack.c.b16 %v5748, %v5744
    %v6069 = vpack.c.b16 %v5749, %v5745
    %6390 = vmatpush.bf16.msra.mxu0 %v5778
    %6391 = vmatpush.bf16.msra.mxu0 %v5774
    %6392 = vmatpush.bf16.msra.mxu0 %v5770
    %6393 = vmatpush.bf16.msra.mxu0 %v5766
    %6394 = vmatpush.bf16.msra.mxu0 %v5762
    %6395 = vmatpush.bf16.msra.mxu0 %v5758
    %6396 = vmatpush.bf16.msra.mxu0 %v5754
    %6397 = vmatpush.bf16.msra.mxu0 %v5750
    %6398 = vmatmul.bf16.gmra.mxu0 %v4450
    %v6399 = vpop.f32.mrf.mxu0
    %v6400 = vadd.f32 %v4782, %v6399
    %v6401 = vpop.f32.mrf.mxu0
    %6402 = vdwg.mxu0
    %6403 = vmatpush.bf16.msra.mxu0 %v5810
    %6404 = vmatpush.bf16.msra.mxu0 %v5806
    %6405 = vmatpush.bf16.msra.mxu0 %v5802
    %6406 = vmatpush.bf16.msra.mxu0 %v5798
    %6407 = vmatpush.bf16.msra.mxu0 %v5794
    %6408 = vmatpush.bf16.msra.mxu0 %v5790
    %6409 = vmatpush.bf16.msra.mxu0 %v5786
    %6410 = vmatpush.bf16.msra.mxu0 %v5782
    %6411 = vmatmul.bf16.gmra.mxu0 %v4451
    %v6412 = vpop.f32.mrf.mxu0
    %v6413 = vadd.f32 %v6400, %v6412
    %v6414 = vpop.f32.mrf.mxu0
    %6415 = vdwg.mxu0
    %6416 = vmatpush.bf16.msra.mxu0 %v5842
    %6417 = vmatpush.bf16.msra.mxu0 %v5838
    %6418 = vmatpush.bf16.msra.mxu0 %v5834
    %6419 = vmatpush.bf16.msra.mxu0 %v5830
    %6420 = vmatpush.bf16.msra.mxu0 %v5826
    %6421 = vmatpush.bf16.msra.mxu0 %v5822
    %6422 = vmatpush.bf16.msra.mxu0 %v5818
    %6423 = vmatpush.bf16.msra.mxu0 %v5814
    %6424 = vmatmul.bf16.gmra.mxu0 %v4452
    %v6425 = vpop.f32.mrf.mxu0
    %v6426 = vadd.f32 %v6413, %v6425
    %v6427 = vpop.f32.mrf.mxu0
    %6428 = vdwg.mxu0
    %6429 = vmatpush.bf16.msra.mxu0 %v5874
    %6430 = vmatpush.bf16.msra.mxu0 %v5870
    %6431 = vmatpush.bf16.msra.mxu0 %v5866
    %6432 = vmatpush.bf16.msra.mxu0 %v5862
    %6433 = vmatpush.bf16.msra.mxu0 %v5858
    %6434 = vmatpush.bf16.msra.mxu0 %v5854
    %6435 = vmatpush.bf16.msra.mxu0 %v5850
    %6436 = vmatpush.bf16.msra.mxu0 %v5846
    %6437 = vmatmul.bf16.gmra.mxu0 %v4453
    %v6438 = vpop.f32.mrf.mxu0
    %v6439 = vadd.f32 %v6426, %v6438
    %v6440 = vpop.f32.mrf.mxu0
    %6441 = vdwg.mxu0
    %6442 = vmatpush.bf16.msra.mxu0 %v5906
    %6443 = vmatpush.bf16.msra.mxu0 %v5902
    %6444 = vmatpush.bf16.msra.mxu0 %v5898
    %6445 = vmatpush.bf16.msra.mxu0 %v5894
    %6446 = vmatpush.bf16.msra.mxu0 %v5890
    %6447 = vmatpush.bf16.msra.mxu0 %v5886
    %6448 = vmatpush.bf16.msra.mxu0 %v5882
    %6449 = vmatpush.bf16.msra.mxu0 %v5878
    %6450 = vmatmul.bf16.gmra.mxu0 %v4454
    %v6451 = vpop.f32.mrf.mxu0
    %v6452 = vadd.f32 %v6439, %v6451
    %v6453 = vpop.f32.mrf.mxu0
    %6454 = vdwg.mxu0
    %6455 = vmatpush.bf16.msra.mxu0 %v5938
    %6456 = vmatpush.bf16.msra.mxu0 %v5934
    %6457 = vmatpush.bf16.msra.mxu0 %v5930
    %6458 = vmatpush.bf16.msra.mxu0 %v5926
    %6459 = vmatpush.bf16.msra.mxu0 %v5922
    %6460 = vmatpush.bf16.msra.mxu0 %v5918
    %6461 = vmatpush.bf16.msra.mxu0 %v5914
    %6462 = vmatpush.bf16.msra.mxu0 %v5910
    %6463 = vmatmul.bf16.gmra.mxu0 %v4455
    %v6464 = vpop.f32.mrf.mxu0
    %v6465 = vadd.f32 %v6452, %v6464
    %v6466 = vpop.f32.mrf.mxu0
    %6467 = vdwg.mxu0
    %6468 = vmatpush.bf16.msra.mxu0 %v5970
    %6469 = vmatpush.bf16.msra.mxu0 %v5966
    %6470 = vmatpush.bf16.msra.mxu0 %v5962
    %6471 = vmatpush.bf16.msra.mxu0 %v5958
    %6472 = vmatpush.bf16.msra.mxu0 %v5954
    %6473 = vmatpush.bf16.msra.mxu0 %v5950
    %6474 = vmatpush.bf16.msra.mxu0 %v5946
    %6475 = vmatpush.bf16.msra.mxu0 %v5942
    %6476 = vmatmul.bf16.gmra.mxu0 %v4456
    %v6477 = vpop.f32.mrf.mxu0
    %v6478 = vadd.f32 %v6465, %v6477
    %v6479 = vpop.f32.mrf.mxu0
    %6480 = vdwg.mxu0
    %6481 = vmatpush.bf16.msra.mxu0 %v6002
    %6482 = vmatpush.bf16.msra.mxu0 %v5998
    %6483 = vmatpush.bf16.msra.mxu0 %v5994
    %6484 = vmatpush.bf16.msra.mxu0 %v5990
    %6485 = vmatpush.bf16.msra.mxu0 %v5986
    %6486 = vmatpush.bf16.msra.mxu0 %v5982
    %6487 = vmatpush.bf16.msra.mxu0 %v5978
    %6488 = vmatpush.bf16.msra.mxu0 %v5974
    %6489 = vmatmul.bf16.gmra.mxu0 %v4457
    %v6490 = vpop.f32.mrf.mxu0
    %v6491 = vadd.f32 %v6478, %v6490
    %v6492 = vpop.f32.mrf.mxu0
    %6493 = vdwg.mxu0
    %6494 = vmatpush.bf16.msra.mxu0 %v6034
    %6495 = vmatpush.bf16.msra.mxu0 %v6030
    %6496 = vmatpush.bf16.msra.mxu0 %v6026
    %6497 = vmatpush.bf16.msra.mxu0 %v6022
    %6498 = vmatpush.bf16.msra.mxu0 %v6018
    %6499 = vmatpush.bf16.msra.mxu0 %v6014
    %6500 = vmatpush.bf16.msra.mxu0 %v6010
    %6501 = vmatpush.bf16.msra.mxu0 %v6006
    %6502 = vmatmul.bf16.gmra.mxu0 %v4458
    %v6503 = vpop.f32.mrf.mxu0
    %v6504 = vadd.f32 %v6491, %v6503
    %v6505 = vpop.f32.mrf.mxu0
    %6506 = vdwg.mxu0
    %6507 = vmatpush.bf16.msra.mxu0 %v6066
    %6508 = vmatpush.bf16.msra.mxu0 %v6062
    %6509 = vmatpush.bf16.msra.mxu0 %v6058
    %6510 = vmatpush.bf16.msra.mxu0 %v6054
    %6511 = vmatpush.bf16.msra.mxu0 %v6050
    %6512 = vmatpush.bf16.msra.mxu0 %v6046
    %6513 = vmatpush.bf16.msra.mxu0 %v6042
    %6514 = vmatpush.bf16.msra.mxu0 %v6038
    %6515 = vmatmul.bf16.gmra.mxu0 %v4459
    %v6516 = vpop.f32.mrf.mxu0
    %v6517 = vadd.f32 %v6504, %v6516
    %v6518 = vpop.f32.mrf.mxu0
    %6519 = vdwg.mxu0
    %6520 = vmatpush.bf16.msra.mxu0 %v5779
    %6521 = vmatpush.bf16.msra.mxu0 %v5775
    %6522 = vmatpush.bf16.msra.mxu0 %v5771
    %6523 = vmatpush.bf16.msra.mxu0 %v5767
    %6524 = vmatpush.bf16.msra.mxu0 %v5763
    %6525 = vmatpush.bf16.msra.mxu0 %v5759
    %6526 = vmatpush.bf16.msra.mxu0 %v5755
    %6527 = vmatpush.bf16.msra.mxu0 %v5751
    %6528 = vmatmul.bf16.gmra.mxu0 %v4450
    %v6529 = vpop.f32.mrf.mxu0
    %v6530 = vadd.f32 %v4783, %v6529
    %v6531 = vpop.f32.mrf.mxu0
    %6532 = vdwg.mxu0
    %6533 = vmatpush.bf16.msra.mxu0 %v5811
    %6534 = vmatpush.bf16.msra.mxu0 %v5807
    %6535 = vmatpush.bf16.msra.mxu0 %v5803
    %6536 = vmatpush.bf16.msra.mxu0 %v5799
    %6537 = vmatpush.bf16.msra.mxu0 %v5795
    %6538 = vmatpush.bf16.msra.mxu0 %v5791
    %6539 = vmatpush.bf16.msra.mxu0 %v5787
    %6540 = vmatpush.bf16.msra.mxu0 %v5783
    %6541 = vmatmul.bf16.gmra.mxu0 %v4451
    %v6542 = vpop.f32.mrf.mxu0
    %v6543 = vadd.f32 %v6530, %v6542
    %v6544 = vpop.f32.mrf.mxu0
    %6545 = vdwg.mxu0
    %6546 = vmatpush.bf16.msra.mxu0 %v5843
    %6547 = vmatpush.bf16.msra.mxu0 %v5839
    %6548 = vmatpush.bf16.msra.mxu0 %v5835
    %6549 = vmatpush.bf16.msra.mxu0 %v5831
    %6550 = vmatpush.bf16.msra.mxu0 %v5827
    %6551 = vmatpush.bf16.msra.mxu0 %v5823
    %6552 = vmatpush.bf16.msra.mxu0 %v5819
    %6553 = vmatpush.bf16.msra.mxu0 %v5815
    %6554 = vmatmul.bf16.gmra.mxu0 %v4452
    %v6555 = vpop.f32.mrf.mxu0
    %v6556 = vadd.f32 %v6543, %v6555
    %v6557 = vpop.f32.mrf.mxu0
    %6558 = vdwg.mxu0
    %6559 = vmatpush.bf16.msra.mxu0 %v5875
    %6560 = vmatpush.bf16.msra.mxu0 %v5871
    %6561 = vmatpush.bf16.msra.mxu0 %v5867
    %6562 = vmatpush.bf16.msra.mxu0 %v5863
    %6563 = vmatpush.bf16.msra.mxu0 %v5859
    %6564 = vmatpush.bf16.msra.mxu0 %v5855
    %6565 = vmatpush.bf16.msra.mxu0 %v5851
    %6566 = vmatpush.bf16.msra.mxu0 %v5847
    %6567 = vmatmul.bf16.gmra.mxu0 %v4453
    %v6568 = vpop.f32.mrf.mxu0
    %v6569 = vadd.f32 %v6556, %v6568
    %v6570 = vpop.f32.mrf.mxu0
    %6571 = vdwg.mxu0
    %6572 = vmatpush.bf16.msra.mxu0 %v5907
    %6573 = vmatpush.bf16.msra.mxu0 %v5903
    %6574 = vmatpush.bf16.msra.mxu0 %v5899
    %6575 = vmatpush.bf16.msra.mxu0 %v5895
    %6576 = vmatpush.bf16.msra.mxu0 %v5891
    %6577 = vmatpush.bf16.msra.mxu0 %v5887
    %6578 = vmatpush.bf16.msra.mxu0 %v5883
    %6579 = vmatpush.bf16.msra.mxu0 %v5879
    %6580 = vmatmul.bf16.gmra.mxu0 %v4454
    %v6581 = vpop.f32.mrf.mxu0
    %v6582 = vadd.f32 %v6569, %v6581
    %v6583 = vpop.f32.mrf.mxu0
    %6584 = vdwg.mxu0
    %6585 = vmatpush.bf16.msra.mxu0 %v5939
    %6586 = vmatpush.bf16.msra.mxu0 %v5935
    %6587 = vmatpush.bf16.msra.mxu0 %v5931
    %6588 = vmatpush.bf16.msra.mxu0 %v5927
    %6589 = vmatpush.bf16.msra.mxu0 %v5923
    %6590 = vmatpush.bf16.msra.mxu0 %v5919
    %6591 = vmatpush.bf16.msra.mxu0 %v5915
    %6592 = vmatpush.bf16.msra.mxu0 %v5911
    %6593 = vmatmul.bf16.gmra.mxu0 %v4455
    %v6594 = vpop.f32.mrf.mxu0
    %v6595 = vadd.f32 %v6582, %v6594
    %v6596 = vpop.f32.mrf.mxu0
    %6597 = vdwg.mxu0
    %6598 = vmatpush.bf16.msra.mxu0 %v5971
    %6599 = vmatpush.bf16.msra.mxu0 %v5967
    %6600 = vmatpush.bf16.msra.mxu0 %v5963
    %6601 = vmatpush.bf16.msra.mxu0 %v5959
    %6602 = vmatpush.bf16.msra.mxu0 %v5955
    %6603 = vmatpush.bf16.msra.mxu0 %v5951
    %6604 = vmatpush.bf16.msra.mxu0 %v5947
    %6605 = vmatpush.bf16.msra.mxu0 %v5943
    %6606 = vmatmul.bf16.gmra.mxu0 %v4456
    %v6607 = vpop.f32.mrf.mxu0
    %v6608 = vadd.f32 %v6595, %v6607
    %v6609 = vpop.f32.mrf.mxu0
    %6610 = vdwg.mxu0
    %6611 = vmatpush.bf16.msra.mxu0 %v6003
    %6612 = vmatpush.bf16.msra.mxu0 %v5999
    %6613 = vmatpush.bf16.msra.mxu0 %v5995
    %6614 = vmatpush.bf16.msra.mxu0 %v5991
    %6615 = vmatpush.bf16.msra.mxu0 %v5987
    %6616 = vmatpush.bf16.msra.mxu0 %v5983
    %6617 = vmatpush.bf16.msra.mxu0 %v5979
    %6618 = vmatpush.bf16.msra.mxu0 %v5975
    %6619 = vmatmul.bf16.gmra.mxu0 %v4457
    %v6620 = vpop.f32.mrf.mxu0
    %v6621 = vadd.f32 %v6608, %v6620
    %v6622 = vpop.f32.mrf.mxu0
    %6623 = vdwg.mxu0
    %6624 = vmatpush.bf16.msra.mxu0 %v6035
    %6625 = vmatpush.bf16.msra.mxu0 %v6031
    %6626 = vmatpush.bf16.msra.mxu0 %v6027
    %6627 = vmatpush.bf16.msra.mxu0 %v6023
    %6628 = vmatpush.bf16.msra.mxu0 %v6019
    %6629 = vmatpush.bf16.msra.mxu0 %v6015
    %6630 = vmatpush.bf16.msra.mxu0 %v6011
    %6631 = vmatpush.bf16.msra.mxu0 %v6007
    %6632 = vmatmul.bf16.gmra.mxu0 %v4458
    %v6633 = vpop.f32.mrf.mxu0
    %v6634 = vadd.f32 %v6621, %v6633
    %v6635 = vpop.f32.mrf.mxu0
    %6636 = vdwg.mxu0
    %6637 = vmatpush.bf16.msra.mxu0 %v6067
    %6638 = vmatpush.bf16.msra.mxu0 %v6063
    %6639 = vmatpush.bf16.msra.mxu0 %v6059
    %6640 = vmatpush.bf16.msra.mxu0 %v6055
    %6641 = vmatpush.bf16.msra.mxu0 %v6051
    %6642 = vmatpush.bf16.msra.mxu0 %v6047
    %6643 = vmatpush.bf16.msra.mxu0 %v6043
    %6644 = vmatpush.bf16.msra.mxu0 %v6039
    %6645 = vmatmul.bf16.gmra.mxu0 %v4459
    %v6646 = vpop.f32.mrf.mxu0
    %v6647 = vadd.f32 %v6634, %v6646
    %v6648 = vpop.f32.mrf.mxu0
    %6649 = vdwg.mxu0
    %6650 = vmatpush.bf16.msra.mxu0 %v5780
    %6651 = vmatpush.bf16.msra.mxu0 %v5776
    %6652 = vmatpush.bf16.msra.mxu0 %v5772
    %6653 = vmatpush.bf16.msra.mxu0 %v5768
    %6654 = vmatpush.bf16.msra.mxu0 %v5764
    %6655 = vmatpush.bf16.msra.mxu0 %v5760
    %6656 = vmatpush.bf16.msra.mxu0 %v5756
    %6657 = vmatpush.bf16.msra.mxu0 %v5752
    %6658 = vmatmul.bf16.gmra.mxu0 %v4450
    %v6659 = vpop.f32.mrf.mxu0
    %v6660 = vadd.f32 %v4784, %v6659
    %v6661 = vpop.f32.mrf.mxu0
    %6662 = vdwg.mxu0
    %6663 = vmatpush.bf16.msra.mxu0 %v5812
    %6664 = vmatpush.bf16.msra.mxu0 %v5808
    %6665 = vmatpush.bf16.msra.mxu0 %v5804
    %6666 = vmatpush.bf16.msra.mxu0 %v5800
    %6667 = vmatpush.bf16.msra.mxu0 %v5796
    %6668 = vmatpush.bf16.msra.mxu0 %v5792
    %6669 = vmatpush.bf16.msra.mxu0 %v5788
    %6670 = vmatpush.bf16.msra.mxu0 %v5784
    %6671 = vmatmul.bf16.gmra.mxu0 %v4451
    %v6672 = vpop.f32.mrf.mxu0
    %v6673 = vadd.f32 %v6660, %v6672
    %v6674 = vpop.f32.mrf.mxu0
    %6675 = vdwg.mxu0
    %6676 = vmatpush.bf16.msra.mxu0 %v5844
    %6677 = vmatpush.bf16.msra.mxu0 %v5840
    %6678 = vmatpush.bf16.msra.mxu0 %v5836
    %6679 = vmatpush.bf16.msra.mxu0 %v5832
    %6680 = vmatpush.bf16.msra.mxu0 %v5828
    %6681 = vmatpush.bf16.msra.mxu0 %v5824
    %6682 = vmatpush.bf16.msra.mxu0 %v5820
    %6683 = vmatpush.bf16.msra.mxu0 %v5816
    %6684 = vmatmul.bf16.gmra.mxu0 %v4452
    %v6685 = vpop.f32.mrf.mxu0
    %v6686 = vadd.f32 %v6673, %v6685
    %v6687 = vpop.f32.mrf.mxu0
    %6688 = vdwg.mxu0
    %6689 = vmatpush.bf16.msra.mxu0 %v5876
    %6690 = vmatpush.bf16.msra.mxu0 %v5872
    %6691 = vmatpush.bf16.msra.mxu0 %v5868
    %6692 = vmatpush.bf16.msra.mxu0 %v5864
    %6693 = vmatpush.bf16.msra.mxu0 %v5860
    %6694 = vmatpush.bf16.msra.mxu0 %v5856
    %6695 = vmatpush.bf16.msra.mxu0 %v5852
    %6696 = vmatpush.bf16.msra.mxu0 %v5848
    %6697 = vmatmul.bf16.gmra.mxu0 %v4453
    %v6698 = vpop.f32.mrf.mxu0
    %v6699 = vadd.f32 %v6686, %v6698
    %v6700 = vpop.f32.mrf.mxu0
    %6701 = vdwg.mxu0
    %6702 = vmatpush.bf16.msra.mxu0 %v5908
    %6703 = vmatpush.bf16.msra.mxu0 %v5904
    %6704 = vmatpush.bf16.msra.mxu0 %v5900
    %6705 = vmatpush.bf16.msra.mxu0 %v5896
    %6706 = vmatpush.bf16.msra.mxu0 %v5892
    %6707 = vmatpush.bf16.msra.mxu0 %v5888
    %6708 = vmatpush.bf16.msra.mxu0 %v5884
    %6709 = vmatpush.bf16.msra.mxu0 %v5880
    %6710 = vmatmul.bf16.gmra.mxu0 %v4454
    %v6711 = vpop.f32.mrf.mxu0
    %v6712 = vadd.f32 %v6699, %v6711
    %v6713 = vpop.f32.mrf.mxu0
    %6714 = vdwg.mxu0
    %6715 = vmatpush.bf16.msra.mxu0 %v5940
    %6716 = vmatpush.bf16.msra.mxu0 %v5936
    %6717 = vmatpush.bf16.msra.mxu0 %v5932
    %6718 = vmatpush.bf16.msra.mxu0 %v5928
    %6719 = vmatpush.bf16.msra.mxu0 %v5924
    %6720 = vmatpush.bf16.msra.mxu0 %v5920
    %6721 = vmatpush.bf16.msra.mxu0 %v5916
    %6722 = vmatpush.bf16.msra.mxu0 %v5912
    %6723 = vmatmul.bf16.gmra.mxu0 %v4455
    %v6724 = vpop.f32.mrf.mxu0
    %v6725 = vadd.f32 %v6712, %v6724
    %v6726 = vpop.f32.mrf.mxu0
    %6727 = vdwg.mxu0
    %6728 = vmatpush.bf16.msra.mxu0 %v5972
    %6729 = vmatpush.bf16.msra.mxu0 %v5968
    %6730 = vmatpush.bf16.msra.mxu0 %v5964
    %6731 = vmatpush.bf16.msra.mxu0 %v5960
    %6732 = vmatpush.bf16.msra.mxu0 %v5956
    %6733 = vmatpush.bf16.msra.mxu0 %v5952
    %6734 = vmatpush.bf16.msra.mxu0 %v5948
    %6735 = vmatpush.bf16.msra.mxu0 %v5944
    %6736 = vmatmul.bf16.gmra.mxu0 %v4456
    %v6737 = vpop.f32.mrf.mxu0
    %v6738 = vadd.f32 %v6725, %v6737
    %v6739 = vpop.f32.mrf.mxu0
    %6740 = vdwg.mxu0
    %6741 = vmatpush.bf16.msra.mxu0 %v6004
    %6742 = vmatpush.bf16.msra.mxu0 %v6000
    %6743 = vmatpush.bf16.msra.mxu0 %v5996
    %6744 = vmatpush.bf16.msra.mxu0 %v5992
    %6745 = vmatpush.bf16.msra.mxu0 %v5988
    %6746 = vmatpush.bf16.msra.mxu0 %v5984
    %6747 = vmatpush.bf16.msra.mxu0 %v5980
    %6748 = vmatpush.bf16.msra.mxu0 %v5976
    %6749 = vmatmul.bf16.gmra.mxu0 %v4457
    %v6750 = vpop.f32.mrf.mxu0
    %v6751 = vadd.f32 %v6738, %v6750
    %v6752 = vpop.f32.mrf.mxu0
    %6753 = vdwg.mxu0
    %6754 = vmatpush.bf16.msra.mxu0 %v6036
    %6755 = vmatpush.bf16.msra.mxu0 %v6032
    %6756 = vmatpush.bf16.msra.mxu0 %v6028
    %6757 = vmatpush.bf16.msra.mxu0 %v6024
    %6758 = vmatpush.bf16.msra.mxu0 %v6020
    %6759 = vmatpush.bf16.msra.mxu0 %v6016
    %6760 = vmatpush.bf16.msra.mxu0 %v6012
    %6761 = vmatpush.bf16.msra.mxu0 %v6008
    %6762 = vmatmul.bf16.gmra.mxu0 %v4458
    %v6763 = vpop.f32.mrf.mxu0
    %v6764 = vadd.f32 %v6751, %v6763
    %v6765 = vpop.f32.mrf.mxu0
    %6766 = vdwg.mxu0
    %6767 = vmatpush.bf16.msra.mxu0 %v6068
    %6768 = vmatpush.bf16.msra.mxu0 %v6064
    %6769 = vmatpush.bf16.msra.mxu0 %v6060
    %6770 = vmatpush.bf16.msra.mxu0 %v6056
    %6771 = vmatpush.bf16.msra.mxu0 %v6052
    %6772 = vmatpush.bf16.msra.mxu0 %v6048
    %6773 = vmatpush.bf16.msra.mxu0 %v6044
    %6774 = vmatpush.bf16.msra.mxu0 %v6040
    %6775 = vmatmul.bf16.gmra.mxu0 %v4459
    %v6776 = vpop.f32.mrf.mxu0
    %v6777 = vadd.f32 %v6764, %v6776
    %v6778 = vpop.f32.mrf.mxu0
    %6779 = vdwg.mxu0
    %6780 = vmatpush.bf16.msra.mxu0 %v5781
    %6781 = vmatpush.bf16.msra.mxu0 %v5777
    %6782 = vmatpush.bf16.msra.mxu0 %v5773
    %6783 = vmatpush.bf16.msra.mxu0 %v5769
    %6784 = vmatpush.bf16.msra.mxu0 %v5765
    %6785 = vmatpush.bf16.msra.mxu0 %v5761
    %6786 = vmatpush.bf16.msra.mxu0 %v5757
    %6787 = vmatpush.bf16.msra.mxu0 %v5753
    %6788 = vmatmul.bf16.gmra.mxu0 %v4450
    %v6789 = vpop.f32.mrf.mxu0
    %v6790 = vadd.f32 %v4785, %v6789
    %v6791 = vpop.f32.mrf.mxu0
    %6792 = vdwg.mxu0
    %6793 = vmatpush.bf16.msra.mxu0 %v5813
    %6794 = vmatpush.bf16.msra.mxu0 %v5809
    %6795 = vmatpush.bf16.msra.mxu0 %v5805
    %6796 = vmatpush.bf16.msra.mxu0 %v5801
    %6797 = vmatpush.bf16.msra.mxu0 %v5797
    %6798 = vmatpush.bf16.msra.mxu0 %v5793
    %6799 = vmatpush.bf16.msra.mxu0 %v5789
    %6800 = vmatpush.bf16.msra.mxu0 %v5785
    %6801 = vmatmul.bf16.gmra.mxu0 %v4451
    %v6802 = vpop.f32.mrf.mxu0
    %v6803 = vadd.f32 %v6790, %v6802
    %v6804 = vpop.f32.mrf.mxu0
    %6805 = vdwg.mxu0
    %6806 = vmatpush.bf16.msra.mxu0 %v5845
    %6807 = vmatpush.bf16.msra.mxu0 %v5841
    %6808 = vmatpush.bf16.msra.mxu0 %v5837
    %6809 = vmatpush.bf16.msra.mxu0 %v5833
    %6810 = vmatpush.bf16.msra.mxu0 %v5829
    %6811 = vmatpush.bf16.msra.mxu0 %v5825
    %6812 = vmatpush.bf16.msra.mxu0 %v5821
    %6813 = vmatpush.bf16.msra.mxu0 %v5817
    %6814 = vmatmul.bf16.gmra.mxu0 %v4452
    %v6815 = vpop.f32.mrf.mxu0
    %v6816 = vadd.f32 %v6803, %v6815
    %v6817 = vpop.f32.mrf.mxu0
    %6818 = vdwg.mxu0
    %6819 = vmatpush.bf16.msra.mxu0 %v5877
    %6820 = vmatpush.bf16.msra.mxu0 %v5873
    %6821 = vmatpush.bf16.msra.mxu0 %v5869
    %6822 = vmatpush.bf16.msra.mxu0 %v5865
    %6823 = vmatpush.bf16.msra.mxu0 %v5861
    %6824 = vmatpush.bf16.msra.mxu0 %v5857
    %6825 = vmatpush.bf16.msra.mxu0 %v5853
    %6826 = vmatpush.bf16.msra.mxu0 %v5849
    %6827 = vmatmul.bf16.gmra.mxu0 %v4453
    %v6828 = vpop.f32.mrf.mxu0
    %v6829 = vadd.f32 %v6816, %v6828
    %v6830 = vpop.f32.mrf.mxu0
    %6831 = vdwg.mxu0
    %6832 = vmatpush.bf16.msra.mxu0 %v5909
    %6833 = vmatpush.bf16.msra.mxu0 %v5905
    %6834 = vmatpush.bf16.msra.mxu0 %v5901
    %6835 = vmatpush.bf16.msra.mxu0 %v5897
    %6836 = vmatpush.bf16.msra.mxu0 %v5893
    %6837 = vmatpush.bf16.msra.mxu0 %v5889
    %6838 = vmatpush.bf16.msra.mxu0 %v5885
    %6839 = vmatpush.bf16.msra.mxu0 %v5881
    %6840 = vmatmul.bf16.gmra.mxu0 %v4454
    %v6841 = vpop.f32.mrf.mxu0
    %v6842 = vadd.f32 %v6829, %v6841
    %v6843 = vpop.f32.mrf.mxu0
    %6844 = vdwg.mxu0
    %6845 = vmatpush.bf16.msra.mxu0 %v5941
    %6846 = vmatpush.bf16.msra.mxu0 %v5937
    %6847 = vmatpush.bf16.msra.mxu0 %v5933
    %6848 = vmatpush.bf16.msra.mxu0 %v5929
    %6849 = vmatpush.bf16.msra.mxu0 %v5925
    %6850 = vmatpush.bf16.msra.mxu0 %v5921
    %6851 = vmatpush.bf16.msra.mxu0 %v5917
    %6852 = vmatpush.bf16.msra.mxu0 %v5913
    %6853 = vmatmul.bf16.gmra.mxu0 %v4455
    %v6854 = vpop.f32.mrf.mxu0
    %v6855 = vadd.f32 %v6842, %v6854
    %v6856 = vpop.f32.mrf.mxu0
    %6857 = vdwg.mxu0
    %6858 = vmatpush.bf16.msra.mxu0 %v5973
    %6859 = vmatpush.bf16.msra.mxu0 %v5969
    %6860 = vmatpush.bf16.msra.mxu0 %v5965
    %6861 = vmatpush.bf16.msra.mxu0 %v5961
    %6862 = vmatpush.bf16.msra.mxu0 %v5957
    %6863 = vmatpush.bf16.msra.mxu0 %v5953
    %6864 = vmatpush.bf16.msra.mxu0 %v5949
    %6865 = vmatpush.bf16.msra.mxu0 %v5945
    %6866 = vmatmul.bf16.gmra.mxu0 %v4456
    %v6867 = vpop.f32.mrf.mxu0
    %v6868 = vadd.f32 %v6855, %v6867
    %v6869 = vpop.f32.mrf.mxu0
    %6870 = vdwg.mxu0
    %6871 = vmatpush.bf16.msra.mxu0 %v6005
    %6872 = vmatpush.bf16.msra.mxu0 %v6001
    %6873 = vmatpush.bf16.msra.mxu0 %v5997
    %6874 = vmatpush.bf16.msra.mxu0 %v5993
    %6875 = vmatpush.bf16.msra.mxu0 %v5989
    %6876 = vmatpush.bf16.msra.mxu0 %v5985
    %6877 = vmatpush.bf16.msra.mxu0 %v5981
    %6878 = vmatpush.bf16.msra.mxu0 %v5977
    %6879 = vmatmul.bf16.gmra.mxu0 %v4457
    %v6880 = vpop.f32.mrf.mxu0
    %v6881 = vadd.f32 %v6868, %v6880
    %v6882 = vpop.f32.mrf.mxu0
    %6883 = vdwg.mxu0
    %6884 = vmatpush.bf16.msra.mxu0 %v6037
    %6885 = vmatpush.bf16.msra.mxu0 %v6033
    %6886 = vmatpush.bf16.msra.mxu0 %v6029
    %6887 = vmatpush.bf16.msra.mxu0 %v6025
    %6888 = vmatpush.bf16.msra.mxu0 %v6021
    %6889 = vmatpush.bf16.msra.mxu0 %v6017
    %6890 = vmatpush.bf16.msra.mxu0 %v6013
    %6891 = vmatpush.bf16.msra.mxu0 %v6009
    %6892 = vmatmul.bf16.gmra.mxu0 %v4458
    %v6893 = vpop.f32.mrf.mxu0
    %v6894 = vadd.f32 %v6881, %v6893
    %v6895 = vpop.f32.mrf.mxu0
    %6896 = vdwg.mxu0
    %6897 = vmatpush.bf16.msra.mxu0 %v6069
    %6898 = vmatpush.bf16.msra.mxu0 %v6065
    %6899 = vmatpush.bf16.msra.mxu0 %v6061
    %6900 = vmatpush.bf16.msra.mxu0 %v6057
    %6901 = vmatpush.bf16.msra.mxu0 %v6053
    %6902 = vmatpush.bf16.msra.mxu0 %v6049
    %6903 = vmatpush.bf16.msra.mxu0 %v6045
    %6904 = vmatpush.bf16.msra.mxu0 %v6041
    %6905 = vmatmul.bf16.gmra.mxu0 %v4459
    %v6906 = vpop.f32.mrf.mxu0
    %v6907 = vadd.f32 %v6894, %v6906
    %v6908 = vpop.f32.mrf.mxu0
    %6909 = vdwg.mxu0
    %v6910 = vmax.f32 %v6517, 0.0
    %v6911 = vmax.f32 %v6647, 0.0
    %v6912 = vmax.f32 %v6777, 0.0
    %v6913 = vmax.f32 %v6907, 0.0
    %v6914 = vpack.c.bf16 %v6910, %v6910
    %v6915 = vpack.c.bf16 %v6911, %v6911
    %v6916 = vpack.c.bf16 %v6912, %v6912
    %v6917 = vpack.c.bf16 %v6913, %v6913
    %v6918 = vld [vmem:[#allocation13] sm:$0xff]
    %v6919 = vld [vmem:[#allocation13 + $0x8] sm:$0xff]
    %v6920 = vld [vmem:[#allocation13 + $0x10] sm:$0xff]
    %v6921 = vld [vmem:[#allocation13 + $0x18] sm:$0xff]
    %v6922 = vld [vmem:[#allocation13 + $0x20] sm:$0xff]
    %v6923 = vld [vmem:[#allocation13 + $0x28] sm:$0xff]
    %v6924 = vld [vmem:[#allocation13 + $0x30] sm:$0xff]
    %v6925 = vld [vmem:[#allocation13 + $0x38] sm:$0xff]
    %v6926 = vld [vmem:[#allocation13 + $0x40] sm:$0xff]
    %v6927 = vld [vmem:[#allocation13 + $0x48] sm:$0xff]
    %v6928 = vld [vmem:[#allocation13 + $0x50] sm:$0xff]
    %v6929 = vld [vmem:[#allocation13 + $0x58] sm:$0xff]
    %v6930 = vld [vmem:[#allocation13 + $0x60] sm:$0xff]
    %v6931 = vld [vmem:[#allocation13 + $0x68] sm:$0xff]
    %v6932 = vld [vmem:[#allocation13 + $0x70] sm:$0xff]
    %v6933 = vld [vmem:[#allocation13 + $0x78] sm:$0xff]
    %v6934 = vld [vmem:[#allocation13 + $0x80] sm:$0xff]
    %v6935 = vld [vmem:[#allocation13 + $0x88] sm:$0xff]
    %v6936 = vld [vmem:[#allocation13 + $0x90] sm:$0xff]
    %v6937 = vld [vmem:[#allocation13 + $0x98] sm:$0xff]
    %v6938 = vld [vmem:[#allocation13 + $0xa0] sm:$0xff]
    %v6939 = vld [vmem:[#allocation13 + $0xa8] sm:$0xff]
    %v6940 = vld [vmem:[#allocation13 + $0xb0] sm:$0xff]
    %v6941 = vld [vmem:[#allocation13 + $0xb8] sm:$0xff]
    %v6942 = vld [vmem:[#allocation13 + $0xc0] sm:$0xff]
    %v6943 = vld [vmem:[#allocation13 + $0xc8] sm:$0xff]
    %v6944 = vld [vmem:[#allocation13 + $0xd0] sm:$0xff]
    %v6945 = vld [vmem:[#allocation13 + $0xd8] sm:$0xff]
    %v6946 = vld [vmem:[#allocation13 + $0xe0] sm:$0xff]
    %v6947 = vld [vmem:[#allocation13 + $0xe8] sm:$0xff]
    %v6948 = vld [vmem:[#allocation13 + $0xf0] sm:$0xff]
    %v6949 = vld [vmem:[#allocation13 + $0xf8] sm:$0xff]
    %v6950 = vld [vmem:[#allocation13 + $0x100] sm:$0xff]
    %v6951 = vld [vmem:[#allocation13 + $0x108] sm:$0xff]
    %v6952 = vld [vmem:[#allocation13 + $0x110] sm:$0xff]
    %v6953 = vld [vmem:[#allocation13 + $0x118] sm:$0xff]
    %v6954 = vld [vmem:[#allocation13 + $0x120] sm:$0xff]
    %v6955 = vld [vmem:[#allocation13 + $0x128] sm:$0xff]
    %v6956 = vld [vmem:[#allocation13 + $0x130] sm:$0xff]
    %v6957 = vld [vmem:[#allocation13 + $0x138] sm:$0xff]
    %v6958 = vld [vmem:[#allocation13 + $0x140] sm:$0xff]
    %v6959 = vld [vmem:[#allocation13 + $0x148] sm:$0xff]
    %v6960 = vld [vmem:[#allocation13 + $0x150] sm:$0xff]
    %v6961 = vld [vmem:[#allocation13 + $0x158] sm:$0xff]
    %v6962 = vld [vmem:[#allocation13 + $0x160] sm:$0xff]
    %v6963 = vld [vmem:[#allocation13 + $0x168] sm:$0xff]
    %v6964 = vld [vmem:[#allocation13 + $0x170] sm:$0xff]
    %v6965 = vld [vmem:[#allocation13 + $0x178] sm:$0xff]
    %v6966 = vld [vmem:[#allocation13 + $0x180] sm:$0xff]
    %v6967 = vld [vmem:[#allocation13 + $0x188] sm:$0xff]
    %v6968 = vld [vmem:[#allocation13 + $0x190] sm:$0xff]
    %v6969 = vld [vmem:[#allocation13 + $0x198] sm:$0xff]
    %v6970 = vld [vmem:[#allocation13 + $0x1a0] sm:$0xff]
    %v6971 = vld [vmem:[#allocation13 + $0x1a8] sm:$0xff]
    %v6972 = vld [vmem:[#allocation13 + $0x1b0] sm:$0xff]
    %v6973 = vld [vmem:[#allocation13 + $0x1b8] sm:$0xff]
    %v6974 = vld [vmem:[#allocation13 + $0x1c0] sm:$0xff]
    %v6975 = vld [vmem:[#allocation13 + $0x1c8] sm:$0xff]
    %v6976 = vld [vmem:[#allocation13 + $0x1d0] sm:$0xff]
    %v6977 = vld [vmem:[#allocation13 + $0x1d8] sm:$0xff]
    %v6978 = vld [vmem:[#allocation13 + $0x1e0] sm:$0xff]
    %v6979 = vld [vmem:[#allocation13 + $0x1e8] sm:$0xff]
    %v6980 = vld [vmem:[#allocation13 + $0x1f0] sm:$0xff]
    %v6981 = vld [vmem:[#allocation13 + $0x1f8] sm:$0xff]
    %v6982 = vld [vmem:[#allocation14] sm:$0x3]
    %v6984 = vperm.slane %v6982, 0
    %v6985 = vperm.slane %v6982, 1
    %v7052 = vunpack.c.l.b16 %v6918
    %v7053 = vunpack.c.h.b16 %v6918
    %v7054 = vunpack.c.l.b16 %v6919
    %v7055 = vunpack.c.h.b16 %v6919
    %v7056 = vunpack.c.l.b16 %v6920
    %v7057 = vunpack.c.h.b16 %v6920
    %v7058 = vunpack.c.l.b16 %v6921
    %v7059 = vunpack.c.h.b16 %v6921
    %v7060 = vunpack.c.l.b16 %v6922
    %v7061 = vunpack.c.h.b16 %v6922
    %v7062 = vunpack.c.l.b16 %v6923
    %v7063 = vunpack.c.h.b16 %v6923
    %v7064 = vunpack.c.l.b16 %v6924
    %v7065 = vunpack.c.h.b16 %v6924
    %v7066 = vunpack.c.l.b16 %v6925
    %v7067 = vunpack.c.h.b16 %v6925
    %v7068 = vunpack.c.l.b16 %v6926
    %v7069 = vunpack.c.h.b16 %v6926
    %v7070 = vunpack.c.l.b16 %v6927
    %v7071 = vunpack.c.h.b16 %v6927
    %v7072 = vunpack.c.l.b16 %v6928
    %v7073 = vunpack.c.h.b16 %v6928
    %v7074 = vunpack.c.l.b16 %v6929
    %v7075 = vunpack.c.h.b16 %v6929
    %v7076 = vunpack.c.l.b16 %v6930
    %v7077 = vunpack.c.h.b16 %v6930
    %v7078 = vunpack.c.l.b16 %v6931
    %v7079 = vunpack.c.h.b16 %v6931
    %v7080 = vunpack.c.l.b16 %v6932
    %v7081 = vunpack.c.h.b16 %v6932
    %v7082 = vunpack.c.l.b16 %v6933
    %v7083 = vunpack.c.h.b16 %v6933
    %v7084 = vunpack.c.l.b16 %v6934
    %v7085 = vunpack.c.h.b16 %v6934
    %v7086 = vunpack.c.l.b16 %v6935
    %v7087 = vunpack.c.h.b16 %v6935
    %v7088 = vunpack.c.l.b16 %v6936
    %v7089 = vunpack.c.h.b16 %v6936
    %v7090 = vunpack.c.l.b16 %v6937
    %v7091 = vunpack.c.h.b16 %v6937
    %v7092 = vunpack.c.l.b16 %v6938
    %v7093 = vunpack.c.h.b16 %v6938
    %v7094 = vunpack.c.l.b16 %v6939
    %v7095 = vunpack.c.h.b16 %v6939
    %v7096 = vunpack.c.l.b16 %v6940
    %v7097 = vunpack.c.h.b16 %v6940
    %v7098 = vunpack.c.l.b16 %v6941
    %v7099 = vunpack.c.h.b16 %v6941
    %v7100 = vunpack.c.l.b16 %v6942
    %v7101 = vunpack.c.h.b16 %v6942
    %v7102 = vunpack.c.l.b16 %v6943
    %v7103 = vunpack.c.h.b16 %v6943
    %v7104 = vunpack.c.l.b16 %v6944
    %v7105 = vunpack.c.h.b16 %v6944
    %v7106 = vunpack.c.l.b16 %v6945
    %v7107 = vunpack.c.h.b16 %v6945
    %v7108 = vunpack.c.l.b16 %v6946
    %v7109 = vunpack.c.h.b16 %v6946
    %v7110 = vunpack.c.l.b16 %v6947
    %v7111 = vunpack.c.h.b16 %v6947
    %v7112 = vunpack.c.l.b16 %v6948
    %v7113 = vunpack.c.h.b16 %v6948
    %v7114 = vunpack.c.l.b16 %v6949
    %v7115 = vunpack.c.h.b16 %v6949
    %v7116 = vunpack.c.l.b16 %v6950
    %v7117 = vunpack.c.h.b16 %v6950
    %v7118 = vunpack.c.l.b16 %v6951
    %v7119 = vunpack.c.h.b16 %v6951
    %v7120 = vunpack.c.l.b16 %v6952
    %v7121 = vunpack.c.h.b16 %v6952
    %v7122 = vunpack.c.l.b16 %v6953
    %v7123 = vunpack.c.h.b16 %v6953
    %v7124 = vunpack.c.l.b16 %v6954
    %v7125 = vunpack.c.h.b16 %v6954
    %v7126 = vunpack.c.l.b16 %v6955
    %v7127 = vunpack.c.h.b16 %v6955
    %v7128 = vunpack.c.l.b16 %v6956
    %v7129 = vunpack.c.h.b16 %v6956
    %v7130 = vunpack.c.l.b16 %v6957
    %v7131 = vunpack.c.h.b16 %v6957
    %v7132 = vunpack.c.l.b16 %v6958
    %v7133 = vunpack.c.h.b16 %v6958
    %v7134 = vunpack.c.l.b16 %v6959
    %v7135 = vunpack.c.h.b16 %v6959
    %v7136 = vunpack.c.l.b16 %v6960
    %v7137 = vunpack.c.h.b16 %v6960
    %v7138 = vunpack.c.l.b16 %v6961
    %v7139 = vunpack.c.h.b16 %v6961
    %v7140 = vunpack.c.l.b16 %v6962
    %v7141 = vunpack.c.h.b16 %v6962
    %v7142 = vunpack.c.l.b16 %v6963
    %v7143 = vunpack.c.h.b16 %v6963
    %v7144 = vunpack.c.l.b16 %v6964
    %v7145 = vunpack.c.h.b16 %v6964
    %v7146 = vunpack.c.l.b16 %v6965
    %v7147 = vunpack.c.h.b16 %v6965
    %v7148 = vunpack.c.l.b16 %v6966
    %v7149 = vunpack.c.h.b16 %v6966
    %v7150 = vunpack.c.l.b16 %v6967
    %v7151 = vunpack.c.h.b16 %v6967
    %v7152 = vunpack.c.l.b16 %v6968
    %v7153 = vunpack.c.h.b16 %v6968
    %v7154 = vunpack.c.l.b16 %v6969
    %v7155 = vunpack.c.h.b16 %v6969
    %v7156 = vunpack.c.l.b16 %v6970
    %v7157 = vunpack.c.h.b16 %v6970
    %v7158 = vunpack.c.l.b16 %v6971
    %v7159 = vunpack.c.h.b16 %v6971
    %v7160 = vunpack.c.l.b16 %v6972
    %v7161 = vunpack.c.h.b16 %v6972
    %v7162 = vunpack.c.l.b16 %v6973
    %v7163 = vunpack.c.h.b16 %v6973
    %v7164 = vunpack.c.l.b16 %v6974
    %v7165 = vunpack.c.h.b16 %v6974
    %v7166 = vunpack.c.l.b16 %v6975
    %v7167 = vunpack.c.h.b16 %v6975
    %v7168 = vunpack.c.l.b16 %v6976
    %v7169 = vunpack.c.h.b16 %v6976
    %v7170 = vunpack.c.l.b16 %v6977
    %v7171 = vunpack.c.h.b16 %v6977
    %v7172 = vunpack.c.l.b16 %v6978
    %v7173 = vunpack.c.h.b16 %v6978
    %v7174 = vunpack.c.l.b16 %v6979
    %v7175 = vunpack.c.h.b16 %v6979
    %v7176 = vunpack.c.l.b16 %v6980
    %v7177 = vunpack.c.h.b16 %v6980
    %v7178 = vunpack.c.l.b16 %v6981
    %v7179 = vunpack.c.h.b16 %v6981
    %v7180 = vpack.c.b16 %v7054, %v7052
    %v7181 = vpack.c.b16 %v7055, %v7053
    %v7182 = vpack.c.b16 %v7058, %v7056
    %v7183 = vpack.c.b16 %v7059, %v7057
    %v7184 = vpack.c.b16 %v7062, %v7060
    %v7185 = vpack.c.b16 %v7063, %v7061
    %v7186 = vpack.c.b16 %v7066, %v7064
    %v7187 = vpack.c.b16 %v7067, %v7065
    %v7188 = vpack.c.b16 %v7070, %v7068
    %v7189 = vpack.c.b16 %v7071, %v7069
    %v7190 = vpack.c.b16 %v7074, %v7072
    %v7191 = vpack.c.b16 %v7075, %v7073
    %v7192 = vpack.c.b16 %v7078, %v7076
    %v7193 = vpack.c.b16 %v7079, %v7077
    %v7194 = vpack.c.b16 %v7082, %v7080
    %v7195 = vpack.c.b16 %v7083, %v7081
    %v7196 = vpack.c.b16 %v7086, %v7084
    %v7197 = vpack.c.b16 %v7087, %v7085
    %v7198 = vpack.c.b16 %v7090, %v7088
    %v7199 = vpack.c.b16 %v7091, %v7089
    %v7200 = vpack.c.b16 %v7094, %v7092
    %v7201 = vpack.c.b16 %v7095, %v7093
    %v7202 = vpack.c.b16 %v7098, %v7096
    %v7203 = vpack.c.b16 %v7099, %v7097
    %v7204 = vpack.c.b16 %v7102, %v7100
    %v7205 = vpack.c.b16 %v7103, %v7101
    %v7206 = vpack.c.b16 %v7106, %v7104
    %v7207 = vpack.c.b16 %v7107, %v7105
    %v7208 = vpack.c.b16 %v7110, %v7108
    %v7209 = vpack.c.b16 %v7111, %v7109
    %v7210 = vpack.c.b16 %v7114, %v7112
    %v7211 = vpack.c.b16 %v7115, %v7113
    %v7212 = vpack.c.b16 %v7118, %v7116
    %v7213 = vpack.c.b16 %v7119, %v7117
    %v7214 = vpack.c.b16 %v7122, %v7120
    %v7215 = vpack.c.b16 %v7123, %v7121
    %v7216 = vpack.c.b16 %v7126, %v7124
    %v7217 = vpack.c.b16 %v7127, %v7125
    %v7218 = vpack.c.b16 %v7130, %v7128
    %v7219 = vpack.c.b16 %v7131, %v7129
    %v7220 = vpack.c.b16 %v7134, %v7132
    %v7221 = vpack.c.b16 %v7135, %v7133
    %v7222 = vpack.c.b16 %v7138, %v7136
    %v7223 = vpack.c.b16 %v7139, %v7137
    %v7224 = vpack.c.b16 %v7142, %v7140
    %v7225 = vpack.c.b16 %v7143, %v7141
    %v7226 = vpack.c.b16 %v7146, %v7144
    %v7227 = vpack.c.b16 %v7147, %v7145
    %v7228 = vpack.c.b16 %v7150, %v7148
    %v7229 = vpack.c.b16 %v7151, %v7149
    %v7230 = vpack.c.b16 %v7154, %v7152
    %v7231 = vpack.c.b16 %v7155, %v7153
    %v7232 = vpack.c.b16 %v7158, %v7156
    %v7233 = vpack.c.b16 %v7159, %v7157
    %v7234 = vpack.c.b16 %v7162, %v7160
    %v7235 = vpack.c.b16 %v7163, %v7161
    %v7236 = vpack.c.b16 %v7166, %v7164
    %v7237 = vpack.c.b16 %v7167, %v7165
    %v7238 = vpack.c.b16 %v7170, %v7168
    %v7239 = vpack.c.b16 %v7171, %v7169
    %v7240 = vpack.c.b16 %v7174, %v7172
    %v7241 = vpack.c.b16 %v7175, %v7173
    %v7242 = vpack.c.b16 %v7178, %v7176
    %v7243 = vpack.c.b16 %v7179, %v7177
    %7308 = vmatpush.bf16.msra.mxu0 %v7194
    %7309 = vmatpush.bf16.msra.mxu0 %v7192
    %7310 = vmatpush.bf16.msra.mxu0 %v7190
    %7311 = vmatpush.bf16.msra.mxu0 %v7188
    %7312 = vmatpush.bf16.msra.mxu0 %v7186
    %7313 = vmatpush.bf16.msra.mxu0 %v7184
    %7314 = vmatpush.bf16.msra.mxu0 %v7182
    %7315 = vmatpush.bf16.msra.mxu0 %v7180
    %7316 = vmatmul.bf16.gmra.mxu0 %v6914
    %v7317 = vpop.f32.mrf.mxu0
    %v7318 = vadd.f32 %v6984, %v7317
    %v7319 = vpop.f32.mrf.mxu0
    %7320 = vdwg.mxu0
    %7321 = vmatpush.bf16.msra.mxu0 %v7210
    %7322 = vmatpush.bf16.msra.mxu0 %v7208
    %7323 = vmatpush.bf16.msra.mxu0 %v7206
    %7324 = vmatpush.bf16.msra.mxu0 %v7204
    %7325 = vmatpush.bf16.msra.mxu0 %v7202
    %7326 = vmatpush.bf16.msra.mxu0 %v7200
    %7327 = vmatpush.bf16.msra.mxu0 %v7198
    %7328 = vmatpush.bf16.msra.mxu0 %v7196
    %7329 = vmatmul.bf16.gmra.mxu0 %v6915
    %v7330 = vpop.f32.mrf.mxu0
    %v7331 = vadd.f32 %v7318, %v7330
    %v7332 = vpop.f32.mrf.mxu0
    %7333 = vdwg.mxu0
    %7334 = vmatpush.bf16.msra.mxu0 %v7226
    %7335 = vmatpush.bf16.msra.mxu0 %v7224
    %7336 = vmatpush.bf16.msra.mxu0 %v7222
    %7337 = vmatpush.bf16.msra.mxu0 %v7220
    %7338 = vmatpush.bf16.msra.mxu0 %v7218
    %7339 = vmatpush.bf16.msra.mxu0 %v7216
    %7340 = vmatpush.bf16.msra.mxu0 %v7214
    %7341 = vmatpush.bf16.msra.mxu0 %v7212
    %7342 = vmatmul.bf16.gmra.mxu0 %v6916
    %v7343 = vpop.f32.mrf.mxu0
    %v7344 = vadd.f32 %v7331, %v7343
    %v7345 = vpop.f32.mrf.mxu0
    %7346 = vdwg.mxu0
    %7347 = vmatpush.bf16.msra.mxu0 %v7242
    %7348 = vmatpush.bf16.msra.mxu0 %v7240
    %7349 = vmatpush.bf16.msra.mxu0 %v7238
    %7350 = vmatpush.bf16.msra.mxu0 %v7236
    %7351 = vmatpush.bf16.msra.mxu0 %v7234
    %7352 = vmatpush.bf16.msra.mxu0 %v7232
    %7353 = vmatpush.bf16.msra.mxu0 %v7230
    %7354 = vmatpush.bf16.msra.mxu0 %v7228
    %7355 = vmatmul.bf16.gmra.mxu0 %v6917
    %v7356 = vpop.f32.mrf.mxu0
    %v7357 = vadd.f32 %v7344, %v7356
    %v7358 = vpop.f32.mrf.mxu0
    %7359 = vdwg.mxu0
    %7360 = vmatpush.bf16.msra.mxu0 %v7195
    %7361 = vmatpush.bf16.msra.mxu0 %v7193
    %7362 = vmatpush.bf16.msra.mxu0 %v7191
    %7363 = vmatpush.bf16.msra.mxu0 %v7189
    %7364 = vmatpush.bf16.msra.mxu0 %v7187
    %7365 = vmatpush.bf16.msra.mxu0 %v7185
    %7366 = vmatpush.bf16.msra.mxu0 %v7183
    %7367 = vmatpush.bf16.msra.mxu0 %v7181
    %7368 = vmatmul.bf16.gmra.mxu0 %v6914
    %v7369 = vpop.f32.mrf.mxu0
    %v7370 = vadd.f32 %v6985, %v7369
    %v7371 = vpop.f32.mrf.mxu0
    %7372 = vdwg.mxu0
    %7373 = vmatpush.bf16.msra.mxu0 %v7211
    %7374 = vmatpush.bf16.msra.mxu0 %v7209
    %7375 = vmatpush.bf16.msra.mxu0 %v7207
    %7376 = vmatpush.bf16.msra.mxu0 %v7205
    %7377 = vmatpush.bf16.msra.mxu0 %v7203
    %7378 = vmatpush.bf16.msra.mxu0 %v7201
    %7379 = vmatpush.bf16.msra.mxu0 %v7199
    %7380 = vmatpush.bf16.msra.mxu0 %v7197
    %7381 = vmatmul.bf16.gmra.mxu0 %v6915
    %v7382 = vpop.f32.mrf.mxu0
    %v7383 = vadd.f32 %v7370, %v7382
    %v7384 = vpop.f32.mrf.mxu0
    %7385 = vdwg.mxu0
    %7386 = vmatpush.bf16.msra.mxu0 %v7227
    %7387 = vmatpush.bf16.msra.mxu0 %v7225
    %7388 = vmatpush.bf16.msra.mxu0 %v7223
    %7389 = vmatpush.bf16.msra.mxu0 %v7221
    %7390 = vmatpush.bf16.msra.mxu0 %v7219
    %7391 = vmatpush.bf16.msra.mxu0 %v7217
    %7392 = vmatpush.bf16.msra.mxu0 %v7215
    %7393 = vmatpush.bf16.msra.mxu0 %v7213
    %7394 = vmatmul.bf16.gmra.mxu0 %v6916
    %v7395 = vpop.f32.mrf.mxu0
    %v7396 = vadd.f32 %v7383, %v7395
    %v7397 = vpop.f32.mrf.mxu0
    %7398 = vdwg.mxu0
    %7399 = vmatpush.bf16.msra.mxu0 %v7243
    %7400 = vmatpush.bf16.msra.mxu0 %v7241
    %7401 = vmatpush.bf16.msra.mxu0 %v7239
    %7402 = vmatpush.bf16.msra.mxu0 %v7237
    %7403 = vmatpush.bf16.msra.mxu0 %v7235
    %7404 = vmatpush.bf16.msra.mxu0 %v7233
    %7405 = vmatpush.bf16.msra.mxu0 %v7231
    %7406 = vmatpush.bf16.msra.mxu0 %v7229
    %7407 = vmatmul.bf16.gmra.mxu0 %v6917
    %v7408 = vpop.f32.mrf.mxu0
    %v7409 = vadd.f32 %v7396, %v7408
    %v7410 = vpop.f32.mrf.mxu0
    %7411 = vdwg.mxu0
    %v7412 = vmax.f32 %v7357, 0.0
    %v7413 = vmax.f32 %v7409, 0.0
    %v7414 = vpack.c.bf16 %v7412, %v7412
    %v7415 = vpack.c.bf16 %v7413, %v7413
    %v7416 = vld [vmem:[#allocation16] sm:$0xf]
    %v7417 = vld [vmem:[#allocation16 + $0x4] sm:$0xf]
    %v7418 = vld [vmem:[#allocation16 + $0x8] sm:$0xf]
    %v7419 = vld [vmem:[#allocation16 + $0xc] sm:$0xf]
    %v7420 = vld [vmem:[#allocation16 + $0x10] sm:$0xf]
    %v7421 = vld [vmem:[#allocation16 + $0x14] sm:$0xf]
    %v7422 = vld [vmem:[#allocation16 + $0x18] sm:$0xf]
    %v7423 = vld [vmem:[#allocation16 + $0x1c] sm:$0xf]
    %v7424 = vld [vmem:[#allocation16 + $0x20] sm:$0xf]
    %v7425 = vld [vmem:[#allocation16 + $0x24] sm:$0xf]
    %v7426 = vld [vmem:[#allocation16 + $0x28] sm:$0xf]
    %v7427 = vld [vmem:[#allocation16 + $0x2c] sm:$0xf]
    %v7428 = vld [vmem:[#allocation16 + $0x30] sm:$0xf]
    %v7429 = vld [vmem:[#allocation16 + $0x34] sm:$0xf]
    %v7430 = vld [vmem:[#allocation16 + $0x38] sm:$0xf]
    %v7431 = vld [vmem:[#allocation16 + $0x3c] sm:$0xf]
    %v7432 = vld [vmem:[#allocation16 + $0x40] sm:$0xf]
    %v7433 = vld [vmem:[#allocation16 + $0x44] sm:$0xf]
    %v7434 = vld [vmem:[#allocation16 + $0x48] sm:$0xf]
    %v7435 = vld [vmem:[#allocation16 + $0x4c] sm:$0xf]
    %v7436 = vld [vmem:[#allocation16 + $0x50] sm:$0xf]
    %v7437 = vld [vmem:[#allocation16 + $0x54] sm:$0xf]
    %v7438 = vld [vmem:[#allocation16 + $0x58] sm:$0xf]
    %v7439 = vld [vmem:[#allocation16 + $0x5c] sm:$0xf]
    %v7440 = vld [vmem:[#allocation16 + $0x60] sm:$0xf]
    %v7441 = vld [vmem:[#allocation16 + $0x64] sm:$0xf]
    %v7442 = vld [vmem:[#allocation16 + $0x68] sm:$0xf]
    %v7443 = vld [vmem:[#allocation16 + $0x6c] sm:$0xf]
    %v7444 = vld [vmem:[#allocation16 + $0x70] sm:$0xf]
    %v7445 = vld [vmem:[#allocation16 + $0x74] sm:$0xf]
    %v7446 = vld [vmem:[#allocation16 + $0x78] sm:$0xf]
    %v7447 = vld [vmem:[#allocation16 + $0x7c] sm:$0xf]
    %v7448 = vld [vmem:[#allocation17] sm:$0x1]
    %v7450 = vperm.slane %v7448, 0
    %v7484 = vunpack.c.l.b16 %v7416
    %v7485 = vunpack.c.l.b16 %v7417
    %v7486 = vunpack.c.l.b16 %v7418
    %v7487 = vunpack.c.l.b16 %v7419
    %v7488 = vunpack.c.l.b16 %v7420
    %v7489 = vunpack.c.l.b16 %v7421
    %v7490 = vunpack.c.l.b16 %v7422
    %v7491 = vunpack.c.l.b16 %v7423
    %v7492 = vunpack.c.l.b16 %v7424
    %v7493 = vunpack.c.l.b16 %v7425
    %v7494 = vunpack.c.l.b16 %v7426
    %v7495 = vunpack.c.l.b16 %v7427
    %v7496 = vunpack.c.l.b16 %v7428
    %v7497 = vunpack.c.l.b16 %v7429
    %v7498 = vunpack.c.l.b16 %v7430
    %v7499 = vunpack.c.l.b16 %v7431
    %v7500 = vunpack.c.l.b16 %v7432
    %v7501 = vunpack.c.l.b16 %v7433
    %v7502 = vunpack.c.l.b16 %v7434
    %v7503 = vunpack.c.l.b16 %v7435
    %v7504 = vunpack.c.l.b16 %v7436
    %v7505 = vunpack.c.l.b16 %v7437
    %v7506 = vunpack.c.l.b16 %v7438
    %v7507 = vunpack.c.l.b16 %v7439
    %v7508 = vunpack.c.l.b16 %v7440
    %v7509 = vunpack.c.l.b16 %v7441
    %v7510 = vunpack.c.l.b16 %v7442
    %v7511 = vunpack.c.l.b16 %v7443
    %v7512 = vunpack.c.l.b16 %v7444
    %v7513 = vunpack.c.l.b16 %v7445
    %v7514 = vunpack.c.l.b16 %v7446
    %v7515 = vunpack.c.l.b16 %v7447
    %v7516 = vpack.c.b16 %v7485, %v7484
    %v7517 = vpack.c.b16 %v7487, %v7486
    %v7518 = vpack.c.b16 %v7489, %v7488
    %v7519 = vpack.c.b16 %v7491, %v7490
    %v7520 = vpack.c.b16 %v7493, %v7492
    %v7521 = vpack.c.b16 %v7495, %v7494
    %v7522 = vpack.c.b16 %v7497, %v7496
    %v7523 = vpack.c.b16 %v7499, %v7498
    %v7524 = vpack.c.b16 %v7501, %v7500
    %v7525 = vpack.c.b16 %v7503, %v7502
    %v7526 = vpack.c.b16 %v7505, %v7504
    %v7527 = vpack.c.b16 %v7507, %v7506
    %v7528 = vpack.c.b16 %v7509, %v7508
    %v7529 = vpack.c.b16 %v7511, %v7510
    %v7530 = vpack.c.b16 %v7513, %v7512
    %v7531 = vpack.c.b16 %v7515, %v7514
    %7548 = vmatpush.bf16.msra.mxu0 %v7523
    %7549 = vmatpush.bf16.msra.mxu0 %v7522
    %7550 = vmatpush.bf16.msra.mxu0 %v7521
    %7551 = vmatpush.bf16.msra.mxu0 %v7520
    %7552 = vmatpush.bf16.msra.mxu0 %v7519
    %7553 = vmatpush.bf16.msra.mxu0 %v7518
    %7554 = vmatpush.bf16.msra.mxu0 %v7517
    %7555 = vmatpush.bf16.msra.mxu0 %v7516
    %7556 = vmatmul.bf16.gmra.mxu0 %v7414
    %v7557 = vpop.f32.mrf.mxu0
    %v7558 = vadd.f32 %v7450, %v7557
    %v7559 = vpop.f32.mrf.mxu0
    %7560 = vdwg.mxu0
    %7561 = vmatpush.bf16.msra.mxu0 %v7531
    %7562 = vmatpush.bf16.msra.mxu0 %v7530
    %7563 = vmatpush.bf16.msra.mxu0 %v7529
    %7564 = vmatpush.bf16.msra.mxu0 %v7528
    %7565 = vmatpush.bf16.msra.mxu0 %v7527
    %7566 = vmatpush.bf16.msra.mxu0 %v7526
    %7567 = vmatpush.bf16.msra.mxu0 %v7525
    %7568 = vmatpush.bf16.msra.mxu0 %v7524
    %7569 = vmatmul.bf16.gmra.mxu0 %v7415
    %v7570 = vpop.f32.mrf.mxu0
    %v7571 = vadd.f32 %v7558, %v7570
    %v7572 = vpop.f32.mrf.mxu0
    %7573 = vdwg.mxu0
    %7574 = vst [vmem:[#allocation20] sm:$0x3] %v7571
    // Predicated region
    $region86: #{defect_classifier_forward.1} parent=1 // pred_check
      _
    $region87: #{defect_classifier_forward.1} parent=1 // pred_check_branch
      %7576 = sbr.rel (0) target = $region89
    $region88: #{defect_classifier_forward.1} parent=1 // pred_region
      %7578 = vsyncadd [#allocation4], 0
      %s7580 = sshll.u32 [#allocation19], 4
      %s7581 = int_to_ptr.vmem [resolvable:$true] %s7580
      %s7582 = sshll.u32 %s11, 4
      %s7583 = int_to_ptr.hbm [resolvable:$true] %s7582
      %7585 = dma.vmem_to_hbm [thread:$0]  %s7581, 320, %s7583, [#allocation4]
    $region89: #{defect_classifier_forward.1} parent=1 // pred_fallthru
      _
    // Predicated region
    $region90: #{defect_classifier_forward.1} parent=1 // pred_check
      _
    $region91: #{defect_classifier_forward.1} parent=1 // pred_check_branch
      %7587 = sbr.rel (0) target = $region93
    $region92: #{defect_classifier_forward.1} parent=1 // pred_region
      %7589 = vsyncadd [#allocation21], 0
      %s7591 = sshll.u32 [#allocation20], 4
      %s7592 = int_to_ptr.vmem [resolvable:$true] %s7591
      %s7593 = sshll.u32 %s12, 4
      %s7594 = int_to_ptr.hbm [resolvable:$true] %s7593
      %7596 = dma.vmem_to_hbm [thread:$0]  %s7592, 32, %s7594, [#allocation21]
    $region93: #{defect_classifier_forward.1} parent=1 // pred_fallthru
      _
    // Predicated region
    $region94: #{defect_classifier_forward.1} parent=1 // pred_check
      _
    $region95: #{defect_classifier_forward.1} parent=1 // pred_check_branch
      %7598 = sbr.rel (0) target = $region97
    $region96: #{defect_classifier_forward.1} parent=1 // pred_region
      %7600 = dma.done [#allocation4], 320
    $region97: #{defect_classifier_forward.1} parent=1 // pred_fallthru
      _
    // Predicated region
    $region98: #{defect_classifier_forward.1} parent=1 // pred_check
      _
    $region99: #{defect_classifier_forward.1} parent=1 // pred_check_branch
      %7602 = sbr.rel (0) target = $region101
    $region100: #{defect_classifier_forward.1} parent=1 // pred_region
      %7604 = dma.done [#allocation21], 32
    $region101: #{defect_classifier_forward.1} parent=1 // pred_fallthru
      _
    %7605 = vsyncpa [#allocation3], 1
    %7606 = vsyncpa [#allocation6], 1
    %7607 = vsyncpa [#allocation9], 1
    %7608 = vsyncpa [#allocation12], 1
    %7609 = vsyncpa [#allocation15], 1
    %7610 = vsyncpa [#allocation18], 1
    %7611 = vsyncpa [#allocation4], 1
    %7612 = vsyncpa [#allocation21], 1

</llo_original>
